<compile_context>
chip_gen: v5e
topology: v5e:2x2
jax: 0.10.0
libtpu: 0.0.40
codegen_flags: <defaults>
</compile_context>

<pallas_src>
import numpy as np
import jax
import jax.numpy as jnp
from jax.experimental import pallas as pl
from jax.experimental.pallas import tpu as pltpu


_COMPUTE_DTYPE = jnp.bfloat16          # MXU operand dtype (f32 accumulation)
_ACT_DTYPE = jnp.bfloat16              # inter-stage activation dtype in HBM
_VMEM_LIMIT = 48 * 1024 * 1024         # explicit scoped-VMEM limit (< v7x 64 MiB)
_ROW_OFF = 8                           # sublane-aligned interior start in scratch


# --------------------------------------------------------------------------- #
# Layout helpers: NHWC <-> lane-dense (B, H, W*C).  Free row-major reshapes.
# --------------------------------------------------------------------------- #
def _dense(x):
    B, H, W, C = x.shape
    return x.reshape(B, H, W * C)


def _undense(x, C):
    B, H, WC = x.shape
    return x.reshape(B, H, WC // C, C)


# --------------------------------------------------------------------------- #
# Host-side weight preprocessing (numpy).  Runs ONCE, outside jit.
# --------------------------------------------------------------------------- #
def _banded_conv_matrix(w, cins, W, dtype=_COMPUTE_DTYPE):
    """HWIO weights (K, K, sum(cins), Cout) -> stacked banded matrices built
    over the UNPADDED width.  Blocks are ordered (dy major, input minor);
    block (dy, i) has shape (W*Ci, W*Cout) with
        M[q*Ci + c, x*Cout + o] = w[dy, q - x + pad, off_i + c, o]
    for 0 <= q - x + pad < K, else 0.  A dot of the (lane-aligned, unshifted)
    input row with this block performs the dx/channel part of the convolution
    and emits the result directly in the lane-dense (W*Cout) layout; width
    zero-padding is encoded by the zero entries (exact in bf16)."""
    w = np.asarray(w, np.float32)
    K, _, _, Cout = w.shape
    pad = (K - 1) // 2
    blocks = []
    for dy in range(K):
        ch_off = 0
        for Ci in cins:
            wi = w[dy, :, ch_off:ch_off + Ci, :]             # (K, Ci, Cout)
            m = np.zeros((W, Ci, W, Cout), np.float32)
            for x in range(W):
                for dx in range(K):
                    q = x + dx - pad
                    if 0 <= q < W:
                        m[q, :, x, :] = wi[dx]
            blocks.append(m.reshape(W * Ci, W * Cout))
            ch_off += Ci
    return jnp.asarray(np.concatenate(blocks, axis=0), dtype=dtype)


def _block_diag(w, W, dtype=_COMPUTE_DTYPE):
    """1x1-conv weight (Cin, Cout) -> (W*Cin, W*Cout) block-diagonal matrix."""
    w = np.asarray(w, np.float32)
    Cin, Cout = w.shape
    m = np.zeros((W, Cin, W, Cout), np.float32)
    for x in range(W):
        m[x, :, x, :] = w
    return jnp.asarray(m.reshape(W * Cin, W * Cout), dtype=dtype)


def _tile_bias(b, W):
    """(1, Cout) bias -> (1, W*Cout) lane-dense f32 bias."""
    b = np.asarray(b, np.float32).reshape(1, -1)
    return jnp.asarray(np.tile(b, (1, W)), jnp.float32)


def prepare_weights(p, W):
    """Builds all banded / block-diagonal / folded weights once (host side)."""
    C = p["rcab_w1"].shape[2]
    return {
        "rcab1_band": _banded_conv_matrix(p["rcab_w1"], [C], W),
        "rcab1_bias": _tile_bias(p["rcab_b1"], W),
        "rcab2_band": _banded_conv_matrix(p["rcab_w2"], [C], W),
        "rcab2_bias": _tile_bias(p["rcab_b2"], W),
        # CALayer 1x1s with the dense<->per-channel conversions folded in:
        #   pooled @ W1          == mean_h(u_dense) @ (tile_rows(W1) / W)
        #   tile_W(sigmoid(z))   == sigmoid(h @ tile_cols(W2) + tile_cols(b2))
        "ca_w1": jnp.asarray(np.tile(np.asarray(p["ca_w1"], np.float32), (W, 1)) / W),
        "ca_b1": jnp.asarray(np.asarray(p["ca_b1"], np.float32)),
        "ca_w2": jnp.asarray(np.tile(np.asarray(p["ca_w2"], np.float32), (1, W))),
        "ca_b2": _tile_bias(p["ca_b2"], W),
        "dcn_band": _banded_conv_matrix(p["dcn_w"], [C], W),
        "da_band": _banded_conv_matrix(p["da_w"], [C], W),
        "da_bias": _tile_bias(p["da_b"], W),
        "fb1_bd": _block_diag(p["fb1_w"], W), "fb1_bias": _tile_bias(p["fb1_b"], W),
        "fb2_bd": _block_diag(p["fb2_w"], W), "fb2_bias": _tile_bias(p["fb2_b"], W),
        "fb3_bd": _block_diag(p["fb3_w"], W), "fb3_bias": _tile_bias(p["fb3_b"], W),
        "fbc_band": _banded_conv_matrix(p["fbc_w"], [C, C], W),
        "fbc_bias": _tile_bias(p["fbc_b"], W),
    }


# --------------------------------------------------------------------------- #
# In-kernel helpers (trace-time).
# --------------------------------------------------------------------------- #
def _zero_pad_rows(scr, H, pad):
    """Zero only the pad border rows of a row-padded scratch (not the whole
    scratch); the interior is overwritten afterwards."""
    if pad == 0:
        return
    z = jnp.zeros((pad, scr.shape[1]), scr.dtype)
    scr[_ROW_OFF - pad:_ROW_OFF, :] = z
    scr[_ROW_OFF + H:_ROW_OFF + H + pad, :] = z


def _banded_conv(scrs, w_ref, H, pad, K):
    """KxK 'same' conv as K banded matmuls over row-shifted bands of the
    row-padded scratches (dy major, input minor).  Returns f32 (H, W*Cout)."""
    acc = None
    off = 0
    for dy in range(K):
        for scr in scrs:
            wc = scr.shape[1]
            band = scr[_ROW_OFF - pad + dy:_ROW_OFF - pad + dy + H, :]
            part = jnp.dot(band.astype(_COMPUTE_DTYPE), w_ref[off:off + wc, :],
                           preferred_element_type=jnp.float32)
            acc = part if acc is None else acc + part
            off += wc
    return acc


# --------------------------------------------------------------------------- #
# Kernel 1: RCAB  (conv3x3 + ReLU + conv3x3 + bias + CALayer + residual).
# --------------------------------------------------------------------------- #
def rcab_block(rgb, w1b, b1d, w2b, b2d, caw1, cab1, caw2, cab2):
    B, H, WC = rgb.shape
    K1, K2 = w1b.shape[0] // WC, w2b.shape[0] // WC
    pad1, pad2 = (K1 - 1) // 2, (K2 - 1) // 2
    assert max(pad1, pad2) <= _ROW_OFF
    ROWS = _ROW_OFF + H + max(pad1, pad2)
    Cr = caw1.shape[1]

    def kernel(x_ref, w1_ref, b1_ref, w2_ref, b2_ref,
               w1c_ref, b1c_ref, w2c_ref, b2c_ref, out_ref, xs, ts):
        _zero_pad_rows(xs, H, pad1)
        _zero_pad_rows(ts, H, pad2)
        xs[_ROW_OFF:_ROW_OFF + H, :] = x_ref[0].astype(xs.dtype)

        # conv3x3 + bias + ReLU  -> t (stays in VMEM)
        t = jnp.maximum(_banded_conv([xs], w1_ref, H, pad1, K1) + b1_ref[...], 0.0)
        ts[_ROW_OFF:_ROW_OFF + H, :] = t.astype(ts.dtype)

        # conv3x3 + bias -> u
        u = _banded_conv([ts], w2_ref, H, pad2, K2) + b2_ref[...]

        # CALayer: global avg-pool -> 1x1 -> ReLU -> 1x1 -> sigmoid -> scale
        # (pool / layout conversions folded into the effective 1x1 weights).
        m = jnp.mean(u, axis=0, keepdims=True)                            # (1, WC)
        h = jnp.maximum(
            jnp.dot(m, w1c_ref[...], preferred_element_type=jnp.float32)
            + b1c_ref[...], 0.0)                                          # (1, Cr)
        s = jax.nn.sigmoid(
            jnp.dot(h, w2c_ref[...], preferred_element_type=jnp.float32)
            + b2c_ref[...])                                               # (1, WC)

        out_ref[0] = (u * s + x_ref[0].astype(jnp.float32)).astype(out_ref.dtype)

    return pl.pallas_call(
        kernel,
        out_shape=jax.ShapeDtypeStruct((B, H, WC), _ACT_DTYPE),
        grid=(B,),
        in_specs=[
            pl.BlockSpec((1, H, WC), lambda b: (b, 0, 0)),        # rgb
            pl.BlockSpec((K1 * WC, WC), lambda b: (0, 0)),        # banded w1
            pl.BlockSpec((1, WC), lambda b: (0, 0)),              # b1
            pl.BlockSpec((K2 * WC, WC), lambda b: (0, 0)),        # banded w2
            pl.BlockSpec((1, WC), lambda b: (0, 0)),              # b2
            pl.BlockSpec((WC, Cr), lambda b: (0, 0)),             # CA W1 eff
            pl.BlockSpec((1, Cr), lambda b: (0, 0)),              # CA b1
            pl.BlockSpec((Cr, WC), lambda b: (0, 0)),             # CA W2 eff
            pl.BlockSpec((1, WC), lambda b: (0, 0)),              # CA b2 eff
        ],
        out_specs=pl.BlockSpec((1, H, WC), lambda b: (b, 0, 0)),
        scratch_shapes=[pltpu.VMEM((ROWS, WC), jnp.float32),
                        pltpu.VMEM((ROWS, WC), jnp.float32)],
        compiler_params=pltpu.CompilerParams(
            dimension_semantics=("parallel",), vmem_limit_bytes=_VMEM_LIMIT),
    )(rgb, w1b, b1d, w2b, b2d, caw1, cab1, caw2, cab2)


# --------------------------------------------------------------------------- #
# Kernel 2: DA_rgb tail  (dcn conv + (out2+out1) add + 3x3 conv + bias).
# --------------------------------------------------------------------------- #
def da_back_block(out1, dcn_band, da_band, da_bias):
    B, H, WC = out1.shape
    Kd, Ka = dcn_band.shape[0] // WC, da_band.shape[0] // WC
    padd, pada = (Kd - 1) // 2, (Ka - 1) // 2
    assert max(padd, pada) <= _ROW_OFF
    ROWS = _ROW_OFF + H + max(padd, pada)

    def kernel(x_ref, wd_ref, wa_ref, ba_ref, out_ref, s1, s2):
        _zero_pad_rows(s1, H, padd)
        _zero_pad_rows(s2, H, pada)
        s1[_ROW_OFF:_ROW_OFF + H, :] = x_ref[0].astype(s1.dtype)

        # TODO(synk): DCN_layer_rgb source is unavailable; the modulated
        # deformable conv is substituted with a plain KxK conv (bias=False), so
        # `inter`/`fea` do not steer the sampling as in the PyTorch reference.
        d = _banded_conv([s1], wd_ref, H, padd, Kd) + x_ref[0].astype(jnp.float32)
        s2[_ROW_OFF:_ROW_OFF + H, :] = d.astype(s2.dtype)

        r = _banded_conv([s2], wa_ref, H, pada, Ka) + ba_ref[...]
        out_ref[0] = r.astype(out_ref.dtype)

    return pl.pallas_call(
        kernel,
        out_shape=jax.ShapeDtypeStruct((B, H, WC), _ACT_DTYPE),
        grid=(B,),
        in_specs=[
            pl.BlockSpec((1, H, WC), lambda b: (b, 0, 0)),        # out1
            pl.BlockSpec((Kd * WC, WC), lambda b: (0, 0)),        # banded dcn w
            pl.BlockSpec((Ka * WC, WC), lambda b: (0, 0)),        # banded da w
            pl.BlockSpec((1, WC), lambda b: (0, 0)),              # da bias
        ],
        out_specs=pl.BlockSpec((1, H, WC), lambda b: (b, 0, 0)),
        scratch_shapes=[pltpu.VMEM((ROWS, WC), jnp.float32),
                        pltpu.VMEM((ROWS, WC), jnp.float32)],
        compiler_params=pltpu.CompilerParams(
            dimension_semantics=("parallel",), vmem_limit_bytes=_VMEM_LIMIT),
    )(out1, dcn_band, da_band, da_bias)


# --------------------------------------------------------------------------- #
# Kernel 3: FusionBlock 1x1 chain + concat-folded 3x3 conv + DOFT residual.
#   rgb3 = conv3(conv2(rgb_feat) * sigmoid(conv1(inter))) + rgb_feat
#   out  = conv3x3(concat([rgb3, x])) + bias + x
# --------------------------------------------------------------------------- #
def fusion_block(inter, rgb_feat, x, bd1, b1, bd2, b2, bd3, b3,
                 conv_band, conv_bias):
    B, H, WC = x.shape
    WC4 = bd1.shape[1]
    Kc = conv_band.shape[0] // (2 * WC)
    padc = (Kc - 1) // 2
    assert padc <= _ROW_OFF
    ROWS = _ROW_OFF + H + padc

    def kernel(i_ref, r_ref, x_ref, w1_ref, b1_ref, w2_ref, b2_ref,
               w3_ref, b3_ref, wc_ref, bc_ref, out_ref, s_r, s_x):
        _zero_pad_rows(s_r, H, padc)
        _zero_pad_rows(s_x, H, padc)

        xi = i_ref[0].astype(_COMPUTE_DTYPE)           # inter
        xr = r_ref[0]                                  # rgb_feat (bf16)
        xd = x_ref[0]                                  # depth features (f32)

        # 1x1 convs as block-diagonal matmuls (lane-dense throughout).
        wgt = jax.nn.sigmoid(
            jnp.dot(xi, w1_ref[...], preferred_element_type=jnp.float32)
            + b1_ref[...])
        r1 = (jnp.dot(xr.astype(_COMPUTE_DTYPE), w2_ref[...],
                      preferred_element_type=jnp.float32) + b2_ref[...]) * wgt
        rgb3 = (jnp.dot(r1.astype(_COMPUTE_DTYPE), w3_ref[...],
                        preferred_element_type=jnp.float32) + b3_ref[...]) \
               + xr.astype(jnp.float32)

        s_r[_ROW_OFF:_ROW_OFF + H, :] = rgb3.astype(s_r.dtype)
        s_x[_ROW_OFF:_ROW_OFF + H, :] = xd.astype(s_x.dtype)

        # 3x3 conv over concat([rgb3, x]); the channel concat is folded into
        # the banded weight's input blocks.  Then the DOFT residual (+x).
        acc = _banded_conv([s_r, s_x], wc_ref, H, padc, Kc)
        out_ref[0] = (acc + bc_ref[...] + xd.astype(jnp.float32)
                      ).astype(out_ref.dtype)

    return pl.pallas_call(
        kernel,
        out_shape=jax.ShapeDtypeStruct((B, H, WC), x.dtype),
        grid=(B,),
        in_specs=[
            pl.BlockSpec((1, H, WC), lambda b: (b, 0, 0)),        # inter
            pl.BlockSpec((1, H, WC), lambda b: (b, 0, 0)),        # rgb_feat
            pl.BlockSpec((1, H, WC), lambda b: (b, 0, 0)),        # x
            pl.BlockSpec((WC, WC4), lambda b: (0, 0)),            # bd1
            pl.BlockSpec((1, WC4), lambda b: (0, 0)),             # b1
            pl.BlockSpec((WC, WC4), lambda b: (0, 0)),            # bd2
            pl.BlockSpec((1, WC4), lambda b: (0, 0)),             # b2
            pl.BlockSpec((WC4, WC), lambda b: (0, 0)),            # bd3
            pl.BlockSpec((1, WC), lambda b: (0, 0)),              # b3
            pl.BlockSpec((2 * Kc * WC, WC), lambda b: (0, 0)),    # banded fbc w
            pl.BlockSpec((1, WC), lambda b: (0, 0)),              # fbc bias
        ],
        out_specs=pl.BlockSpec((1, H, WC), lambda b: (b, 0, 0)),
        scratch_shapes=[pltpu.VMEM((ROWS, WC), jnp.float32),
                        pltpu.VMEM((ROWS, WC), jnp.float32)],
        compiler_params=pltpu.CompilerParams(
            dimension_semantics=("parallel",), vmem_limit_bytes=_VMEM_LIMIT),
    )(inter, rgb_feat, x, bd1, b1, bd2, b2, bd3, b3, conv_band, conv_bias)


# --------------------------------------------------------------------------- #
# Synthetic parameter init (deterministic).
# --------------------------------------------------------------------------- #
def init_params(key, C, reduction, dcn_ks):
    keys = jax.random.split(key, 10)

    def conv_p(k, K, cin, cout, bias=True):
        kw, kb = jax.random.split(k)
        w = jax.random.normal(kw, (K, K, cin, cout), jnp.float32) \
            / float(np.sqrt(K * K * cin))
        bb = (jax.random.normal(kb, (1, cout), jnp.float32) * 0.05) if bias else None
        return w, bb

    p = {}
    p["rcab_w1"], p["rcab_b1"] = conv_p(keys[0], 3, C, C)
    p["rcab_w2"], p["rcab_b2"] = conv_p(keys[1], 3, C, C)
    w, b = conv_p(keys[2], 1, C, C // reduction)
    p["ca_w1"], p["ca_b1"] = w.reshape(C, C // reduction), b
    w, b = conv_p(keys[3], 1, C // reduction, C)
    p["ca_w2"], p["ca_b2"] = w.reshape(C // reduction, C), b
    p["dcn_w"], _ = conv_p(keys[4], dcn_ks, C, C, bias=False)
    p["da_w"], p["da_b"] = conv_p(keys[5], 3, C, C)
    w, b = conv_p(keys[6], 1, C, C // 4)
    p["fb1_w"], p["fb1_b"] = w.reshape(C, C // 4), b
    w, b = conv_p(keys[7], 1, C, C // 4)
    p["fb2_w"], p["fb2_b"] = w.reshape(C, C // 4), b
    w, b = conv_p(keys[8], 1, C // 4, C)
    p["fb3_w"], p["fb3_b"] = w.reshape(C // 4, C), b
    p["fbc_w"], p["fbc_b"] = conv_p(keys[9], 3, 2 * C, C)
    return p


# --------------------------------------------------------------------------- #
# DOFT forward (3 fused pallas_calls).  `pw` is the pre-processed weight dict.
# --------------------------------------------------------------------------- #
def doft_forward(pw, x, inter, rgb, fea):
    C = x.shape[-1]
    del fea  # TODO(synk): fea only feeds the (unavailable) DCN offset branch.
    xd, interd, rgbd = _dense(x), _dense(inter), _dense(rgb)

    # DA_rgb.rcab1: conv-ReLU-conv-CALayer + residual  (one kernel)
    out1 = rcab_block(rgbd, pw["rcab1_band"], pw["rcab1_bias"],
                      pw["rcab2_band"], pw["rcab2_bias"],
                      pw["ca_w1"], pw["ca_b1"], pw["ca_w2"], pw["ca_b2"])
    # DA_rgb tail: dcn(out1) + out1, then 3x3 conv  (one kernel)
    rgb_feat = da_back_block(out1, pw["dcn_band"], pw["da_band"], pw["da_bias"])
    # FusionBlock + final 3x3 conv over concat + DOFT residual (+x)  (one kernel)
    outd = fusion_block(interd, rgb_feat, xd,
                        pw["fb1_bd"], pw["fb1_bias"],
                        pw["fb2_bd"], pw["fb2_bias"],
                        pw["fb3_bd"], pw["fb3_bias"],
                        pw["fbc_band"], pw["fbc_bias"])
    return _undense(outd, C)


if __name__ == "__main__":
    B, H, W, C = 2, 16, 16, 16
    reduction = 4
    kernel_size = 3  # DCN kernel size

    key = jax.random.PRNGKey(0)
    kx, ki, kr, kf = jax.random.split(key, 4)
    x = jax.random.normal(kx, (B, H, W, C), jnp.float32)      # "depth" features
    inter = jax.random.normal(ki, (B, H, W, C), jnp.float32)
    rgb = jax.random.normal(kr, (B, H, W, C), jnp.float32)
    fea = jax.random.normal(kf, (B, H, W, C), jnp.float32)

    params = init_params(jax.random.PRNGKey(1234), C, reduction, kernel_size)
    pw = prepare_weights(params, W)     # host-side, runs ONCE (hoisted out of jit)

    fwd = jax.jit(doft_forward)
    out = fwd(pw, x, inter, rgb, fea)
    jax.block_until_ready(out)
    assert out.shape == (B, H, W, C)
    print("KERNEL_OK")
</pallas_src>

<mosaic_0001>
module attributes {stable_mosaic.version = 11 : i64} {
  func.func @kernel(%arg0: i32, %arg1: memref<1x16x256xbf16, #tpu.memory_space<vmem>>, %arg2: memref<768x256xbf16, #tpu.memory_space<vmem>>, %arg3: memref<768x256xbf16, #tpu.memory_space<vmem>>, %arg4: memref<1x256xf32, #tpu.memory_space<vmem>>, %arg5: memref<1x16x256xbf16, #tpu.memory_space<vmem>>, %arg6: memref<25x256xf32, #tpu.memory_space<vmem>>, %arg7: memref<25x256xf32, #tpu.memory_space<vmem>>) attributes {dimension_semantics = [#tpu.dimension_semantics<parallel>], iteration_bounds = array<i64: 2>, scalar_prefetch = 0 : i64, scratch_operands = 2 : i64, tpu.core_type = #tpu.core_type<tc>, window_params = [{transform_indices = @transform_0, window_bounds = array<i64: 1, 16, 256>}, {pipeline_mode = #tpu.pipeline_mode<synchronous>, transform_indices = @transform_1, window_bounds = array<i64: 768, 256>}, {pipeline_mode = #tpu.pipeline_mode<synchronous>, transform_indices = @transform_2, window_bounds = array<i64: 768, 256>}, {pipeline_mode = #tpu.pipeline_mode<synchronous>, transform_indices = @transform_3, window_bounds = array<i64: 1, 256>}, {transform_indices = @transform_4, window_bounds = array<i64: 1, 16, 256>}]} {
    %cst = arith.constant 0.000000e+00 : f32
    %0 = vector.broadcast %cst : f32 to vector<1x256xf32>
    %c7 = arith.constant 7 : index
    %c0 = arith.constant 0 : index
    %1 = vector.load %arg6[%c7, %c0] : memref<25x256xf32, #tpu.memory_space<vmem>>, vector<1x256xf32>
    tpu.vector_store %arg6[%c7, %c0], %0 {strides = array<i32>} : memref<25x256xf32, #tpu.memory_space<vmem>>, vector<1x256xf32>,
    %c24 = arith.constant 24 : index
    %c0_0 = arith.constant 0 : index
    %2 = vector.load %arg6[%c24, %c0_0] : memref<25x256xf32, #tpu.memory_space<vmem>>, vector<1x256xf32>
    tpu.vector_store %arg6[%c24, %c0_0], %0 {strides = array<i32>} : memref<25x256xf32, #tpu.memory_space<vmem>>, vector<1x256xf32>,
    %cst_1 = arith.constant 0.000000e+00 : f32
    %3 = vector.broadcast %cst_1 : f32 to vector<1x256xf32>
    %c7_2 = arith.constant 7 : index
    %c0_3 = arith.constant 0 : index
    %4 = vector.load %arg7[%c7_2, %c0_3] : memref<25x256xf32, #tpu.memory_space<vmem>>, vector<1x256xf32>
    tpu.vector_store %arg7[%c7_2, %c0_3], %3 {strides = array<i32>} : memref<25x256xf32, #tpu.memory_space<vmem>>, vector<1x256xf32>,
    %c24_4 = arith.constant 24 : index
    %c0_5 = arith.constant 0 : index
    %5 = vector.load %arg7[%c24_4, %c0_5] : memref<25x256xf32, #tpu.memory_space<vmem>>, vector<1x256xf32>
    tpu.vector_store %arg7[%c24_4, %c0_5], %3 {strides = array<i32>} : memref<25x256xf32, #tpu.memory_space<vmem>>, vector<1x256xf32>,
    %c0_6 = arith.constant 0 : index
    %c0_7 = arith.constant 0 : index
    %c0_8 = arith.constant 0 : index
    %6 = vector.load %arg1[%c0_6, %c0_7, %c0_8] : memref<1x16x256xbf16, #tpu.memory_space<vmem>>, vector<1x16x256xbf16>
    %7 = vector.shape_cast %6 : vector<1x16x256xbf16> to vector<16x256xbf16>
    %8 = arith.extf %7 : vector<16x256xbf16> to vector<16x256xf32>
    %c8 = arith.constant 8 : index
    %c0_9 = arith.constant 0 : index
    %9 = vector.load %arg6[%c8, %c0_9] : memref<25x256xf32, #tpu.memory_space<vmem>>, vector<16x256xf32>
    tpu.vector_store %arg6[%c8, %c0_9], %8 {strides = array<i32>} : memref<25x256xf32, #tpu.memory_space<vmem>>, vector<16x256xf32>,
    %c7_10 = arith.constant 7 : index
    %c0_11 = arith.constant 0 : index
    %10 = vector.load %arg6[%c7_10, %c0_11] : memref<25x256xf32, #tpu.memory_space<vmem>>, vector<16x256xf32>
    %11 = arith.truncf %10 : vector<16x256xf32> to vector<16x256xbf16>
    %c0_12 = arith.constant 0 : index
    %c0_13 = arith.constant 0 : index
    %12 = vector.load %arg2[%c0_12, %c0_13] : memref<768x256xbf16, #tpu.memory_space<vmem>>, vector<256x256xbf16>
    %cst_14 = arith.constant dense<0.000000e+00> : vector<16x256xf32>
    %13 = tpu.matmul %11, %12, %cst_14 {dimension_numbers = #tpu.dot_dimension_numbers<[1], [0], [0], [1], [0, 0, 1, 1], [], []>} : vector<16x256xbf16>, vector<256x256xbf16>, vector<16x256xf32> -> vector<16x256xf32>
    %c8_15 = arith.constant 8 : index
    %c0_16 = arith.constant 0 : index
    %14 = vector.load %arg6[%c8_15, %c0_16] : memref<25x256xf32, #tpu.memory_space<vmem>>, vector<16x256xf32>
    %15 = arith.truncf %14 : vector<16x256xf32> to vector<16x256xbf16>
    %c256 = arith.constant 256 : index
    %c0_17 = arith.constant 0 : index
    %16 = vector.load %arg2[%c256, %c0_17] : memref<768x256xbf16, #tpu.memory_space<vmem>>, vector<256x256xbf16>
    %cst_18 = arith.constant dense<0.000000e+00> : vector<16x256xf32>
    %17 = tpu.matmul %15, %16, %cst_18 {dimension_numbers = #tpu.dot_dimension_numbers<[1], [0], [0], [1], [0, 0, 1, 1], [], []>} : vector<16x256xbf16>, vector<256x256xbf16>, vector<16x256xf32> -> vector<16x256xf32>
    %18 = arith.addf %13, %17 : vector<16x256xf32>
    %c9 = arith.constant 9 : index
    %c0_19 = arith.constant 0 : index
    %19 = vector.load %arg6[%c9, %c0_19] : memref<25x256xf32, #tpu.memory_space<vmem>>, vector<16x256xf32>
    %20 = arith.truncf %19 : vector<16x256xf32> to vector<16x256xbf16>
    %c512 = arith.constant 512 : index
    %c0_20 = arith.constant 0 : index
    %21 = vector.load %arg2[%c512, %c0_20] : memref<768x256xbf16, #tpu.memory_space<vmem>>, vector<256x256xbf16>
    %cst_21 = arith.constant dense<0.000000e+00> : vector<16x256xf32>
    %22 = tpu.matmul %20, %21, %cst_21 {dimension_numbers = #tpu.dot_dimension_numbers<[1], [0], [0], [1], [0, 0, 1, 1], [], []>} : vector<16x256xbf16>, vector<256x256xbf16>, vector<16x256xf32> -> vector<16x256xf32>
    %23 = arith.addf %18, %22 : vector<16x256xf32>
    %c0_22 = arith.constant 0 : index
    %c0_23 = arith.constant 0 : index
    %c0_24 = arith.constant 0 : index
    %24 = vector.load %arg1[%c0_22, %c0_23, %c0_24] : memref<1x16x256xbf16, #tpu.memory_space<vmem>>, vector<1x16x256xbf16>
    %25 = vector.shape_cast %24 : vector<1x16x256xbf16> to vector<16x256xbf16>
    %26 = arith.extf %25 : vector<16x256xbf16> to vector<16x256xf32>
    %27 = arith.addf %23, %26 : vector<16x256xf32>
    %c8_25 = arith.constant 8 : index
    %c0_26 = arith.constant 0 : index
    %28 = vector.load %arg7[%c8_25, %c0_26] : memref<25x256xf32, #tpu.memory_space<vmem>>, vector<16x256xf32>
    tpu.vector_store %arg7[%c8_25, %c0_26], %27 {strides = array<i32>} : memref<25x256xf32, #tpu.memory_space<vmem>>, vector<16x256xf32>,
    %c7_27 = arith.constant 7 : index
    %c0_28 = arith.constant 0 : index
    %29 = vector.load %arg7[%c7_27, %c0_28] : memref<25x256xf32, #tpu.memory_space<vmem>>, vector<16x256xf32>
    %30 = arith.truncf %29 : vector<16x256xf32> to vector<16x256xbf16>
    %c0_29 = arith.constant 0 : index
    %c0_30 = arith.constant 0 : index
    %31 = vector.load %arg3[%c0_29, %c0_30] : memref<768x256xbf16, #tpu.memory_space<vmem>>, vector<256x256xbf16>
    %cst_31 = arith.constant dense<0.000000e+00> : vector<16x256xf32>
    %32 = tpu.matmul %30, %31, %cst_31 {dimension_numbers = #tpu.dot_dimension_numbers<[1], [0], [0], [1], [0, 0, 1, 1], [], []>} : vector<16x256xbf16>, vector<256x256xbf16>, vector<16x256xf32> -> vector<16x256xf32>
    %c8_32 = arith.constant 8 : index
    %c0_33 = arith.constant 0 : index
    %33 = vector.load %arg7[%c8_32, %c0_33] : memref<25x256xf32, #tpu.memory_space<vmem>>, vector<16x256xf32>
    %34 = arith.truncf %33 : vector<16x256xf32> to vector<16x256xbf16>
    %c256_34 = arith.constant 256 : index
    %c0_35 = arith.constant 0 : index
    %35 = vector.load %arg3[%c256_34, %c0_35] : memref<768x256xbf16, #tpu.memory_space<vmem>>, vector<256x256xbf16>
    %cst_36 = arith.constant dense<0.000000e+00> : vector<16x256xf32>
    %36 = tpu.matmul %34, %35, %cst_36 {dimension_numbers = #tpu.dot_dimension_numbers<[1], [0], [0], [1], [0, 0, 1, 1], [], []>} : vector<16x256xbf16>, vector<256x256xbf16>, vector<16x256xf32> -> vector<16x256xf32>
    %37 = arith.addf %32, %36 : vector<16x256xf32>
    %c9_37 = arith.constant 9 : index
    %c0_38 = arith.constant 0 : index
    %38 = vector.load %arg7[%c9_37, %c0_38] : memref<25x256xf32, #tpu.memory_space<vmem>>, vector<16x256xf32>
    %39 = arith.truncf %38 : vector<16x256xf32> to vector<16x256xbf16>
    %c512_39 = arith.constant 512 : index
    %c0_40 = arith.constant 0 : index
    %40 = vector.load %arg3[%c512_39, %c0_40] : memref<768x256xbf16, #tpu.memory_space<vmem>>, vector<256x256xbf16>
    %cst_41 = arith.constant dense<0.000000e+00> : vector<16x256xf32>
    %41 = tpu.matmul %39, %40, %cst_41 {dimension_numbers = #tpu.dot_dimension_numbers<[1], [0], [0], [1], [0, 0, 1, 1], [], []>} : vector<16x256xbf16>, vector<256x256xbf16>, vector<16x256xf32> -> vector<16x256xf32>
    %42 = arith.addf %37, %41 : vector<16x256xf32>
    %c0_42 = arith.constant 0 : index
    %c0_43 = arith.constant 0 : index
    %43 = vector.load %arg4[%c0_42, %c0_43] : memref<1x256xf32, #tpu.memory_space<vmem>>, vector<1x256xf32>
    %44 = vector.broadcast %43 : vector<1x256xf32> to vector<16x256xf32>
    %45 = arith.addf %42, %44 : vector<16x256xf32>
    %46 = arith.truncf %45 : vector<16x256xf32> to vector<16x256xbf16>
    %c0_44 = arith.constant 0 : index
    %c0_45 = arith.constant 0 : index
    %c0_46 = arith.constant 0 : index
    %47 = vector.load %arg5[%c0_44, %c0_45, %c0_46] : memref<1x16x256xbf16, #tpu.memory_space<vmem>>, vector<1x16x256xbf16>
    %48 = vector.shape_cast %47 : vector<1x16x256xbf16> to vector<16x256xbf16>
    %49 = vector.shape_cast %46 : vector<16x256xbf16> to vector<1x16x256xbf16>
    tpu.vector_store %arg5[%c0_44, %c0_45, %c0_46], %49 {strides = array<i32>} : memref<1x16x256xbf16, #tpu.memory_space<vmem>>, vector<1x16x256xbf16>,
    return
  }
  func.func @transform_0(%arg0: i32) -> (i32, i32, i32) {
    %c0_i32 = arith.constant 0 : i32
    %c0_i32_0 = arith.constant 0 : i32
    %c0_i32_1 = arith.constant 0 : i32
    return %arg0, %c0_i32, %c0_i32_0 : i32, i32, i32
  }
  func.func @transform_1(%arg0: i32) -> (i32, i32) {
    %c0_i32 = arith.constant 0 : i32
    %c0_i32_0 = arith.constant 0 : i32
    %c0_i32_1 = arith.constant 0 : i32
    return %c0_i32, %c0_i32_0 : i32, i32
  }
  func.func @transform_2(%arg0: i32) -> (i32, i32) {
    %c0_i32 = arith.constant 0 : i32
    %c0_i32_0 = arith.constant 0 : i32
    %c0_i32_1 = arith.constant 0 : i32
    return %c0_i32, %c0_i32_0 : i32, i32
  }
  func.func @transform_3(%arg0: i32) -> (i32, i32) {
    %c0_i32 = arith.constant 0 : i32
    %c0_i32_0 = arith.constant 0 : i32
    %c0_i32_1 = arith.constant 0 : i32
    return %c0_i32, %c0_i32_0 : i32, i32
  }
  func.func @transform_4(%arg0: i32) -> (i32, i32, i32) {
    %c0_i32 = arith.constant 0 : i32
    %c0_i32_0 = arith.constant 0 : i32
    %c0_i32_1 = arith.constant 0 : i32
    return %arg0, %c0_i32, %c0_i32_0 : i32, i32, i32
  }
}

module attributes {stable_mosaic.version = 11 : i64} {
  func.func @kernel(%arg0: i32, %arg1: memref<1x16x256xf32, #tpu.memory_space<vmem>>, %arg2: memref<768x256xbf16, #tpu.memory_space<vmem>>, %arg3: memref<1x256xf32, #tpu.memory_space<vmem>>, %arg4: memref<768x256xbf16, #tpu.memory_space<vmem>>, %arg5: memref<1x256xf32, #tpu.memory_space<vmem>>, %arg6: memref<256x4xf32, #tpu.memory_space<vmem>>, %arg7: memref<1x4xf32, #tpu.memory_space<vmem>>, %arg8: memref<4x256xf32, #tpu.memory_space<vmem>>, %arg9: memref<1x256xf32, #tpu.memory_space<vmem>>, %arg10: memref<1x16x256xbf16, #tpu.memory_space<vmem>>, %arg11: memref<25x256xf32, #tpu.memory_space<vmem>>, %arg12: memref<25x256xf32, #tpu.memory_space<vmem>>) attributes {dimension_semantics = [#tpu.dimension_semantics<parallel>], iteration_bounds = array<i64: 2>, scalar_prefetch = 0 : i64, scratch_operands = 2 : i64, tpu.core_type = #tpu.core_type<tc>, window_params = [{transform_indices = @transform_0, window_bounds = array<i64: 1, 16, 256>}, {pipeline_mode = #tpu.pipeline_mode<synchronous>, transform_indices = @transform_1, window_bounds = array<i64: 768, 256>}, {pipeline_mode = #tpu.pipeline_mode<synchronous>, transform_indices = @transform_2, window_bounds = array<i64: 1, 256>}, {pipeline_mode = #tpu.pipeline_mode<synchronous>, transform_indices = @transform_3, window_bounds = array<i64: 768, 256>}, {pipeline_mode = #tpu.pipeline_mode<synchronous>, transform_indices = @transform_4, window_bounds = array<i64: 1, 256>}, {pipeline_mode = #tpu.pipeline_mode<synchronous>, transform_indices = @transform_5, window_bounds = array<i64: 256, 4>}, {pipeline_mode = #tpu.pipeline_mode<synchronous>, transform_indices = @transform_6, window_bounds = array<i64: 1, 4>}, {pipeline_mode = #tpu.pipeline_mode<synchronous>, transform_indices = @transform_7, window_bounds = array<i64: 4, 256>}, {pipeline_mode = #tpu.pipeline_mode<synchronous>, transform_indices = @transform_8, window_bounds = array<i64: 1, 256>}, {transform_indices = @transform_9, window_bounds = array<i64: 1, 16, 256>}]} {
    %cst = arith.constant 0.000000e+00 : f32
    %0 = vector.broadcast %cst : f32 to vector<1x256xf32>
    %c7 = arith.constant 7 : index
    %c0 = arith.constant 0 : index
    %1 = vector.load %arg11[%c7, %c0] : memref<25x256xf32, #tpu.memory_space<vmem>>, vector<1x256xf32>
    tpu.vector_store %arg11[%c7, %c0], %0 {strides = array<i32>} : memref<25x256xf32, #tpu.memory_space<vmem>>, vector<1x256xf32>,
    %c24 = arith.constant 24 : index
    %c0_0 = arith.constant 0 : index
    %2 = vector.load %arg11[%c24, %c0_0] : memref<25x256xf32, #tpu.memory_space<vmem>>, vector<1x256xf32>
    tpu.vector_store %arg11[%c24, %c0_0], %0 {strides = array<i32>} : memref<25x256xf32, #tpu.memory_space<vmem>>, vector<1x256xf32>,
    %cst_1 = arith.constant 0.000000e+00 : f32
    %3 = vector.broadcast %cst_1 : f32 to vector<1x256xf32>
    %c7_2 = arith.constant 7 : index
    %c0_3 = arith.constant 0 : index
    %4 = vector.load %arg12[%c7_2, %c0_3] : memref<25x256xf32, #tpu.memory_space<vmem>>, vector<1x256xf32>
    tpu.vector_store %arg12[%c7_2, %c0_3], %3 {strides = array<i32>} : memref<25x256xf32, #tpu.memory_space<vmem>>, vector<1x256xf32>,
    %c24_4 = arith.constant 24 : index
    %c0_5 = arith.constant 0 : index
    %5 = vector.load %arg12[%c24_4, %c0_5] : memref<25x256xf32, #tpu.memory_space<vmem>>, vector<1x256xf32>
    tpu.vector_store %arg12[%c24_4, %c0_5], %3 {strides = array<i32>} : memref<25x256xf32, #tpu.memory_space<vmem>>, vector<1x256xf32>,
    %c0_6 = arith.constant 0 : index
    %c0_7 = arith.constant 0 : index
    %c0_8 = arith.constant 0 : index
    %6 = vector.load %arg1[%c0_6, %c0_7, %c0_8] : memref<1x16x256xf32, #tpu.memory_space<vmem>>, vector<1x16x256xf32>
    %7 = vector.shape_cast %6 : vector<1x16x256xf32> to vector<16x256xf32>
    %c8 = arith.constant 8 : index
    %c0_9 = arith.constant 0 : index
    %8 = vector.load %arg11[%c8, %c0_9] : memref<25x256xf32, #tpu.memory_space<vmem>>, vector<16x256xf32>
    tpu.vector_store %arg11[%c8, %c0_9], %7 {strides = array<i32>} : memref<25x256xf32, #tpu.memory_space<vmem>>, vector<16x256xf32>,
    %c7_10 = arith.constant 7 : index
    %c0_11 = arith.constant 0 : index
    %9 = vector.load %arg11[%c7_10, %c0_11] : memref<25x256xf32, #tpu.memory_space<vmem>>, vector<16x256xf32>
    %10 = arith.truncf %9 : vector<16x256xf32> to vector<16x256xbf16>
    %c0_12 = arith.constant 0 : index
    %c0_13 = arith.constant 0 : index
    %11 = vector.load %arg2[%c0_12, %c0_13] : memref<768x256xbf16, #tpu.memory_space<vmem>>, vector<256x256xbf16>
    %cst_14 = arith.constant dense<0.000000e+00> : vector<16x256xf32>
    %12 = tpu.matmul %10, %11, %cst_14 {dimension_numbers = #tpu.dot_dimension_numbers<[1], [0], [0], [1], [0, 0, 1, 1], [], []>} : vector<16x256xbf16>, vector<256x256xbf16>, vector<16x256xf32> -> vector<16x256xf32>
    %c8_15 = arith.constant 8 : index
    %c0_16 = arith.constant 0 : index
    %13 = vector.load %arg11[%c8_15, %c0_16] : memref<25x256xf32, #tpu.memory_space<vmem>>, vector<16x256xf32>
    %14 = arith.truncf %13 : vector<16x256xf32> to vector<16x256xbf16>
    %c256 = arith.constant 256 : index
    %c0_17 = arith.constant 0 : index
    %15 = vector.load %arg2[%c256, %c0_17] : memref<768x256xbf16, #tpu.memory_space<vmem>>, vector<256x256xbf16>
    %cst_18 = arith.constant dense<0.000000e+00> : vector<16x256xf32>
    %16 = tpu.matmul %14, %15, %cst_18 {dimension_numbers = #tpu.dot_dimension_numbers<[1], [0], [0], [1], [0, 0, 1, 1], [], []>} : vector<16x256xbf16>, vector<256x256xbf16>, vector<16x256xf32> -> vector<16x256xf32>
    %17 = arith.addf %12, %16 : vector<16x256xf32>
    %c9 = arith.constant 9 : index
    %c0_19 = arith.constant 0 : index
    %18 = vector.load %arg11[%c9, %c0_19] : memref<25x256xf32, #tpu.memory_space<vmem>>, vector<16x256xf32>
    %19 = arith.truncf %18 : vector<16x256xf32> to vector<16x256xbf16>
    %c512 = arith.constant 512 : index
    %c0_20 = arith.constant 0 : index
    %20 = vector.load %arg2[%c512, %c0_20] : memref<768x256xbf16, #tpu.memory_space<vmem>>, vector<256x256xbf16>
    %cst_21 = arith.constant dense<0.000000e+00> : vector<16x256xf32>
    %21 = tpu.matmul %19, %20, %cst_21 {dimension_numbers = #tpu.dot_dimension_numbers<[1], [0], [0], [1], [0, 0, 1, 1], [], []>} : vector<16x256xbf16>, vector<256x256xbf16>, vector<16x256xf32> -> vector<16x256xf32>
    %22 = arith.addf %17, %21 : vector<16x256xf32>
    %c0_22 = arith.constant 0 : index
    %c0_23 = arith.constant 0 : index
    %23 = vector.load %arg3[%c0_22, %c0_23] : memref<1x256xf32, #tpu.memory_space<vmem>>, vector<1x256xf32>
    %24 = vector.broadcast %23 : vector<1x256xf32> to vector<16x256xf32>
    %25 = arith.addf %22, %24 : vector<16x256xf32>
    %cst_24 = arith.constant 0.000000e+00 : f32
    %26 = vector.broadcast %cst_24 : f32 to vector<16x256xf32>
    %27 = arith.maximumf %25, %26 : vector<16x256xf32>
    %c8_25 = arith.constant 8 : index
    %c0_26 = arith.constant 0 : index
    %28 = vector.load %arg12[%c8_25, %c0_26] : memref<25x256xf32, #tpu.memory_space<vmem>>, vector<16x256xf32>
    tpu.vector_store %arg12[%c8_25, %c0_26], %27 {strides = array<i32>} : memref<25x256xf32, #tpu.memory_space<vmem>>, vector<16x256xf32>,
    %c7_27 = arith.constant 7 : index
    %c0_28 = arith.constant 0 : index
    %29 = vector.load %arg12[%c7_27, %c0_28] : memref<25x256xf32, #tpu.memory_space<vmem>>, vector<16x256xf32>
    %30 = arith.truncf %29 : vector<16x256xf32> to vector<16x256xbf16>
    %c0_29 = arith.constant 0 : index
    %c0_30 = arith.constant 0 : index
    %31 = vector.load %arg4[%c0_29, %c0_30] : memref<768x256xbf16, #tpu.memory_space<vmem>>, vector<256x256xbf16>
    %cst_31 = arith.constant dense<0.000000e+00> : vector<16x256xf32>
    %32 = tpu.matmul %30, %31, %cst_31 {dimension_numbers = #tpu.dot_dimension_numbers<[1], [0], [0], [1], [0, 0, 1, 1], [], []>} : vector<16x256xbf16>, vector<256x256xbf16>, vector<16x256xf32> -> vector<16x256xf32>
    %c8_32 = arith.constant 8 : index
    %c0_33 = arith.constant 0 : index
    %33 = vector.load %arg12[%c8_32, %c0_33] : memref<25x256xf32, #tpu.memory_space<vmem>>, vector<16x256xf32>
    %34 = arith.truncf %33 : vector<16x256xf32> to vector<16x256xbf16>
    %c256_34 = arith.constant 256 : index
    %c0_35 = arith.constant 0 : index
    %35 = vector.load %arg4[%c256_34, %c0_35] : memref<768x256xbf16, #tpu.memory_space<vmem>>, vector<256x256xbf16>
    %cst_36 = arith.constant dense<0.000000e+00> : vector<16x256xf32>
    %36 = tpu.matmul %34, %35, %cst_36 {dimension_numbers = #tpu.dot_dimension_numbers<[1], [0], [0], [1], [0, 0, 1, 1], [], []>} : vector<16x256xbf16>, vector<256x256xbf16>, vector<16x256xf32> -> vector<16x256xf32>
    %37 = arith.addf %32, %36 : vector<16x256xf32>
    %c9_37 = arith.constant 9 : index
    %c0_38 = arith.constant 0 : index
    %38 = vector.load %arg12[%c9_37, %c0_38] : memref<25x256xf32, #tpu.memory_space<vmem>>, vector<16x256xf32>
    %39 = arith.truncf %38 : vector<16x256xf32> to vector<16x256xbf16>
    %c512_39 = arith.constant 512 : index
    %c0_40 = arith.constant 0 : index
    %40 = vector.load %arg4[%c512_39, %c0_40] : memref<768x256xbf16, #tpu.memory_space<vmem>>, vector<256x256xbf16>
    %cst_41 = arith.constant dense<0.000000e+00> : vector<16x256xf32>
    %41 = tpu.matmul %39, %40, %cst_41 {dimension_numbers = #tpu.dot_dimension_numbers<[1], [0], [0], [1], [0, 0, 1, 1], [], []>} : vector<16x256xbf16>, vector<256x256xbf16>, vector<16x256xf32> -> vector<16x256xf32>
    %42 = arith.addf %37, %41 : vector<16x256xf32>
    %c0_42 = arith.constant 0 : index
    %c0_43 = arith.constant 0 : index
    %43 = vector.load %arg5[%c0_42, %c0_43] : memref<1x256xf32, #tpu.memory_space<vmem>>, vector<1x256xf32>
    %44 = vector.broadcast %43 : vector<1x256xf32> to vector<16x256xf32>
    %45 = arith.addf %42, %44 : vector<16x256xf32>
    %cst_44 = arith.constant dense<0.000000e+00> : vector<256xf32>
    %46 = vector.multi_reduction <add>, %45, %cst_44 [0] : vector<16x256xf32> to vector<256xf32>
    %47 = vector.shape_cast %46 : vector<256xf32> to vector<1x256xf32>
    %cst_45 = arith.constant 1.600000e+01 : f32
    %48 = vector.broadcast %cst_45 : f32 to vector<1x256xf32>
    %49 = arith.divf %47, %48 : vector<1x256xf32>
    %c0_46 = arith.constant 0 : index
    %c0_47 = arith.constant 0 : index
    %50 = vector.load %arg6[%c0_46, %c0_47] : memref<256x4xf32, #tpu.memory_space<vmem>>, vector<256x4xf32>
    %cst_48 = arith.constant dense<0.000000e+00> : vector<1x4xf32>
    %51 = tpu.matmul %49, %50, %cst_48 {dimension_numbers = #tpu.dot_dimension_numbers<[1], [0], [0], [1], [0, 0, 1, 1], [], []>} : vector<1x256xf32>, vector<256x4xf32>, vector<1x4xf32> -> vector<1x4xf32>
    %c0_49 = arith.constant 0 : index
    %c0_50 = arith.constant 0 : index
    %52 = vector.load %arg7[%c0_49, %c0_50] : memref<1x4xf32, #tpu.memory_space<vmem>>, vector<1x4xf32>
    %53 = arith.addf %51, %52 : vector<1x4xf32>
    %cst_51 = arith.constant 0.000000e+00 : f32
    %54 = vector.broadcast %cst_51 : f32 to vector<1x4xf32>
    %55 = arith.maximumf %53, %54 : vector<1x4xf32>
    %c0_52 = arith.constant 0 : index
    %c0_53 = arith.constant 0 : index
    %56 = vector.load %arg8[%c0_52, %c0_53] : memref<4x256xf32, #tpu.memory_space<vmem>>, vector<4x256xf32>
    %cst_54 = arith.constant dense<0.000000e+00> : vector<1x256xf32>
    %57 = tpu.matmul %55, %56, %cst_54 {dimension_numbers = #tpu.dot_dimension_numbers<[1], [0], [0], [1], [0, 0, 1, 1], [], []>} : vector<1x4xf32>, vector<4x256xf32>, vector<1x256xf32> -> vector<1x256xf32>
    %c0_55 = arith.constant 0 : index
    %c0_56 = arith.constant 0 : index
    %58 = vector.load %arg9[%c0_55, %c0_56] : memref<1x256xf32, #tpu.memory_space<vmem>>, vector<1x256xf32>
    %59 = arith.addf %57, %58 : vector<1x256xf32>
    %60 = arith.negf %59 : vector<1x256xf32>
    %61 = math.exp %60 : vector<1x256xf32>
    %cst_57 = arith.constant 1.000000e+00 : f32
    %62 = vector.broadcast %cst_57 : f32 to vector<1x256xf32>
    %63 = arith.addf %62, %61 : vector<1x256xf32>
    %64 = arith.divf %62, %63 : vector<1x256xf32>
    %65 = vector.broadcast %64 : vector<1x256xf32> to vector<16x256xf32>
    %66 = arith.mulf %45, %65 : vector<16x256xf32>
    %c0_58 = arith.constant 0 : index
    %c0_59 = arith.constant 0 : index
    %c0_60 = arith.constant 0 : index
    %67 = vector.load %arg1[%c0_58, %c0_59, %c0_60] : memref<1x16x256xf32, #tpu.memory_space<vmem>>, vector<1x16x256xf32>
    %68 = vector.shape_cast %67 : vector<1x16x256xf32> to vector<16x256xf32>
    %69 = arith.addf %66, %68 : vector<16x256xf32>
    %70 = arith.truncf %69 : vector<16x256xf32> to vector<16x256xbf16>
    %c0_61 = arith.constant 0 : index
    %c0_62 = arith.constant 0 : index
    %c0_63 = arith.constant 0 : index
    %71 = vector.load %arg10[%c0_61, %c0_62, %c0_63] : memref<1x16x256xbf16, #tpu.memory_space<vmem>>, vector<1x16x256xbf16>
    %72 = vector.shape_cast %71 : vector<1x16x256xbf16> to vector<16x256xbf16>
    %73 = vector.shape_cast %70 : vector<16x256xbf16> to vector<1x16x256xbf16>
    tpu.vector_store %arg10[%c0_61, %c0_62, %c0_63], %73 {strides = array<i32>} : memref<1x16x256xbf16, #tpu.memory_space<vmem>>, vector<1x16x256xbf16>,
    return
  }
  func.func @transform_0(%arg0: i32) -> (i32, i32, i32) {
    %c0_i32 = arith.constant 0 : i32
    %c0_i32_0 = arith.constant 0 : i32
    %c0_i32_1 = arith.constant 0 : i32
    return %arg0, %c0_i32, %c0_i32_0 : i32, i32, i32
  }
  func.func @transform_1(%arg0: i32) -> (i32, i32) {
    %c0_i32 = arith.constant 0 : i32
    %c0_i32_0 = arith.constant 0 : i32
    %c0_i32_1 = arith.constant 0 : i32
    return %c0_i32, %c0_i32_0 : i32, i32
  }
  func.func @transform_2(%arg0: i32) -> (i32, i32) {
    %c0_i32 = arith.constant 0 : i32
    %c0_i32_0 = arith.constant 0 : i32
    %c0_i32_1 = arith.constant 0 : i32
    return %c0_i32, %c0_i32_0 : i32, i32
  }
  func.func @transform_3(%arg0: i32) -> (i32, i32) {
    %c0_i32 = arith.constant 0 : i32
    %c0_i32_0 = arith.constant 0 : i32
    %c0_i32_1 = arith.constant 0 : i32
    return %c0_i32, %c0_i32_0 : i32, i32
  }
  func.func @transform_4(%arg0: i32) -> (i32, i32) {
    %c0_i32 = arith.constant 0 : i32
    %c0_i32_0 = arith.constant 0 : i32
    %c0_i32_1 = arith.constant 0 : i32
    return %c0_i32, %c0_i32_0 : i32, i32
  }
  func.func @transform_5(%arg0: i32) -> (i32, i32) {
    %c0_i32 = arith.constant 0 : i32
    %c0_i32_0 = arith.constant 0 : i32
    %c0_i32_1 = arith.constant 0 : i32
    return %c0_i32, %c0_i32_0 : i32, i32
  }
  func.func @transform_6(%arg0: i32) -> (i32, i32) {
    %c0_i32 = arith.constant 0 : i32
    %c0_i32_0 = arith.constant 0 : i32
    %c0_i32_1 = arith.constant 0 : i32
    return %c0_i32, %c0_i32_0 : i32, i32
  }
  func.func @transform_7(%arg0: i32) -> (i32, i32) {
    %c0_i32 = arith.constant 0 : i32
    %c0_i32_0 = arith.constant 0 : i32
    %c0_i32_1 = arith.constant 0 : i32
    return %c0_i32, %c0_i32_0 : i32, i32
  }
  func.func @transform_8(%arg0: i32) -> (i32, i32) {
    %c0_i32 = arith.constant 0 : i32
    %c0_i32_0 = arith.constant 0 : i32
    %c0_i32_1 = arith.constant 0 : i32
    return %c0_i32, %c0_i32_0 : i32, i32
  }
  func.func @transform_9(%arg0: i32) -> (i32, i32, i32) {
    %c0_i32 = arith.constant 0 : i32
    %c0_i32_0 = arith.constant 0 : i32
    %c0_i32_1 = arith.constant 0 : i32
    return %arg0, %c0_i32, %c0_i32_0 : i32, i32, i32
  }
}

module attributes {stable_mosaic.version = 11 : i64} {
  func.func @kernel(%arg0: i32, %arg1: memref<1x16x256xf32, #tpu.memory_space<vmem>>, %arg2: memref<1x16x256xbf16, #tpu.memory_space<vmem>>, %arg3: memref<1x16x256xf32, #tpu.memory_space<vmem>>, %arg4: memref<256x64xbf16, #tpu.memory_space<vmem>>, %arg5: memref<1x64xf32, #tpu.memory_space<vmem>>, %arg6: memref<256x64xbf16, #tpu.memory_space<vmem>>, %arg7: memref<1x64xf32, #tpu.memory_space<vmem>>, %arg8: memref<64x256xbf16, #tpu.memory_space<vmem>>, %arg9: memref<1x256xf32, #tpu.memory_space<vmem>>, %arg10: memref<1536x256xbf16, #tpu.memory_space<vmem>>, %arg11: memref<1x256xf32, #tpu.memory_space<vmem>>, %arg12: memref<1x16x256xf32, #tpu.memory_space<vmem>>, %arg13: memref<25x256xf32, #tpu.memory_space<vmem>>, %arg14: memref<25x256xf32, #tpu.memory_space<vmem>>) attributes {dimension_semantics = [#tpu.dimension_semantics<parallel>], iteration_bounds = array<i64: 2>, scalar_prefetch = 0 : i64, scratch_operands = 2 : i64, tpu.core_type = #tpu.core_type<tc>, window_params = [{transform_indices = @transform_0, window_bounds = array<i64: 1, 16, 256>}, {transform_indices = @transform_1, window_bounds = array<i64: 1, 16, 256>}, {transform_indices = @transform_2, window_bounds = array<i64: 1, 16, 256>}, {pipeline_mode = #tpu.pipeline_mode<synchronous>, transform_indices = @transform_3, window_bounds = array<i64: 256, 64>}, {pipeline_mode = #tpu.pipeline_mode<synchronous>, transform_indices = @transform_4, window_bounds = array<i64: 1, 64>}, {pipeline_mode = #tpu.pipeline_mode<synchronous>, transform_indices = @transform_5, window_bounds = array<i64: 256, 64>}, {pipeline_mode = #tpu.pipeline_mode<synchronous>, transform_indices = @transform_6, window_bounds = array<i64: 1, 64>}, {pipeline_mode = #tpu.pipeline_mode<synchronous>, transform_indices = @transform_7, window_bounds = array<i64: 64, 256>}, {pipeline_mode = #tpu.pipeline_mode<synchronous>, transform_indices = @transform_8, window_bounds = array<i64: 1, 256>}, {pipeline_mode = #tpu.pipeline_mode<synchronous>, transform_indices = @transform_9, window_bounds = array<i64: 1536, 256>}, {pipeline_mode = #tpu.pipeline_mode<synchronous>, transform_indices = @transform_10, window_bounds = array<i64: 1, 256>}, {transform_indices = @transform_11, window_bounds = array<i64: 1, 16, 256>}]} {
    %cst = arith.constant 0.000000e+00 : f32
    %0 = vector.broadcast %cst : f32 to vector<1x256xf32>
    %c7 = arith.constant 7 : index
    %c0 = arith.constant 0 : index
    %1 = vector.load %arg13[%c7, %c0] : memref<25x256xf32, #tpu.memory_space<vmem>>, vector<1x256xf32>
    tpu.vector_store %arg13[%c7, %c0], %0 {strides = array<i32>} : memref<25x256xf32, #tpu.memory_space<vmem>>, vector<1x256xf32>,
    %c24 = arith.constant 24 : index
    %c0_0 = arith.constant 0 : index
    %2 = vector.load %arg13[%c24, %c0_0] : memref<25x256xf32, #tpu.memory_space<vmem>>, vector<1x256xf32>
    tpu.vector_store %arg13[%c24, %c0_0], %0 {strides = array<i32>} : memref<25x256xf32, #tpu.memory_space<vmem>>, vector<1x256xf32>,
    %cst_1 = arith.constant 0.000000e+00 : f32
    %3 = vector.broadcast %cst_1 : f32 to vector<1x256xf32>
    %c7_2 = arith.constant 7 : index
    %c0_3 = arith.constant 0 : index
    %4 = vector.load %arg14[%c7_2, %c0_3] : memref<25x256xf32, #tpu.memory_space<vmem>>, vector<1x256xf32>
    tpu.vector_store %arg14[%c7_2, %c0_3], %3 {strides = array<i32>} : memref<25x256xf32, #tpu.memory_space<vmem>>, vector<1x256xf32>,
    %c24_4 = arith.constant 24 : index
    %c0_5 = arith.constant 0 : index
    %5 = vector.load %arg14[%c24_4, %c0_5] : memref<25x256xf32, #tpu.memory_space<vmem>>, vector<1x256xf32>
    tpu.vector_store %arg14[%c24_4, %c0_5], %3 {strides = array<i32>} : memref<25x256xf32, #tpu.memory_space<vmem>>, vector<1x256xf32>,
    %c0_6 = arith.constant 0 : index
    %c0_7 = arith.constant 0 : index
    %c0_8 = arith.constant 0 : index
    %6 = vector.load %arg1[%c0_6, %c0_7, %c0_8] : memref<1x16x256xf32, #tpu.memory_space<vmem>>, vector<1x16x256xf32>
    %7 = vector.shape_cast %6 : vector<1x16x256xf32> to vector<16x256xf32>
    %8 = arith.truncf %7 : vector<16x256xf32> to vector<16x256xbf16>
    %c0_9 = arith.constant 0 : index
    %c0_10 = arith.constant 0 : index
    %c0_11 = arith.constant 0 : index
    %9 = vector.load %arg2[%c0_9, %c0_10, %c0_11] : memref<1x16x256xbf16, #tpu.memory_space<vmem>>, vector<1x16x256xbf16>
    %10 = vector.shape_cast %9 : vector<1x16x256xbf16> to vector<16x256xbf16>
    %c0_12 = arith.constant 0 : index
    %c0_13 = arith.constant 0 : index
    %c0_14 = arith.constant 0 : index
    %11 = vector.load %arg3[%c0_12, %c0_13, %c0_14] : memref<1x16x256xf32, #tpu.memory_space<vmem>>, vector<1x16x256xf32>
    %12 = vector.shape_cast %11 : vector<1x16x256xf32> to vector<16x256xf32>
    %c0_15 = arith.constant 0 : index
    %c0_16 = arith.constant 0 : index
    %13 = vector.load %arg4[%c0_15, %c0_16] : memref<256x64xbf16, #tpu.memory_space<vmem>>, vector<256x64xbf16>
    %cst_17 = arith.constant dense<0.000000e+00> : vector<16x64xf32>
    %14 = tpu.matmul %8, %13, %cst_17 {dimension_numbers = #tpu.dot_dimension_numbers<[1], [0], [0], [1], [0, 0, 1, 1], [], []>} : vector<16x256xbf16>, vector<256x64xbf16>, vector<16x64xf32> -> vector<16x64xf32>
    %c0_18 = arith.constant 0 : index
    %c0_19 = arith.constant 0 : index
    %15 = vector.load %arg5[%c0_18, %c0_19] : memref<1x64xf32, #tpu.memory_space<vmem>>, vector<1x64xf32>
    %16 = vector.broadcast %15 : vector<1x64xf32> to vector<16x64xf32>
    %17 = arith.addf %14, %16 : vector<16x64xf32>
    %18 = arith.negf %17 : vector<16x64xf32>
    %19 = math.exp %18 : vector<16x64xf32>
    %cst_20 = arith.constant 1.000000e+00 : f32
    %20 = vector.broadcast %cst_20 : f32 to vector<16x64xf32>
    %21 = arith.addf %20, %19 : vector<16x64xf32>
    %22 = arith.divf %20, %21 : vector<16x64xf32>
    %c0_21 = arith.constant 0 : index
    %c0_22 = arith.constant 0 : index
    %23 = vector.load %arg6[%c0_21, %c0_22] : memref<256x64xbf16, #tpu.memory_space<vmem>>, vector<256x64xbf16>
    %cst_23 = arith.constant dense<0.000000e+00> : vector<16x64xf32>
    %24 = tpu.matmul %10, %23, %cst_23 {dimension_numbers = #tpu.dot_dimension_numbers<[1], [0], [0], [1], [0, 0, 1, 1], [], []>} : vector<16x256xbf16>, vector<256x64xbf16>, vector<16x64xf32> -> vector<16x64xf32>
    %c0_24 = arith.constant 0 : index
    %c0_25 = arith.constant 0 : index
    %25 = vector.load %arg7[%c0_24, %c0_25] : memref<1x64xf32, #tpu.memory_space<vmem>>, vector<1x64xf32>
    %26 = vector.broadcast %25 : vector<1x64xf32> to vector<16x64xf32>
    %27 = arith.addf %24, %26 : vector<16x64xf32>
    %28 = arith.mulf %27, %22 : vector<16x64xf32>
    %29 = arith.truncf %28 : vector<16x64xf32> to vector<16x64xbf16>
    %c0_26 = arith.constant 0 : index
    %c0_27 = arith.constant 0 : index
    %30 = vector.load %arg8[%c0_26, %c0_27] : memref<64x256xbf16, #tpu.memory_space<vmem>>, vector<64x256xbf16>
    %cst_28 = arith.constant dense<0.000000e+00> : vector<16x256xf32>
    %31 = tpu.matmul %29, %30, %cst_28 {dimension_numbers = #tpu.dot_dimension_numbers<[1], [0], [0], [1], [0, 0, 1, 1], [], []>} : vector<16x64xbf16>, vector<64x256xbf16>, vector<16x256xf32> -> vector<16x256xf32>
    %c0_29 = arith.constant 0 : index
    %c0_30 = arith.constant 0 : index
    %32 = vector.load %arg9[%c0_29, %c0_30] : memref<1x256xf32, #tpu.memory_space<vmem>>, vector<1x256xf32>
    %33 = vector.broadcast %32 : vector<1x256xf32> to vector<16x256xf32>
    %34 = arith.addf %31, %33 : vector<16x256xf32>
    %35 = arith.extf %10 : vector<16x256xbf16> to vector<16x256xf32>
    %36 = arith.addf %34, %35 : vector<16x256xf32>
    %c8 = arith.constant 8 : index
    %c0_31 = arith.constant 0 : index
    %37 = vector.load %arg13[%c8, %c0_31] : memref<25x256xf32, #tpu.memory_space<vmem>>, vector<16x256xf32>
    tpu.vector_store %arg13[%c8, %c0_31], %36 {strides = array<i32>} : memref<25x256xf32, #tpu.memory_space<vmem>>, vector<16x256xf32>,
    %c8_32 = arith.constant 8 : index
    %c0_33 = arith.constant 0 : index
    %38 = vector.load %arg14[%c8_32, %c0_33] : memref<25x256xf32, #tpu.memory_space<vmem>>, vector<16x256xf32>
    tpu.vector_store %arg14[%c8_32, %c0_33], %12 {strides = array<i32>} : memref<25x256xf32, #tpu.memory_space<vmem>>, vector<16x256xf32>,
    %c7_34 = arith.constant 7 : index
    %c0_35 = arith.constant 0 : index
    %39 = vector.load %arg13[%c7_34, %c0_35] : memref<25x256xf32, #tpu.memory_space<vmem>>, vector<16x256xf32>
    %40 = arith.truncf %39 : vector<16x256xf32> to vector<16x256xbf16>
    %c0_36 = arith.constant 0 : index
    %c0_37 = arith.constant 0 : index
    %41 = vector.load %arg10[%c0_36, %c0_37] : memref<1536x256xbf16, #tpu.memory_space<vmem>>, vector<256x256xbf16>
    %cst_38 = arith.constant dense<0.000000e+00> : vector<16x256xf32>
    %42 = tpu.matmul %40, %41, %cst_38 {dimension_numbers = #tpu.dot_dimension_numbers<[1], [0], [0], [1], [0, 0, 1, 1], [], []>} : vector<16x256xbf16>, vector<256x256xbf16>, vector<16x256xf32> -> vector<16x256xf32>
    %c7_39 = arith.constant 7 : index
    %c0_40 = arith.constant 0 : index
    %43 = vector.load %arg14[%c7_39, %c0_40] : memref<25x256xf32, #tpu.memory_space<vmem>>, vector<16x256xf32>
    %44 = arith.truncf %43 : vector<16x256xf32> to vector<16x256xbf16>
    %c256 = arith.constant 256 : index
    %c0_41 = arith.constant 0 : index
    %45 = vector.load %arg10[%c256, %c0_41] : memref<1536x256xbf16, #tpu.memory_space<vmem>>, vector<256x256xbf16>
    %cst_42 = arith.constant dense<0.000000e+00> : vector<16x256xf32>
    %46 = tpu.matmul %44, %45, %cst_42 {dimension_numbers = #tpu.dot_dimension_numbers<[1], [0], [0], [1], [0, 0, 1, 1], [], []>} : vector<16x256xbf16>, vector<256x256xbf16>, vector<16x256xf32> -> vector<16x256xf32>
    %47 = arith.addf %42, %46 : vector<16x256xf32>
    %c8_43 = arith.constant 8 : index
    %c0_44 = arith.constant 0 : index
    %48 = vector.load %arg13[%c8_43, %c0_44] : memref<25x256xf32, #tpu.memory_space<vmem>>, vector<16x256xf32>
    %49 = arith.truncf %48 : vector<16x256xf32> to vector<16x256xbf16>
    %c512 = arith.constant 512 : index
    %c0_45 = arith.constant 0 : index
    %50 = vector.load %arg10[%c512, %c0_45] : memref<1536x256xbf16, #tpu.memory_space<vmem>>, vector<256x256xbf16>
    %cst_46 = arith.constant dense<0.000000e+00> : vector<16x256xf32>
    %51 = tpu.matmul %49, %50, %cst_46 {dimension_numbers = #tpu.dot_dimension_numbers<[1], [0], [0], [1], [0, 0, 1, 1], [], []>} : vector<16x256xbf16>, vector<256x256xbf16>, vector<16x256xf32> -> vector<16x256xf32>
    %52 = arith.addf %47, %51 : vector<16x256xf32>
    %c8_47 = arith.constant 8 : index
    %c0_48 = arith.constant 0 : index
    %53 = vector.load %arg14[%c8_47, %c0_48] : memref<25x256xf32, #tpu.memory_space<vmem>>, vector<16x256xf32>
    %54 = arith.truncf %53 : vector<16x256xf32> to vector<16x256xbf16>
    %c768 = arith.constant 768 : index
    %c0_49 = arith.constant 0 : index
    %55 = vector.load %arg10[%c768, %c0_49] : memref<1536x256xbf16, #tpu.memory_space<vmem>>, vector<256x256xbf16>
    %cst_50 = arith.constant dense<0.000000e+00> : vector<16x256xf32>
    %56 = tpu.matmul %54, %55, %cst_50 {dimension_numbers = #tpu.dot_dimension_numbers<[1], [0], [0], [1], [0, 0, 1, 1], [], []>} : vector<16x256xbf16>, vector<256x256xbf16>, vector<16x256xf32> -> vector<16x256xf32>
    %57 = arith.addf %52, %56 : vector<16x256xf32>
    %c9 = arith.constant 9 : index
    %c0_51 = arith.constant 0 : index
    %58 = vector.load %arg13[%c9, %c0_51] : memref<25x256xf32, #tpu.memory_space<vmem>>, vector<16x256xf32>
    %59 = arith.truncf %58 : vector<16x256xf32> to vector<16x256xbf16>
    %c1024 = arith.constant 1024 : index
    %c0_52 = arith.constant 0 : index
    %60 = vector.load %arg10[%c1024, %c0_52] : memref<1536x256xbf16, #tpu.memory_space<vmem>>, vector<256x256xbf16>
    %cst_53 = arith.constant dense<0.000000e+00> : vector<16x256xf32>
    %61 = tpu.matmul %59, %60, %cst_53 {dimension_numbers = #tpu.dot_dimension_numbers<[1], [0], [0], [1], [0, 0, 1, 1], [], []>} : vector<16x256xbf16>, vector<256x256xbf16>, vector<16x256xf32> -> vector<16x256xf32>
    %62 = arith.addf %57, %61 : vector<16x256xf32>
    %c9_54 = arith.constant 9 : index
    %c0_55 = arith.constant 0 : index
    %63 = vector.load %arg14[%c9_54, %c0_55] : memref<25x256xf32, #tpu.memory_space<vmem>>, vector<16x256xf32>
    %64 = arith.truncf %63 : vector<16x256xf32> to vector<16x256xbf16>
    %c1280 = arith.constant 1280 : index
    %c0_56 = arith.constant 0 : index
    %65 = vector.load %arg10[%c1280, %c0_56] : memref<1536x256xbf16, #tpu.memory_space<vmem>>, vector<256x256xbf16>
    %cst_57 = arith.constant dense<0.000000e+00> : vector<16x256xf32>
    %66 = tpu.matmul %64, %65, %cst_57 {dimension_numbers = #tpu.dot_dimension_numbers<[1], [0], [0], [1], [0, 0, 1, 1], [], []>} : vector<16x256xbf16>, vector<256x256xbf16>, vector<16x256xf32> -> vector<16x256xf32>
    %67 = arith.addf %62, %66 : vector<16x256xf32>
    %c0_58 = arith.constant 0 : index
    %c0_59 = arith.constant 0 : index
    %68 = vector.load %arg11[%c0_58, %c0_59] : memref<1x256xf32, #tpu.memory_space<vmem>>, vector<1x256xf32>
    %69 = vector.broadcast %68 : vector<1x256xf32> to vector<16x256xf32>
    %70 = arith.addf %67, %69 : vector<16x256xf32>
    %71 = arith.addf %70, %12 : vector<16x256xf32>
    %c0_60 = arith.constant 0 : index
    %c0_61 = arith.constant 0 : index
    %c0_62 = arith.constant 0 : index
    %72 = vector.load %arg12[%c0_60, %c0_61, %c0_62] : memref<1x16x256xf32, #tpu.memory_space<vmem>>, vector<1x16x256xf32>
    %73 = vector.shape_cast %72 : vector<1x16x256xf32> to vector<16x256xf32>
    %74 = vector.shape_cast %71 : vector<16x256xf32> to vector<1x16x256xf32>
    tpu.vector_store %arg12[%c0_60, %c0_61, %c0_62], %74 {strides = array<i32>} : memref<1x16x256xf32, #tpu.memory_space<vmem>>, vector<1x16x256xf32>,
    return
  }
  func.func @transform_0(%arg0: i32) -> (i32, i32, i32) {
    %c0_i32 = arith.constant 0 : i32
    %c0_i32_0 = arith.constant 0 : i32
    %c0_i32_1 = arith.constant 0 : i32
    return %arg0, %c0_i32, %c0_i32_0 : i32, i32, i32
  }
  func.func @transform_1(%arg0: i32) -> (i32, i32, i32) {
    %c0_i32 = arith.constant 0 : i32
    %c0_i32_0 = arith.constant 0 : i32
    %c0_i32_1 = arith.constant 0 : i32
    return %arg0, %c0_i32, %c0_i32_0 : i32, i32, i32
  }
  func.func @transform_2(%arg0: i32) -> (i32, i32, i32) {
    %c0_i32 = arith.constant 0 : i32
    %c0_i32_0 = arith.constant 0 : i32
    %c0_i32_1 = arith.constant 0 : i32
    return %arg0, %c0_i32, %c0_i32_0 : i32, i32, i32
  }
  func.func @transform_3(%arg0: i32) -> (i32, i32) {
    %c0_i32 = arith.constant 0 : i32
    %c0_i32_0 = arith.constant 0 : i32
    %c0_i32_1 = arith.constant 0 : i32
    return %c0_i32, %c0_i32_0 : i32, i32
  }
  func.func @transform_4(%arg0: i32) -> (i32, i32) {
    %c0_i32 = arith.constant 0 : i32
    %c0_i32_0 = arith.constant 0 : i32
    %c0_i32_1 = arith.constant 0 : i32
    return %c0_i32, %c0_i32_0 : i32, i32
  }
  func.func @transform_5(%arg0: i32) -> (i32, i32) {
    %c0_i32 = arith.constant 0 : i32
    %c0_i32_0 = arith.constant 0 : i32
    %c0_i32_1 = arith.constant 0 : i32
    return %c0_i32, %c0_i32_0 : i32, i32
  }
  func.func @transform_6(%arg0: i32) -> (i32, i32) {
    %c0_i32 = arith.constant 0 : i32
    %c0_i32_0 = arith.constant 0 : i32
    %c0_i32_1 = arith.constant 0 : i32
    return %c0_i32, %c0_i32_0 : i32, i32
  }
  func.func @transform_7(%arg0: i32) -> (i32, i32) {
    %c0_i32 = arith.constant 0 : i32
    %c0_i32_0 = arith.constant 0 : i32
    %c0_i32_1 = arith.constant 0 : i32
    return %c0_i32, %c0_i32_0 : i32, i32
  }
  func.func @transform_8(%arg0: i32) -> (i32, i32) {
    %c0_i32 = arith.constant 0 : i32
    %c0_i32_0 = arith.constant 0 : i32
    %c0_i32_1 = arith.constant 0 : i32
    return %c0_i32, %c0_i32_0 : i32, i32
  }
  func.func @transform_9(%arg0: i32) -> (i32, i32) {
    %c0_i32 = arith.constant 0 : i32
    %c0_i32_0 = arith.constant 0 : i32
    %c0_i32_1 = arith.constant 0 : i32
    return %c0_i32, %c0_i32_0 : i32, i32
  }
  func.func @transform_10(%arg0: i32) -> (i32, i32) {
    %c0_i32 = arith.constant 0 : i32
    %c0_i32_0 = arith.constant 0 : i32
    %c0_i32_1 = arith.constant 0 : i32
    return %c0_i32, %c0_i32_0 : i32, i32
  }
  func.func @transform_11(%arg0: i32) -> (i32, i32, i32) {
    %c0_i32 = arith.constant 0 : i32
    %c0_i32_0 = arith.constant 0 : i32
    %c0_i32_1 = arith.constant 0 : i32
    return %arg0, %c0_i32, %c0_i32_0 : i32, i32, i32
  }
}

</mosaic_0001>

<llo_original>
// kernel: doft_forward.4
$region0: #{doft_forward.4}
  #allocation0 [shape = 'u32[]', space=smem, size = 0x4, offset = 0x4, fixed_abs, tag = 'smem constant byte address 0x4 - core index']
  #allocation1 [shape = 'u32[72,128]{1,0:T(1,128)}', space=vmem, size = 0x9000, scoped, tag = 'internal scratch']
  #allocation2 [shape = 'f32[25,256]{1,0:T(8,128)}', space=vmem, size = 0x8000, scoped, tag = 'scratch operand']
  #allocation3 [shape = 'f32[25,256]{1,0:T(8,128)}', space=vmem, size = 0x8000, scoped, tag = 'scratch operand']
  %s0 = inlined_call_operand.vmem [shape: bf16[2,16,256], index: 0, kind: input, shape index: {}]
  %s1 = inlined_call_operand.hbm [shape: bf16[768,256], index: 1, kind: input, shape index: {}]
  %s2 = inlined_call_operand.hbm [shape: bf16[768,256], index: 2, kind: input, shape index: {}]
  %s3 = inlined_call_operand.vmem [shape: f32[1,256], index: 3, kind: input, shape index: {}]
  %s4 = inlined_call_operand.vmem [shape: bf16[2,16,256], index: 4, kind: output, shape index: {}]
  %s5 = sld [smem:[#allocation0]]
  $region57: #{doft_forward.4} parent=0
    _
  %s7 = ssub.s32 1, %s5
  %s8 = scalar_select 0, %s7, %s5
  $region1: #{doft_forward.4} parent=0
    #allocation4 [shape = 'u8[393216]{0}', space=vmem, size = 0x60000, scoped, tag = 'input window, operand 1, single buffered']
    #allocation5 [shape = 's32[2]{0}', space=sflag, size = 0x8, scoped, tag = 'scoped memory for doft_forward.4']
    #allocation6 [shape = 'u8[393216]{0}', space=vmem, size = 0x60000, scoped, tag = 'input window, operand 2, single buffered']
    #allocation7 [shape = 's32[1]{0}', space=sflag, size = 0x4, scoped, tag = 'scoped memory for doft_forward.4']
    %9 = vsyncpa [#allocation5], 0
    %10 = vsyncpa [#allocation7], 0
    loop: start=0, step=1, limit=4
    $region2: #{doft_forward.4} parent=1 // loop_pre_header
      _
    $region3: #{doft_forward.4} parent=1 // loop_header
      %s12 = sphi 0, %s16
      %p13 = scmp.ge.s32.totalorder %s12, 4
      %s22 = sphi 0, %s24
      %s25 = sphi 0, %s22
      %s26 = sphi 0, %s25
      %s42 = sphi 0, %s26
      %s46 = sphi 0, %s46
      %s48 = sphi 0, %s46
      %s49 = sphi 0, %s48
      %s63 = sphi 0, %s49
      %s67 = sphi 0, %s67
      %s69 = sphi 0, %s67
      %s70 = sphi 0, %s69
      %s84 = sphi 0, %s70
      %s88 = sphi 0, %s88
      %s90 = sphi 0, %s88
      %s91 = sphi 0, %s90
      %s105 = sphi 0, %s91
      %s111 = sphi 0, %s113
      %s114 = sphi 0, %s111
      %s115 = sphi 0, %s114
      %s131 = sphi 0, %s115
    $region4: #{doft_forward.4} parent=1 // loop_header_branch
      %15 = sbr.rel (%p13) target = $region8
    $region5: #{doft_forward.4} parent=1 // loop_body
      %s17 = ssub.s32 %s12, 1
      %s18 = ssub.s32 %s12, 2
      %s19 = sadd.s32 %s12, 1
      %s20 = ssub.s32 %s12, %s19
      %p21 = scmp.eq.s32.totalorder %s20, 0
      %s23 = sadd.s32 %s22, 1
      %s24 = scalar_select %p21, %s22, %s23
      %p27 = pneg %p21
      %p28 = scmp.eq.s32.totalorder %s12, 1
      %p29 = por %p27, %p28
      %p30 = scmp.ne.s32.totalorder %s22, %s25
      %p31 = scmp.eq.s32.totalorder %s12, 0
      %p32 = por %p30, %p31
      %p33 = scmp.ne.s32.totalorder %s22, %s25
      %p34 = scmp.eq.s32.totalorder %s17, 1
      %p35 = por %p33, %p34
      %p36 = scmp.ne.s32.totalorder %s25, %s26
      %p37 = scmp.eq.s32.totalorder %s17, 0
      %p38 = por %p36, %p37
      %p39 = scmp.ne.s32.totalorder %s25, %s26
      %p40 = scmp.eq.s32.totalorder %s18, 1
      %p41 = por %p39, %p40
      %p43 = scmp.ne.s32.totalorder %s26, %s42
      %p44 = scmp.eq.s32.totalorder %s18, 0
      %p45 = por %p43, %p44
      %s47 = sadd.s32 %s46, 1
      %p50 = scmp.eq.s32.totalorder %s12, 1
      %p51 = scmp.ne.s32.totalorder %s46, %s48
      %p52 = scmp.eq.s32.totalorder %s12, 0
      %p53 = por %p51, %p52
      %p54 = scmp.ne.s32.totalorder %s46, %s48
      %p55 = scmp.eq.s32.totalorder %s17, 1
      %p56 = por %p54, %p55
      %p57 = scmp.ne.s32.totalorder %s48, %s49
      %p58 = scmp.eq.s32.totalorder %s17, 0
      %p59 = por %p57, %p58
      %p60 = scmp.ne.s32.totalorder %s48, %s49
      %p61 = scmp.eq.s32.totalorder %s18, 1
      %p62 = por %p60, %p61
      %p64 = scmp.ne.s32.totalorder %s49, %s63
      %p65 = scmp.eq.s32.totalorder %s18, 0
      %p66 = por %p64, %p65
      %s68 = sadd.s32 %s67, 1
      %p71 = scmp.eq.s32.totalorder %s12, 1
      %p72 = scmp.ne.s32.totalorder %s67, %s69
      %p73 = scmp.eq.s32.totalorder %s12, 0
      %p74 = por %p72, %p73
      %p75 = scmp.ne.s32.totalorder %s67, %s69
      %p76 = scmp.eq.s32.totalorder %s17, 1
      %p77 = por %p75, %p76
      %p78 = scmp.ne.s32.totalorder %s69, %s70
      %p79 = scmp.eq.s32.totalorder %s17, 0
      %p80 = por %p78, %p79
      %p81 = scmp.ne.s32.totalorder %s69, %s70
      %p82 = scmp.eq.s32.totalorder %s18, 1
      %p83 = por %p81, %p82
      %p85 = scmp.ne.s32.totalorder %s70, %s84
      %p86 = scmp.eq.s32.totalorder %s18, 0
      %p87 = por %p85, %p86
      %s89 = sadd.s32 %s88, 1
      %p92 = scmp.eq.s32.totalorder %s12, 1
      %p93 = scmp.ne.s32.totalorder %s88, %s90
      %p94 = scmp.eq.s32.totalorder %s12, 0
      %p95 = por %p93, %p94
      %p96 = scmp.ne.s32.totalorder %s88, %s90
      %p97 = scmp.eq.s32.totalorder %s17, 1
      %p98 = por %p96, %p97
      %p99 = scmp.ne.s32.totalorder %s90, %s91
      %p100 = scmp.eq.s32.totalorder %s17, 0
      %p101 = por %p99, %p100
      %p102 = scmp.ne.s32.totalorder %s90, %s91
      %p103 = scmp.eq.s32.totalorder %s18, 1
      %p104 = por %p102, %p103
      %p106 = scmp.ne.s32.totalorder %s91, %s105
      %p107 = scmp.eq.s32.totalorder %s18, 0
      %p108 = por %p106, %p107
      %s109 = ssub.s32 %s12, %s19
      %p110 = scmp.eq.s32.totalorder %s109, 0
      %s112 = sadd.s32 %s111, 1
      %s113 = scalar_select %p110, %s111, %s112
      %p116 = pneg %p110
      %p117 = scmp.eq.s32.totalorder %s12, 1
      %p118 = por %p116, %p117
      %p119 = scmp.ne.s32.totalorder %s111, %s114
      %p120 = scmp.eq.s32.totalorder %s12, 0
      %p121 = por %p119, %p120
      %p122 = scmp.ne.s32.totalorder %s111, %s114
      %p123 = scmp.eq.s32.totalorder %s17, 1
      %p124 = por %p122, %p123
      %p125 = scmp.ne.s32.totalorder %s114, %s115
      %p126 = scmp.eq.s32.totalorder %s17, 0
      %p127 = por %p125, %p126
      %p128 = scmp.ne.s32.totalorder %s114, %s115
      %p129 = scmp.eq.s32.totalorder %s18, 1
      %p130 = por %p128, %p129
      %p132 = scmp.ne.s32.totalorder %s115, %s131
      %p133 = scmp.eq.s32.totalorder %s18, 0
      %p134 = por %p132, %p133
      %p135 = scmp.le.s32.totalorder 1, %s12
      %p136 = scmp.lt.s32.totalorder %s12, 3
      %p137 = pnand %p135, %p136
      %p138 = pneg %p137
      // Predicated region
      $region9: #{doft_forward.4} parent=5 // pred_check
        _
      $region10: #{doft_forward.4} parent=5 // pred_check_branch
        %140 = sbr.rel (%p137) target = $region12
      $region11: #{doft_forward.4} parent=5 // pred_region
        %s141 = ssub.s32 %s12, 1
        // Predicated region
        $region13: #{doft_forward.4} parent=11 // pred_check
          %p142 = pneg %p59
        $region14: #{doft_forward.4} parent=11 // pred_check_branch
          %144 = sbr.rel (%p142) target = $region16
        $region15: #{doft_forward.4} parent=11 // pred_region
          %146 = vsyncadd [#allocation5], 0
          %s147 = sshll.u32 %s1, 4
          %s148 = int_to_ptr.hbm [resolvable:$true] %s147
          %s149 = sshll.u32 [#allocation4], 4
          %s150 = int_to_ptr.vmem [resolvable:$true] %s149
          %155 = dma.hbm_to_vmem [thread:$0]  %s148, 12288, %s150, [#allocation5], 128, 128, 8
        $region16: #{doft_forward.4} parent=11 // pred_fallthru
          _
        // Predicated region
        $region17: #{doft_forward.4} parent=11 // pred_check
          %p156 = pneg %p80
        $region18: #{doft_forward.4} parent=11 // pred_check_branch
          %158 = sbr.rel (%p156) target = $region20
        $region19: #{doft_forward.4} parent=11 // pred_region
          %160 = vsyncadd [#allocation7], 0
          %s161 = sshll.u32 %s2, 4
          %s162 = int_to_ptr.hbm [resolvable:$true] %s161
          %s163 = sshll.u32 [#allocation6], 4
          %s164 = int_to_ptr.vmem [resolvable:$true] %s163
          %169 = dma.hbm_to_vmem [thread:$0]  %s162, 12288, %s164, [#allocation7], 128, 128, 8
        $region20: #{doft_forward.4} parent=11 // pred_fallthru
          _
        // Predicated region
        $region21: #{doft_forward.4} parent=11 // pred_check
          %p170 = pneg %p101
        $region22: #{doft_forward.4} parent=11 // pred_check_branch
          %172 = sbr.rel (%p170) target = $region24
        $region23: #{doft_forward.4} parent=11 // pred_region
          _
        $region24: #{doft_forward.4} parent=11 // pred_fallthru
          _
      $region12: #{doft_forward.4} parent=5 // pred_fallthru
        _
      %p173 = scmp.lt.s32.totalorder %s12, 2
      // Predicated region
      $region25: #{doft_forward.4} parent=5 // pred_check
        %p174 = pneg %p173
      $region26: #{doft_forward.4} parent=5 // pred_check_branch
        %176 = sbr.rel (%p174) target = $region28
      $region27: #{doft_forward.4} parent=5 // pred_region
        // Predicated region
        $region29: #{doft_forward.4} parent=27 // pred_check
          %p177 = pneg %p32
        $region30: #{doft_forward.4} parent=27 // pred_check_branch
          %179 = sbr.rel (%p177) target = $region32
        $region31: #{doft_forward.4} parent=27 // pred_region
          %p180 = scmp.lt.s32.totalorder %s12, 1
          %s181 = scalar_select %p180, %s12, 1
          %s182 = smul.addr %s181, 4
          %s183 = smul.addr %s182, 4
          %s184 = scalar_lea.vmem %s0, %s183
        $region32: #{doft_forward.4} parent=27 // pred_fallthru
          _
      $region28: #{doft_forward.4} parent=5 // pred_fallthru
        _
      %p185 = scmp.le.s32.totalorder 1, %s12
      %p186 = scmp.lt.s32.totalorder %s12, 3
      %p187 = pnand %p185, %p186
      %p188 = pneg %p187
      // Predicated region
      $region33: #{doft_forward.4} parent=5 // pred_check
        _
      $region34: #{doft_forward.4} parent=5 // pred_check_branch
        %190 = sbr.rel (%p187) target = $region36
      $region35: #{doft_forward.4} parent=5 // pred_region
        %s191 = ssub.s32 %s12, 1
        // Predicated region
        $region37: #{doft_forward.4} parent=35 // pred_check
          %p192 = pneg %p59
        $region38: #{doft_forward.4} parent=35 // pred_check_branch
          %194 = sbr.rel (%p192) target = $region40
        $region39: #{doft_forward.4} parent=35 // pred_region
          %196 = dma.done [#allocation5], 12288
        $region40: #{doft_forward.4} parent=35 // pred_fallthru
          _
        // Predicated region
        $region41: #{doft_forward.4} parent=35 // pred_check
          %p197 = pneg %p80
        $region42: #{doft_forward.4} parent=35 // pred_check_branch
          %199 = sbr.rel (%p197) target = $region44
        $region43: #{doft_forward.4} parent=35 // pred_region
          %201 = dma.done [#allocation7], 12288
        $region44: #{doft_forward.4} parent=35 // pred_fallthru
          _
        %p202 = scmp.lt.s32.totalorder %s17, 1
        %s203 = scalar_select %p202, %s17, 1
        %s204 = smul.addr %s203, 4
        %s205 = smul.addr %s204, 4
        %s206 = scalar_lea.vmem %s0, %s205
        %p207 = pneg %p38
        %p208 = pneg %p35
        %p209 = pneg %p59
        %p210 = pneg %p56
        %p211 = pneg %p80
        %p212 = pneg %p77
        %p213 = pneg %p101
        %p214 = pneg %p98
        %p215 = pneg %p127
        %p216 = pneg %p124
        %p217 = scmp.lt.s32.totalorder %s17, 1
        %s218 = scalar_select %p217, %s17, 1
        %s219 = smul.addr %s218, 4
        %s220 = smul.addr %s219, 4
        %s221 = scalar_lea.vmem %s4, %s220
        %p222 = scmp.lt.s32.totalorder %s17, 1
        %s223 = scalar_select %p222, %s17, 1
        %s224 = smul.addr %s223, 4
        %s225 = smul.addr %s224, 4
        %s226 = scalar_lea.vmem %s0, %s225
        %p227 = scmp.lt.s32.totalorder %s17, 1
        %s228 = scalar_select %p227, %s17, 1
        %s229 = smul.addr %s228, 4
        %s230 = smul.addr %s229, 4
        %s231 = scalar_lea.vmem %s4, %s230
        %v232 = vlaneseq
        %vm233 = vcmp.ge.s32.totalorder %v232, 0
        %vm234 = vcmp.lt.s32.totalorder %v232, 256
        %vm235 = vmand %vm233, %vm234
        %s236 = scalar_lea.vmem [#allocation2], 7
        %237 = vst.msk [vmem:[%s236] ss:$8 sm:$0x3] %vm235, 0.0
        %238 = vst.msk [vmem:[%s236] ss:$8 sm:$0x0] %vm235, 0.0
        %s239 = scalar_lea.vmem [#allocation2], 48
        %240 = vst.msk [vmem:[%s239] ss:$8 sm:$0x3] %vm235, 0.0
        %241 = vst.msk [vmem:[%s239] ss:$8 sm:$0x0] %vm235, 0.0
        %s242 = scalar_lea.vmem [#allocation3], 7
        %243 = vst.msk [vmem:[%s242] ss:$8 sm:$0x3] %vm235, 0.0
        %244 = vst.msk [vmem:[%s242] ss:$8 sm:$0x0] %vm235, 0.0
        %s245 = scalar_lea.vmem [#allocation3], 48
        %246 = vst.msk [vmem:[%s245] ss:$8 sm:$0x3] %vm235, 0.0
        %247 = vst.msk [vmem:[%s245] ss:$8 sm:$0x0] %vm235, 0.0
        %v248 = vld [vmem:[%s226] sm:$0xff]
        %v249 = vld [vmem:[%s226 + $0x8] sm:$0xff]
        %v250 = vunpack.c.l.bf16 %v248
        %v251 = vunpack.c.h.bf16 %v248
        %v252 = vunpack.c.l.bf16 %v249
        %v253 = vunpack.c.h.bf16 %v249
        %254 = vst [vmem:[#allocation2 + $0x10] sm:$0xff] %v250
        %255 = vst [vmem:[#allocation2 + $0x18] sm:$0xff] %v251
        %256 = vst [vmem:[#allocation2 + $0x20] sm:$0xff] %v252
        %257 = vst [vmem:[#allocation2 + $0x28] sm:$0xff] %v253
        %v258 = vld [vmem:[#allocation2] sm:$0x80]
        %v259 = vld [vmem:[#allocation2 + $0x8] sm:$0x80]
        %v260 = vld [vmem:[#allocation2 + $0x10] sm:$0xff]
        %v261 = vld [vmem:[#allocation2 + $0x18] sm:$0xff]
        %v262 = vld [vmem:[#allocation2 + $0x20] sm:$0x7f]
        %v263 = vld [vmem:[#allocation2 + $0x28] sm:$0x7f]
        %v264 = vpack.c.bf16 %v260, %v258
        %v265 = vpack.c.bf16 %v261, %v259
        %v266 = vpack.c.bf16 %v262, %v262
        %v267 = vpack.c.bf16 %v263, %v263
        %v268 = vld [vmem:[#allocation4] sm:$0xff]
        %v269 = vld [vmem:[#allocation4 + $0x8] sm:$0xff]
        %v270 = vld [vmem:[#allocation4 + $0x10] sm:$0xff]
        %v271 = vld [vmem:[#allocation4 + $0x18] sm:$0xff]
        %v272 = vld [vmem:[#allocation4 + $0x20] sm:$0xff]
        %v273 = vld [vmem:[#allocation4 + $0x28] sm:$0xff]
        %v274 = vld [vmem:[#allocation4 + $0x30] sm:$0xff]
        %v275 = vld [vmem:[#allocation4 + $0x38] sm:$0xff]
        %v276 = vld [vmem:[#allocation4 + $0x40] sm:$0xff]
        %v277 = vld [vmem:[#allocation4 + $0x48] sm:$0xff]
        %v278 = vld [vmem:[#allocation4 + $0x50] sm:$0xff]
        %v279 = vld [vmem:[#allocation4 + $0x58] sm:$0xff]
        %v280 = vld [vmem:[#allocation4 + $0x60] sm:$0xff]
        %v281 = vld [vmem:[#allocation4 + $0x68] sm:$0xff]
        %v282 = vld [vmem:[#allocation4 + $0x70] sm:$0xff]
        %v283 = vld [vmem:[#allocation4 + $0x78] sm:$0xff]
        %v284 = vld [vmem:[#allocation4 + $0x80] sm:$0xff]
        %v285 = vld [vmem:[#allocation4 + $0x88] sm:$0xff]
        %v286 = vld [vmem:[#allocation4 + $0x90] sm:$0xff]
        %v287 = vld [vmem:[#allocation4 + $0x98] sm:$0xff]
        %v288 = vld [vmem:[#allocation4 + $0xa0] sm:$0xff]
        %v289 = vld [vmem:[#allocation4 + $0xa8] sm:$0xff]
        %v290 = vld [vmem:[#allocation4 + $0xb0] sm:$0xff]
        %v291 = vld [vmem:[#allocation4 + $0xb8] sm:$0xff]
        %v292 = vld [vmem:[#allocation4 + $0xc0] sm:$0xff]
        %v293 = vld [vmem:[#allocation4 + $0xc8] sm:$0xff]
        %v294 = vld [vmem:[#allocation4 + $0xd0] sm:$0xff]
        %v295 = vld [vmem:[#allocation4 + $0xd8] sm:$0xff]
        %v296 = vld [vmem:[#allocation4 + $0xe0] sm:$0xff]
        %v297 = vld [vmem:[#allocation4 + $0xe8] sm:$0xff]
        %v298 = vld [vmem:[#allocation4 + $0xf0] sm:$0xff]
        %v299 = vld [vmem:[#allocation4 + $0xf8] sm:$0xff]
        %v300 = vld [vmem:[#allocation2 + $0x20] sm:$0xff]
        %v301 = vld [vmem:[#allocation2 + $0x28] sm:$0xff]
        %v302 = vpack.c.bf16 %v300, %v260
        %v303 = vpack.c.bf16 %v301, %v261
        %v304 = vld [vmem:[#allocation4 + $0x100] sm:$0xff]
        %v305 = vld [vmem:[#allocation4 + $0x108] sm:$0xff]
        %v306 = vld [vmem:[#allocation4 + $0x110] sm:$0xff]
        %v307 = vld [vmem:[#allocation4 + $0x118] sm:$0xff]
        %v308 = vld [vmem:[#allocation4 + $0x120] sm:$0xff]
        %v309 = vld [vmem:[#allocation4 + $0x128] sm:$0xff]
        %v310 = vld [vmem:[#allocation4 + $0x130] sm:$0xff]
        %v311 = vld [vmem:[#allocation4 + $0x138] sm:$0xff]
        %v312 = vld [vmem:[#allocation4 + $0x140] sm:$0xff]
        %v313 = vld [vmem:[#allocation4 + $0x148] sm:$0xff]
        %v314 = vld [vmem:[#allocation4 + $0x150] sm:$0xff]
        %v315 = vld [vmem:[#allocation4 + $0x158] sm:$0xff]
        %v316 = vld [vmem:[#allocation4 + $0x160] sm:$0xff]
        %v317 = vld [vmem:[#allocation4 + $0x168] sm:$0xff]
        %v318 = vld [vmem:[#allocation4 + $0x170] sm:$0xff]
        %v319 = vld [vmem:[#allocation4 + $0x178] sm:$0xff]
        %v320 = vld [vmem:[#allocation4 + $0x180] sm:$0xff]
        %v321 = vld [vmem:[#allocation4 + $0x188] sm:$0xff]
        %v322 = vld [vmem:[#allocation4 + $0x190] sm:$0xff]
        %v323 = vld [vmem:[#allocation4 + $0x198] sm:$0xff]
        %v324 = vld [vmem:[#allocation4 + $0x1a0] sm:$0xff]
        %v325 = vld [vmem:[#allocation4 + $0x1a8] sm:$0xff]
        %v326 = vld [vmem:[#allocation4 + $0x1b0] sm:$0xff]
        %v327 = vld [vmem:[#allocation4 + $0x1b8] sm:$0xff]
        %v328 = vld [vmem:[#allocation4 + $0x1c0] sm:$0xff]
        %v329 = vld [vmem:[#allocation4 + $0x1c8] sm:$0xff]
        %v330 = vld [vmem:[#allocation4 + $0x1d0] sm:$0xff]
        %v331 = vld [vmem:[#allocation4 + $0x1d8] sm:$0xff]
        %v332 = vld [vmem:[#allocation4 + $0x1e0] sm:$0xff]
        %v333 = vld [vmem:[#allocation4 + $0x1e8] sm:$0xff]
        %v334 = vld [vmem:[#allocation4 + $0x1f0] sm:$0xff]
        %v335 = vld [vmem:[#allocation4 + $0x1f8] sm:$0xff]
        %v368 = vunpack.c.l.b16 %v304
        %v369 = vunpack.c.h.b16 %v304
        %v370 = vunpack.c.l.b16 %v305
        %v371 = vunpack.c.h.b16 %v305
        %v372 = vunpack.c.l.b16 %v306
        %v373 = vunpack.c.h.b16 %v306
        %v374 = vunpack.c.l.b16 %v307
        %v375 = vunpack.c.h.b16 %v307
        %v376 = vunpack.c.l.b16 %v308
        %v377 = vunpack.c.h.b16 %v308
        %v378 = vunpack.c.l.b16 %v309
        %v379 = vunpack.c.h.b16 %v309
        %v380 = vunpack.c.l.b16 %v310
        %v381 = vunpack.c.h.b16 %v310
        %v382 = vunpack.c.l.b16 %v311
        %v383 = vunpack.c.h.b16 %v311
        %v384 = vunpack.c.l.b16 %v312
        %v385 = vunpack.c.h.b16 %v312
        %v386 = vunpack.c.l.b16 %v313
        %v387 = vunpack.c.h.b16 %v313
        %v388 = vunpack.c.l.b16 %v314
        %v389 = vunpack.c.h.b16 %v314
        %v390 = vunpack.c.l.b16 %v315
        %v391 = vunpack.c.h.b16 %v315
        %v392 = vunpack.c.l.b16 %v316
        %v393 = vunpack.c.h.b16 %v316
        %v394 = vunpack.c.l.b16 %v317
        %v395 = vunpack.c.h.b16 %v317
        %v396 = vunpack.c.l.b16 %v318
        %v397 = vunpack.c.h.b16 %v318
        %v398 = vunpack.c.l.b16 %v319
        %v399 = vunpack.c.h.b16 %v319
        %v400 = vunpack.c.l.b16 %v320
        %v401 = vunpack.c.h.b16 %v320
        %v402 = vunpack.c.l.b16 %v321
        %v403 = vunpack.c.h.b16 %v321
        %v404 = vunpack.c.l.b16 %v322
        %v405 = vunpack.c.h.b16 %v322
        %v406 = vunpack.c.l.b16 %v323
        %v407 = vunpack.c.h.b16 %v323
        %v408 = vunpack.c.l.b16 %v324
        %v409 = vunpack.c.h.b16 %v324
        %v410 = vunpack.c.l.b16 %v325
        %v411 = vunpack.c.h.b16 %v325
        %v412 = vunpack.c.l.b16 %v326
        %v413 = vunpack.c.h.b16 %v326
        %v414 = vunpack.c.l.b16 %v327
        %v415 = vunpack.c.h.b16 %v327
        %v416 = vunpack.c.l.b16 %v328
        %v417 = vunpack.c.h.b16 %v328
        %v418 = vunpack.c.l.b16 %v329
        %v419 = vunpack.c.h.b16 %v329
        %v420 = vunpack.c.l.b16 %v330
        %v421 = vunpack.c.h.b16 %v330
        %v422 = vunpack.c.l.b16 %v331
        %v423 = vunpack.c.h.b16 %v331
        %v424 = vunpack.c.l.b16 %v332
        %v425 = vunpack.c.h.b16 %v332
        %v426 = vunpack.c.l.b16 %v333
        %v427 = vunpack.c.h.b16 %v333
        %v428 = vunpack.c.l.b16 %v334
        %v429 = vunpack.c.h.b16 %v334
        %v430 = vunpack.c.l.b16 %v335
        %v431 = vunpack.c.h.b16 %v335
        %v432 = vpack.c.b16 %v370, %v368
        %v433 = vpack.c.b16 %v371, %v369
        %v434 = vpack.c.b16 %v374, %v372
        %v435 = vpack.c.b16 %v375, %v373
        %v436 = vpack.c.b16 %v378, %v376
        %v437 = vpack.c.b16 %v379, %v377
        %v438 = vpack.c.b16 %v382, %v380
        %v439 = vpack.c.b16 %v383, %v381
        %v440 = vpack.c.b16 %v386, %v384
        %v441 = vpack.c.b16 %v387, %v385
        %v442 = vpack.c.b16 %v390, %v388
        %v443 = vpack.c.b16 %v391, %v389
        %v444 = vpack.c.b16 %v394, %v392
        %v445 = vpack.c.b16 %v395, %v393
        %v446 = vpack.c.b16 %v398, %v396
        %v447 = vpack.c.b16 %v399, %v397
        %v448 = vpack.c.b16 %v402, %v400
        %v449 = vpack.c.b16 %v403, %v401
        %v450 = vpack.c.b16 %v406, %v404
        %v451 = vpack.c.b16 %v407, %v405
        %v452 = vpack.c.b16 %v410, %v408
        %v453 = vpack.c.b16 %v411, %v409
        %v454 = vpack.c.b16 %v414, %v412
        %v455 = vpack.c.b16 %v415, %v413
        %v456 = vpack.c.b16 %v418, %v416
        %v457 = vpack.c.b16 %v419, %v417
        %v458 = vpack.c.b16 %v422, %v420
        %v459 = vpack.c.b16 %v423, %v421
        %v460 = vpack.c.b16 %v426, %v424
        %v461 = vpack.c.b16 %v427, %v425
        %v462 = vpack.c.b16 %v430, %v428
        %v463 = vpack.c.b16 %v431, %v429
        %496 = vmatpush.bf16.msra.mxu0 %v446
        %497 = vmatpush.bf16.msra.mxu0 %v444
        %498 = vmatpush.bf16.msra.mxu0 %v442
        %499 = vmatpush.bf16.msra.mxu0 %v440
        %500 = vmatpush.bf16.msra.mxu0 %v438
        %501 = vmatpush.bf16.msra.mxu0 %v436
        %502 = vmatpush.bf16.msra.mxu0 %v434
        %503 = vmatpush.bf16.msra.mxu0 %v432
        %504 = vmatmul.bf16.gmra.mxu0 %v302
        %v505 = vpop.f32.mrf.mxu0
        %v506 = vadd.f32 0.0, %v505
        %v507 = vpop.f32.mrf.mxu0
        %v508 = vadd.f32 0.0, %v507
        %509 = vdwg.mxu0
        %510 = vmatpush.bf16.msra.mxu0 %v462
        %511 = vmatpush.bf16.msra.mxu0 %v460
        %512 = vmatpush.bf16.msra.mxu0 %v458
        %513 = vmatpush.bf16.msra.mxu0 %v456
        %514 = vmatpush.bf16.msra.mxu0 %v454
        %515 = vmatpush.bf16.msra.mxu0 %v452
        %516 = vmatpush.bf16.msra.mxu0 %v450
        %517 = vmatpush.bf16.msra.mxu0 %v448
        %518 = vmatmul.bf16.gmra.mxu0 %v303
        %v519 = vpop.f32.mrf.mxu0
        %v520 = vadd.f32 %v506, %v519
        %v521 = vpop.f32.mrf.mxu0
        %v522 = vadd.f32 %v508, %v521
        %523 = vdwg.mxu0
        %524 = vmatpush.bf16.msra.mxu0 %v447
        %525 = vmatpush.bf16.msra.mxu0 %v445
        %526 = vmatpush.bf16.msra.mxu0 %v443
        %527 = vmatpush.bf16.msra.mxu0 %v441
        %528 = vmatpush.bf16.msra.mxu0 %v439
        %529 = vmatpush.bf16.msra.mxu0 %v437
        %530 = vmatpush.bf16.msra.mxu0 %v435
        %531 = vmatpush.bf16.msra.mxu0 %v433
        %532 = vmatmul.bf16.gmra.mxu0 %v302
        %v533 = vpop.f32.mrf.mxu0
        %v534 = vadd.f32 0.0, %v533
        %v535 = vpop.f32.mrf.mxu0
        %v536 = vadd.f32 0.0, %v535
        %537 = vdwg.mxu0
        %538 = vmatpush.bf16.msra.mxu0 %v463
        %539 = vmatpush.bf16.msra.mxu0 %v461
        %540 = vmatpush.bf16.msra.mxu0 %v459
        %541 = vmatpush.bf16.msra.mxu0 %v457
        %542 = vmatpush.bf16.msra.mxu0 %v455
        %543 = vmatpush.bf16.msra.mxu0 %v453
        %544 = vmatpush.bf16.msra.mxu0 %v451
        %545 = vmatpush.bf16.msra.mxu0 %v449
        %546 = vmatmul.bf16.gmra.mxu0 %v303
        %v547 = vpop.f32.mrf.mxu0
        %v548 = vadd.f32 %v534, %v547
        %v549 = vpop.f32.mrf.mxu0
        %v550 = vadd.f32 %v536, %v549
        %551 = vdwg.mxu0
        %vm552 = vsmask.f32 4352
        %v554 = vshrl.u32 %v264, 16
        %v556 = vrot.slane %v554, 3
        %v557 = vshll.u32 %v264, 16
        %v559 = vrot.slane %v557, 4
        %v560 = vor.u32 %v556, %v559
        %v562 = vshrl.u32 %v266, 16
        %v564 = vrot.slane %v562, 3
        %v565 = vshll.u32 %v266, 16
        %v567 = vrot.slane %v565, 4
        %v568 = vor.u32 %v564, %v567
        %v569 = vsel %vm552, %v560, %v568
        %v571 = vshrl.u32 %v265, 16
        %v573 = vrot.slane %v571, 3
        %v574 = vshll.u32 %v265, 16
        %v576 = vrot.slane %v574, 4
        %v577 = vor.u32 %v573, %v576
        %v579 = vshrl.u32 %v267, 16
        %v581 = vrot.slane %v579, 3
        %v582 = vshll.u32 %v267, 16
        %v584 = vrot.slane %v582, 4
        %v585 = vor.u32 %v581, %v584
        %v586 = vsel %vm552, %v577, %v585
        %v621 = vunpack.c.l.b16 %v268
        %v622 = vunpack.c.h.b16 %v268
        %v623 = vunpack.c.l.b16 %v269
        %v624 = vunpack.c.h.b16 %v269
        %v625 = vunpack.c.l.b16 %v270
        %v626 = vunpack.c.h.b16 %v270
        %v627 = vunpack.c.l.b16 %v271
        %v628 = vunpack.c.h.b16 %v271
        %v629 = vunpack.c.l.b16 %v272
        %v630 = vunpack.c.h.b16 %v272
        %v631 = vunpack.c.l.b16 %v273
        %v632 = vunpack.c.h.b16 %v273
        %v633 = vunpack.c.l.b16 %v274
        %v634 = vunpack.c.h.b16 %v274
        %v635 = vunpack.c.l.b16 %v275
        %v636 = vunpack.c.h.b16 %v275
        %v637 = vunpack.c.l.b16 %v276
        %v638 = vunpack.c.h.b16 %v276
        %v639 = vunpack.c.l.b16 %v277
        %v640 = vunpack.c.h.b16 %v277
        %v641 = vunpack.c.l.b16 %v278
        %v642 = vunpack.c.h.b16 %v278
        %v643 = vunpack.c.l.b16 %v279
        %v644 = vunpack.c.h.b16 %v279
        %v645 = vunpack.c.l.b16 %v280
        %v646 = vunpack.c.h.b16 %v280
        %v647 = vunpack.c.l.b16 %v281
        %v648 = vunpack.c.h.b16 %v281
        %v649 = vunpack.c.l.b16 %v282
        %v650 = vunpack.c.h.b16 %v282
        %v651 = vunpack.c.l.b16 %v283
        %v652 = vunpack.c.h.b16 %v283
        %v653 = vunpack.c.l.b16 %v284
        %v654 = vunpack.c.h.b16 %v284
        %v655 = vunpack.c.l.b16 %v285
        %v656 = vunpack.c.h.b16 %v285
        %v657 = vunpack.c.l.b16 %v286
        %v658 = vunpack.c.h.b16 %v286
        %v659 = vunpack.c.l.b16 %v287
        %v660 = vunpack.c.h.b16 %v287
        %v661 = vunpack.c.l.b16 %v288
        %v662 = vunpack.c.h.b16 %v288
        %v663 = vunpack.c.l.b16 %v289
        %v664 = vunpack.c.h.b16 %v289
        %v665 = vunpack.c.l.b16 %v290
        %v666 = vunpack.c.h.b16 %v290
        %v667 = vunpack.c.l.b16 %v291
        %v668 = vunpack.c.h.b16 %v291
        %v669 = vunpack.c.l.b16 %v292
        %v670 = vunpack.c.h.b16 %v292
        %v671 = vunpack.c.l.b16 %v293
        %v672 = vunpack.c.h.b16 %v293
        %v673 = vunpack.c.l.b16 %v294
        %v674 = vunpack.c.h.b16 %v294
        %v675 = vunpack.c.l.b16 %v295
        %v676 = vunpack.c.h.b16 %v295
        %v677 = vunpack.c.l.b16 %v296
        %v678 = vunpack.c.h.b16 %v296
        %v679 = vunpack.c.l.b16 %v297
        %v680 = vunpack.c.h.b16 %v297
        %v681 = vunpack.c.l.b16 %v298
        %v682 = vunpack.c.h.b16 %v298
        %v683 = vunpack.c.l.b16 %v299
        %v684 = vunpack.c.h.b16 %v299
        %v685 = vpack.c.b16 %v623, %v621
        %v686 = vpack.c.b16 %v624, %v622
        %v687 = vpack.c.b16 %v627, %v625
        %v688 = vpack.c.b16 %v628, %v626
        %v689 = vpack.c.b16 %v631, %v629
        %v690 = vpack.c.b16 %v632, %v630
        %v691 = vpack.c.b16 %v635, %v633
        %v692 = vpack.c.b16 %v636, %v634
        %v693 = vpack.c.b16 %v639, %v637
        %v694 = vpack.c.b16 %v640, %v638
        %v695 = vpack.c.b16 %v643, %v641
        %v696 = vpack.c.b16 %v644, %v642
        %v697 = vpack.c.b16 %v647, %v645
        %v698 = vpack.c.b16 %v648, %v646
        %v699 = vpack.c.b16 %v651, %v649
        %v700 = vpack.c.b16 %v652, %v650
        %v701 = vpack.c.b16 %v655, %v653
        %v702 = vpack.c.b16 %v656, %v654
        %v703 = vpack.c.b16 %v659, %v657
        %v704 = vpack.c.b16 %v660, %v658
        %v705 = vpack.c.b16 %v663, %v661
        %v706 = vpack.c.b16 %v664, %v662
        %v707 = vpack.c.b16 %v667, %v665
        %v708 = vpack.c.b16 %v668, %v666
        %v709 = vpack.c.b16 %v671, %v669
        %v710 = vpack.c.b16 %v672, %v670
        %v711 = vpack.c.b16 %v675, %v673
        %v712 = vpack.c.b16 %v676, %v674
        %v713 = vpack.c.b16 %v679, %v677
        %v714 = vpack.c.b16 %v680, %v678
        %v715 = vpack.c.b16 %v683, %v681
        %v716 = vpack.c.b16 %v684, %v682
        %749 = vmatpush.bf16.msra.mxu0 %v699
        %750 = vmatpush.bf16.msra.mxu0 %v697
        %751 = vmatpush.bf16.msra.mxu0 %v695
        %752 = vmatpush.bf16.msra.mxu0 %v693
        %753 = vmatpush.bf16.msra.mxu0 %v691
        %754 = vmatpush.bf16.msra.mxu0 %v689
        %755 = vmatpush.bf16.msra.mxu0 %v687
        %756 = vmatpush.bf16.msra.mxu0 %v685
        %757 = vmatmul.bf16.gmra.mxu0 %v569
        %v758 = vpop.f32.mrf.mxu0
        %v759 = vadd.f32 %v520, %v758
        %v760 = vpop.f32.mrf.mxu0
        %v761 = vadd.f32 %v522, %v760
        %762 = vdwg.mxu0
        %763 = vmatpush.bf16.msra.mxu0 %v715
        %764 = vmatpush.bf16.msra.mxu0 %v713
        %765 = vmatpush.bf16.msra.mxu0 %v711
        %766 = vmatpush.bf16.msra.mxu0 %v709
        %767 = vmatpush.bf16.msra.mxu0 %v707
        %768 = vmatpush.bf16.msra.mxu0 %v705
        %769 = vmatpush.bf16.msra.mxu0 %v703
        %770 = vmatpush.bf16.msra.mxu0 %v701
        %771 = vmatmul.bf16.gmra.mxu0 %v586
        %v772 = vpop.f32.mrf.mxu0
        %v773 = vadd.f32 %v759, %v772
        %v774 = vpop.f32.mrf.mxu0
        %v775 = vadd.f32 %v761, %v774
        %776 = vdwg.mxu0
        %777 = vmatpush.bf16.msra.mxu0 %v700
        %778 = vmatpush.bf16.msra.mxu0 %v698
        %779 = vmatpush.bf16.msra.mxu0 %v696
        %780 = vmatpush.bf16.msra.mxu0 %v694
        %781 = vmatpush.bf16.msra.mxu0 %v692
        %782 = vmatpush.bf16.msra.mxu0 %v690
        %783 = vmatpush.bf16.msra.mxu0 %v688
        %784 = vmatpush.bf16.msra.mxu0 %v686
        %785 = vmatmul.bf16.gmra.mxu0 %v569
        %v786 = vpop.f32.mrf.mxu0
        %v787 = vadd.f32 %v548, %v786
        %v788 = vpop.f32.mrf.mxu0
        %v789 = vadd.f32 %v550, %v788
        %790 = vdwg.mxu0
        %791 = vmatpush.bf16.msra.mxu0 %v716
        %792 = vmatpush.bf16.msra.mxu0 %v714
        %793 = vmatpush.bf16.msra.mxu0 %v712
        %794 = vmatpush.bf16.msra.mxu0 %v710
        %795 = vmatpush.bf16.msra.mxu0 %v708
        %796 = vmatpush.bf16.msra.mxu0 %v706
        %797 = vmatpush.bf16.msra.mxu0 %v704
        %798 = vmatpush.bf16.msra.mxu0 %v702
        %799 = vmatmul.bf16.gmra.mxu0 %v586
        %v800 = vpop.f32.mrf.mxu0
        %v801 = vadd.f32 %v787, %v800
        %v802 = vpop.f32.mrf.mxu0
        %v803 = vadd.f32 %v789, %v802
        %804 = vdwg.mxu0
        %v805 = vld [vmem:[#allocation2 + $0x10] sm:$0xfe]
        %v806 = vld [vmem:[#allocation2 + $0x18] sm:$0xfe]
        %v807 = vld [vmem:[#allocation2 + $0x20] sm:$0xff]
        %v808 = vld [vmem:[#allocation2 + $0x28] sm:$0xff]
        %v809 = vld [vmem:[#allocation2 + $0x30] sm:$0x1]
        %v810 = vld [vmem:[#allocation2 + $0x38] sm:$0x1]
        %v811 = vpack.c.bf16 %v807, %v805
        %v812 = vpack.c.bf16 %v808, %v806
        %v813 = vpack.c.bf16 %v809, %v809
        %v814 = vpack.c.bf16 %v810, %v810
        %v815 = vld [vmem:[#allocation4 + $0x200] sm:$0xff]
        %v816 = vld [vmem:[#allocation4 + $0x208] sm:$0xff]
        %v817 = vld [vmem:[#allocation4 + $0x210] sm:$0xff]
        %v818 = vld [vmem:[#allocation4 + $0x218] sm:$0xff]
        %v819 = vld [vmem:[#allocation4 + $0x220] sm:$0xff]
        %v820 = vld [vmem:[#allocation4 + $0x228] sm:$0xff]
        %v821 = vld [vmem:[#allocation4 + $0x230] sm:$0xff]
        %v822 = vld [vmem:[#allocation4 + $0x238] sm:$0xff]
        %v823 = vld [vmem:[#allocation4 + $0x240] sm:$0xff]
        %v824 = vld [vmem:[#allocation4 + $0x248] sm:$0xff]
        %v825 = vld [vmem:[#allocation4 + $0x250] sm:$0xff]
        %v826 = vld [vmem:[#allocation4 + $0x258] sm:$0xff]
        %v827 = vld [vmem:[#allocation4 + $0x260] sm:$0xff]
        %v828 = vld [vmem:[#allocation4 + $0x268] sm:$0xff]
        %v829 = vld [vmem:[#allocation4 + $0x270] sm:$0xff]
        %v830 = vld [vmem:[#allocation4 + $0x278] sm:$0xff]
        %v831 = vld [vmem:[#allocation4 + $0x280] sm:$0xff]
        %v832 = vld [vmem:[#allocation4 + $0x288] sm:$0xff]
        %v833 = vld [vmem:[#allocation4 + $0x290] sm:$0xff]
        %v834 = vld [vmem:[#allocation4 + $0x298] sm:$0xff]
        %v835 = vld [vmem:[#allocation4 + $0x2a0] sm:$0xff]
        %v836 = vld [vmem:[#allocation4 + $0x2a8] sm:$0xff]
        %v837 = vld [vmem:[#allocation4 + $0x2b0] sm:$0xff]
        %v838 = vld [vmem:[#allocation4 + $0x2b8] sm:$0xff]
        %v839 = vld [vmem:[#allocation4 + $0x2c0] sm:$0xff]
        %v840 = vld [vmem:[#allocation4 + $0x2c8] sm:$0xff]
        %v841 = vld [vmem:[#allocation4 + $0x2d0] sm:$0xff]
        %v842 = vld [vmem:[#allocation4 + $0x2d8] sm:$0xff]
        %v843 = vld [vmem:[#allocation4 + $0x2e0] sm:$0xff]
        %v844 = vld [vmem:[#allocation4 + $0x2e8] sm:$0xff]
        %v845 = vld [vmem:[#allocation4 + $0x2f0] sm:$0xff]
        %v846 = vld [vmem:[#allocation4 + $0x2f8] sm:$0xff]
        %vm847 = vsmask.f32 7424
        %v849 = vshrl.u32 %v811, 16
        %v851 = vshll.u32 %v811, 16
        %v853 = vrot.slane %v851, 1
        %v854 = vor.u32 %v849, %v853
        %v856 = vshll.u32 %v813, 16
        %v858 = vrot.slane %v856, 1
        %v859 = vsel %vm847, %v854, %v858
        %v861 = vshrl.u32 %v812, 16
        %v863 = vshll.u32 %v812, 16
        %v865 = vrot.slane %v863, 1
        %v866 = vor.u32 %v861, %v865
        %v868 = vshll.u32 %v814, 16
        %v870 = vrot.slane %v868, 1
        %v871 = vsel %vm847, %v866, %v870
        %v906 = vunpack.c.l.b16 %v815
        %v907 = vunpack.c.h.b16 %v815
        %v908 = vunpack.c.l.b16 %v816
        %v909 = vunpack.c.h.b16 %v816
        %v910 = vunpack.c.l.b16 %v817
        %v911 = vunpack.c.h.b16 %v817
        %v912 = vunpack.c.l.b16 %v818
        %v913 = vunpack.c.h.b16 %v818
        %v914 = vunpack.c.l.b16 %v819
        %v915 = vunpack.c.h.b16 %v819
        %v916 = vunpack.c.l.b16 %v820
        %v917 = vunpack.c.h.b16 %v820
        %v918 = vunpack.c.l.b16 %v821
        %v919 = vunpack.c.h.b16 %v821
        %v920 = vunpack.c.l.b16 %v822
        %v921 = vunpack.c.h.b16 %v822
        %v922 = vunpack.c.l.b16 %v823
        %v923 = vunpack.c.h.b16 %v823
        %v924 = vunpack.c.l.b16 %v824
        %v925 = vunpack.c.h.b16 %v824
        %v926 = vunpack.c.l.b16 %v825
        %v927 = vunpack.c.h.b16 %v825
        %v928 = vunpack.c.l.b16 %v826
        %v929 = vunpack.c.h.b16 %v826
        %v930 = vunpack.c.l.b16 %v827
        %v931 = vunpack.c.h.b16 %v827
        %v932 = vunpack.c.l.b16 %v828
        %v933 = vunpack.c.h.b16 %v828
        %v934 = vunpack.c.l.b16 %v829
        %v935 = vunpack.c.h.b16 %v829
        %v936 = vunpack.c.l.b16 %v830
        %v937 = vunpack.c.h.b16 %v830
        %v938 = vunpack.c.l.b16 %v831
        %v939 = vunpack.c.h.b16 %v831
        %v940 = vunpack.c.l.b16 %v832
        %v941 = vunpack.c.h.b16 %v832
        %v942 = vunpack.c.l.b16 %v833
        %v943 = vunpack.c.h.b16 %v833
        %v944 = vunpack.c.l.b16 %v834
        %v945 = vunpack.c.h.b16 %v834
        %v946 = vunpack.c.l.b16 %v835
        %v947 = vunpack.c.h.b16 %v835
        %v948 = vunpack.c.l.b16 %v836
        %v949 = vunpack.c.h.b16 %v836
        %v950 = vunpack.c.l.b16 %v837
        %v951 = vunpack.c.h.b16 %v837
        %v952 = vunpack.c.l.b16 %v838
        %v953 = vunpack.c.h.b16 %v838
        %v954 = vunpack.c.l.b16 %v839
        %v955 = vunpack.c.h.b16 %v839
        %v956 = vunpack.c.l.b16 %v840
        %v957 = vunpack.c.h.b16 %v840
        %v958 = vunpack.c.l.b16 %v841
        %v959 = vunpack.c.h.b16 %v841
        %v960 = vunpack.c.l.b16 %v842
        %v961 = vunpack.c.h.b16 %v842
        %v962 = vunpack.c.l.b16 %v843
        %v963 = vunpack.c.h.b16 %v843
        %v964 = vunpack.c.l.b16 %v844
        %v965 = vunpack.c.h.b16 %v844
        %v966 = vunpack.c.l.b16 %v845
        %v967 = vunpack.c.h.b16 %v845
        %v968 = vunpack.c.l.b16 %v846
        %v969 = vunpack.c.h.b16 %v846
        %v970 = vpack.c.b16 %v908, %v906
        %v971 = vpack.c.b16 %v909, %v907
        %v972 = vpack.c.b16 %v912, %v910
        %v973 = vpack.c.b16 %v913, %v911
        %v974 = vpack.c.b16 %v916, %v914
        %v975 = vpack.c.b16 %v917, %v915
        %v976 = vpack.c.b16 %v920, %v918
        %v977 = vpack.c.b16 %v921, %v919
        %v978 = vpack.c.b16 %v924, %v922
        %v979 = vpack.c.b16 %v925, %v923
        %v980 = vpack.c.b16 %v928, %v926
        %v981 = vpack.c.b16 %v929, %v927
        %v982 = vpack.c.b16 %v932, %v930
        %v983 = vpack.c.b16 %v933, %v931
        %v984 = vpack.c.b16 %v936, %v934
        %v985 = vpack.c.b16 %v937, %v935
        %v986 = vpack.c.b16 %v940, %v938
        %v987 = vpack.c.b16 %v941, %v939
        %v988 = vpack.c.b16 %v944, %v942
        %v989 = vpack.c.b16 %v945, %v943
        %v990 = vpack.c.b16 %v948, %v946
        %v991 = vpack.c.b16 %v949, %v947
        %v992 = vpack.c.b16 %v952, %v950
        %v993 = vpack.c.b16 %v953, %v951
        %v994 = vpack.c.b16 %v956, %v954
        %v995 = vpack.c.b16 %v957, %v955
        %v996 = vpack.c.b16 %v960, %v958
        %v997 = vpack.c.b16 %v961, %v959
        %v998 = vpack.c.b16 %v964, %v962
        %v999 = vpack.c.b16 %v965, %v963
        %v1000 = vpack.c.b16 %v968, %v966
        %v1001 = vpack.c.b16 %v969, %v967
        %1034 = vmatpush.bf16.msra.mxu0 %v984
        %1035 = vmatpush.bf16.msra.mxu0 %v982
        %1036 = vmatpush.bf16.msra.mxu0 %v980
        %1037 = vmatpush.bf16.msra.mxu0 %v978
        %1038 = vmatpush.bf16.msra.mxu0 %v976
        %1039 = vmatpush.bf16.msra.mxu0 %v974
        %1040 = vmatpush.bf16.msra.mxu0 %v972
        %1041 = vmatpush.bf16.msra.mxu0 %v970
        %1042 = vmatmul.bf16.gmra.mxu0 %v859
        %v1043 = vpop.f32.mrf.mxu0
        %v1044 = vadd.f32 0.0, %v1043
        %v1045 = vpop.f32.mrf.mxu0
        %v1046 = vadd.f32 0.0, %v1045
        %1047 = vdwg.mxu0
        %1048 = vmatpush.bf16.msra.mxu0 %v1000
        %1049 = vmatpush.bf16.msra.mxu0 %v998
        %1050 = vmatpush.bf16.msra.mxu0 %v996
        %1051 = vmatpush.bf16.msra.mxu0 %v994
        %1052 = vmatpush.bf16.msra.mxu0 %v992
        %1053 = vmatpush.bf16.msra.mxu0 %v990
        %1054 = vmatpush.bf16.msra.mxu0 %v988
        %1055 = vmatpush.bf16.msra.mxu0 %v986
        %1056 = vmatmul.bf16.gmra.mxu0 %v871
        %v1057 = vpop.f32.mrf.mxu0
        %v1058 = vadd.f32 %v1044, %v1057
        %v1059 = vpop.f32.mrf.mxu0
        %v1060 = vadd.f32 %v1046, %v1059
        %1061 = vdwg.mxu0
        %1062 = vmatpush.bf16.msra.mxu0 %v985
        %1063 = vmatpush.bf16.msra.mxu0 %v983
        %1064 = vmatpush.bf16.msra.mxu0 %v981
        %1065 = vmatpush.bf16.msra.mxu0 %v979
        %1066 = vmatpush.bf16.msra.mxu0 %v977
        %1067 = vmatpush.bf16.msra.mxu0 %v975
        %1068 = vmatpush.bf16.msra.mxu0 %v973
        %1069 = vmatpush.bf16.msra.mxu0 %v971
        %1070 = vmatmul.bf16.gmra.mxu0 %v859
        %v1071 = vpop.f32.mrf.mxu0
        %v1072 = vadd.f32 0.0, %v1071
        %v1073 = vpop.f32.mrf.mxu0
        %v1074 = vadd.f32 0.0, %v1073
        %1075 = vdwg.mxu0
        %1076 = vmatpush.bf16.msra.mxu0 %v1001
        %1077 = vmatpush.bf16.msra.mxu0 %v999
        %1078 = vmatpush.bf16.msra.mxu0 %v997
        %1079 = vmatpush.bf16.msra.mxu0 %v995
        %1080 = vmatpush.bf16.msra.mxu0 %v993
        %1081 = vmatpush.bf16.msra.mxu0 %v991
        %1082 = vmatpush.bf16.msra.mxu0 %v989
        %1083 = vmatpush.bf16.msra.mxu0 %v987
        %1084 = vmatmul.bf16.gmra.mxu0 %v871
        %v1085 = vpop.f32.mrf.mxu0
        %v1086 = vadd.f32 %v1072, %v1085
        %v1087 = vpop.f32.mrf.mxu0
        %v1088 = vadd.f32 %v1074, %v1087
        %1089 = vdwg.mxu0
        %v1090 = vadd.f32 %v773, %v1058
        %v1091 = vadd.f32 %v801, %v1086
        %v1092 = vadd.f32 %v775, %v1060
        %v1093 = vadd.f32 %v803, %v1088
        %v1094 = vld [vmem:[%s226] sm:$0xff]
        %v1095 = vld [vmem:[%s226 + $0x8] sm:$0xff]
        %v1096 = vunpack.c.l.bf16 %v1094
        %v1097 = vunpack.c.h.bf16 %v1094
        %v1098 = vunpack.c.l.bf16 %v1095
        %v1099 = vunpack.c.h.bf16 %v1095
        %v1100 = vadd.f32 %v1090, %v1096
        %v1101 = vadd.f32 %v1091, %v1097
        %v1102 = vadd.f32 %v1092, %v1098
        %v1103 = vadd.f32 %v1093, %v1099
        %1104 = vst [vmem:[#allocation3 + $0x10] sm:$0xff] %v1100
        %1105 = vst [vmem:[#allocation3 + $0x18] sm:$0xff] %v1101
        %1106 = vst [vmem:[#allocation3 + $0x20] sm:$0xff] %v1102
        %1107 = vst [vmem:[#allocation3 + $0x28] sm:$0xff] %v1103
        %v1108 = vld [vmem:[#allocation3] sm:$0x80]
        %v1109 = vld [vmem:[#allocation3 + $0x8] sm:$0x80]
        %v1110 = vld [vmem:[#allocation3 + $0x10] sm:$0xff]
        %v1111 = vld [vmem:[#allocation3 + $0x18] sm:$0xff]
        %v1112 = vld [vmem:[#allocation3 + $0x20] sm:$0x7f]
        %v1113 = vld [vmem:[#allocation3 + $0x28] sm:$0x7f]
        %v1114 = vpack.c.bf16 %v1110, %v1108
        %v1115 = vpack.c.bf16 %v1111, %v1109
        %v1116 = vpack.c.bf16 %v1112, %v1112
        %v1117 = vpack.c.bf16 %v1113, %v1113
        %v1118 = vld [vmem:[#allocation6] sm:$0xff]
        %v1119 = vld [vmem:[#allocation6 + $0x8] sm:$0xff]
        %v1120 = vld [vmem:[#allocation6 + $0x10] sm:$0xff]
        %v1121 = vld [vmem:[#allocation6 + $0x18] sm:$0xff]
        %v1122 = vld [vmem:[#allocation6 + $0x20] sm:$0xff]
        %v1123 = vld [vmem:[#allocation6 + $0x28] sm:$0xff]
        %v1124 = vld [vmem:[#allocation6 + $0x30] sm:$0xff]
        %v1125 = vld [vmem:[#allocation6 + $0x38] sm:$0xff]
        %v1126 = vld [vmem:[#allocation6 + $0x40] sm:$0xff]
        %v1127 = vld [vmem:[#allocation6 + $0x48] sm:$0xff]
        %v1128 = vld [vmem:[#allocation6 + $0x50] sm:$0xff]
        %v1129 = vld [vmem:[#allocation6 + $0x58] sm:$0xff]
        %v1130 = vld [vmem:[#allocation6 + $0x60] sm:$0xff]
        %v1131 = vld [vmem:[#allocation6 + $0x68] sm:$0xff]
        %v1132 = vld [vmem:[#allocation6 + $0x70] sm:$0xff]
        %v1133 = vld [vmem:[#allocation6 + $0x78] sm:$0xff]
        %v1134 = vld [vmem:[#allocation6 + $0x80] sm:$0xff]
        %v1135 = vld [vmem:[#allocation6 + $0x88] sm:$0xff]
        %v1136 = vld [vmem:[#allocation6 + $0x90] sm:$0xff]
        %v1137 = vld [vmem:[#allocation6 + $0x98] sm:$0xff]
        %v1138 = vld [vmem:[#allocation6 + $0xa0] sm:$0xff]
        %v1139 = vld [vmem:[#allocation6 + $0xa8] sm:$0xff]
        %v1140 = vld [vmem:[#allocation6 + $0xb0] sm:$0xff]
        %v1141 = vld [vmem:[#allocation6 + $0xb8] sm:$0xff]
        %v1142 = vld [vmem:[#allocation6 + $0xc0] sm:$0xff]
        %v1143 = vld [vmem:[#allocation6 + $0xc8] sm:$0xff]
        %v1144 = vld [vmem:[#allocation6 + $0xd0] sm:$0xff]
        %v1145 = vld [vmem:[#allocation6 + $0xd8] sm:$0xff]
        %v1146 = vld [vmem:[#allocation6 + $0xe0] sm:$0xff]
        %v1147 = vld [vmem:[#allocation6 + $0xe8] sm:$0xff]
        %v1148 = vld [vmem:[#allocation6 + $0xf0] sm:$0xff]
        %v1149 = vld [vmem:[#allocation6 + $0xf8] sm:$0xff]
        %v1150 = vld [vmem:[#allocation3 + $0x20] sm:$0xff]
        %v1151 = vld [vmem:[#allocation3 + $0x28] sm:$0xff]
        %v1152 = vpack.c.bf16 %v1150, %v1110
        %v1153 = vpack.c.bf16 %v1151, %v1111
        %v1154 = vld [vmem:[#allocation6 + $0x100] sm:$0xff]
        %v1155 = vld [vmem:[#allocation6 + $0x108] sm:$0xff]
        %v1156 = vld [vmem:[#allocation6 + $0x110] sm:$0xff]
        %v1157 = vld [vmem:[#allocation6 + $0x118] sm:$0xff]
        %v1158 = vld [vmem:[#allocation6 + $0x120] sm:$0xff]
        %v1159 = vld [vmem:[#allocation6 + $0x128] sm:$0xff]
        %v1160 = vld [vmem:[#allocation6 + $0x130] sm:$0xff]
        %v1161 = vld [vmem:[#allocation6 + $0x138] sm:$0xff]
        %v1162 = vld [vmem:[#allocation6 + $0x140] sm:$0xff]
        %v1163 = vld [vmem:[#allocation6 + $0x148] sm:$0xff]
        %v1164 = vld [vmem:[#allocation6 + $0x150] sm:$0xff]
        %v1165 = vld [vmem:[#allocation6 + $0x158] sm:$0xff]
        %v1166 = vld [vmem:[#allocation6 + $0x160] sm:$0xff]
        %v1167 = vld [vmem:[#allocation6 + $0x168] sm:$0xff]
        %v1168 = vld [vmem:[#allocation6 + $0x170] sm:$0xff]
        %v1169 = vld [vmem:[#allocation6 + $0x178] sm:$0xff]
        %v1170 = vld [vmem:[#allocation6 + $0x180] sm:$0xff]
        %v1171 = vld [vmem:[#allocation6 + $0x188] sm:$0xff]
        %v1172 = vld [vmem:[#allocation6 + $0x190] sm:$0xff]
        %v1173 = vld [vmem:[#allocation6 + $0x198] sm:$0xff]
        %v1174 = vld [vmem:[#allocation6 + $0x1a0] sm:$0xff]
        %v1175 = vld [vmem:[#allocation6 + $0x1a8] sm:$0xff]
        %v1176 = vld [vmem:[#allocation6 + $0x1b0] sm:$0xff]
        %v1177 = vld [vmem:[#allocation6 + $0x1b8] sm:$0xff]
        %v1178 = vld [vmem:[#allocation6 + $0x1c0] sm:$0xff]
        %v1179 = vld [vmem:[#allocation6 + $0x1c8] sm:$0xff]
        %v1180 = vld [vmem:[#allocation6 + $0x1d0] sm:$0xff]
        %v1181 = vld [vmem:[#allocation6 + $0x1d8] sm:$0xff]
        %v1182 = vld [vmem:[#allocation6 + $0x1e0] sm:$0xff]
        %v1183 = vld [vmem:[#allocation6 + $0x1e8] sm:$0xff]
        %v1184 = vld [vmem:[#allocation6 + $0x1f0] sm:$0xff]
        %v1185 = vld [vmem:[#allocation6 + $0x1f8] sm:$0xff]
        %v1218 = vunpack.c.l.b16 %v1154
        %v1219 = vunpack.c.h.b16 %v1154
        %v1220 = vunpack.c.l.b16 %v1155
        %v1221 = vunpack.c.h.b16 %v1155
        %v1222 = vunpack.c.l.b16 %v1156
        %v1223 = vunpack.c.h.b16 %v1156
        %v1224 = vunpack.c.l.b16 %v1157
        %v1225 = vunpack.c.h.b16 %v1157
        %v1226 = vunpack.c.l.b16 %v1158
        %v1227 = vunpack.c.h.b16 %v1158
        %v1228 = vunpack.c.l.b16 %v1159
        %v1229 = vunpack.c.h.b16 %v1159
        %v1230 = vunpack.c.l.b16 %v1160
        %v1231 = vunpack.c.h.b16 %v1160
        %v1232 = vunpack.c.l.b16 %v1161
        %v1233 = vunpack.c.h.b16 %v1161
        %v1234 = vunpack.c.l.b16 %v1162
        %v1235 = vunpack.c.h.b16 %v1162
        %v1236 = vunpack.c.l.b16 %v1163
        %v1237 = vunpack.c.h.b16 %v1163
        %v1238 = vunpack.c.l.b16 %v1164
        %v1239 = vunpack.c.h.b16 %v1164
        %v1240 = vunpack.c.l.b16 %v1165
        %v1241 = vunpack.c.h.b16 %v1165
        %v1242 = vunpack.c.l.b16 %v1166
        %v1243 = vunpack.c.h.b16 %v1166
        %v1244 = vunpack.c.l.b16 %v1167
        %v1245 = vunpack.c.h.b16 %v1167
        %v1246 = vunpack.c.l.b16 %v1168
        %v1247 = vunpack.c.h.b16 %v1168
        %v1248 = vunpack.c.l.b16 %v1169
        %v1249 = vunpack.c.h.b16 %v1169
        %v1250 = vunpack.c.l.b16 %v1170
        %v1251 = vunpack.c.h.b16 %v1170
        %v1252 = vunpack.c.l.b16 %v1171
        %v1253 = vunpack.c.h.b16 %v1171
        %v1254 = vunpack.c.l.b16 %v1172
        %v1255 = vunpack.c.h.b16 %v1172
        %v1256 = vunpack.c.l.b16 %v1173
        %v1257 = vunpack.c.h.b16 %v1173
        %v1258 = vunpack.c.l.b16 %v1174
        %v1259 = vunpack.c.h.b16 %v1174
        %v1260 = vunpack.c.l.b16 %v1175
        %v1261 = vunpack.c.h.b16 %v1175
        %v1262 = vunpack.c.l.b16 %v1176
        %v1263 = vunpack.c.h.b16 %v1176
        %v1264 = vunpack.c.l.b16 %v1177
        %v1265 = vunpack.c.h.b16 %v1177
        %v1266 = vunpack.c.l.b16 %v1178
        %v1267 = vunpack.c.h.b16 %v1178
        %v1268 = vunpack.c.l.b16 %v1179
        %v1269 = vunpack.c.h.b16 %v1179
        %v1270 = vunpack.c.l.b16 %v1180
        %v1271 = vunpack.c.h.b16 %v1180
        %v1272 = vunpack.c.l.b16 %v1181
        %v1273 = vunpack.c.h.b16 %v1181
        %v1274 = vunpack.c.l.b16 %v1182
        %v1275 = vunpack.c.h.b16 %v1182
        %v1276 = vunpack.c.l.b16 %v1183
        %v1277 = vunpack.c.h.b16 %v1183
        %v1278 = vunpack.c.l.b16 %v1184
        %v1279 = vunpack.c.h.b16 %v1184
        %v1280 = vunpack.c.l.b16 %v1185
        %v1281 = vunpack.c.h.b16 %v1185
        %v1282 = vpack.c.b16 %v1220, %v1218
        %v1283 = vpack.c.b16 %v1221, %v1219
        %v1284 = vpack.c.b16 %v1224, %v1222
        %v1285 = vpack.c.b16 %v1225, %v1223
        %v1286 = vpack.c.b16 %v1228, %v1226
        %v1287 = vpack.c.b16 %v1229, %v1227
        %v1288 = vpack.c.b16 %v1232, %v1230
        %v1289 = vpack.c.b16 %v1233, %v1231
        %v1290 = vpack.c.b16 %v1236, %v1234
        %v1291 = vpack.c.b16 %v1237, %v1235
        %v1292 = vpack.c.b16 %v1240, %v1238
        %v1293 = vpack.c.b16 %v1241, %v1239
        %v1294 = vpack.c.b16 %v1244, %v1242
        %v1295 = vpack.c.b16 %v1245, %v1243
        %v1296 = vpack.c.b16 %v1248, %v1246
        %v1297 = vpack.c.b16 %v1249, %v1247
        %v1298 = vpack.c.b16 %v1252, %v1250
        %v1299 = vpack.c.b16 %v1253, %v1251
        %v1300 = vpack.c.b16 %v1256, %v1254
        %v1301 = vpack.c.b16 %v1257, %v1255
        %v1302 = vpack.c.b16 %v1260, %v1258
        %v1303 = vpack.c.b16 %v1261, %v1259
        %v1304 = vpack.c.b16 %v1264, %v1262
        %v1305 = vpack.c.b16 %v1265, %v1263
        %v1306 = vpack.c.b16 %v1268, %v1266
        %v1307 = vpack.c.b16 %v1269, %v1267
        %v1308 = vpack.c.b16 %v1272, %v1270
        %v1309 = vpack.c.b16 %v1273, %v1271
        %v1310 = vpack.c.b16 %v1276, %v1274
        %v1311 = vpack.c.b16 %v1277, %v1275
        %v1312 = vpack.c.b16 %v1280, %v1278
        %v1313 = vpack.c.b16 %v1281, %v1279
        %1346 = vmatpush.bf16.msra.mxu0 %v1296
        %1347 = vmatpush.bf16.msra.mxu0 %v1294
        %1348 = vmatpush.bf16.msra.mxu0 %v1292
        %1349 = vmatpush.bf16.msra.mxu0 %v1290
        %1350 = vmatpush.bf16.msra.mxu0 %v1288
        %1351 = vmatpush.bf16.msra.mxu0 %v1286
        %1352 = vmatpush.bf16.msra.mxu0 %v1284
        %1353 = vmatpush.bf16.msra.mxu0 %v1282
        %1354 = vmatmul.bf16.gmra.mxu0 %v1152
        %v1355 = vpop.f32.mrf.mxu0
        %v1356 = vadd.f32 0.0, %v1355
        %v1357 = vpop.f32.mrf.mxu0
        %v1358 = vadd.f32 0.0, %v1357
        %1359 = vdwg.mxu0
        %1360 = vmatpush.bf16.msra.mxu0 %v1312
        %1361 = vmatpush.bf16.msra.mxu0 %v1310
        %1362 = vmatpush.bf16.msra.mxu0 %v1308
        %1363 = vmatpush.bf16.msra.mxu0 %v1306
        %1364 = vmatpush.bf16.msra.mxu0 %v1304
        %1365 = vmatpush.bf16.msra.mxu0 %v1302
        %1366 = vmatpush.bf16.msra.mxu0 %v1300
        %1367 = vmatpush.bf16.msra.mxu0 %v1298
        %1368 = vmatmul.bf16.gmra.mxu0 %v1153
        %v1369 = vpop.f32.mrf.mxu0
        %v1370 = vadd.f32 %v1356, %v1369
        %v1371 = vpop.f32.mrf.mxu0
        %v1372 = vadd.f32 %v1358, %v1371
        %1373 = vdwg.mxu0
        %1374 = vmatpush.bf16.msra.mxu0 %v1297
        %1375 = vmatpush.bf16.msra.mxu0 %v1295
        %1376 = vmatpush.bf16.msra.mxu0 %v1293
        %1377 = vmatpush.bf16.msra.mxu0 %v1291
        %1378 = vmatpush.bf16.msra.mxu0 %v1289
        %1379 = vmatpush.bf16.msra.mxu0 %v1287
        %1380 = vmatpush.bf16.msra.mxu0 %v1285
        %1381 = vmatpush.bf16.msra.mxu0 %v1283
        %1382 = vmatmul.bf16.gmra.mxu0 %v1152
        %v1383 = vpop.f32.mrf.mxu0
        %v1384 = vadd.f32 0.0, %v1383
        %v1385 = vpop.f32.mrf.mxu0
        %v1386 = vadd.f32 0.0, %v1385
        %1387 = vdwg.mxu0
        %1388 = vmatpush.bf16.msra.mxu0 %v1313
        %1389 = vmatpush.bf16.msra.mxu0 %v1311
        %1390 = vmatpush.bf16.msra.mxu0 %v1309
        %1391 = vmatpush.bf16.msra.mxu0 %v1307
        %1392 = vmatpush.bf16.msra.mxu0 %v1305
        %1393 = vmatpush.bf16.msra.mxu0 %v1303
        %1394 = vmatpush.bf16.msra.mxu0 %v1301
        %1395 = vmatpush.bf16.msra.mxu0 %v1299
        %1396 = vmatmul.bf16.gmra.mxu0 %v1153
        %v1397 = vpop.f32.mrf.mxu0
        %v1398 = vadd.f32 %v1384, %v1397
        %v1399 = vpop.f32.mrf.mxu0
        %v1400 = vadd.f32 %v1386, %v1399
        %1401 = vdwg.mxu0
        %v1403 = vshrl.u32 %v1114, 16
        %v1405 = vrot.slane %v1403, 3
        %v1406 = vshll.u32 %v1114, 16
        %v1408 = vrot.slane %v1406, 4
        %v1409 = vor.u32 %v1405, %v1408
        %v1411 = vshrl.u32 %v1116, 16
        %v1413 = vrot.slane %v1411, 3
        %v1414 = vshll.u32 %v1116, 16
        %v1416 = vrot.slane %v1414, 4
        %v1417 = vor.u32 %v1413, %v1416
        %v1418 = vsel %vm552, %v1409, %v1417
        %v1420 = vshrl.u32 %v1115, 16
        %v1422 = vrot.slane %v1420, 3
        %v1423 = vshll.u32 %v1115, 16
        %v1425 = vrot.slane %v1423, 4
        %v1426 = vor.u32 %v1422, %v1425
        %v1428 = vshrl.u32 %v1117, 16
        %v1430 = vrot.slane %v1428, 3
        %v1431 = vshll.u32 %v1117, 16
        %v1433 = vrot.slane %v1431, 4
        %v1434 = vor.u32 %v1430, %v1433
        %v1435 = vsel %vm552, %v1426, %v1434
        %v1470 = vunpack.c.l.b16 %v1118
        %v1471 = vunpack.c.h.b16 %v1118
        %v1472 = vunpack.c.l.b16 %v1119
        %v1473 = vunpack.c.h.b16 %v1119
        %v1474 = vunpack.c.l.b16 %v1120
        %v1475 = vunpack.c.h.b16 %v1120
        %v1476 = vunpack.c.l.b16 %v1121
        %v1477 = vunpack.c.h.b16 %v1121
        %v1478 = vunpack.c.l.b16 %v1122
        %v1479 = vunpack.c.h.b16 %v1122
        %v1480 = vunpack.c.l.b16 %v1123
        %v1481 = vunpack.c.h.b16 %v1123
        %v1482 = vunpack.c.l.b16 %v1124
        %v1483 = vunpack.c.h.b16 %v1124
        %v1484 = vunpack.c.l.b16 %v1125
        %v1485 = vunpack.c.h.b16 %v1125
        %v1486 = vunpack.c.l.b16 %v1126
        %v1487 = vunpack.c.h.b16 %v1126
        %v1488 = vunpack.c.l.b16 %v1127
        %v1489 = vunpack.c.h.b16 %v1127
        %v1490 = vunpack.c.l.b16 %v1128
        %v1491 = vunpack.c.h.b16 %v1128
        %v1492 = vunpack.c.l.b16 %v1129
        %v1493 = vunpack.c.h.b16 %v1129
        %v1494 = vunpack.c.l.b16 %v1130
        %v1495 = vunpack.c.h.b16 %v1130
        %v1496 = vunpack.c.l.b16 %v1131
        %v1497 = vunpack.c.h.b16 %v1131
        %v1498 = vunpack.c.l.b16 %v1132
        %v1499 = vunpack.c.h.b16 %v1132
        %v1500 = vunpack.c.l.b16 %v1133
        %v1501 = vunpack.c.h.b16 %v1133
        %v1502 = vunpack.c.l.b16 %v1134
        %v1503 = vunpack.c.h.b16 %v1134
        %v1504 = vunpack.c.l.b16 %v1135
        %v1505 = vunpack.c.h.b16 %v1135
        %v1506 = vunpack.c.l.b16 %v1136
        %v1507 = vunpack.c.h.b16 %v1136
        %v1508 = vunpack.c.l.b16 %v1137
        %v1509 = vunpack.c.h.b16 %v1137
        %v1510 = vunpack.c.l.b16 %v1138
        %v1511 = vunpack.c.h.b16 %v1138
        %v1512 = vunpack.c.l.b16 %v1139
        %v1513 = vunpack.c.h.b16 %v1139
        %v1514 = vunpack.c.l.b16 %v1140
        %v1515 = vunpack.c.h.b16 %v1140
        %v1516 = vunpack.c.l.b16 %v1141
        %v1517 = vunpack.c.h.b16 %v1141
        %v1518 = vunpack.c.l.b16 %v1142
        %v1519 = vunpack.c.h.b16 %v1142
        %v1520 = vunpack.c.l.b16 %v1143
        %v1521 = vunpack.c.h.b16 %v1143
        %v1522 = vunpack.c.l.b16 %v1144
        %v1523 = vunpack.c.h.b16 %v1144
        %v1524 = vunpack.c.l.b16 %v1145
        %v1525 = vunpack.c.h.b16 %v1145
        %v1526 = vunpack.c.l.b16 %v1146
        %v1527 = vunpack.c.h.b16 %v1146
        %v1528 = vunpack.c.l.b16 %v1147
        %v1529 = vunpack.c.h.b16 %v1147
        %v1530 = vunpack.c.l.b16 %v1148
        %v1531 = vunpack.c.h.b16 %v1148
        %v1532 = vunpack.c.l.b16 %v1149
        %v1533 = vunpack.c.h.b16 %v1149
        %v1534 = vpack.c.b16 %v1472, %v1470
        %v1535 = vpack.c.b16 %v1473, %v1471
        %v1536 = vpack.c.b16 %v1476, %v1474
        %v1537 = vpack.c.b16 %v1477, %v1475
        %v1538 = vpack.c.b16 %v1480, %v1478
        %v1539 = vpack.c.b16 %v1481, %v1479
        %v1540 = vpack.c.b16 %v1484, %v1482
        %v1541 = vpack.c.b16 %v1485, %v1483
        %v1542 = vpack.c.b16 %v1488, %v1486
        %v1543 = vpack.c.b16 %v1489, %v1487
        %v1544 = vpack.c.b16 %v1492, %v1490
        %v1545 = vpack.c.b16 %v1493, %v1491
        %v1546 = vpack.c.b16 %v1496, %v1494
        %v1547 = vpack.c.b16 %v1497, %v1495
        %v1548 = vpack.c.b16 %v1500, %v1498
        %v1549 = vpack.c.b16 %v1501, %v1499
        %v1550 = vpack.c.b16 %v1504, %v1502
        %v1551 = vpack.c.b16 %v1505, %v1503
        %v1552 = vpack.c.b16 %v1508, %v1506
        %v1553 = vpack.c.b16 %v1509, %v1507
        %v1554 = vpack.c.b16 %v1512, %v1510
        %v1555 = vpack.c.b16 %v1513, %v1511
        %v1556 = vpack.c.b16 %v1516, %v1514
        %v1557 = vpack.c.b16 %v1517, %v1515
        %v1558 = vpack.c.b16 %v1520, %v1518
        %v1559 = vpack.c.b16 %v1521, %v1519
        %v1560 = vpack.c.b16 %v1524, %v1522
        %v1561 = vpack.c.b16 %v1525, %v1523
        %v1562 = vpack.c.b16 %v1528, %v1526
        %v1563 = vpack.c.b16 %v1529, %v1527
        %v1564 = vpack.c.b16 %v1532, %v1530
        %v1565 = vpack.c.b16 %v1533, %v1531
        %1598 = vmatpush.bf16.msra.mxu0 %v1548
        %1599 = vmatpush.bf16.msra.mxu0 %v1546
        %1600 = vmatpush.bf16.msra.mxu0 %v1544
        %1601 = vmatpush.bf16.msra.mxu0 %v1542
        %1602 = vmatpush.bf16.msra.mxu0 %v1540
        %1603 = vmatpush.bf16.msra.mxu0 %v1538
        %1604 = vmatpush.bf16.msra.mxu0 %v1536
        %1605 = vmatpush.bf16.msra.mxu0 %v1534
        %1606 = vmatmul.bf16.gmra.mxu0 %v1418
        %v1607 = vpop.f32.mrf.mxu0
        %v1608 = vadd.f32 %v1370, %v1607
        %v1609 = vpop.f32.mrf.mxu0
        %v1610 = vadd.f32 %v1372, %v1609
        %1611 = vdwg.mxu0
        %1612 = vmatpush.bf16.msra.mxu0 %v1564
        %1613 = vmatpush.bf16.msra.mxu0 %v1562
        %1614 = vmatpush.bf16.msra.mxu0 %v1560
        %1615 = vmatpush.bf16.msra.mxu0 %v1558
        %1616 = vmatpush.bf16.msra.mxu0 %v1556
        %1617 = vmatpush.bf16.msra.mxu0 %v1554
        %1618 = vmatpush.bf16.msra.mxu0 %v1552
        %1619 = vmatpush.bf16.msra.mxu0 %v1550
        %1620 = vmatmul.bf16.gmra.mxu0 %v1435
        %v1621 = vpop.f32.mrf.mxu0
        %v1622 = vadd.f32 %v1608, %v1621
        %v1623 = vpop.f32.mrf.mxu0
        %v1624 = vadd.f32 %v1610, %v1623
        %1625 = vdwg.mxu0
        %1626 = vmatpush.bf16.msra.mxu0 %v1549
        %1627 = vmatpush.bf16.msra.mxu0 %v1547
        %1628 = vmatpush.bf16.msra.mxu0 %v1545
        %1629 = vmatpush.bf16.msra.mxu0 %v1543
        %1630 = vmatpush.bf16.msra.mxu0 %v1541
        %1631 = vmatpush.bf16.msra.mxu0 %v1539
        %1632 = vmatpush.bf16.msra.mxu0 %v1537
        %1633 = vmatpush.bf16.msra.mxu0 %v1535
        %1634 = vmatmul.bf16.gmra.mxu0 %v1418
        %v1635 = vpop.f32.mrf.mxu0
        %v1636 = vadd.f32 %v1398, %v1635
        %v1637 = vpop.f32.mrf.mxu0
        %v1638 = vadd.f32 %v1400, %v1637
        %1639 = vdwg.mxu0
        %1640 = vmatpush.bf16.msra.mxu0 %v1565
        %1641 = vmatpush.bf16.msra.mxu0 %v1563
        %1642 = vmatpush.bf16.msra.mxu0 %v1561
        %1643 = vmatpush.bf16.msra.mxu0 %v1559
        %1644 = vmatpush.bf16.msra.mxu0 %v1557
        %1645 = vmatpush.bf16.msra.mxu0 %v1555
        %1646 = vmatpush.bf16.msra.mxu0 %v1553
        %1647 = vmatpush.bf16.msra.mxu0 %v1551
        %1648 = vmatmul.bf16.gmra.mxu0 %v1435
        %v1649 = vpop.f32.mrf.mxu0
        %v1650 = vadd.f32 %v1636, %v1649
        %v1651 = vpop.f32.mrf.mxu0
        %v1652 = vadd.f32 %v1638, %v1651
        %1653 = vdwg.mxu0
        %v1654 = vld [vmem:[#allocation3 + $0x10] sm:$0xfe]
        %v1655 = vld [vmem:[#allocation3 + $0x18] sm:$0xfe]
        %v1656 = vld [vmem:[#allocation3 + $0x20] sm:$0xff]
        %v1657 = vld [vmem:[#allocation3 + $0x28] sm:$0xff]
        %v1658 = vld [vmem:[#allocation3 + $0x30] sm:$0x1]
        %v1659 = vld [vmem:[#allocation3 + $0x38] sm:$0x1]
        %v1660 = vpack.c.bf16 %v1656, %v1654
        %v1661 = vpack.c.bf16 %v1657, %v1655
        %v1662 = vpack.c.bf16 %v1658, %v1658
        %v1663 = vpack.c.bf16 %v1659, %v1659
        %v1664 = vld [vmem:[#allocation6 + $0x200] sm:$0xff]
        %v1665 = vld [vmem:[#allocation6 + $0x208] sm:$0xff]
        %v1666 = vld [vmem:[#allocation6 + $0x210] sm:$0xff]
        %v1667 = vld [vmem:[#allocation6 + $0x218] sm:$0xff]
        %v1668 = vld [vmem:[#allocation6 + $0x220] sm:$0xff]
        %v1669 = vld [vmem:[#allocation6 + $0x228] sm:$0xff]
        %v1670 = vld [vmem:[#allocation6 + $0x230] sm:$0xff]
        %v1671 = vld [vmem:[#allocation6 + $0x238] sm:$0xff]
        %v1672 = vld [vmem:[#allocation6 + $0x240] sm:$0xff]
        %v1673 = vld [vmem:[#allocation6 + $0x248] sm:$0xff]
        %v1674 = vld [vmem:[#allocation6 + $0x250] sm:$0xff]
        %v1675 = vld [vmem:[#allocation6 + $0x258] sm:$0xff]
        %v1676 = vld [vmem:[#allocation6 + $0x260] sm:$0xff]
        %v1677 = vld [vmem:[#allocation6 + $0x268] sm:$0xff]
        %v1678 = vld [vmem:[#allocation6 + $0x270] sm:$0xff]
        %v1679 = vld [vmem:[#allocation6 + $0x278] sm:$0xff]
        %v1680 = vld [vmem:[#allocation6 + $0x280] sm:$0xff]
        %v1681 = vld [vmem:[#allocation6 + $0x288] sm:$0xff]
        %v1682 = vld [vmem:[#allocation6 + $0x290] sm:$0xff]
        %v1683 = vld [vmem:[#allocation6 + $0x298] sm:$0xff]
        %v1684 = vld [vmem:[#allocation6 + $0x2a0] sm:$0xff]
        %v1685 = vld [vmem:[#allocation6 + $0x2a8] sm:$0xff]
        %v1686 = vld [vmem:[#allocation6 + $0x2b0] sm:$0xff]
        %v1687 = vld [vmem:[#allocation6 + $0x2b8] sm:$0xff]
        %v1688 = vld [vmem:[#allocation6 + $0x2c0] sm:$0xff]
        %v1689 = vld [vmem:[#allocation6 + $0x2c8] sm:$0xff]
        %v1690 = vld [vmem:[#allocation6 + $0x2d0] sm:$0xff]
        %v1691 = vld [vmem:[#allocation6 + $0x2d8] sm:$0xff]
        %v1692 = vld [vmem:[#allocation6 + $0x2e0] sm:$0xff]
        %v1693 = vld [vmem:[#allocation6 + $0x2e8] sm:$0xff]
        %v1694 = vld [vmem:[#allocation6 + $0x2f0] sm:$0xff]
        %v1695 = vld [vmem:[#allocation6 + $0x2f8] sm:$0xff]
        %v1697 = vshrl.u32 %v1660, 16
        %v1699 = vshll.u32 %v1660, 16
        %v1701 = vrot.slane %v1699, 1
        %v1702 = vor.u32 %v1697, %v1701
        %v1704 = vshll.u32 %v1662, 16
        %v1706 = vrot.slane %v1704, 1
        %v1707 = vsel %vm847, %v1702, %v1706
        %v1709 = vshrl.u32 %v1661, 16
        %v1711 = vshll.u32 %v1661, 16
        %v1713 = vrot.slane %v1711, 1
        %v1714 = vor.u32 %v1709, %v1713
        %v1716 = vshll.u32 %v1663, 16
        %v1718 = vrot.slane %v1716, 1
        %v1719 = vsel %vm847, %v1714, %v1718
        %v1754 = vunpack.c.l.b16 %v1664
        %v1755 = vunpack.c.h.b16 %v1664
        %v1756 = vunpack.c.l.b16 %v1665
        %v1757 = vunpack.c.h.b16 %v1665
        %v1758 = vunpack.c.l.b16 %v1666
        %v1759 = vunpack.c.h.b16 %v1666
        %v1760 = vunpack.c.l.b16 %v1667
        %v1761 = vunpack.c.h.b16 %v1667
        %v1762 = vunpack.c.l.b16 %v1668
        %v1763 = vunpack.c.h.b16 %v1668
        %v1764 = vunpack.c.l.b16 %v1669
        %v1765 = vunpack.c.h.b16 %v1669
        %v1766 = vunpack.c.l.b16 %v1670
        %v1767 = vunpack.c.h.b16 %v1670
        %v1768 = vunpack.c.l.b16 %v1671
        %v1769 = vunpack.c.h.b16 %v1671
        %v1770 = vunpack.c.l.b16 %v1672
        %v1771 = vunpack.c.h.b16 %v1672
        %v1772 = vunpack.c.l.b16 %v1673
        %v1773 = vunpack.c.h.b16 %v1673
        %v1774 = vunpack.c.l.b16 %v1674
        %v1775 = vunpack.c.h.b16 %v1674
        %v1776 = vunpack.c.l.b16 %v1675
        %v1777 = vunpack.c.h.b16 %v1675
        %v1778 = vunpack.c.l.b16 %v1676
        %v1779 = vunpack.c.h.b16 %v1676
        %v1780 = vunpack.c.l.b16 %v1677
        %v1781 = vunpack.c.h.b16 %v1677
        %v1782 = vunpack.c.l.b16 %v1678
        %v1783 = vunpack.c.h.b16 %v1678
        %v1784 = vunpack.c.l.b16 %v1679
        %v1785 = vunpack.c.h.b16 %v1679
        %v1786 = vunpack.c.l.b16 %v1680
        %v1787 = vunpack.c.h.b16 %v1680
        %v1788 = vunpack.c.l.b16 %v1681
        %v1789 = vunpack.c.h.b16 %v1681
        %v1790 = vunpack.c.l.b16 %v1682
        %v1791 = vunpack.c.h.b16 %v1682
        %v1792 = vunpack.c.l.b16 %v1683
        %v1793 = vunpack.c.h.b16 %v1683
        %v1794 = vunpack.c.l.b16 %v1684
        %v1795 = vunpack.c.h.b16 %v1684
        %v1796 = vunpack.c.l.b16 %v1685
        %v1797 = vunpack.c.h.b16 %v1685
        %v1798 = vunpack.c.l.b16 %v1686
        %v1799 = vunpack.c.h.b16 %v1686
        %v1800 = vunpack.c.l.b16 %v1687
        %v1801 = vunpack.c.h.b16 %v1687
        %v1802 = vunpack.c.l.b16 %v1688
        %v1803 = vunpack.c.h.b16 %v1688
        %v1804 = vunpack.c.l.b16 %v1689
        %v1805 = vunpack.c.h.b16 %v1689
        %v1806 = vunpack.c.l.b16 %v1690
        %v1807 = vunpack.c.h.b16 %v1690
        %v1808 = vunpack.c.l.b16 %v1691
        %v1809 = vunpack.c.h.b16 %v1691
        %v1810 = vunpack.c.l.b16 %v1692
        %v1811 = vunpack.c.h.b16 %v1692
        %v1812 = vunpack.c.l.b16 %v1693
        %v1813 = vunpack.c.h.b16 %v1693
        %v1814 = vunpack.c.l.b16 %v1694
        %v1815 = vunpack.c.h.b16 %v1694
        %v1816 = vunpack.c.l.b16 %v1695
        %v1817 = vunpack.c.h.b16 %v1695
        %v1818 = vpack.c.b16 %v1756, %v1754
        %v1819 = vpack.c.b16 %v1757, %v1755
        %v1820 = vpack.c.b16 %v1760, %v1758
        %v1821 = vpack.c.b16 %v1761, %v1759
        %v1822 = vpack.c.b16 %v1764, %v1762
        %v1823 = vpack.c.b16 %v1765, %v1763
        %v1824 = vpack.c.b16 %v1768, %v1766
        %v1825 = vpack.c.b16 %v1769, %v1767
        %v1826 = vpack.c.b16 %v1772, %v1770
        %v1827 = vpack.c.b16 %v1773, %v1771
        %v1828 = vpack.c.b16 %v1776, %v1774
        %v1829 = vpack.c.b16 %v1777, %v1775
        %v1830 = vpack.c.b16 %v1780, %v1778
        %v1831 = vpack.c.b16 %v1781, %v1779
        %v1832 = vpack.c.b16 %v1784, %v1782
        %v1833 = vpack.c.b16 %v1785, %v1783
        %v1834 = vpack.c.b16 %v1788, %v1786
        %v1835 = vpack.c.b16 %v1789, %v1787
        %v1836 = vpack.c.b16 %v1792, %v1790
        %v1837 = vpack.c.b16 %v1793, %v1791
        %v1838 = vpack.c.b16 %v1796, %v1794
        %v1839 = vpack.c.b16 %v1797, %v1795
        %v1840 = vpack.c.b16 %v1800, %v1798
        %v1841 = vpack.c.b16 %v1801, %v1799
        %v1842 = vpack.c.b16 %v1804, %v1802
        %v1843 = vpack.c.b16 %v1805, %v1803
        %v1844 = vpack.c.b16 %v1808, %v1806
        %v1845 = vpack.c.b16 %v1809, %v1807
        %v1846 = vpack.c.b16 %v1812, %v1810
        %v1847 = vpack.c.b16 %v1813, %v1811
        %v1848 = vpack.c.b16 %v1816, %v1814
        %v1849 = vpack.c.b16 %v1817, %v1815
        %1882 = vmatpush.bf16.msra.mxu0 %v1832
        %1883 = vmatpush.bf16.msra.mxu0 %v1830
        %1884 = vmatpush.bf16.msra.mxu0 %v1828
        %1885 = vmatpush.bf16.msra.mxu0 %v1826
        %1886 = vmatpush.bf16.msra.mxu0 %v1824
        %1887 = vmatpush.bf16.msra.mxu0 %v1822
        %1888 = vmatpush.bf16.msra.mxu0 %v1820
        %1889 = vmatpush.bf16.msra.mxu0 %v1818
        %1890 = vmatmul.bf16.gmra.mxu0 %v1707
        %v1891 = vpop.f32.mrf.mxu0
        %v1892 = vadd.f32 0.0, %v1891
        %v1893 = vpop.f32.mrf.mxu0
        %v1894 = vadd.f32 0.0, %v1893
        %1895 = vdwg.mxu0
        %1896 = vmatpush.bf16.msra.mxu0 %v1848
        %1897 = vmatpush.bf16.msra.mxu0 %v1846
        %1898 = vmatpush.bf16.msra.mxu0 %v1844
        %1899 = vmatpush.bf16.msra.mxu0 %v1842
        %1900 = vmatpush.bf16.msra.mxu0 %v1840
        %1901 = vmatpush.bf16.msra.mxu0 %v1838
        %1902 = vmatpush.bf16.msra.mxu0 %v1836
        %1903 = vmatpush.bf16.msra.mxu0 %v1834
        %1904 = vmatmul.bf16.gmra.mxu0 %v1719
        %v1905 = vpop.f32.mrf.mxu0
        %v1906 = vadd.f32 %v1892, %v1905
        %v1907 = vpop.f32.mrf.mxu0
        %v1908 = vadd.f32 %v1894, %v1907
        %1909 = vdwg.mxu0
        %1910 = vmatpush.bf16.msra.mxu0 %v1833
        %1911 = vmatpush.bf16.msra.mxu0 %v1831
        %1912 = vmatpush.bf16.msra.mxu0 %v1829
        %1913 = vmatpush.bf16.msra.mxu0 %v1827
        %1914 = vmatpush.bf16.msra.mxu0 %v1825
        %1915 = vmatpush.bf16.msra.mxu0 %v1823
        %1916 = vmatpush.bf16.msra.mxu0 %v1821
        %1917 = vmatpush.bf16.msra.mxu0 %v1819
        %1918 = vmatmul.bf16.gmra.mxu0 %v1707
        %v1919 = vpop.f32.mrf.mxu0
        %v1920 = vadd.f32 0.0, %v1919
        %v1921 = vpop.f32.mrf.mxu0
        %v1922 = vadd.f32 0.0, %v1921
        %1923 = vdwg.mxu0
        %1924 = vmatpush.bf16.msra.mxu0 %v1849
        %1925 = vmatpush.bf16.msra.mxu0 %v1847
        %1926 = vmatpush.bf16.msra.mxu0 %v1845
        %1927 = vmatpush.bf16.msra.mxu0 %v1843
        %1928 = vmatpush.bf16.msra.mxu0 %v1841
        %1929 = vmatpush.bf16.msra.mxu0 %v1839
        %1930 = vmatpush.bf16.msra.mxu0 %v1837
        %1931 = vmatpush.bf16.msra.mxu0 %v1835
        %1932 = vmatmul.bf16.gmra.mxu0 %v1719
        %v1933 = vpop.f32.mrf.mxu0
        %v1934 = vadd.f32 %v1920, %v1933
        %v1935 = vpop.f32.mrf.mxu0
        %v1936 = vadd.f32 %v1922, %v1935
        %1937 = vdwg.mxu0
        %v1938 = vadd.f32 %v1622, %v1906
        %v1939 = vadd.f32 %v1650, %v1934
        %v1940 = vadd.f32 %v1624, %v1908
        %v1941 = vadd.f32 %v1652, %v1936
        %v1942 = vld [vmem:[%s3] sm:$0x3]
        %v1944 = vperm.slane %v1942, 0
        %v1945 = vperm.slane %v1942, 1
        %v1948 = vadd.f32 %v1938, %v1944
        %v1949 = vadd.f32 %v1939, %v1945
        %v1950 = vadd.f32 %v1940, %v1944
        %v1951 = vadd.f32 %v1941, %v1945
        %v1952 = vpack.c.bf16 %v1949, %v1948
        %v1953 = vpack.c.bf16 %v1951, %v1950
        %1954 = vst [vmem:[%s231] sm:$0xff] %v1952
        %1955 = vst [vmem:[%s231 + $0x8] sm:$0xff] %v1953
        %p1956 = scmp.lt.s32.totalorder %s17, 1
        %s1957 = scalar_select %p1956, %s17, 1
        %s1958 = smul.addr %s1957, 4
        %s1959 = smul.addr %s1958, 4
        %s1960 = scalar_lea.vmem %s4, %s1959
        // Predicated region
        $region45: #{doft_forward.4} parent=35 // pred_check
          %p1961 = pneg %p124
        $region46: #{doft_forward.4} parent=35 // pred_check_branch
          %1963 = sbr.rel (%p1961) target = $region48
        $region47: #{doft_forward.4} parent=35 // pred_region
          _
        $region48: #{doft_forward.4} parent=35 // pred_fallthru
          _
      $region36: #{doft_forward.4} parent=5 // pred_fallthru
        _
      %p1964 = scmp.le.s32.totalorder 2, %s12
      // Predicated region
      $region49: #{doft_forward.4} parent=5 // pred_check
        %p1965 = pneg %p1964
      $region50: #{doft_forward.4} parent=5 // pred_check_branch
        %1967 = sbr.rel (%p1965) target = $region52
      $region51: #{doft_forward.4} parent=5 // pred_region
        %s1968 = ssub.s32 %s12, 2
        // Predicated region
        $region53: #{doft_forward.4} parent=51 // pred_check
          %p1969 = pneg %p130
        $region54: #{doft_forward.4} parent=51 // pred_check_branch
          %1971 = sbr.rel (%p1969) target = $region56
        $region55: #{doft_forward.4} parent=51 // pred_region
          %p1972 = scmp.lt.s32.totalorder %s18, 1
          %s1973 = scalar_select %p1972, %s18, 1
          %s1974 = smul.addr %s1973, 4
          %s1975 = smul.addr %s1974, 4
          %s1976 = scalar_lea.vmem %s4, %s1975
        $region56: #{doft_forward.4} parent=51 // pred_fallthru
          _
      $region52: #{doft_forward.4} parent=5 // pred_fallthru
        _
    $region6: #{doft_forward.4} parent=1 // loop_footer
      %s16 = sadd.s32 1, %s12
    $region7: #{doft_forward.4} parent=1 // loop_footer_branch
      %11 = sbr.rel target = $region3
    $region8: #{doft_forward.4} parent=1 // loop_exit
      _
    %1977 = vsyncpa [#allocation5], 1
    %s1978 = scalar_lea.sflag [#allocation5], 1
    %1979 = vsyncpa %s1978, 1
    %1980 = vsyncpa [#allocation7], 1

// kernel: doft_forward.3
$region0: #{doft_forward.3}
  #allocation0 [shape = 'u32[]', space=smem, size = 0x4, offset = 0x4, fixed_abs, tag = 'smem constant byte address 0x4 - core index']
  #allocation1 [shape = 'u32[72,128]{1,0:T(1,128)}', space=vmem, size = 0x9000, scoped, tag = 'internal scratch']
  #allocation2 [shape = 'f32[25,256]{1,0:T(8,128)}', space=vmem, size = 0x8000, scoped, tag = 'scratch operand']
  #allocation3 [shape = 'f32[25,256]{1,0:T(8,128)}', space=vmem, size = 0x8000, scoped, tag = 'scratch operand']
  %s0 = inlined_call_operand.vmem [shape: f32[2,16,256], index: 0, kind: input, shape index: {}]
  %s1 = inlined_call_operand.hbm [shape: bf16[768,256], index: 1, kind: input, shape index: {}]
  %s2 = inlined_call_operand.vmem [shape: f32[1,256], index: 2, kind: input, shape index: {}]
  %s3 = inlined_call_operand.hbm [shape: bf16[768,256], index: 3, kind: input, shape index: {}]
  %s4 = inlined_call_operand.vmem [shape: f32[1,256], index: 4, kind: input, shape index: {}]
  %s5 = inlined_call_operand.vmem [shape: f32[256,4], index: 5, kind: input, shape index: {}]
  %s6 = inlined_call_operand.vmem [shape: f32[1,4], index: 6, kind: input, shape index: {}]
  %s7 = inlined_call_operand.vmem [shape: f32[4,256], index: 7, kind: input, shape index: {}]
  %s8 = inlined_call_operand.vmem [shape: f32[1,256], index: 8, kind: input, shape index: {}]
  %s9 = inlined_call_operand.vmem [shape: bf16[2,16,256], index: 9, kind: output, shape index: {}]
  %s10 = sld [smem:[#allocation0]]
  $region77: #{doft_forward.3} parent=0
    _
  %s12 = ssub.s32 1, %s10
  %s13 = scalar_select 0, %s12, %s10
  $region1: #{doft_forward.3} parent=0
    #allocation4 [shape = 'u8[393216]{0}', space=vmem, size = 0x60000, scoped, tag = 'input window, operand 1, single buffered']
    #allocation5 [shape = 's32[2]{0}', space=sflag, size = 0x8, scoped, tag = 'scoped memory for doft_forward.3']
    #allocation6 [shape = 'u8[393216]{0}', space=vmem, size = 0x60000, scoped, tag = 'input window, operand 3, single buffered']
    #allocation7 [shape = 's32[1]{0}', space=sflag, size = 0x4, scoped, tag = 'scoped memory for doft_forward.3']
    %14 = vsyncpa [#allocation5], 0
    %15 = vsyncpa [#allocation7], 0
    loop: start=0, step=1, limit=4
    $region2: #{doft_forward.3} parent=1 // loop_pre_header
      _
    $region3: #{doft_forward.3} parent=1 // loop_header
      %s17 = sphi 0, %s21
      %p18 = scmp.ge.s32.totalorder %s17, 4
      %s27 = sphi 0, %s29
      %s30 = sphi 0, %s27
      %s31 = sphi 0, %s30
      %s47 = sphi 0, %s31
      %s51 = sphi 0, %s51
      %s53 = sphi 0, %s51
      %s54 = sphi 0, %s53
      %s68 = sphi 0, %s54
      %s72 = sphi 0, %s72
      %s74 = sphi 0, %s72
      %s75 = sphi 0, %s74
      %s89 = sphi 0, %s75
      %s93 = sphi 0, %s93
      %s95 = sphi 0, %s93
      %s96 = sphi 0, %s95
      %s110 = sphi 0, %s96
      %s114 = sphi 0, %s114
      %s116 = sphi 0, %s114
      %s117 = sphi 0, %s116
      %s131 = sphi 0, %s117
      %s135 = sphi 0, %s135
      %s137 = sphi 0, %s135
      %s138 = sphi 0, %s137
      %s152 = sphi 0, %s138
      %s156 = sphi 0, %s156
      %s158 = sphi 0, %s156
      %s159 = sphi 0, %s158
      %s173 = sphi 0, %s159
      %s177 = sphi 0, %s177
      %s179 = sphi 0, %s177
      %s180 = sphi 0, %s179
      %s194 = sphi 0, %s180
      %s198 = sphi 0, %s198
      %s200 = sphi 0, %s198
      %s201 = sphi 0, %s200
      %s215 = sphi 0, %s201
      %s221 = sphi 0, %s223
      %s224 = sphi 0, %s221
      %s225 = sphi 0, %s224
      %s241 = sphi 0, %s225
    $region4: #{doft_forward.3} parent=1 // loop_header_branch
      %20 = sbr.rel (%p18) target = $region8
    $region5: #{doft_forward.3} parent=1 // loop_body
      %s22 = ssub.s32 %s17, 1
      %s23 = ssub.s32 %s17, 2
      %s24 = sadd.s32 %s17, 1
      %s25 = ssub.s32 %s17, %s24
      %p26 = scmp.eq.s32.totalorder %s25, 0
      %s28 = sadd.s32 %s27, 1
      %s29 = scalar_select %p26, %s27, %s28
      %p32 = pneg %p26
      %p33 = scmp.eq.s32.totalorder %s17, 1
      %p34 = por %p32, %p33
      %p35 = scmp.ne.s32.totalorder %s27, %s30
      %p36 = scmp.eq.s32.totalorder %s17, 0
      %p37 = por %p35, %p36
      %p38 = scmp.ne.s32.totalorder %s27, %s30
      %p39 = scmp.eq.s32.totalorder %s22, 1
      %p40 = por %p38, %p39
      %p41 = scmp.ne.s32.totalorder %s30, %s31
      %p42 = scmp.eq.s32.totalorder %s22, 0
      %p43 = por %p41, %p42
      %p44 = scmp.ne.s32.totalorder %s30, %s31
      %p45 = scmp.eq.s32.totalorder %s23, 1
      %p46 = por %p44, %p45
      %p48 = scmp.ne.s32.totalorder %s31, %s47
      %p49 = scmp.eq.s32.totalorder %s23, 0
      %p50 = por %p48, %p49
      %s52 = sadd.s32 %s51, 1
      %p55 = scmp.eq.s32.totalorder %s17, 1
      %p56 = scmp.ne.s32.totalorder %s51, %s53
      %p57 = scmp.eq.s32.totalorder %s17, 0
      %p58 = por %p56, %p57
      %p59 = scmp.ne.s32.totalorder %s51, %s53
      %p60 = scmp.eq.s32.totalorder %s22, 1
      %p61 = por %p59, %p60
      %p62 = scmp.ne.s32.totalorder %s53, %s54
      %p63 = scmp.eq.s32.totalorder %s22, 0
      %p64 = por %p62, %p63
      %p65 = scmp.ne.s32.totalorder %s53, %s54
      %p66 = scmp.eq.s32.totalorder %s23, 1
      %p67 = por %p65, %p66
      %p69 = scmp.ne.s32.totalorder %s54, %s68
      %p70 = scmp.eq.s32.totalorder %s23, 0
      %p71 = por %p69, %p70
      %s73 = sadd.s32 %s72, 1
      %p76 = scmp.eq.s32.totalorder %s17, 1
      %p77 = scmp.ne.s32.totalorder %s72, %s74
      %p78 = scmp.eq.s32.totalorder %s17, 0
      %p79 = por %p77, %p78
      %p80 = scmp.ne.s32.totalorder %s72, %s74
      %p81 = scmp.eq.s32.totalorder %s22, 1
      %p82 = por %p80, %p81
      %p83 = scmp.ne.s32.totalorder %s74, %s75
      %p84 = scmp.eq.s32.totalorder %s22, 0
      %p85 = por %p83, %p84
      %p86 = scmp.ne.s32.totalorder %s74, %s75
      %p87 = scmp.eq.s32.totalorder %s23, 1
      %p88 = por %p86, %p87
      %p90 = scmp.ne.s32.totalorder %s75, %s89
      %p91 = scmp.eq.s32.totalorder %s23, 0
      %p92 = por %p90, %p91
      %s94 = sadd.s32 %s93, 1
      %p97 = scmp.eq.s32.totalorder %s17, 1
      %p98 = scmp.ne.s32.totalorder %s93, %s95
      %p99 = scmp.eq.s32.totalorder %s17, 0
      %p100 = por %p98, %p99
      %p101 = scmp.ne.s32.totalorder %s93, %s95
      %p102 = scmp.eq.s32.totalorder %s22, 1
      %p103 = por %p101, %p102
      %p104 = scmp.ne.s32.totalorder %s95, %s96
      %p105 = scmp.eq.s32.totalorder %s22, 0
      %p106 = por %p104, %p105
      %p107 = scmp.ne.s32.totalorder %s95, %s96
      %p108 = scmp.eq.s32.totalorder %s23, 1
      %p109 = por %p107, %p108
      %p111 = scmp.ne.s32.totalorder %s96, %s110
      %p112 = scmp.eq.s32.totalorder %s23, 0
      %p113 = por %p111, %p112
      %s115 = sadd.s32 %s114, 1
      %p118 = scmp.eq.s32.totalorder %s17, 1
      %p119 = scmp.ne.s32.totalorder %s114, %s116
      %p120 = scmp.eq.s32.totalorder %s17, 0
      %p121 = por %p119, %p120
      %p122 = scmp.ne.s32.totalorder %s114, %s116
      %p123 = scmp.eq.s32.totalorder %s22, 1
      %p124 = por %p122, %p123
      %p125 = scmp.ne.s32.totalorder %s116, %s117
      %p126 = scmp.eq.s32.totalorder %s22, 0
      %p127 = por %p125, %p126
      %p128 = scmp.ne.s32.totalorder %s116, %s117
      %p129 = scmp.eq.s32.totalorder %s23, 1
      %p130 = por %p128, %p129
      %p132 = scmp.ne.s32.totalorder %s117, %s131
      %p133 = scmp.eq.s32.totalorder %s23, 0
      %p134 = por %p132, %p133
      %s136 = sadd.s32 %s135, 1
      %p139 = scmp.eq.s32.totalorder %s17, 1
      %p140 = scmp.ne.s32.totalorder %s135, %s137
      %p141 = scmp.eq.s32.totalorder %s17, 0
      %p142 = por %p140, %p141
      %p143 = scmp.ne.s32.totalorder %s135, %s137
      %p144 = scmp.eq.s32.totalorder %s22, 1
      %p145 = por %p143, %p144
      %p146 = scmp.ne.s32.totalorder %s137, %s138
      %p147 = scmp.eq.s32.totalorder %s22, 0
      %p148 = por %p146, %p147
      %p149 = scmp.ne.s32.totalorder %s137, %s138
      %p150 = scmp.eq.s32.totalorder %s23, 1
      %p151 = por %p149, %p150
      %p153 = scmp.ne.s32.totalorder %s138, %s152
      %p154 = scmp.eq.s32.totalorder %s23, 0
      %p155 = por %p153, %p154
      %s157 = sadd.s32 %s156, 1
      %p160 = scmp.eq.s32.totalorder %s17, 1
      %p161 = scmp.ne.s32.totalorder %s156, %s158
      %p162 = scmp.eq.s32.totalorder %s17, 0
      %p163 = por %p161, %p162
      %p164 = scmp.ne.s32.totalorder %s156, %s158
      %p165 = scmp.eq.s32.totalorder %s22, 1
      %p166 = por %p164, %p165
      %p167 = scmp.ne.s32.totalorder %s158, %s159
      %p168 = scmp.eq.s32.totalorder %s22, 0
      %p169 = por %p167, %p168
      %p170 = scmp.ne.s32.totalorder %s158, %s159
      %p171 = scmp.eq.s32.totalorder %s23, 1
      %p172 = por %p170, %p171
      %p174 = scmp.ne.s32.totalorder %s159, %s173
      %p175 = scmp.eq.s32.totalorder %s23, 0
      %p176 = por %p174, %p175
      %s178 = sadd.s32 %s177, 1
      %p181 = scmp.eq.s32.totalorder %s17, 1
      %p182 = scmp.ne.s32.totalorder %s177, %s179
      %p183 = scmp.eq.s32.totalorder %s17, 0
      %p184 = por %p182, %p183
      %p185 = scmp.ne.s32.totalorder %s177, %s179
      %p186 = scmp.eq.s32.totalorder %s22, 1
      %p187 = por %p185, %p186
      %p188 = scmp.ne.s32.totalorder %s179, %s180
      %p189 = scmp.eq.s32.totalorder %s22, 0
      %p190 = por %p188, %p189
      %p191 = scmp.ne.s32.totalorder %s179, %s180
      %p192 = scmp.eq.s32.totalorder %s23, 1
      %p193 = por %p191, %p192
      %p195 = scmp.ne.s32.totalorder %s180, %s194
      %p196 = scmp.eq.s32.totalorder %s23, 0
      %p197 = por %p195, %p196
      %s199 = sadd.s32 %s198, 1
      %p202 = scmp.eq.s32.totalorder %s17, 1
      %p203 = scmp.ne.s32.totalorder %s198, %s200
      %p204 = scmp.eq.s32.totalorder %s17, 0
      %p205 = por %p203, %p204
      %p206 = scmp.ne.s32.totalorder %s198, %s200
      %p207 = scmp.eq.s32.totalorder %s22, 1
      %p208 = por %p206, %p207
      %p209 = scmp.ne.s32.totalorder %s200, %s201
      %p210 = scmp.eq.s32.totalorder %s22, 0
      %p211 = por %p209, %p210
      %p212 = scmp.ne.s32.totalorder %s200, %s201
      %p213 = scmp.eq.s32.totalorder %s23, 1
      %p214 = por %p212, %p213
      %p216 = scmp.ne.s32.totalorder %s201, %s215
      %p217 = scmp.eq.s32.totalorder %s23, 0
      %p218 = por %p216, %p217
      %s219 = ssub.s32 %s17, %s24
      %p220 = scmp.eq.s32.totalorder %s219, 0
      %s222 = sadd.s32 %s221, 1
      %s223 = scalar_select %p220, %s221, %s222
      %p226 = pneg %p220
      %p227 = scmp.eq.s32.totalorder %s17, 1
      %p228 = por %p226, %p227
      %p229 = scmp.ne.s32.totalorder %s221, %s224
      %p230 = scmp.eq.s32.totalorder %s17, 0
      %p231 = por %p229, %p230
      %p232 = scmp.ne.s32.totalorder %s221, %s224
      %p233 = scmp.eq.s32.totalorder %s22, 1
      %p234 = por %p232, %p233
      %p235 = scmp.ne.s32.totalorder %s224, %s225
      %p236 = scmp.eq.s32.totalorder %s22, 0
      %p237 = por %p235, %p236
      %p238 = scmp.ne.s32.totalorder %s224, %s225
      %p239 = scmp.eq.s32.totalorder %s23, 1
      %p240 = por %p238, %p239
      %p242 = scmp.ne.s32.totalorder %s225, %s241
      %p243 = scmp.eq.s32.totalorder %s23, 0
      %p244 = por %p242, %p243
      %p245 = scmp.le.s32.totalorder 1, %s17
      %p246 = scmp.lt.s32.totalorder %s17, 3
      %p247 = pnand %p245, %p246
      %p248 = pneg %p247
      // Predicated region
      $region9: #{doft_forward.3} parent=5 // pred_check
        _
      $region10: #{doft_forward.3} parent=5 // pred_check_branch
        %250 = sbr.rel (%p247) target = $region12
      $region11: #{doft_forward.3} parent=5 // pred_region
        %s251 = ssub.s32 %s17, 1
        // Predicated region
        $region13: #{doft_forward.3} parent=11 // pred_check
          %p252 = pneg %p64
        $region14: #{doft_forward.3} parent=11 // pred_check_branch
          %254 = sbr.rel (%p252) target = $region16
        $region15: #{doft_forward.3} parent=11 // pred_region
          %256 = vsyncadd [#allocation5], 0
          %s257 = sshll.u32 %s1, 4
          %s258 = int_to_ptr.hbm [resolvable:$true] %s257
          %s259 = sshll.u32 [#allocation4], 4
          %s260 = int_to_ptr.vmem [resolvable:$true] %s259
          %265 = dma.hbm_to_vmem [thread:$0]  %s258, 12288, %s260, [#allocation5], 128, 128, 8
        $region16: #{doft_forward.3} parent=11 // pred_fallthru
          _
        // Predicated region
        $region17: #{doft_forward.3} parent=11 // pred_check
          %p266 = pneg %p85
        $region18: #{doft_forward.3} parent=11 // pred_check_branch
          %268 = sbr.rel (%p266) target = $region20
        $region19: #{doft_forward.3} parent=11 // pred_region
          _
        $region20: #{doft_forward.3} parent=11 // pred_fallthru
          _
        // Predicated region
        $region21: #{doft_forward.3} parent=11 // pred_check
          %p269 = pneg %p106
        $region22: #{doft_forward.3} parent=11 // pred_check_branch
          %271 = sbr.rel (%p269) target = $region24
        $region23: #{doft_forward.3} parent=11 // pred_region
          %273 = vsyncadd [#allocation7], 0
          %s274 = sshll.u32 %s3, 4
          %s275 = int_to_ptr.hbm [resolvable:$true] %s274
          %s276 = sshll.u32 [#allocation6], 4
          %s277 = int_to_ptr.vmem [resolvable:$true] %s276
          %282 = dma.hbm_to_vmem [thread:$0]  %s275, 12288, %s277, [#allocation7], 128, 128, 8
        $region24: #{doft_forward.3} parent=11 // pred_fallthru
          _
        // Predicated region
        $region25: #{doft_forward.3} parent=11 // pred_check
          %p283 = pneg %p127
        $region26: #{doft_forward.3} parent=11 // pred_check_branch
          %285 = sbr.rel (%p283) target = $region28
        $region27: #{doft_forward.3} parent=11 // pred_region
          _
        $region28: #{doft_forward.3} parent=11 // pred_fallthru
          _
        // Predicated region
        $region29: #{doft_forward.3} parent=11 // pred_check
          %p286 = pneg %p148
        $region30: #{doft_forward.3} parent=11 // pred_check_branch
          %288 = sbr.rel (%p286) target = $region32
        $region31: #{doft_forward.3} parent=11 // pred_region
          _
        $region32: #{doft_forward.3} parent=11 // pred_fallthru
          _
        // Predicated region
        $region33: #{doft_forward.3} parent=11 // pred_check
          %p289 = pneg %p169
        $region34: #{doft_forward.3} parent=11 // pred_check_branch
          %291 = sbr.rel (%p289) target = $region36
        $region35: #{doft_forward.3} parent=11 // pred_region
          _
        $region36: #{doft_forward.3} parent=11 // pred_fallthru
          _
        // Predicated region
        $region37: #{doft_forward.3} parent=11 // pred_check
          %p292 = pneg %p190
        $region38: #{doft_forward.3} parent=11 // pred_check_branch
          %294 = sbr.rel (%p292) target = $region40
        $region39: #{doft_forward.3} parent=11 // pred_region
          _
        $region40: #{doft_forward.3} parent=11 // pred_fallthru
          _
        // Predicated region
        $region41: #{doft_forward.3} parent=11 // pred_check
          %p295 = pneg %p211
        $region42: #{doft_forward.3} parent=11 // pred_check_branch
          %297 = sbr.rel (%p295) target = $region44
        $region43: #{doft_forward.3} parent=11 // pred_region
          _
        $region44: #{doft_forward.3} parent=11 // pred_fallthru
          _
      $region12: #{doft_forward.3} parent=5 // pred_fallthru
        _
      %p298 = scmp.lt.s32.totalorder %s17, 2
      // Predicated region
      $region45: #{doft_forward.3} parent=5 // pred_check
        %p299 = pneg %p298
      $region46: #{doft_forward.3} parent=5 // pred_check_branch
        %301 = sbr.rel (%p299) target = $region48
      $region47: #{doft_forward.3} parent=5 // pred_region
        // Predicated region
        $region49: #{doft_forward.3} parent=47 // pred_check
          %p302 = pneg %p37
        $region50: #{doft_forward.3} parent=47 // pred_check_branch
          %304 = sbr.rel (%p302) target = $region52
        $region51: #{doft_forward.3} parent=47 // pred_region
          %p305 = scmp.lt.s32.totalorder %s17, 1
          %s306 = scalar_select %p305, %s17, 1
          %s307 = smul.addr %s306, 4
          %s308 = smul.addr %s307, 8
          %s309 = scalar_lea.vmem %s0, %s308
        $region52: #{doft_forward.3} parent=47 // pred_fallthru
          _
      $region48: #{doft_forward.3} parent=5 // pred_fallthru
        _
      %p310 = scmp.le.s32.totalorder 1, %s17
      %p311 = scmp.lt.s32.totalorder %s17, 3
      %p312 = pnand %p310, %p311
      %p313 = pneg %p312
      // Predicated region
      $region53: #{doft_forward.3} parent=5 // pred_check
        _
      $region54: #{doft_forward.3} parent=5 // pred_check_branch
        %315 = sbr.rel (%p312) target = $region56
      $region55: #{doft_forward.3} parent=5 // pred_region
        %s316 = ssub.s32 %s17, 1
        // Predicated region
        $region57: #{doft_forward.3} parent=55 // pred_check
          %p317 = pneg %p64
        $region58: #{doft_forward.3} parent=55 // pred_check_branch
          %319 = sbr.rel (%p317) target = $region60
        $region59: #{doft_forward.3} parent=55 // pred_region
          %321 = dma.done [#allocation5], 12288
        $region60: #{doft_forward.3} parent=55 // pred_fallthru
          _
        // Predicated region
        $region61: #{doft_forward.3} parent=55 // pred_check
          %p322 = pneg %p106
        $region62: #{doft_forward.3} parent=55 // pred_check_branch
          %324 = sbr.rel (%p322) target = $region64
        $region63: #{doft_forward.3} parent=55 // pred_region
          %326 = dma.done [#allocation7], 12288
        $region64: #{doft_forward.3} parent=55 // pred_fallthru
          _
        %p327 = scmp.lt.s32.totalorder %s22, 1
        %s328 = scalar_select %p327, %s22, 1
        %s329 = smul.addr %s328, 4
        %s330 = smul.addr %s329, 8
        %s331 = scalar_lea.vmem %s0, %s330
        %p332 = pneg %p43
        %p333 = pneg %p40
        %p334 = pneg %p64
        %p335 = pneg %p61
        %p336 = pneg %p85
        %p337 = pneg %p82
        %p338 = pneg %p106
        %p339 = pneg %p103
        %p340 = pneg %p127
        %p341 = pneg %p124
        %p342 = pneg %p148
        %p343 = pneg %p145
        %p344 = pneg %p169
        %p345 = pneg %p166
        %p346 = pneg %p190
        %p347 = pneg %p187
        %p348 = pneg %p211
        %p349 = pneg %p208
        %p350 = pneg %p237
        %p351 = pneg %p234
        %p352 = scmp.lt.s32.totalorder %s22, 1
        %s353 = scalar_select %p352, %s22, 1
        %s354 = smul.addr %s353, 4
        %s355 = smul.addr %s354, 4
        %s356 = scalar_lea.vmem %s9, %s355
        %p357 = scmp.lt.s32.totalorder %s22, 1
        %s358 = scalar_select %p357, %s22, 1
        %s359 = smul.addr %s358, 4
        %s360 = smul.addr %s359, 8
        %s361 = scalar_lea.vmem %s0, %s360
        %p362 = scmp.lt.s32.totalorder %s22, 1
        %s363 = scalar_select %p362, %s22, 1
        %s364 = smul.addr %s363, 4
        %s365 = smul.addr %s364, 4
        %s366 = scalar_lea.vmem %s9, %s365
        %v367 = vlaneseq
        %vm368 = vcmp.ge.s32.totalorder %v367, 0
        %vm369 = vcmp.lt.s32.totalorder %v367, 256
        %vm370 = vmand %vm368, %vm369
        %s371 = scalar_lea.vmem [#allocation2], 7
        %372 = vst.msk [vmem:[%s371] ss:$8 sm:$0x3] %vm370, 0.0
        %373 = vst.msk [vmem:[%s371] ss:$8 sm:$0x0] %vm370, 0.0
        %s374 = scalar_lea.vmem [#allocation2], 48
        %375 = vst.msk [vmem:[%s374] ss:$8 sm:$0x3] %vm370, 0.0
        %376 = vst.msk [vmem:[%s374] ss:$8 sm:$0x0] %vm370, 0.0
        %s377 = scalar_lea.vmem [#allocation3], 7
        %378 = vst.msk [vmem:[%s377] ss:$8 sm:$0x3] %vm370, 0.0
        %379 = vst.msk [vmem:[%s377] ss:$8 sm:$0x0] %vm370, 0.0
        %s380 = scalar_lea.vmem [#allocation3], 48
        %381 = vst.msk [vmem:[%s380] ss:$8 sm:$0x3] %vm370, 0.0
        %382 = vst.msk [vmem:[%s380] ss:$8 sm:$0x0] %vm370, 0.0
        %v383 = vld [vmem:[%s361] sm:$0xff]
        %v384 = vld [vmem:[%s361 + $0x8] sm:$0xff]
        %v385 = vld [vmem:[%s361 + $0x10] sm:$0xff]
        %v386 = vld [vmem:[%s361 + $0x18] sm:$0xff]
        %387 = vst [vmem:[#allocation2 + $0x10] sm:$0xff] %v383
        %388 = vst [vmem:[#allocation2 + $0x18] sm:$0xff] %v384
        %389 = vst [vmem:[#allocation2 + $0x20] sm:$0xff] %v385
        %390 = vst [vmem:[#allocation2 + $0x28] sm:$0xff] %v386
        %v391 = vld [vmem:[#allocation2] sm:$0x80]
        %v392 = vld [vmem:[#allocation2 + $0x8] sm:$0x80]
        %v393 = vld [vmem:[#allocation2 + $0x10] sm:$0xff]
        %v394 = vld [vmem:[#allocation2 + $0x18] sm:$0xff]
        %v395 = vld [vmem:[#allocation2 + $0x20] sm:$0x7f]
        %v396 = vld [vmem:[#allocation2 + $0x28] sm:$0x7f]
        %v397 = vpack.c.bf16 %v393, %v391
        %v398 = vpack.c.bf16 %v394, %v392
        %v399 = vpack.c.bf16 %v395, %v395
        %v400 = vpack.c.bf16 %v396, %v396
        %v401 = vld [vmem:[#allocation4] sm:$0xff]
        %v402 = vld [vmem:[#allocation4 + $0x8] sm:$0xff]
        %v403 = vld [vmem:[#allocation4 + $0x10] sm:$0xff]
        %v404 = vld [vmem:[#allocation4 + $0x18] sm:$0xff]
        %v405 = vld [vmem:[#allocation4 + $0x20] sm:$0xff]
        %v406 = vld [vmem:[#allocation4 + $0x28] sm:$0xff]
        %v407 = vld [vmem:[#allocation4 + $0x30] sm:$0xff]
        %v408 = vld [vmem:[#allocation4 + $0x38] sm:$0xff]
        %v409 = vld [vmem:[#allocation4 + $0x40] sm:$0xff]
        %v410 = vld [vmem:[#allocation4 + $0x48] sm:$0xff]
        %v411 = vld [vmem:[#allocation4 + $0x50] sm:$0xff]
        %v412 = vld [vmem:[#allocation4 + $0x58] sm:$0xff]
        %v413 = vld [vmem:[#allocation4 + $0x60] sm:$0xff]
        %v414 = vld [vmem:[#allocation4 + $0x68] sm:$0xff]
        %v415 = vld [vmem:[#allocation4 + $0x70] sm:$0xff]
        %v416 = vld [vmem:[#allocation4 + $0x78] sm:$0xff]
        %v417 = vld [vmem:[#allocation4 + $0x80] sm:$0xff]
        %v418 = vld [vmem:[#allocation4 + $0x88] sm:$0xff]
        %v419 = vld [vmem:[#allocation4 + $0x90] sm:$0xff]
        %v420 = vld [vmem:[#allocation4 + $0x98] sm:$0xff]
        %v421 = vld [vmem:[#allocation4 + $0xa0] sm:$0xff]
        %v422 = vld [vmem:[#allocation4 + $0xa8] sm:$0xff]
        %v423 = vld [vmem:[#allocation4 + $0xb0] sm:$0xff]
        %v424 = vld [vmem:[#allocation4 + $0xb8] sm:$0xff]
        %v425 = vld [vmem:[#allocation4 + $0xc0] sm:$0xff]
        %v426 = vld [vmem:[#allocation4 + $0xc8] sm:$0xff]
        %v427 = vld [vmem:[#allocation4 + $0xd0] sm:$0xff]
        %v428 = vld [vmem:[#allocation4 + $0xd8] sm:$0xff]
        %v429 = vld [vmem:[#allocation4 + $0xe0] sm:$0xff]
        %v430 = vld [vmem:[#allocation4 + $0xe8] sm:$0xff]
        %v431 = vld [vmem:[#allocation4 + $0xf0] sm:$0xff]
        %v432 = vld [vmem:[#allocation4 + $0xf8] sm:$0xff]
        %v433 = vld [vmem:[#allocation2 + $0x20] sm:$0xff]
        %v434 = vld [vmem:[#allocation2 + $0x28] sm:$0xff]
        %v435 = vpack.c.bf16 %v433, %v393
        %v436 = vpack.c.bf16 %v434, %v394
        %v437 = vld [vmem:[#allocation4 + $0x100] sm:$0xff]
        %v438 = vld [vmem:[#allocation4 + $0x108] sm:$0xff]
        %v439 = vld [vmem:[#allocation4 + $0x110] sm:$0xff]
        %v440 = vld [vmem:[#allocation4 + $0x118] sm:$0xff]
        %v441 = vld [vmem:[#allocation4 + $0x120] sm:$0xff]
        %v442 = vld [vmem:[#allocation4 + $0x128] sm:$0xff]
        %v443 = vld [vmem:[#allocation4 + $0x130] sm:$0xff]
        %v444 = vld [vmem:[#allocation4 + $0x138] sm:$0xff]
        %v445 = vld [vmem:[#allocation4 + $0x140] sm:$0xff]
        %v446 = vld [vmem:[#allocation4 + $0x148] sm:$0xff]
        %v447 = vld [vmem:[#allocation4 + $0x150] sm:$0xff]
        %v448 = vld [vmem:[#allocation4 + $0x158] sm:$0xff]
        %v449 = vld [vmem:[#allocation4 + $0x160] sm:$0xff]
        %v450 = vld [vmem:[#allocation4 + $0x168] sm:$0xff]
        %v451 = vld [vmem:[#allocation4 + $0x170] sm:$0xff]
        %v452 = vld [vmem:[#allocation4 + $0x178] sm:$0xff]
        %v453 = vld [vmem:[#allocation4 + $0x180] sm:$0xff]
        %v454 = vld [vmem:[#allocation4 + $0x188] sm:$0xff]
        %v455 = vld [vmem:[#allocation4 + $0x190] sm:$0xff]
        %v456 = vld [vmem:[#allocation4 + $0x198] sm:$0xff]
        %v457 = vld [vmem:[#allocation4 + $0x1a0] sm:$0xff]
        %v458 = vld [vmem:[#allocation4 + $0x1a8] sm:$0xff]
        %v459 = vld [vmem:[#allocation4 + $0x1b0] sm:$0xff]
        %v460 = vld [vmem:[#allocation4 + $0x1b8] sm:$0xff]
        %v461 = vld [vmem:[#allocation4 + $0x1c0] sm:$0xff]
        %v462 = vld [vmem:[#allocation4 + $0x1c8] sm:$0xff]
        %v463 = vld [vmem:[#allocation4 + $0x1d0] sm:$0xff]
        %v464 = vld [vmem:[#allocation4 + $0x1d8] sm:$0xff]
        %v465 = vld [vmem:[#allocation4 + $0x1e0] sm:$0xff]
        %v466 = vld [vmem:[#allocation4 + $0x1e8] sm:$0xff]
        %v467 = vld [vmem:[#allocation4 + $0x1f0] sm:$0xff]
        %v468 = vld [vmem:[#allocation4 + $0x1f8] sm:$0xff]
        %v501 = vunpack.c.l.b16 %v437
        %v502 = vunpack.c.h.b16 %v437
        %v503 = vunpack.c.l.b16 %v438
        %v504 = vunpack.c.h.b16 %v438
        %v505 = vunpack.c.l.b16 %v439
        %v506 = vunpack.c.h.b16 %v439
        %v507 = vunpack.c.l.b16 %v440
        %v508 = vunpack.c.h.b16 %v440
        %v509 = vunpack.c.l.b16 %v441
        %v510 = vunpack.c.h.b16 %v441
        %v511 = vunpack.c.l.b16 %v442
        %v512 = vunpack.c.h.b16 %v442
        %v513 = vunpack.c.l.b16 %v443
        %v514 = vunpack.c.h.b16 %v443
        %v515 = vunpack.c.l.b16 %v444
        %v516 = vunpack.c.h.b16 %v444
        %v517 = vunpack.c.l.b16 %v445
        %v518 = vunpack.c.h.b16 %v445
        %v519 = vunpack.c.l.b16 %v446
        %v520 = vunpack.c.h.b16 %v446
        %v521 = vunpack.c.l.b16 %v447
        %v522 = vunpack.c.h.b16 %v447
        %v523 = vunpack.c.l.b16 %v448
        %v524 = vunpack.c.h.b16 %v448
        %v525 = vunpack.c.l.b16 %v449
        %v526 = vunpack.c.h.b16 %v449
        %v527 = vunpack.c.l.b16 %v450
        %v528 = vunpack.c.h.b16 %v450
        %v529 = vunpack.c.l.b16 %v451
        %v530 = vunpack.c.h.b16 %v451
        %v531 = vunpack.c.l.b16 %v452
        %v532 = vunpack.c.h.b16 %v452
        %v533 = vunpack.c.l.b16 %v453
        %v534 = vunpack.c.h.b16 %v453
        %v535 = vunpack.c.l.b16 %v454
        %v536 = vunpack.c.h.b16 %v454
        %v537 = vunpack.c.l.b16 %v455
        %v538 = vunpack.c.h.b16 %v455
        %v539 = vunpack.c.l.b16 %v456
        %v540 = vunpack.c.h.b16 %v456
        %v541 = vunpack.c.l.b16 %v457
        %v542 = vunpack.c.h.b16 %v457
        %v543 = vunpack.c.l.b16 %v458
        %v544 = vunpack.c.h.b16 %v458
        %v545 = vunpack.c.l.b16 %v459
        %v546 = vunpack.c.h.b16 %v459
        %v547 = vunpack.c.l.b16 %v460
        %v548 = vunpack.c.h.b16 %v460
        %v549 = vunpack.c.l.b16 %v461
        %v550 = vunpack.c.h.b16 %v461
        %v551 = vunpack.c.l.b16 %v462
        %v552 = vunpack.c.h.b16 %v462
        %v553 = vunpack.c.l.b16 %v463
        %v554 = vunpack.c.h.b16 %v463
        %v555 = vunpack.c.l.b16 %v464
        %v556 = vunpack.c.h.b16 %v464
        %v557 = vunpack.c.l.b16 %v465
        %v558 = vunpack.c.h.b16 %v465
        %v559 = vunpack.c.l.b16 %v466
        %v560 = vunpack.c.h.b16 %v466
        %v561 = vunpack.c.l.b16 %v467
        %v562 = vunpack.c.h.b16 %v467
        %v563 = vunpack.c.l.b16 %v468
        %v564 = vunpack.c.h.b16 %v468
        %v565 = vpack.c.b16 %v503, %v501
        %v566 = vpack.c.b16 %v504, %v502
        %v567 = vpack.c.b16 %v507, %v505
        %v568 = vpack.c.b16 %v508, %v506
        %v569 = vpack.c.b16 %v511, %v509
        %v570 = vpack.c.b16 %v512, %v510
        %v571 = vpack.c.b16 %v515, %v513
        %v572 = vpack.c.b16 %v516, %v514
        %v573 = vpack.c.b16 %v519, %v517
        %v574 = vpack.c.b16 %v520, %v518
        %v575 = vpack.c.b16 %v523, %v521
        %v576 = vpack.c.b16 %v524, %v522
        %v577 = vpack.c.b16 %v527, %v525
        %v578 = vpack.c.b16 %v528, %v526
        %v579 = vpack.c.b16 %v531, %v529
        %v580 = vpack.c.b16 %v532, %v530
        %v581 = vpack.c.b16 %v535, %v533
        %v582 = vpack.c.b16 %v536, %v534
        %v583 = vpack.c.b16 %v539, %v537
        %v584 = vpack.c.b16 %v540, %v538
        %v585 = vpack.c.b16 %v543, %v541
        %v586 = vpack.c.b16 %v544, %v542
        %v587 = vpack.c.b16 %v547, %v545
        %v588 = vpack.c.b16 %v548, %v546
        %v589 = vpack.c.b16 %v551, %v549
        %v590 = vpack.c.b16 %v552, %v550
        %v591 = vpack.c.b16 %v555, %v553
        %v592 = vpack.c.b16 %v556, %v554
        %v593 = vpack.c.b16 %v559, %v557
        %v594 = vpack.c.b16 %v560, %v558
        %v595 = vpack.c.b16 %v563, %v561
        %v596 = vpack.c.b16 %v564, %v562
        %629 = vmatpush.bf16.msra.mxu0 %v579
        %630 = vmatpush.bf16.msra.mxu0 %v577
        %631 = vmatpush.bf16.msra.mxu0 %v575
        %632 = vmatpush.bf16.msra.mxu0 %v573
        %633 = vmatpush.bf16.msra.mxu0 %v571
        %634 = vmatpush.bf16.msra.mxu0 %v569
        %635 = vmatpush.bf16.msra.mxu0 %v567
        %636 = vmatpush.bf16.msra.mxu0 %v565
        %637 = vmatmul.bf16.gmra.mxu0 %v435
        %v638 = vpop.f32.mrf.mxu0
        %v639 = vadd.f32 0.0, %v638
        %v640 = vpop.f32.mrf.mxu0
        %v641 = vadd.f32 0.0, %v640
        %642 = vdwg.mxu0
        %643 = vmatpush.bf16.msra.mxu0 %v595
        %644 = vmatpush.bf16.msra.mxu0 %v593
        %645 = vmatpush.bf16.msra.mxu0 %v591
        %646 = vmatpush.bf16.msra.mxu0 %v589
        %647 = vmatpush.bf16.msra.mxu0 %v587
        %648 = vmatpush.bf16.msra.mxu0 %v585
        %649 = vmatpush.bf16.msra.mxu0 %v583
        %650 = vmatpush.bf16.msra.mxu0 %v581
        %651 = vmatmul.bf16.gmra.mxu0 %v436
        %v652 = vpop.f32.mrf.mxu0
        %v653 = vadd.f32 %v639, %v652
        %v654 = vpop.f32.mrf.mxu0
        %v655 = vadd.f32 %v641, %v654
        %656 = vdwg.mxu0
        %657 = vmatpush.bf16.msra.mxu0 %v580
        %658 = vmatpush.bf16.msra.mxu0 %v578
        %659 = vmatpush.bf16.msra.mxu0 %v576
        %660 = vmatpush.bf16.msra.mxu0 %v574
        %661 = vmatpush.bf16.msra.mxu0 %v572
        %662 = vmatpush.bf16.msra.mxu0 %v570
        %663 = vmatpush.bf16.msra.mxu0 %v568
        %664 = vmatpush.bf16.msra.mxu0 %v566
        %665 = vmatmul.bf16.gmra.mxu0 %v435
        %v666 = vpop.f32.mrf.mxu0
        %v667 = vadd.f32 0.0, %v666
        %v668 = vpop.f32.mrf.mxu0
        %v669 = vadd.f32 0.0, %v668
        %670 = vdwg.mxu0
        %671 = vmatpush.bf16.msra.mxu0 %v596
        %672 = vmatpush.bf16.msra.mxu0 %v594
        %673 = vmatpush.bf16.msra.mxu0 %v592
        %674 = vmatpush.bf16.msra.mxu0 %v590
        %675 = vmatpush.bf16.msra.mxu0 %v588
        %676 = vmatpush.bf16.msra.mxu0 %v586
        %677 = vmatpush.bf16.msra.mxu0 %v584
        %678 = vmatpush.bf16.msra.mxu0 %v582
        %679 = vmatmul.bf16.gmra.mxu0 %v436
        %v680 = vpop.f32.mrf.mxu0
        %v681 = vadd.f32 %v667, %v680
        %v682 = vpop.f32.mrf.mxu0
        %v683 = vadd.f32 %v669, %v682
        %684 = vdwg.mxu0
        %vm685 = vsmask.f32 4352
        %v687 = vshrl.u32 %v397, 16
        %v689 = vrot.slane %v687, 3
        %v690 = vshll.u32 %v397, 16
        %v692 = vrot.slane %v690, 4
        %v693 = vor.u32 %v689, %v692
        %v695 = vshrl.u32 %v399, 16
        %v697 = vrot.slane %v695, 3
        %v698 = vshll.u32 %v399, 16
        %v700 = vrot.slane %v698, 4
        %v701 = vor.u32 %v697, %v700
        %v702 = vsel %vm685, %v693, %v701
        %v704 = vshrl.u32 %v398, 16
        %v706 = vrot.slane %v704, 3
        %v707 = vshll.u32 %v398, 16
        %v709 = vrot.slane %v707, 4
        %v710 = vor.u32 %v706, %v709
        %v712 = vshrl.u32 %v400, 16
        %v714 = vrot.slane %v712, 3
        %v715 = vshll.u32 %v400, 16
        %v717 = vrot.slane %v715, 4
        %v718 = vor.u32 %v714, %v717
        %v719 = vsel %vm685, %v710, %v718
        %v754 = vunpack.c.l.b16 %v401
        %v755 = vunpack.c.h.b16 %v401
        %v756 = vunpack.c.l.b16 %v402
        %v757 = vunpack.c.h.b16 %v402
        %v758 = vunpack.c.l.b16 %v403
        %v759 = vunpack.c.h.b16 %v403
        %v760 = vunpack.c.l.b16 %v404
        %v761 = vunpack.c.h.b16 %v404
        %v762 = vunpack.c.l.b16 %v405
        %v763 = vunpack.c.h.b16 %v405
        %v764 = vunpack.c.l.b16 %v406
        %v765 = vunpack.c.h.b16 %v406
        %v766 = vunpack.c.l.b16 %v407
        %v767 = vunpack.c.h.b16 %v407
        %v768 = vunpack.c.l.b16 %v408
        %v769 = vunpack.c.h.b16 %v408
        %v770 = vunpack.c.l.b16 %v409
        %v771 = vunpack.c.h.b16 %v409
        %v772 = vunpack.c.l.b16 %v410
        %v773 = vunpack.c.h.b16 %v410
        %v774 = vunpack.c.l.b16 %v411
        %v775 = vunpack.c.h.b16 %v411
        %v776 = vunpack.c.l.b16 %v412
        %v777 = vunpack.c.h.b16 %v412
        %v778 = vunpack.c.l.b16 %v413
        %v779 = vunpack.c.h.b16 %v413
        %v780 = vunpack.c.l.b16 %v414
        %v781 = vunpack.c.h.b16 %v414
        %v782 = vunpack.c.l.b16 %v415
        %v783 = vunpack.c.h.b16 %v415
        %v784 = vunpack.c.l.b16 %v416
        %v785 = vunpack.c.h.b16 %v416
        %v786 = vunpack.c.l.b16 %v417
        %v787 = vunpack.c.h.b16 %v417
        %v788 = vunpack.c.l.b16 %v418
        %v789 = vunpack.c.h.b16 %v418
        %v790 = vunpack.c.l.b16 %v419
        %v791 = vunpack.c.h.b16 %v419
        %v792 = vunpack.c.l.b16 %v420
        %v793 = vunpack.c.h.b16 %v420
        %v794 = vunpack.c.l.b16 %v421
        %v795 = vunpack.c.h.b16 %v421
        %v796 = vunpack.c.l.b16 %v422
        %v797 = vunpack.c.h.b16 %v422
        %v798 = vunpack.c.l.b16 %v423
        %v799 = vunpack.c.h.b16 %v423
        %v800 = vunpack.c.l.b16 %v424
        %v801 = vunpack.c.h.b16 %v424
        %v802 = vunpack.c.l.b16 %v425
        %v803 = vunpack.c.h.b16 %v425
        %v804 = vunpack.c.l.b16 %v426
        %v805 = vunpack.c.h.b16 %v426
        %v806 = vunpack.c.l.b16 %v427
        %v807 = vunpack.c.h.b16 %v427
        %v808 = vunpack.c.l.b16 %v428
        %v809 = vunpack.c.h.b16 %v428
        %v810 = vunpack.c.l.b16 %v429
        %v811 = vunpack.c.h.b16 %v429
        %v812 = vunpack.c.l.b16 %v430
        %v813 = vunpack.c.h.b16 %v430
        %v814 = vunpack.c.l.b16 %v431
        %v815 = vunpack.c.h.b16 %v431
        %v816 = vunpack.c.l.b16 %v432
        %v817 = vunpack.c.h.b16 %v432
        %v818 = vpack.c.b16 %v756, %v754
        %v819 = vpack.c.b16 %v757, %v755
        %v820 = vpack.c.b16 %v760, %v758
        %v821 = vpack.c.b16 %v761, %v759
        %v822 = vpack.c.b16 %v764, %v762
        %v823 = vpack.c.b16 %v765, %v763
        %v824 = vpack.c.b16 %v768, %v766
        %v825 = vpack.c.b16 %v769, %v767
        %v826 = vpack.c.b16 %v772, %v770
        %v827 = vpack.c.b16 %v773, %v771
        %v828 = vpack.c.b16 %v776, %v774
        %v829 = vpack.c.b16 %v777, %v775
        %v830 = vpack.c.b16 %v780, %v778
        %v831 = vpack.c.b16 %v781, %v779
        %v832 = vpack.c.b16 %v784, %v782
        %v833 = vpack.c.b16 %v785, %v783
        %v834 = vpack.c.b16 %v788, %v786
        %v835 = vpack.c.b16 %v789, %v787
        %v836 = vpack.c.b16 %v792, %v790
        %v837 = vpack.c.b16 %v793, %v791
        %v838 = vpack.c.b16 %v796, %v794
        %v839 = vpack.c.b16 %v797, %v795
        %v840 = vpack.c.b16 %v800, %v798
        %v841 = vpack.c.b16 %v801, %v799
        %v842 = vpack.c.b16 %v804, %v802
        %v843 = vpack.c.b16 %v805, %v803
        %v844 = vpack.c.b16 %v808, %v806
        %v845 = vpack.c.b16 %v809, %v807
        %v846 = vpack.c.b16 %v812, %v810
        %v847 = vpack.c.b16 %v813, %v811
        %v848 = vpack.c.b16 %v816, %v814
        %v849 = vpack.c.b16 %v817, %v815
        %882 = vmatpush.bf16.msra.mxu0 %v832
        %883 = vmatpush.bf16.msra.mxu0 %v830
        %884 = vmatpush.bf16.msra.mxu0 %v828
        %885 = vmatpush.bf16.msra.mxu0 %v826
        %886 = vmatpush.bf16.msra.mxu0 %v824
        %887 = vmatpush.bf16.msra.mxu0 %v822
        %888 = vmatpush.bf16.msra.mxu0 %v820
        %889 = vmatpush.bf16.msra.mxu0 %v818
        %890 = vmatmul.bf16.gmra.mxu0 %v702
        %v891 = vpop.f32.mrf.mxu0
        %v892 = vadd.f32 %v653, %v891
        %v893 = vpop.f32.mrf.mxu0
        %v894 = vadd.f32 %v655, %v893
        %895 = vdwg.mxu0
        %896 = vmatpush.bf16.msra.mxu0 %v848
        %897 = vmatpush.bf16.msra.mxu0 %v846
        %898 = vmatpush.bf16.msra.mxu0 %v844
        %899 = vmatpush.bf16.msra.mxu0 %v842
        %900 = vmatpush.bf16.msra.mxu0 %v840
        %901 = vmatpush.bf16.msra.mxu0 %v838
        %902 = vmatpush.bf16.msra.mxu0 %v836
        %903 = vmatpush.bf16.msra.mxu0 %v834
        %904 = vmatmul.bf16.gmra.mxu0 %v719
        %v905 = vpop.f32.mrf.mxu0
        %v906 = vadd.f32 %v892, %v905
        %v907 = vpop.f32.mrf.mxu0
        %v908 = vadd.f32 %v894, %v907
        %909 = vdwg.mxu0
        %910 = vmatpush.bf16.msra.mxu0 %v833
        %911 = vmatpush.bf16.msra.mxu0 %v831
        %912 = vmatpush.bf16.msra.mxu0 %v829
        %913 = vmatpush.bf16.msra.mxu0 %v827
        %914 = vmatpush.bf16.msra.mxu0 %v825
        %915 = vmatpush.bf16.msra.mxu0 %v823
        %916 = vmatpush.bf16.msra.mxu0 %v821
        %917 = vmatpush.bf16.msra.mxu0 %v819
        %918 = vmatmul.bf16.gmra.mxu0 %v702
        %v919 = vpop.f32.mrf.mxu0
        %v920 = vadd.f32 %v681, %v919
        %v921 = vpop.f32.mrf.mxu0
        %v922 = vadd.f32 %v683, %v921
        %923 = vdwg.mxu0
        %924 = vmatpush.bf16.msra.mxu0 %v849
        %925 = vmatpush.bf16.msra.mxu0 %v847
        %926 = vmatpush.bf16.msra.mxu0 %v845
        %927 = vmatpush.bf16.msra.mxu0 %v843
        %928 = vmatpush.bf16.msra.mxu0 %v841
        %929 = vmatpush.bf16.msra.mxu0 %v839
        %930 = vmatpush.bf16.msra.mxu0 %v837
        %931 = vmatpush.bf16.msra.mxu0 %v835
        %932 = vmatmul.bf16.gmra.mxu0 %v719
        %v933 = vpop.f32.mrf.mxu0
        %v934 = vadd.f32 %v920, %v933
        %v935 = vpop.f32.mrf.mxu0
        %v936 = vadd.f32 %v922, %v935
        %937 = vdwg.mxu0
        %v938 = vld [vmem:[#allocation2 + $0x10] sm:$0xfe]
        %v939 = vld [vmem:[#allocation2 + $0x18] sm:$0xfe]
        %v940 = vld [vmem:[#allocation2 + $0x20] sm:$0xff]
        %v941 = vld [vmem:[#allocation2 + $0x28] sm:$0xff]
        %v942 = vld [vmem:[#allocation2 + $0x30] sm:$0x1]
        %v943 = vld [vmem:[#allocation2 + $0x38] sm:$0x1]
        %v944 = vpack.c.bf16 %v940, %v938
        %v945 = vpack.c.bf16 %v941, %v939
        %v946 = vpack.c.bf16 %v942, %v942
        %v947 = vpack.c.bf16 %v943, %v943
        %v948 = vld [vmem:[#allocation4 + $0x200] sm:$0xff]
        %v949 = vld [vmem:[#allocation4 + $0x208] sm:$0xff]
        %v950 = vld [vmem:[#allocation4 + $0x210] sm:$0xff]
        %v951 = vld [vmem:[#allocation4 + $0x218] sm:$0xff]
        %v952 = vld [vmem:[#allocation4 + $0x220] sm:$0xff]
        %v953 = vld [vmem:[#allocation4 + $0x228] sm:$0xff]
        %v954 = vld [vmem:[#allocation4 + $0x230] sm:$0xff]
        %v955 = vld [vmem:[#allocation4 + $0x238] sm:$0xff]
        %v956 = vld [vmem:[#allocation4 + $0x240] sm:$0xff]
        %v957 = vld [vmem:[#allocation4 + $0x248] sm:$0xff]
        %v958 = vld [vmem:[#allocation4 + $0x250] sm:$0xff]
        %v959 = vld [vmem:[#allocation4 + $0x258] sm:$0xff]
        %v960 = vld [vmem:[#allocation4 + $0x260] sm:$0xff]
        %v961 = vld [vmem:[#allocation4 + $0x268] sm:$0xff]
        %v962 = vld [vmem:[#allocation4 + $0x270] sm:$0xff]
        %v963 = vld [vmem:[#allocation4 + $0x278] sm:$0xff]
        %v964 = vld [vmem:[#allocation4 + $0x280] sm:$0xff]
        %v965 = vld [vmem:[#allocation4 + $0x288] sm:$0xff]
        %v966 = vld [vmem:[#allocation4 + $0x290] sm:$0xff]
        %v967 = vld [vmem:[#allocation4 + $0x298] sm:$0xff]
        %v968 = vld [vmem:[#allocation4 + $0x2a0] sm:$0xff]
        %v969 = vld [vmem:[#allocation4 + $0x2a8] sm:$0xff]
        %v970 = vld [vmem:[#allocation4 + $0x2b0] sm:$0xff]
        %v971 = vld [vmem:[#allocation4 + $0x2b8] sm:$0xff]
        %v972 = vld [vmem:[#allocation4 + $0x2c0] sm:$0xff]
        %v973 = vld [vmem:[#allocation4 + $0x2c8] sm:$0xff]
        %v974 = vld [vmem:[#allocation4 + $0x2d0] sm:$0xff]
        %v975 = vld [vmem:[#allocation4 + $0x2d8] sm:$0xff]
        %v976 = vld [vmem:[#allocation4 + $0x2e0] sm:$0xff]
        %v977 = vld [vmem:[#allocation4 + $0x2e8] sm:$0xff]
        %v978 = vld [vmem:[#allocation4 + $0x2f0] sm:$0xff]
        %v979 = vld [vmem:[#allocation4 + $0x2f8] sm:$0xff]
        %vm980 = vsmask.f32 7424
        %v982 = vshrl.u32 %v944, 16
        %v984 = vshll.u32 %v944, 16
        %v986 = vrot.slane %v984, 1
        %v987 = vor.u32 %v982, %v986
        %v989 = vshll.u32 %v946, 16
        %v991 = vrot.slane %v989, 1
        %v992 = vsel %vm980, %v987, %v991
        %v994 = vshrl.u32 %v945, 16
        %v996 = vshll.u32 %v945, 16
        %v998 = vrot.slane %v996, 1
        %v999 = vor.u32 %v994, %v998
        %v1001 = vshll.u32 %v947, 16
        %v1003 = vrot.slane %v1001, 1
        %v1004 = vsel %vm980, %v999, %v1003
        %v1039 = vunpack.c.l.b16 %v948
        %v1040 = vunpack.c.h.b16 %v948
        %v1041 = vunpack.c.l.b16 %v949
        %v1042 = vunpack.c.h.b16 %v949
        %v1043 = vunpack.c.l.b16 %v950
        %v1044 = vunpack.c.h.b16 %v950
        %v1045 = vunpack.c.l.b16 %v951
        %v1046 = vunpack.c.h.b16 %v951
        %v1047 = vunpack.c.l.b16 %v952
        %v1048 = vunpack.c.h.b16 %v952
        %v1049 = vunpack.c.l.b16 %v953
        %v1050 = vunpack.c.h.b16 %v953
        %v1051 = vunpack.c.l.b16 %v954
        %v1052 = vunpack.c.h.b16 %v954
        %v1053 = vunpack.c.l.b16 %v955
        %v1054 = vunpack.c.h.b16 %v955
        %v1055 = vunpack.c.l.b16 %v956
        %v1056 = vunpack.c.h.b16 %v956
        %v1057 = vunpack.c.l.b16 %v957
        %v1058 = vunpack.c.h.b16 %v957
        %v1059 = vunpack.c.l.b16 %v958
        %v1060 = vunpack.c.h.b16 %v958
        %v1061 = vunpack.c.l.b16 %v959
        %v1062 = vunpack.c.h.b16 %v959
        %v1063 = vunpack.c.l.b16 %v960
        %v1064 = vunpack.c.h.b16 %v960
        %v1065 = vunpack.c.l.b16 %v961
        %v1066 = vunpack.c.h.b16 %v961
        %v1067 = vunpack.c.l.b16 %v962
        %v1068 = vunpack.c.h.b16 %v962
        %v1069 = vunpack.c.l.b16 %v963
        %v1070 = vunpack.c.h.b16 %v963
        %v1071 = vunpack.c.l.b16 %v964
        %v1072 = vunpack.c.h.b16 %v964
        %v1073 = vunpack.c.l.b16 %v965
        %v1074 = vunpack.c.h.b16 %v965
        %v1075 = vunpack.c.l.b16 %v966
        %v1076 = vunpack.c.h.b16 %v966
        %v1077 = vunpack.c.l.b16 %v967
        %v1078 = vunpack.c.h.b16 %v967
        %v1079 = vunpack.c.l.b16 %v968
        %v1080 = vunpack.c.h.b16 %v968
        %v1081 = vunpack.c.l.b16 %v969
        %v1082 = vunpack.c.h.b16 %v969
        %v1083 = vunpack.c.l.b16 %v970
        %v1084 = vunpack.c.h.b16 %v970
        %v1085 = vunpack.c.l.b16 %v971
        %v1086 = vunpack.c.h.b16 %v971
        %v1087 = vunpack.c.l.b16 %v972
        %v1088 = vunpack.c.h.b16 %v972
        %v1089 = vunpack.c.l.b16 %v973
        %v1090 = vunpack.c.h.b16 %v973
        %v1091 = vunpack.c.l.b16 %v974
        %v1092 = vunpack.c.h.b16 %v974
        %v1093 = vunpack.c.l.b16 %v975
        %v1094 = vunpack.c.h.b16 %v975
        %v1095 = vunpack.c.l.b16 %v976
        %v1096 = vunpack.c.h.b16 %v976
        %v1097 = vunpack.c.l.b16 %v977
        %v1098 = vunpack.c.h.b16 %v977
        %v1099 = vunpack.c.l.b16 %v978
        %v1100 = vunpack.c.h.b16 %v978
        %v1101 = vunpack.c.l.b16 %v979
        %v1102 = vunpack.c.h.b16 %v979
        %v1103 = vpack.c.b16 %v1041, %v1039
        %v1104 = vpack.c.b16 %v1042, %v1040
        %v1105 = vpack.c.b16 %v1045, %v1043
        %v1106 = vpack.c.b16 %v1046, %v1044
        %v1107 = vpack.c.b16 %v1049, %v1047
        %v1108 = vpack.c.b16 %v1050, %v1048
        %v1109 = vpack.c.b16 %v1053, %v1051
        %v1110 = vpack.c.b16 %v1054, %v1052
        %v1111 = vpack.c.b16 %v1057, %v1055
        %v1112 = vpack.c.b16 %v1058, %v1056
        %v1113 = vpack.c.b16 %v1061, %v1059
        %v1114 = vpack.c.b16 %v1062, %v1060
        %v1115 = vpack.c.b16 %v1065, %v1063
        %v1116 = vpack.c.b16 %v1066, %v1064
        %v1117 = vpack.c.b16 %v1069, %v1067
        %v1118 = vpack.c.b16 %v1070, %v1068
        %v1119 = vpack.c.b16 %v1073, %v1071
        %v1120 = vpack.c.b16 %v1074, %v1072
        %v1121 = vpack.c.b16 %v1077, %v1075
        %v1122 = vpack.c.b16 %v1078, %v1076
        %v1123 = vpack.c.b16 %v1081, %v1079
        %v1124 = vpack.c.b16 %v1082, %v1080
        %v1125 = vpack.c.b16 %v1085, %v1083
        %v1126 = vpack.c.b16 %v1086, %v1084
        %v1127 = vpack.c.b16 %v1089, %v1087
        %v1128 = vpack.c.b16 %v1090, %v1088
        %v1129 = vpack.c.b16 %v1093, %v1091
        %v1130 = vpack.c.b16 %v1094, %v1092
        %v1131 = vpack.c.b16 %v1097, %v1095
        %v1132 = vpack.c.b16 %v1098, %v1096
        %v1133 = vpack.c.b16 %v1101, %v1099
        %v1134 = vpack.c.b16 %v1102, %v1100
        %1167 = vmatpush.bf16.msra.mxu0 %v1117
        %1168 = vmatpush.bf16.msra.mxu0 %v1115
        %1169 = vmatpush.bf16.msra.mxu0 %v1113
        %1170 = vmatpush.bf16.msra.mxu0 %v1111
        %1171 = vmatpush.bf16.msra.mxu0 %v1109
        %1172 = vmatpush.bf16.msra.mxu0 %v1107
        %1173 = vmatpush.bf16.msra.mxu0 %v1105
        %1174 = vmatpush.bf16.msra.mxu0 %v1103
        %1175 = vmatmul.bf16.gmra.mxu0 %v992
        %v1176 = vpop.f32.mrf.mxu0
        %v1177 = vadd.f32 0.0, %v1176
        %v1178 = vpop.f32.mrf.mxu0
        %v1179 = vadd.f32 0.0, %v1178
        %1180 = vdwg.mxu0
        %1181 = vmatpush.bf16.msra.mxu0 %v1133
        %1182 = vmatpush.bf16.msra.mxu0 %v1131
        %1183 = vmatpush.bf16.msra.mxu0 %v1129
        %1184 = vmatpush.bf16.msra.mxu0 %v1127
        %1185 = vmatpush.bf16.msra.mxu0 %v1125
        %1186 = vmatpush.bf16.msra.mxu0 %v1123
        %1187 = vmatpush.bf16.msra.mxu0 %v1121
        %1188 = vmatpush.bf16.msra.mxu0 %v1119
        %1189 = vmatmul.bf16.gmra.mxu0 %v1004
        %v1190 = vpop.f32.mrf.mxu0
        %v1191 = vadd.f32 %v1177, %v1190
        %v1192 = vpop.f32.mrf.mxu0
        %v1193 = vadd.f32 %v1179, %v1192
        %1194 = vdwg.mxu0
        %1195 = vmatpush.bf16.msra.mxu0 %v1118
        %1196 = vmatpush.bf16.msra.mxu0 %v1116
        %1197 = vmatpush.bf16.msra.mxu0 %v1114
        %1198 = vmatpush.bf16.msra.mxu0 %v1112
        %1199 = vmatpush.bf16.msra.mxu0 %v1110
        %1200 = vmatpush.bf16.msra.mxu0 %v1108
        %1201 = vmatpush.bf16.msra.mxu0 %v1106
        %1202 = vmatpush.bf16.msra.mxu0 %v1104
        %1203 = vmatmul.bf16.gmra.mxu0 %v992
        %v1204 = vpop.f32.mrf.mxu0
        %v1205 = vadd.f32 0.0, %v1204
        %v1206 = vpop.f32.mrf.mxu0
        %v1207 = vadd.f32 0.0, %v1206
        %1208 = vdwg.mxu0
        %1209 = vmatpush.bf16.msra.mxu0 %v1134
        %1210 = vmatpush.bf16.msra.mxu0 %v1132
        %1211 = vmatpush.bf16.msra.mxu0 %v1130
        %1212 = vmatpush.bf16.msra.mxu0 %v1128
        %1213 = vmatpush.bf16.msra.mxu0 %v1126
        %1214 = vmatpush.bf16.msra.mxu0 %v1124
        %1215 = vmatpush.bf16.msra.mxu0 %v1122
        %1216 = vmatpush.bf16.msra.mxu0 %v1120
        %1217 = vmatmul.bf16.gmra.mxu0 %v1004
        %v1218 = vpop.f32.mrf.mxu0
        %v1219 = vadd.f32 %v1205, %v1218
        %v1220 = vpop.f32.mrf.mxu0
        %v1221 = vadd.f32 %v1207, %v1220
        %1222 = vdwg.mxu0
        %v1223 = vadd.f32 %v906, %v1191
        %v1224 = vadd.f32 %v934, %v1219
        %v1225 = vadd.f32 %v908, %v1193
        %v1226 = vadd.f32 %v936, %v1221
        %v1227 = vld [vmem:[%s2] sm:$0x3]
        %v1229 = vperm.slane %v1227, 0
        %v1230 = vperm.slane %v1227, 1
        %v1233 = vadd.f32 %v1223, %v1229
        %v1234 = vadd.f32 %v1224, %v1230
        %v1235 = vadd.f32 %v1225, %v1229
        %v1236 = vadd.f32 %v1226, %v1230
        %v1237 = vmax.f32 %v1233, 0.0
        %v1238 = vmax.f32 %v1234, 0.0
        %v1239 = vmax.f32 %v1235, 0.0
        %v1240 = vmax.f32 %v1236, 0.0
        %1241 = vst [vmem:[#allocation3 + $0x10] sm:$0xff] %v1237
        %1242 = vst [vmem:[#allocation3 + $0x18] sm:$0xff] %v1238
        %1243 = vst [vmem:[#allocation3 + $0x20] sm:$0xff] %v1239
        %1244 = vst [vmem:[#allocation3 + $0x28] sm:$0xff] %v1240
        %v1245 = vld [vmem:[#allocation3] sm:$0x80]
        %v1246 = vld [vmem:[#allocation3 + $0x8] sm:$0x80]
        %v1247 = vld [vmem:[#allocation3 + $0x10] sm:$0xff]
        %v1248 = vld [vmem:[#allocation3 + $0x18] sm:$0xff]
        %v1249 = vld [vmem:[#allocation3 + $0x20] sm:$0x7f]
        %v1250 = vld [vmem:[#allocation3 + $0x28] sm:$0x7f]
        %v1251 = vpack.c.bf16 %v1247, %v1245
        %v1252 = vpack.c.bf16 %v1248, %v1246
        %v1253 = vpack.c.bf16 %v1249, %v1249
        %v1254 = vpack.c.bf16 %v1250, %v1250
        %v1255 = vld [vmem:[#allocation6] sm:$0xff]
        %v1256 = vld [vmem:[#allocation6 + $0x8] sm:$0xff]
        %v1257 = vld [vmem:[#allocation6 + $0x10] sm:$0xff]
        %v1258 = vld [vmem:[#allocation6 + $0x18] sm:$0xff]
        %v1259 = vld [vmem:[#allocation6 + $0x20] sm:$0xff]
        %v1260 = vld [vmem:[#allocation6 + $0x28] sm:$0xff]
        %v1261 = vld [vmem:[#allocation6 + $0x30] sm:$0xff]
        %v1262 = vld [vmem:[#allocation6 + $0x38] sm:$0xff]
        %v1263 = vld [vmem:[#allocation6 + $0x40] sm:$0xff]
        %v1264 = vld [vmem:[#allocation6 + $0x48] sm:$0xff]
        %v1265 = vld [vmem:[#allocation6 + $0x50] sm:$0xff]
        %v1266 = vld [vmem:[#allocation6 + $0x58] sm:$0xff]
        %v1267 = vld [vmem:[#allocation6 + $0x60] sm:$0xff]
        %v1268 = vld [vmem:[#allocation6 + $0x68] sm:$0xff]
        %v1269 = vld [vmem:[#allocation6 + $0x70] sm:$0xff]
        %v1270 = vld [vmem:[#allocation6 + $0x78] sm:$0xff]
        %v1271 = vld [vmem:[#allocation6 + $0x80] sm:$0xff]
        %v1272 = vld [vmem:[#allocation6 + $0x88] sm:$0xff]
        %v1273 = vld [vmem:[#allocation6 + $0x90] sm:$0xff]
        %v1274 = vld [vmem:[#allocation6 + $0x98] sm:$0xff]
        %v1275 = vld [vmem:[#allocation6 + $0xa0] sm:$0xff]
        %v1276 = vld [vmem:[#allocation6 + $0xa8] sm:$0xff]
        %v1277 = vld [vmem:[#allocation6 + $0xb0] sm:$0xff]
        %v1278 = vld [vmem:[#allocation6 + $0xb8] sm:$0xff]
        %v1279 = vld [vmem:[#allocation6 + $0xc0] sm:$0xff]
        %v1280 = vld [vmem:[#allocation6 + $0xc8] sm:$0xff]
        %v1281 = vld [vmem:[#allocation6 + $0xd0] sm:$0xff]
        %v1282 = vld [vmem:[#allocation6 + $0xd8] sm:$0xff]
        %v1283 = vld [vmem:[#allocation6 + $0xe0] sm:$0xff]
        %v1284 = vld [vmem:[#allocation6 + $0xe8] sm:$0xff]
        %v1285 = vld [vmem:[#allocation6 + $0xf0] sm:$0xff]
        %v1286 = vld [vmem:[#allocation6 + $0xf8] sm:$0xff]
        %v1287 = vld [vmem:[#allocation3 + $0x20] sm:$0xff]
        %v1288 = vld [vmem:[#allocation3 + $0x28] sm:$0xff]
        %v1289 = vpack.c.bf16 %v1287, %v1247
        %v1290 = vpack.c.bf16 %v1288, %v1248
        %v1291 = vld [vmem:[#allocation6 + $0x100] sm:$0xff]
        %v1292 = vld [vmem:[#allocation6 + $0x108] sm:$0xff]
        %v1293 = vld [vmem:[#allocation6 + $0x110] sm:$0xff]
        %v1294 = vld [vmem:[#allocation6 + $0x118] sm:$0xff]
        %v1295 = vld [vmem:[#allocation6 + $0x120] sm:$0xff]
        %v1296 = vld [vmem:[#allocation6 + $0x128] sm:$0xff]
        %v1297 = vld [vmem:[#allocation6 + $0x130] sm:$0xff]
        %v1298 = vld [vmem:[#allocation6 + $0x138] sm:$0xff]
        %v1299 = vld [vmem:[#allocation6 + $0x140] sm:$0xff]
        %v1300 = vld [vmem:[#allocation6 + $0x148] sm:$0xff]
        %v1301 = vld [vmem:[#allocation6 + $0x150] sm:$0xff]
        %v1302 = vld [vmem:[#allocation6 + $0x158] sm:$0xff]
        %v1303 = vld [vmem:[#allocation6 + $0x160] sm:$0xff]
        %v1304 = vld [vmem:[#allocation6 + $0x168] sm:$0xff]
        %v1305 = vld [vmem:[#allocation6 + $0x170] sm:$0xff]
        %v1306 = vld [vmem:[#allocation6 + $0x178] sm:$0xff]
        %v1307 = vld [vmem:[#allocation6 + $0x180] sm:$0xff]
        %v1308 = vld [vmem:[#allocation6 + $0x188] sm:$0xff]
        %v1309 = vld [vmem:[#allocation6 + $0x190] sm:$0xff]
        %v1310 = vld [vmem:[#allocation6 + $0x198] sm:$0xff]
        %v1311 = vld [vmem:[#allocation6 + $0x1a0] sm:$0xff]
        %v1312 = vld [vmem:[#allocation6 + $0x1a8] sm:$0xff]
        %v1313 = vld [vmem:[#allocation6 + $0x1b0] sm:$0xff]
        %v1314 = vld [vmem:[#allocation6 + $0x1b8] sm:$0xff]
        %v1315 = vld [vmem:[#allocation6 + $0x1c0] sm:$0xff]
        %v1316 = vld [vmem:[#allocation6 + $0x1c8] sm:$0xff]
        %v1317 = vld [vmem:[#allocation6 + $0x1d0] sm:$0xff]
        %v1318 = vld [vmem:[#allocation6 + $0x1d8] sm:$0xff]
        %v1319 = vld [vmem:[#allocation6 + $0x1e0] sm:$0xff]
        %v1320 = vld [vmem:[#allocation6 + $0x1e8] sm:$0xff]
        %v1321 = vld [vmem:[#allocation6 + $0x1f0] sm:$0xff]
        %v1322 = vld [vmem:[#allocation6 + $0x1f8] sm:$0xff]
        %v1355 = vunpack.c.l.b16 %v1291
        %v1356 = vunpack.c.h.b16 %v1291
        %v1357 = vunpack.c.l.b16 %v1292
        %v1358 = vunpack.c.h.b16 %v1292
        %v1359 = vunpack.c.l.b16 %v1293
        %v1360 = vunpack.c.h.b16 %v1293
        %v1361 = vunpack.c.l.b16 %v1294
        %v1362 = vunpack.c.h.b16 %v1294
        %v1363 = vunpack.c.l.b16 %v1295
        %v1364 = vunpack.c.h.b16 %v1295
        %v1365 = vunpack.c.l.b16 %v1296
        %v1366 = vunpack.c.h.b16 %v1296
        %v1367 = vunpack.c.l.b16 %v1297
        %v1368 = vunpack.c.h.b16 %v1297
        %v1369 = vunpack.c.l.b16 %v1298
        %v1370 = vunpack.c.h.b16 %v1298
        %v1371 = vunpack.c.l.b16 %v1299
        %v1372 = vunpack.c.h.b16 %v1299
        %v1373 = vunpack.c.l.b16 %v1300
        %v1374 = vunpack.c.h.b16 %v1300
        %v1375 = vunpack.c.l.b16 %v1301
        %v1376 = vunpack.c.h.b16 %v1301
        %v1377 = vunpack.c.l.b16 %v1302
        %v1378 = vunpack.c.h.b16 %v1302
        %v1379 = vunpack.c.l.b16 %v1303
        %v1380 = vunpack.c.h.b16 %v1303
        %v1381 = vunpack.c.l.b16 %v1304
        %v1382 = vunpack.c.h.b16 %v1304
        %v1383 = vunpack.c.l.b16 %v1305
        %v1384 = vunpack.c.h.b16 %v1305
        %v1385 = vunpack.c.l.b16 %v1306
        %v1386 = vunpack.c.h.b16 %v1306
        %v1387 = vunpack.c.l.b16 %v1307
        %v1388 = vunpack.c.h.b16 %v1307
        %v1389 = vunpack.c.l.b16 %v1308
        %v1390 = vunpack.c.h.b16 %v1308
        %v1391 = vunpack.c.l.b16 %v1309
        %v1392 = vunpack.c.h.b16 %v1309
        %v1393 = vunpack.c.l.b16 %v1310
        %v1394 = vunpack.c.h.b16 %v1310
        %v1395 = vunpack.c.l.b16 %v1311
        %v1396 = vunpack.c.h.b16 %v1311
        %v1397 = vunpack.c.l.b16 %v1312
        %v1398 = vunpack.c.h.b16 %v1312
        %v1399 = vunpack.c.l.b16 %v1313
        %v1400 = vunpack.c.h.b16 %v1313
        %v1401 = vunpack.c.l.b16 %v1314
        %v1402 = vunpack.c.h.b16 %v1314
        %v1403 = vunpack.c.l.b16 %v1315
        %v1404 = vunpack.c.h.b16 %v1315
        %v1405 = vunpack.c.l.b16 %v1316
        %v1406 = vunpack.c.h.b16 %v1316
        %v1407 = vunpack.c.l.b16 %v1317
        %v1408 = vunpack.c.h.b16 %v1317
        %v1409 = vunpack.c.l.b16 %v1318
        %v1410 = vunpack.c.h.b16 %v1318
        %v1411 = vunpack.c.l.b16 %v1319
        %v1412 = vunpack.c.h.b16 %v1319
        %v1413 = vunpack.c.l.b16 %v1320
        %v1414 = vunpack.c.h.b16 %v1320
        %v1415 = vunpack.c.l.b16 %v1321
        %v1416 = vunpack.c.h.b16 %v1321
        %v1417 = vunpack.c.l.b16 %v1322
        %v1418 = vunpack.c.h.b16 %v1322
        %v1419 = vpack.c.b16 %v1357, %v1355
        %v1420 = vpack.c.b16 %v1358, %v1356
        %v1421 = vpack.c.b16 %v1361, %v1359
        %v1422 = vpack.c.b16 %v1362, %v1360
        %v1423 = vpack.c.b16 %v1365, %v1363
        %v1424 = vpack.c.b16 %v1366, %v1364
        %v1425 = vpack.c.b16 %v1369, %v1367
        %v1426 = vpack.c.b16 %v1370, %v1368
        %v1427 = vpack.c.b16 %v1373, %v1371
        %v1428 = vpack.c.b16 %v1374, %v1372
        %v1429 = vpack.c.b16 %v1377, %v1375
        %v1430 = vpack.c.b16 %v1378, %v1376
        %v1431 = vpack.c.b16 %v1381, %v1379
        %v1432 = vpack.c.b16 %v1382, %v1380
        %v1433 = vpack.c.b16 %v1385, %v1383
        %v1434 = vpack.c.b16 %v1386, %v1384
        %v1435 = vpack.c.b16 %v1389, %v1387
        %v1436 = vpack.c.b16 %v1390, %v1388
        %v1437 = vpack.c.b16 %v1393, %v1391
        %v1438 = vpack.c.b16 %v1394, %v1392
        %v1439 = vpack.c.b16 %v1397, %v1395
        %v1440 = vpack.c.b16 %v1398, %v1396
        %v1441 = vpack.c.b16 %v1401, %v1399
        %v1442 = vpack.c.b16 %v1402, %v1400
        %v1443 = vpack.c.b16 %v1405, %v1403
        %v1444 = vpack.c.b16 %v1406, %v1404
        %v1445 = vpack.c.b16 %v1409, %v1407
        %v1446 = vpack.c.b16 %v1410, %v1408
        %v1447 = vpack.c.b16 %v1413, %v1411
        %v1448 = vpack.c.b16 %v1414, %v1412
        %v1449 = vpack.c.b16 %v1417, %v1415
        %v1450 = vpack.c.b16 %v1418, %v1416
        %1483 = vmatpush.bf16.msra.mxu0 %v1433
        %1484 = vmatpush.bf16.msra.mxu0 %v1431
        %1485 = vmatpush.bf16.msra.mxu0 %v1429
        %1486 = vmatpush.bf16.msra.mxu0 %v1427
        %1487 = vmatpush.bf16.msra.mxu0 %v1425
        %1488 = vmatpush.bf16.msra.mxu0 %v1423
        %1489 = vmatpush.bf16.msra.mxu0 %v1421
        %1490 = vmatpush.bf16.msra.mxu0 %v1419
        %1491 = vmatmul.bf16.gmra.mxu0 %v1289
        %v1492 = vpop.f32.mrf.mxu0
        %v1493 = vadd.f32 0.0, %v1492
        %v1494 = vpop.f32.mrf.mxu0
        %v1495 = vadd.f32 0.0, %v1494
        %1496 = vdwg.mxu0
        %1497 = vmatpush.bf16.msra.mxu0 %v1449
        %1498 = vmatpush.bf16.msra.mxu0 %v1447
        %1499 = vmatpush.bf16.msra.mxu0 %v1445
        %1500 = vmatpush.bf16.msra.mxu0 %v1443
        %1501 = vmatpush.bf16.msra.mxu0 %v1441
        %1502 = vmatpush.bf16.msra.mxu0 %v1439
        %1503 = vmatpush.bf16.msra.mxu0 %v1437
        %1504 = vmatpush.bf16.msra.mxu0 %v1435
        %1505 = vmatmul.bf16.gmra.mxu0 %v1290
        %v1506 = vpop.f32.mrf.mxu0
        %v1507 = vadd.f32 %v1493, %v1506
        %v1508 = vpop.f32.mrf.mxu0
        %v1509 = vadd.f32 %v1495, %v1508
        %1510 = vdwg.mxu0
        %1511 = vmatpush.bf16.msra.mxu0 %v1434
        %1512 = vmatpush.bf16.msra.mxu0 %v1432
        %1513 = vmatpush.bf16.msra.mxu0 %v1430
        %1514 = vmatpush.bf16.msra.mxu0 %v1428
        %1515 = vmatpush.bf16.msra.mxu0 %v1426
        %1516 = vmatpush.bf16.msra.mxu0 %v1424
        %1517 = vmatpush.bf16.msra.mxu0 %v1422
        %1518 = vmatpush.bf16.msra.mxu0 %v1420
        %1519 = vmatmul.bf16.gmra.mxu0 %v1289
        %v1520 = vpop.f32.mrf.mxu0
        %v1521 = vadd.f32 0.0, %v1520
        %v1522 = vpop.f32.mrf.mxu0
        %v1523 = vadd.f32 0.0, %v1522
        %1524 = vdwg.mxu0
        %1525 = vmatpush.bf16.msra.mxu0 %v1450
        %1526 = vmatpush.bf16.msra.mxu0 %v1448
        %1527 = vmatpush.bf16.msra.mxu0 %v1446
        %1528 = vmatpush.bf16.msra.mxu0 %v1444
        %1529 = vmatpush.bf16.msra.mxu0 %v1442
        %1530 = vmatpush.bf16.msra.mxu0 %v1440
        %1531 = vmatpush.bf16.msra.mxu0 %v1438
        %1532 = vmatpush.bf16.msra.mxu0 %v1436
        %1533 = vmatmul.bf16.gmra.mxu0 %v1290
        %v1534 = vpop.f32.mrf.mxu0
        %v1535 = vadd.f32 %v1521, %v1534
        %v1536 = vpop.f32.mrf.mxu0
        %v1537 = vadd.f32 %v1523, %v1536
        %1538 = vdwg.mxu0
        %v1540 = vshrl.u32 %v1251, 16
        %v1542 = vrot.slane %v1540, 3
        %v1543 = vshll.u32 %v1251, 16
        %v1545 = vrot.slane %v1543, 4
        %v1546 = vor.u32 %v1542, %v1545
        %v1548 = vshrl.u32 %v1253, 16
        %v1550 = vrot.slane %v1548, 3
        %v1551 = vshll.u32 %v1253, 16
        %v1553 = vrot.slane %v1551, 4
        %v1554 = vor.u32 %v1550, %v1553
        %v1555 = vsel %vm685, %v1546, %v1554
        %v1557 = vshrl.u32 %v1252, 16
        %v1559 = vrot.slane %v1557, 3
        %v1560 = vshll.u32 %v1252, 16
        %v1562 = vrot.slane %v1560, 4
        %v1563 = vor.u32 %v1559, %v1562
        %v1565 = vshrl.u32 %v1254, 16
        %v1567 = vrot.slane %v1565, 3
        %v1568 = vshll.u32 %v1254, 16
        %v1570 = vrot.slane %v1568, 4
        %v1571 = vor.u32 %v1567, %v1570
        %v1572 = vsel %vm685, %v1563, %v1571
        %v1607 = vunpack.c.l.b16 %v1255
        %v1608 = vunpack.c.h.b16 %v1255
        %v1609 = vunpack.c.l.b16 %v1256
        %v1610 = vunpack.c.h.b16 %v1256
        %v1611 = vunpack.c.l.b16 %v1257
        %v1612 = vunpack.c.h.b16 %v1257
        %v1613 = vunpack.c.l.b16 %v1258
        %v1614 = vunpack.c.h.b16 %v1258
        %v1615 = vunpack.c.l.b16 %v1259
        %v1616 = vunpack.c.h.b16 %v1259
        %v1617 = vunpack.c.l.b16 %v1260
        %v1618 = vunpack.c.h.b16 %v1260
        %v1619 = vunpack.c.l.b16 %v1261
        %v1620 = vunpack.c.h.b16 %v1261
        %v1621 = vunpack.c.l.b16 %v1262
        %v1622 = vunpack.c.h.b16 %v1262
        %v1623 = vunpack.c.l.b16 %v1263
        %v1624 = vunpack.c.h.b16 %v1263
        %v1625 = vunpack.c.l.b16 %v1264
        %v1626 = vunpack.c.h.b16 %v1264
        %v1627 = vunpack.c.l.b16 %v1265
        %v1628 = vunpack.c.h.b16 %v1265
        %v1629 = vunpack.c.l.b16 %v1266
        %v1630 = vunpack.c.h.b16 %v1266
        %v1631 = vunpack.c.l.b16 %v1267
        %v1632 = vunpack.c.h.b16 %v1267
        %v1633 = vunpack.c.l.b16 %v1268
        %v1634 = vunpack.c.h.b16 %v1268
        %v1635 = vunpack.c.l.b16 %v1269
        %v1636 = vunpack.c.h.b16 %v1269
        %v1637 = vunpack.c.l.b16 %v1270
        %v1638 = vunpack.c.h.b16 %v1270
        %v1639 = vunpack.c.l.b16 %v1271
        %v1640 = vunpack.c.h.b16 %v1271
        %v1641 = vunpack.c.l.b16 %v1272
        %v1642 = vunpack.c.h.b16 %v1272
        %v1643 = vunpack.c.l.b16 %v1273
        %v1644 = vunpack.c.h.b16 %v1273
        %v1645 = vunpack.c.l.b16 %v1274
        %v1646 = vunpack.c.h.b16 %v1274
        %v1647 = vunpack.c.l.b16 %v1275
        %v1648 = vunpack.c.h.b16 %v1275
        %v1649 = vunpack.c.l.b16 %v1276
        %v1650 = vunpack.c.h.b16 %v1276
        %v1651 = vunpack.c.l.b16 %v1277
        %v1652 = vunpack.c.h.b16 %v1277
        %v1653 = vunpack.c.l.b16 %v1278
        %v1654 = vunpack.c.h.b16 %v1278
        %v1655 = vunpack.c.l.b16 %v1279
        %v1656 = vunpack.c.h.b16 %v1279
        %v1657 = vunpack.c.l.b16 %v1280
        %v1658 = vunpack.c.h.b16 %v1280
        %v1659 = vunpack.c.l.b16 %v1281
        %v1660 = vunpack.c.h.b16 %v1281
        %v1661 = vunpack.c.l.b16 %v1282
        %v1662 = vunpack.c.h.b16 %v1282
        %v1663 = vunpack.c.l.b16 %v1283
        %v1664 = vunpack.c.h.b16 %v1283
        %v1665 = vunpack.c.l.b16 %v1284
        %v1666 = vunpack.c.h.b16 %v1284
        %v1667 = vunpack.c.l.b16 %v1285
        %v1668 = vunpack.c.h.b16 %v1285
        %v1669 = vunpack.c.l.b16 %v1286
        %v1670 = vunpack.c.h.b16 %v1286
        %v1671 = vpack.c.b16 %v1609, %v1607
        %v1672 = vpack.c.b16 %v1610, %v1608
        %v1673 = vpack.c.b16 %v1613, %v1611
        %v1674 = vpack.c.b16 %v1614, %v1612
        %v1675 = vpack.c.b16 %v1617, %v1615
        %v1676 = vpack.c.b16 %v1618, %v1616
        %v1677 = vpack.c.b16 %v1621, %v1619
        %v1678 = vpack.c.b16 %v1622, %v1620
        %v1679 = vpack.c.b16 %v1625, %v1623
        %v1680 = vpack.c.b16 %v1626, %v1624
        %v1681 = vpack.c.b16 %v1629, %v1627
        %v1682 = vpack.c.b16 %v1630, %v1628
        %v1683 = vpack.c.b16 %v1633, %v1631
        %v1684 = vpack.c.b16 %v1634, %v1632
        %v1685 = vpack.c.b16 %v1637, %v1635
        %v1686 = vpack.c.b16 %v1638, %v1636
        %v1687 = vpack.c.b16 %v1641, %v1639
        %v1688 = vpack.c.b16 %v1642, %v1640
        %v1689 = vpack.c.b16 %v1645, %v1643
        %v1690 = vpack.c.b16 %v1646, %v1644
        %v1691 = vpack.c.b16 %v1649, %v1647
        %v1692 = vpack.c.b16 %v1650, %v1648
        %v1693 = vpack.c.b16 %v1653, %v1651
        %v1694 = vpack.c.b16 %v1654, %v1652
        %v1695 = vpack.c.b16 %v1657, %v1655
        %v1696 = vpack.c.b16 %v1658, %v1656
        %v1697 = vpack.c.b16 %v1661, %v1659
        %v1698 = vpack.c.b16 %v1662, %v1660
        %v1699 = vpack.c.b16 %v1665, %v1663
        %v1700 = vpack.c.b16 %v1666, %v1664
        %v1701 = vpack.c.b16 %v1669, %v1667
        %v1702 = vpack.c.b16 %v1670, %v1668
        %1735 = vmatpush.bf16.msra.mxu0 %v1685
        %1736 = vmatpush.bf16.msra.mxu0 %v1683
        %1737 = vmatpush.bf16.msra.mxu0 %v1681
        %1738 = vmatpush.bf16.msra.mxu0 %v1679
        %1739 = vmatpush.bf16.msra.mxu0 %v1677
        %1740 = vmatpush.bf16.msra.mxu0 %v1675
        %1741 = vmatpush.bf16.msra.mxu0 %v1673
        %1742 = vmatpush.bf16.msra.mxu0 %v1671
        %1743 = vmatmul.bf16.gmra.mxu0 %v1555
        %v1744 = vpop.f32.mrf.mxu0
        %v1745 = vadd.f32 %v1507, %v1744
        %v1746 = vpop.f32.mrf.mxu0
        %v1747 = vadd.f32 %v1509, %v1746
        %1748 = vdwg.mxu0
        %1749 = vmatpush.bf16.msra.mxu0 %v1701
        %1750 = vmatpush.bf16.msra.mxu0 %v1699
        %1751 = vmatpush.bf16.msra.mxu0 %v1697
        %1752 = vmatpush.bf16.msra.mxu0 %v1695
        %1753 = vmatpush.bf16.msra.mxu0 %v1693
        %1754 = vmatpush.bf16.msra.mxu0 %v1691
        %1755 = vmatpush.bf16.msra.mxu0 %v1689
        %1756 = vmatpush.bf16.msra.mxu0 %v1687
        %1757 = vmatmul.bf16.gmra.mxu0 %v1572
        %v1758 = vpop.f32.mrf.mxu0
        %v1759 = vadd.f32 %v1745, %v1758
        %v1760 = vpop.f32.mrf.mxu0
        %v1761 = vadd.f32 %v1747, %v1760
        %1762 = vdwg.mxu0
        %1763 = vmatpush.bf16.msra.mxu0 %v1686
        %1764 = vmatpush.bf16.msra.mxu0 %v1684
        %1765 = vmatpush.bf16.msra.mxu0 %v1682
        %1766 = vmatpush.bf16.msra.mxu0 %v1680
        %1767 = vmatpush.bf16.msra.mxu0 %v1678
        %1768 = vmatpush.bf16.msra.mxu0 %v1676
        %1769 = vmatpush.bf16.msra.mxu0 %v1674
        %1770 = vmatpush.bf16.msra.mxu0 %v1672
        %1771 = vmatmul.bf16.gmra.mxu0 %v1555
        %v1772 = vpop.f32.mrf.mxu0
        %v1773 = vadd.f32 %v1535, %v1772
        %v1774 = vpop.f32.mrf.mxu0
        %v1775 = vadd.f32 %v1537, %v1774
        %1776 = vdwg.mxu0
        %1777 = vmatpush.bf16.msra.mxu0 %v1702
        %1778 = vmatpush.bf16.msra.mxu0 %v1700
        %1779 = vmatpush.bf16.msra.mxu0 %v1698
        %1780 = vmatpush.bf16.msra.mxu0 %v1696
        %1781 = vmatpush.bf16.msra.mxu0 %v1694
        %1782 = vmatpush.bf16.msra.mxu0 %v1692
        %1783 = vmatpush.bf16.msra.mxu0 %v1690
        %1784 = vmatpush.bf16.msra.mxu0 %v1688
        %1785 = vmatmul.bf16.gmra.mxu0 %v1572
        %v1786 = vpop.f32.mrf.mxu0
        %v1787 = vadd.f32 %v1773, %v1786
        %v1788 = vpop.f32.mrf.mxu0
        %v1789 = vadd.f32 %v1775, %v1788
        %1790 = vdwg.mxu0
        %v1791 = vld [vmem:[#allocation3 + $0x10] sm:$0xfe]
        %v1792 = vld [vmem:[#allocation3 + $0x18] sm:$0xfe]
        %v1793 = vld [vmem:[#allocation3 + $0x20] sm:$0xff]
        %v1794 = vld [vmem:[#allocation3 + $0x28] sm:$0xff]
        %v1795 = vld [vmem:[#allocation3 + $0x30] sm:$0x1]
        %v1796 = vld [vmem:[#allocation3 + $0x38] sm:$0x1]
        %v1797 = vpack.c.bf16 %v1793, %v1791
        %v1798 = vpack.c.bf16 %v1794, %v1792
        %v1799 = vpack.c.bf16 %v1795, %v1795
        %v1800 = vpack.c.bf16 %v1796, %v1796
        %v1801 = vld [vmem:[#allocation6 + $0x200] sm:$0xff]
        %v1802 = vld [vmem:[#allocation6 + $0x208] sm:$0xff]
        %v1803 = vld [vmem:[#allocation6 + $0x210] sm:$0xff]
        %v1804 = vld [vmem:[#allocation6 + $0x218] sm:$0xff]
        %v1805 = vld [vmem:[#allocation6 + $0x220] sm:$0xff]
        %v1806 = vld [vmem:[#allocation6 + $0x228] sm:$0xff]
        %v1807 = vld [vmem:[#allocation6 + $0x230] sm:$0xff]
        %v1808 = vld [vmem:[#allocation6 + $0x238] sm:$0xff]
        %v1809 = vld [vmem:[#allocation6 + $0x240] sm:$0xff]
        %v1810 = vld [vmem:[#allocation6 + $0x248] sm:$0xff]
        %v1811 = vld [vmem:[#allocation6 + $0x250] sm:$0xff]
        %v1812 = vld [vmem:[#allocation6 + $0x258] sm:$0xff]
        %v1813 = vld [vmem:[#allocation6 + $0x260] sm:$0xff]
        %v1814 = vld [vmem:[#allocation6 + $0x268] sm:$0xff]
        %v1815 = vld [vmem:[#allocation6 + $0x270] sm:$0xff]
        %v1816 = vld [vmem:[#allocation6 + $0x278] sm:$0xff]
        %v1817 = vld [vmem:[#allocation6 + $0x280] sm:$0xff]
        %v1818 = vld [vmem:[#allocation6 + $0x288] sm:$0xff]
        %v1819 = vld [vmem:[#allocation6 + $0x290] sm:$0xff]
        %v1820 = vld [vmem:[#allocation6 + $0x298] sm:$0xff]
        %v1821 = vld [vmem:[#allocation6 + $0x2a0] sm:$0xff]
        %v1822 = vld [vmem:[#allocation6 + $0x2a8] sm:$0xff]
        %v1823 = vld [vmem:[#allocation6 + $0x2b0] sm:$0xff]
        %v1824 = vld [vmem:[#allocation6 + $0x2b8] sm:$0xff]
        %v1825 = vld [vmem:[#allocation6 + $0x2c0] sm:$0xff]
        %v1826 = vld [vmem:[#allocation6 + $0x2c8] sm:$0xff]
        %v1827 = vld [vmem:[#allocation6 + $0x2d0] sm:$0xff]
        %v1828 = vld [vmem:[#allocation6 + $0x2d8] sm:$0xff]
        %v1829 = vld [vmem:[#allocation6 + $0x2e0] sm:$0xff]
        %v1830 = vld [vmem:[#allocation6 + $0x2e8] sm:$0xff]
        %v1831 = vld [vmem:[#allocation6 + $0x2f0] sm:$0xff]
        %v1832 = vld [vmem:[#allocation6 + $0x2f8] sm:$0xff]
        %v1834 = vshrl.u32 %v1797, 16
        %v1836 = vshll.u32 %v1797, 16
        %v1838 = vrot.slane %v1836, 1
        %v1839 = vor.u32 %v1834, %v1838
        %v1841 = vshll.u32 %v1799, 16
        %v1843 = vrot.slane %v1841, 1
        %v1844 = vsel %vm980, %v1839, %v1843
        %v1846 = vshrl.u32 %v1798, 16
        %v1848 = vshll.u32 %v1798, 16
        %v1850 = vrot.slane %v1848, 1
        %v1851 = vor.u32 %v1846, %v1850
        %v1853 = vshll.u32 %v1800, 16
        %v1855 = vrot.slane %v1853, 1
        %v1856 = vsel %vm980, %v1851, %v1855
        %v1891 = vunpack.c.l.b16 %v1801
        %v1892 = vunpack.c.h.b16 %v1801
        %v1893 = vunpack.c.l.b16 %v1802
        %v1894 = vunpack.c.h.b16 %v1802
        %v1895 = vunpack.c.l.b16 %v1803
        %v1896 = vunpack.c.h.b16 %v1803
        %v1897 = vunpack.c.l.b16 %v1804
        %v1898 = vunpack.c.h.b16 %v1804
        %v1899 = vunpack.c.l.b16 %v1805
        %v1900 = vunpack.c.h.b16 %v1805
        %v1901 = vunpack.c.l.b16 %v1806
        %v1902 = vunpack.c.h.b16 %v1806
        %v1903 = vunpack.c.l.b16 %v1807
        %v1904 = vunpack.c.h.b16 %v1807
        %v1905 = vunpack.c.l.b16 %v1808
        %v1906 = vunpack.c.h.b16 %v1808
        %v1907 = vunpack.c.l.b16 %v1809
        %v1908 = vunpack.c.h.b16 %v1809
        %v1909 = vunpack.c.l.b16 %v1810
        %v1910 = vunpack.c.h.b16 %v1810
        %v1911 = vunpack.c.l.b16 %v1811
        %v1912 = vunpack.c.h.b16 %v1811
        %v1913 = vunpack.c.l.b16 %v1812
        %v1914 = vunpack.c.h.b16 %v1812
        %v1915 = vunpack.c.l.b16 %v1813
        %v1916 = vunpack.c.h.b16 %v1813
        %v1917 = vunpack.c.l.b16 %v1814
        %v1918 = vunpack.c.h.b16 %v1814
        %v1919 = vunpack.c.l.b16 %v1815
        %v1920 = vunpack.c.h.b16 %v1815
        %v1921 = vunpack.c.l.b16 %v1816
        %v1922 = vunpack.c.h.b16 %v1816
        %v1923 = vunpack.c.l.b16 %v1817
        %v1924 = vunpack.c.h.b16 %v1817
        %v1925 = vunpack.c.l.b16 %v1818
        %v1926 = vunpack.c.h.b16 %v1818
        %v1927 = vunpack.c.l.b16 %v1819
        %v1928 = vunpack.c.h.b16 %v1819
        %v1929 = vunpack.c.l.b16 %v1820
        %v1930 = vunpack.c.h.b16 %v1820
        %v1931 = vunpack.c.l.b16 %v1821
        %v1932 = vunpack.c.h.b16 %v1821
        %v1933 = vunpack.c.l.b16 %v1822
        %v1934 = vunpack.c.h.b16 %v1822
        %v1935 = vunpack.c.l.b16 %v1823
        %v1936 = vunpack.c.h.b16 %v1823
        %v1937 = vunpack.c.l.b16 %v1824
        %v1938 = vunpack.c.h.b16 %v1824
        %v1939 = vunpack.c.l.b16 %v1825
        %v1940 = vunpack.c.h.b16 %v1825
        %v1941 = vunpack.c.l.b16 %v1826
        %v1942 = vunpack.c.h.b16 %v1826
        %v1943 = vunpack.c.l.b16 %v1827
        %v1944 = vunpack.c.h.b16 %v1827
        %v1945 = vunpack.c.l.b16 %v1828
        %v1946 = vunpack.c.h.b16 %v1828
        %v1947 = vunpack.c.l.b16 %v1829
        %v1948 = vunpack.c.h.b16 %v1829
        %v1949 = vunpack.c.l.b16 %v1830
        %v1950 = vunpack.c.h.b16 %v1830
        %v1951 = vunpack.c.l.b16 %v1831
        %v1952 = vunpack.c.h.b16 %v1831
        %v1953 = vunpack.c.l.b16 %v1832
        %v1954 = vunpack.c.h.b16 %v1832
        %v1955 = vpack.c.b16 %v1893, %v1891
        %v1956 = vpack.c.b16 %v1894, %v1892
        %v1957 = vpack.c.b16 %v1897, %v1895
        %v1958 = vpack.c.b16 %v1898, %v1896
        %v1959 = vpack.c.b16 %v1901, %v1899
        %v1960 = vpack.c.b16 %v1902, %v1900
        %v1961 = vpack.c.b16 %v1905, %v1903
        %v1962 = vpack.c.b16 %v1906, %v1904
        %v1963 = vpack.c.b16 %v1909, %v1907
        %v1964 = vpack.c.b16 %v1910, %v1908
        %v1965 = vpack.c.b16 %v1913, %v1911
        %v1966 = vpack.c.b16 %v1914, %v1912
        %v1967 = vpack.c.b16 %v1917, %v1915
        %v1968 = vpack.c.b16 %v1918, %v1916
        %v1969 = vpack.c.b16 %v1921, %v1919
        %v1970 = vpack.c.b16 %v1922, %v1920
        %v1971 = vpack.c.b16 %v1925, %v1923
        %v1972 = vpack.c.b16 %v1926, %v1924
        %v1973 = vpack.c.b16 %v1929, %v1927
        %v1974 = vpack.c.b16 %v1930, %v1928
        %v1975 = vpack.c.b16 %v1933, %v1931
        %v1976 = vpack.c.b16 %v1934, %v1932
        %v1977 = vpack.c.b16 %v1937, %v1935
        %v1978 = vpack.c.b16 %v1938, %v1936
        %v1979 = vpack.c.b16 %v1941, %v1939
        %v1980 = vpack.c.b16 %v1942, %v1940
        %v1981 = vpack.c.b16 %v1945, %v1943
        %v1982 = vpack.c.b16 %v1946, %v1944
        %v1983 = vpack.c.b16 %v1949, %v1947
        %v1984 = vpack.c.b16 %v1950, %v1948
        %v1985 = vpack.c.b16 %v1953, %v1951
        %v1986 = vpack.c.b16 %v1954, %v1952
        %2019 = vmatpush.bf16.msra.mxu0 %v1969
        %2020 = vmatpush.bf16.msra.mxu0 %v1967
        %2021 = vmatpush.bf16.msra.mxu0 %v1965
        %2022 = vmatpush.bf16.msra.mxu0 %v1963
        %2023 = vmatpush.bf16.msra.mxu0 %v1961
        %2024 = vmatpush.bf16.msra.mxu0 %v1959
        %2025 = vmatpush.bf16.msra.mxu0 %v1957
        %2026 = vmatpush.bf16.msra.mxu0 %v1955
        %2027 = vmatmul.bf16.gmra.mxu0 %v1844
        %v2028 = vpop.f32.mrf.mxu0
        %v2029 = vadd.f32 0.0, %v2028
        %v2030 = vpop.f32.mrf.mxu0
        %v2031 = vadd.f32 0.0, %v2030
        %2032 = vdwg.mxu0
        %2033 = vmatpush.bf16.msra.mxu0 %v1985
        %2034 = vmatpush.bf16.msra.mxu0 %v1983
        %2035 = vmatpush.bf16.msra.mxu0 %v1981
        %2036 = vmatpush.bf16.msra.mxu0 %v1979
        %2037 = vmatpush.bf16.msra.mxu0 %v1977
        %2038 = vmatpush.bf16.msra.mxu0 %v1975
        %2039 = vmatpush.bf16.msra.mxu0 %v1973
        %2040 = vmatpush.bf16.msra.mxu0 %v1971
        %2041 = vmatmul.bf16.gmra.mxu0 %v1856
        %v2042 = vpop.f32.mrf.mxu0
        %v2043 = vadd.f32 %v2029, %v2042
        %v2044 = vpop.f32.mrf.mxu0
        %v2045 = vadd.f32 %v2031, %v2044
        %2046 = vdwg.mxu0
        %2047 = vmatpush.bf16.msra.mxu0 %v1970
        %2048 = vmatpush.bf16.msra.mxu0 %v1968
        %2049 = vmatpush.bf16.msra.mxu0 %v1966
        %2050 = vmatpush.bf16.msra.mxu0 %v1964
        %2051 = vmatpush.bf16.msra.mxu0 %v1962
        %2052 = vmatpush.bf16.msra.mxu0 %v1960
        %2053 = vmatpush.bf16.msra.mxu0 %v1958
        %2054 = vmatpush.bf16.msra.mxu0 %v1956
        %2055 = vmatmul.bf16.gmra.mxu0 %v1844
        %v2056 = vpop.f32.mrf.mxu0
        %v2057 = vadd.f32 0.0, %v2056
        %v2058 = vpop.f32.mrf.mxu0
        %v2059 = vadd.f32 0.0, %v2058
        %2060 = vdwg.mxu0
        %2061 = vmatpush.bf16.msra.mxu0 %v1986
        %2062 = vmatpush.bf16.msra.mxu0 %v1984
        %2063 = vmatpush.bf16.msra.mxu0 %v1982
        %2064 = vmatpush.bf16.msra.mxu0 %v1980
        %2065 = vmatpush.bf16.msra.mxu0 %v1978
        %2066 = vmatpush.bf16.msra.mxu0 %v1976
        %2067 = vmatpush.bf16.msra.mxu0 %v1974
        %2068 = vmatpush.bf16.msra.mxu0 %v1972
        %2069 = vmatmul.bf16.gmra.mxu0 %v1856
        %v2070 = vpop.f32.mrf.mxu0
        %v2071 = vadd.f32 %v2057, %v2070
        %v2072 = vpop.f32.mrf.mxu0
        %v2073 = vadd.f32 %v2059, %v2072
        %2074 = vdwg.mxu0
        %v2075 = vadd.f32 %v1759, %v2043
        %v2076 = vadd.f32 %v1787, %v2071
        %v2077 = vadd.f32 %v1761, %v2045
        %v2078 = vadd.f32 %v1789, %v2073
        %v2079 = vld [vmem:[%s4] sm:$0x3]
        %v2081 = vperm.slane %v2079, 0
        %v2082 = vperm.slane %v2079, 1
        %v2085 = vadd.f32 %v2075, %v2081
        %v2086 = vadd.f32 %v2076, %v2082
        %v2087 = vadd.f32 %v2077, %v2081
        %v2088 = vadd.f32 %v2078, %v2082
        %v2089 = vadd.f32 %v2085, %v2087
        %v2090 = vrot.slane %v2089, 4
        %v2091 = vadd.f32 %v2089, %v2090
        %v2092 = vrot.slane %v2091, 2
        %v2093 = vadd.f32 %v2091, %v2092
        %v2094 = vrot.slane %v2093, 1
        %v2095 = vadd.f32 %v2093, %v2094
        %v2096 = vadd.f32 %v2086, %v2088
        %v2097 = vrot.slane %v2096, 4
        %v2098 = vadd.f32 %v2096, %v2097
        %v2099 = vrot.slane %v2098, 2
        %v2100 = vadd.f32 %v2098, %v2099
        %v2101 = vrot.slane %v2100, 1
        %v2102 = vadd.f32 %v2100, %v2101
        %v2103 = vrcp.pop 16.0
        %v2104 = vmul.f32 16.0, %v2103
        %v2105 = vsub.f32 1.0, %v2104
        %v2106 = vmul.f32 %v2103, %v2105
        %v2107 = vadd.f32 %v2103, %v2106
        %vm2108 = vweird.f32 %v2103
        %v2109 = vsel %vm2108, %v2103, %v2107
        %v2110 = vmul.f32 %v2095, %v2109
        %v2111 = vmul.f32 %v2102, %v2109
        %v2112 = vld [vmem:[%s5] sm:$0xff]
        %v2113 = vld [vmem:[%s5 + $0x8] sm:$0xff]
        %v2114 = vld [vmem:[%s5 + $0x10] sm:$0xff]
        %v2115 = vld [vmem:[%s5 + $0x18] sm:$0xff]
        %v2116 = vld [vmem:[%s5 + $0x20] sm:$0xff]
        %v2117 = vld [vmem:[%s5 + $0x28] sm:$0xff]
        %v2118 = vld [vmem:[%s5 + $0x30] sm:$0xff]
        %v2119 = vld [vmem:[%s5 + $0x38] sm:$0xff]
        %v2120 = vld [vmem:[%s5 + $0x40] sm:$0xff]
        %v2121 = vld [vmem:[%s5 + $0x48] sm:$0xff]
        %v2122 = vld [vmem:[%s5 + $0x50] sm:$0xff]
        %v2123 = vld [vmem:[%s5 + $0x58] sm:$0xff]
        %v2124 = vld [vmem:[%s5 + $0x60] sm:$0xff]
        %v2125 = vld [vmem:[%s5 + $0x68] sm:$0xff]
        %v2126 = vld [vmem:[%s5 + $0x70] sm:$0xff]
        %v2127 = vld [vmem:[%s5 + $0x78] sm:$0xff]
        %v2128 = vld [vmem:[%s5 + $0x80] sm:$0xff]
        %v2129 = vld [vmem:[%s5 + $0x88] sm:$0xff]
        %v2130 = vld [vmem:[%s5 + $0x90] sm:$0xff]
        %v2131 = vld [vmem:[%s5 + $0x98] sm:$0xff]
        %v2132 = vld [vmem:[%s5 + $0xa0] sm:$0xff]
        %v2133 = vld [vmem:[%s5 + $0xa8] sm:$0xff]
        %v2134 = vld [vmem:[%s5 + $0xb0] sm:$0xff]
        %v2135 = vld [vmem:[%s5 + $0xb8] sm:$0xff]
        %v2136 = vld [vmem:[%s5 + $0xc0] sm:$0xff]
        %v2137 = vld [vmem:[%s5 + $0xc8] sm:$0xff]
        %v2138 = vld [vmem:[%s5 + $0xd0] sm:$0xff]
        %v2139 = vld [vmem:[%s5 + $0xd8] sm:$0xff]
        %v2140 = vld [vmem:[%s5 + $0xe0] sm:$0xff]
        %v2141 = vld [vmem:[%s5 + $0xe8] sm:$0xff]
        %v2142 = vld [vmem:[%s5 + $0xf0] sm:$0xff]
        %v2143 = vld [vmem:[%s5 + $0xf8] sm:$0xff]
        %v2144 = vld [vmem:[%s6] sm:$0x1]
        %2145 = vmatpush.msra.mxu0 %v2127
        %2146 = vmatpush.msra.mxu0 %v2126
        %2147 = vmatpush.msra.mxu0 %v2125
        %2148 = vmatpush.msra.mxu0 %v2124
        %2149 = vmatpush.msra.mxu0 %v2123
        %2150 = vmatpush.msra.mxu0 %v2122
        %2151 = vmatpush.msra.mxu0 %v2121
        %2152 = vmatpush.msra.mxu0 %v2120
        %2153 = vmatpush.msra.mxu0 %v2119
        %2154 = vmatpush.msra.mxu0 %v2118
        %2155 = vmatpush.msra.mxu0 %v2117
        %2156 = vmatpush.msra.mxu0 %v2116
        %2157 = vmatpush.msra.mxu0 %v2115
        %2158 = vmatpush.msra.mxu0 %v2114
        %2159 = vmatpush.msra.mxu0 %v2113
        %2160 = vmatpush.msra.mxu0 %v2112
        %2161 = vmatmul.f32.gmra.mxu0 %v2110
        %v2162 = vpop.f32.mrf.mxu0
        %v2163 = vadd.f32 %v2144, %v2162
        %2164 = vdwg.mxu0
        %2165 = vmatpush.msra.mxu0 %v2143
        %2166 = vmatpush.msra.mxu0 %v2142
        %2167 = vmatpush.msra.mxu0 %v2141
        %2168 = vmatpush.msra.mxu0 %v2140
        %2169 = vmatpush.msra.mxu0 %v2139
        %2170 = vmatpush.msra.mxu0 %v2138
        %2171 = vmatpush.msra.mxu0 %v2137
        %2172 = vmatpush.msra.mxu0 %v2136
        %2173 = vmatpush.msra.mxu0 %v2135
        %2174 = vmatpush.msra.mxu0 %v2134
        %2175 = vmatpush.msra.mxu0 %v2133
        %2176 = vmatpush.msra.mxu0 %v2132
        %2177 = vmatpush.msra.mxu0 %v2131
        %2178 = vmatpush.msra.mxu0 %v2130
        %2179 = vmatpush.msra.mxu0 %v2129
        %2180 = vmatpush.msra.mxu0 %v2128
        %2181 = vmatmul.f32.gmra.mxu0 %v2111
        %v2182 = vpop.f32.mrf.mxu0
        %v2183 = vadd.f32 %v2163, %v2182
        %2184 = vdwg.mxu0
        %v2185 = vmax.f32 %v2183, 0.0
        %v2186 = vld [vmem:[%s7] sm:$0xff]
        %v2187 = vld [vmem:[%s8] sm:$0x3]
        %2189 = vst [vmem:[#allocation1] ss:$2 sm:$0xff] %v2186
        %v2190 = vld.sshfl [vmem:[#allocation1] sm:$0xff pattern:$0x75316420]
        %v2191 = vld.sshfl [vmem:[#allocation1 + $0x8] sm:$0xff pattern:$0x75316420]
        %v2193 = vperm.slane %v2187, 0
        %v2194 = vperm.slane %v2187, 1
        %vm2197 = vcmask 31744
        %v2199 = vsel %vm2197, %v2185, 0
        %vm2201 = vcmask 1043456
        %v2202 = vsel %vm2201, %v2190, 0
        %v2204 = vsel %vm2201, %v2191, 0
        %2206 = vmatpush.msra.mxu0 0.0
        %2207 = vmatpush.msra.mxu0 0.0
        %2208 = vmatpush.msra.mxu0 0.0
        %2209 = vmatpush.msra.mxu0 0.0
        %2210 = vmatpush.msra.mxu0 0.0
        %2211 = vmatpush.msra.mxu0 0.0
        %2212 = vmatpush.msra.mxu0 0.0
        %2213 = vmatpush.msra.mxu0 0.0
        %2214 = vmatpush.msra.mxu0 0.0
        %2215 = vmatpush.msra.mxu0 0.0
        %2216 = vmatpush.msra.mxu0 0.0
        %2217 = vmatpush.msra.mxu0 0.0
        %2218 = vmatpush.msra.mxu0 0.0
        %2219 = vmatpush.msra.mxu0 0.0
        %2220 = vmatpush.msra.mxu0 0.0
        %2221 = vmatpush.msra.mxu0 %v2202
        %2222 = vmatmul.f32.gmra.mxu0 %v2199
        %v2223 = vpop.f32.mrf.mxu0
        %v2224 = vadd.f32 %v2193, %v2223
        %2225 = vdwg.mxu0
        %2226 = vmatpush.msra.mxu0 0.0
        %2227 = vmatpush.msra.mxu0 0.0
        %2228 = vmatpush.msra.mxu0 0.0
        %2229 = vmatpush.msra.mxu0 0.0
        %2230 = vmatpush.msra.mxu0 0.0
        %2231 = vmatpush.msra.mxu0 0.0
        %2232 = vmatpush.msra.mxu0 0.0
        %2233 = vmatpush.msra.mxu0 0.0
        %2234 = vmatpush.msra.mxu0 0.0
        %2235 = vmatpush.msra.mxu0 0.0
        %2236 = vmatpush.msra.mxu0 0.0
        %2237 = vmatpush.msra.mxu0 0.0
        %2238 = vmatpush.msra.mxu0 0.0
        %2239 = vmatpush.msra.mxu0 0.0
        %2240 = vmatpush.msra.mxu0 0.0
        %2241 = vmatpush.msra.mxu0 %v2204
        %2242 = vmatmul.f32.gmra.mxu0 %v2199
        %v2243 = vpop.f32.mrf.mxu0
        %v2244 = vadd.f32 %v2194, %v2243
        %2245 = vdwg.mxu0
        %v2246 = vxor.u32 %v2224, 2147483648
        %v2247 = vxor.u32 %v2244, 2147483648
        %v2248 = vmul.f32 %v2246, 1.442695
        %v2249 = vpow.pop %v2248
        %v2250 = vmul.f32 %v2247, 1.442695
        %v2251 = vpow.pop %v2250
        %v2252 = vadd.f32 %v2249, 1.0
        %v2253 = vadd.f32 %v2251, 1.0
        %v2254 = vrcp.pop %v2252
        %v2255 = vmul.f32 %v2252, %v2254
        %v2256 = vsub.f32 1.0, %v2255
        %v2257 = vmul.f32 %v2254, %v2256
        %v2258 = vadd.f32 %v2254, %v2257
        %vm2259 = vweird.f32 %v2252
        %vm2260 = vweird.f32 %v2254
        %vm2261 = vmor %vm2259, %vm2260
        %v2262 = vsel %vm2261, %v2254, %v2258
        %v2263 = vand.u32 2147483647, %v2252
        %vm2264 = vcmp.eq.f32.partialorder %v2263, 8.507059e+37
        %v2265 = vand.u32 %v2252, 2147483648
        %v2266 = vor.u32 1.1754944e-38, %v2265
        %v2267 = vsel %vm2264, %v2266, %v2262
        %v2268 = vmul.f32 1.0, %v2267
        %v2269 = vrcp.pop %v2253
        %v2270 = vmul.f32 %v2253, %v2269
        %v2271 = vsub.f32 1.0, %v2270
        %v2272 = vmul.f32 %v2269, %v2271
        %v2273 = vadd.f32 %v2269, %v2272
        %vm2274 = vweird.f32 %v2253
        %vm2275 = vweird.f32 %v2269
        %vm2276 = vmor %vm2274, %vm2275
        %v2277 = vsel %vm2276, %v2269, %v2273
        %v2278 = vand.u32 2147483647, %v2253
        %vm2279 = vcmp.eq.f32.partialorder %v2278, 8.507059e+37
        %v2280 = vand.u32 %v2253, 2147483648
        %v2281 = vor.u32 1.1754944e-38, %v2280
        %v2282 = vsel %vm2279, %v2281, %v2277
        %v2283 = vmul.f32 1.0, %v2282
        %v2284 = vperm.slane %v2268, 0
        %v2285 = vperm.slane %v2283, 0
        %v2286 = vmul.f32 %v2085, %v2284
        %v2287 = vmul.f32 %v2086, %v2285
        %v2288 = vmul.f32 %v2087, %v2284
        %v2289 = vmul.f32 %v2088, %v2285
        %v2290 = vld [vmem:[%s361] sm:$0xff]
        %v2291 = vld [vmem:[%s361 + $0x8] sm:$0xff]
        %v2292 = vld [vmem:[%s361 + $0x10] sm:$0xff]
        %v2293 = vld [vmem:[%s361 + $0x18] sm:$0xff]
        %v2294 = vadd.f32 %v2286, %v2290
        %v2295 = vadd.f32 %v2287, %v2291
        %v2296 = vadd.f32 %v2288, %v2292
        %v2297 = vadd.f32 %v2289, %v2293
        %v2298 = vpack.c.bf16 %v2295, %v2294
        %v2299 = vpack.c.bf16 %v2297, %v2296
        %2300 = vst [vmem:[%s366] sm:$0xff] %v2298
        %2301 = vst [vmem:[%s366 + $0x8] sm:$0xff] %v2299
        %p2302 = scmp.lt.s32.totalorder %s22, 1
        %s2303 = scalar_select %p2302, %s22, 1
        %s2304 = smul.addr %s2303, 4
        %s2305 = smul.addr %s2304, 4
        %s2306 = scalar_lea.vmem %s9, %s2305
        // Predicated region
        $region65: #{doft_forward.3} parent=55 // pred_check
          %p2307 = pneg %p234
        $region66: #{doft_forward.3} parent=55 // pred_check_branch
          %2309 = sbr.rel (%p2307) target = $region68
        $region67: #{doft_forward.3} parent=55 // pred_region
          _
        $region68: #{doft_forward.3} parent=55 // pred_fallthru
          _
      $region56: #{doft_forward.3} parent=5 // pred_fallthru
        _
      %p2310 = scmp.le.s32.totalorder 2, %s17
      // Predicated region
      $region69: #{doft_forward.3} parent=5 // pred_check
        %p2311 = pneg %p2310
      $region70: #{doft_forward.3} parent=5 // pred_check_branch
        %2313 = sbr.rel (%p2311) target = $region72
      $region71: #{doft_forward.3} parent=5 // pred_region
        %s2314 = ssub.s32 %s17, 2
        // Predicated region
        $region73: #{doft_forward.3} parent=71 // pred_check
          %p2315 = pneg %p240
        $region74: #{doft_forward.3} parent=71 // pred_check_branch
          %2317 = sbr.rel (%p2315) target = $region76
        $region75: #{doft_forward.3} parent=71 // pred_region
          %p2318 = scmp.lt.s32.totalorder %s23, 1
          %s2319 = scalar_select %p2318, %s23, 1
          %s2320 = smul.addr %s2319, 4
          %s2321 = smul.addr %s2320, 4
          %s2322 = scalar_lea.vmem %s9, %s2321
        $region76: #{doft_forward.3} parent=71 // pred_fallthru
          _
      $region72: #{doft_forward.3} parent=5 // pred_fallthru
        _
    $region6: #{doft_forward.3} parent=1 // loop_footer
      %s21 = sadd.s32 1, %s17
    $region7: #{doft_forward.3} parent=1 // loop_footer_branch
      %16 = sbr.rel target = $region3
    $region8: #{doft_forward.3} parent=1 // loop_exit
      _
    %2323 = vsyncpa [#allocation5], 1
    %s2324 = scalar_lea.sflag [#allocation5], 1
    %2325 = vsyncpa %s2324, 1
    %2326 = vsyncpa [#allocation7], 1

// kernel: doft_forward.5
$region0: #{doft_forward.5}
  #allocation0 [shape = 'u32[]', space=smem, size = 0x4, offset = 0x4, fixed_abs, tag = 'smem constant byte address 0x4 - core index']
  #allocation1 [shape = 'u32[72,128]{1,0:T(1,128)}', space=vmem, size = 0x9000, scoped, tag = 'internal scratch']
  #allocation2 [shape = 'f32[25,256]{1,0:T(8,128)}', space=vmem, size = 0x8000, scoped, tag = 'scratch operand']
  #allocation3 [shape = 'f32[25,256]{1,0:T(8,128)}', space=vmem, size = 0x8000, scoped, tag = 'scratch operand']
  %s0 = inlined_call_operand.vmem [shape: f32[2,16,256], index: 0, kind: input, shape index: {}]
  %s1 = inlined_call_operand.vmem [shape: bf16[2,16,256], index: 1, kind: input, shape index: {}]
  %s2 = inlined_call_operand.vmem [shape: f32[2,16,256], index: 2, kind: input, shape index: {}]
  %s3 = inlined_call_operand.vmem [shape: bf16[256,64], index: 3, kind: input, shape index: {}]
  %s4 = inlined_call_operand.vmem [shape: f32[1,64], index: 4, kind: input, shape index: {}]
  %s5 = inlined_call_operand.vmem [shape: bf16[256,64], index: 5, kind: input, shape index: {}]
  %s6 = inlined_call_operand.vmem [shape: f32[1,64], index: 6, kind: input, shape index: {}]
  %s7 = inlined_call_operand.vmem [shape: bf16[64,256], index: 7, kind: input, shape index: {}]
  %s8 = inlined_call_operand.vmem [shape: f32[1,256], index: 8, kind: input, shape index: {}]
  %s9 = inlined_call_operand.hbm [shape: bf16[1536,256], index: 9, kind: input, shape index: {}]
  %s10 = inlined_call_operand.vmem [shape: f32[1,256], index: 10, kind: input, shape index: {}]
  %s11 = inlined_call_operand.vmem [shape: f32[2,16,256], index: 11, kind: output, shape index: {}]
  %s12 = sld [smem:[#allocation0]]
  $region81: #{doft_forward.5} parent=0
    _
  %s14 = ssub.s32 1, %s12
  %s15 = scalar_select 0, %s14, %s12
  $region1: #{doft_forward.5} parent=0
    #allocation4 [shape = 'u8[786432]{0}', space=vmem, size = 0xc0000, scoped, tag = 'input window, operand 9, single buffered']
    #allocation5 [shape = 's32[2]{0}', space=sflag, size = 0x8, scoped, tag = 'scoped memory for doft_forward.5']
    %16 = vsyncpa [#allocation5], 0
    loop: start=0, step=1, limit=4
    $region2: #{doft_forward.5} parent=1 // loop_pre_header
      _
    $region3: #{doft_forward.5} parent=1 // loop_header
      %s18 = sphi 0, %s22
      %p19 = scmp.ge.s32.totalorder %s18, 4
      %s28 = sphi 0, %s30
      %s31 = sphi 0, %s28
      %s32 = sphi 0, %s31
      %s48 = sphi 0, %s32
      %s54 = sphi 0, %s56
      %s57 = sphi 0, %s54
      %s58 = sphi 0, %s57
      %s74 = sphi 0, %s58
      %s80 = sphi 0, %s82
      %s83 = sphi 0, %s80
      %s84 = sphi 0, %s83
      %s100 = sphi 0, %s84
      %s104 = sphi 0, %s104
      %s106 = sphi 0, %s104
      %s107 = sphi 0, %s106
      %s121 = sphi 0, %s107
      %s125 = sphi 0, %s125
      %s127 = sphi 0, %s125
      %s128 = sphi 0, %s127
      %s142 = sphi 0, %s128
      %s146 = sphi 0, %s146
      %s148 = sphi 0, %s146
      %s149 = sphi 0, %s148
      %s163 = sphi 0, %s149
      %s167 = sphi 0, %s167
      %s169 = sphi 0, %s167
      %s170 = sphi 0, %s169
      %s184 = sphi 0, %s170
      %s188 = sphi 0, %s188
      %s190 = sphi 0, %s188
      %s191 = sphi 0, %s190
      %s205 = sphi 0, %s191
      %s209 = sphi 0, %s209
      %s211 = sphi 0, %s209
      %s212 = sphi 0, %s211
      %s226 = sphi 0, %s212
      %s230 = sphi 0, %s230
      %s232 = sphi 0, %s230
      %s233 = sphi 0, %s232
      %s247 = sphi 0, %s233
      %s251 = sphi 0, %s251
      %s253 = sphi 0, %s251
      %s254 = sphi 0, %s253
      %s268 = sphi 0, %s254
      %s274 = sphi 0, %s276
      %s277 = sphi 0, %s274
      %s278 = sphi 0, %s277
      %s294 = sphi 0, %s278
    $region4: #{doft_forward.5} parent=1 // loop_header_branch
      %21 = sbr.rel (%p19) target = $region8
    $region5: #{doft_forward.5} parent=1 // loop_body
      %s23 = ssub.s32 %s18, 1
      %s24 = ssub.s32 %s18, 2
      %s25 = sadd.s32 %s18, 1
      %s26 = ssub.s32 %s18, %s25
      %p27 = scmp.eq.s32.totalorder %s26, 0
      %s29 = sadd.s32 %s28, 1
      %s30 = scalar_select %p27, %s28, %s29
      %p33 = pneg %p27
      %p34 = scmp.eq.s32.totalorder %s18, 1
      %p35 = por %p33, %p34
      %p36 = scmp.ne.s32.totalorder %s28, %s31
      %p37 = scmp.eq.s32.totalorder %s18, 0
      %p38 = por %p36, %p37
      %p39 = scmp.ne.s32.totalorder %s28, %s31
      %p40 = scmp.eq.s32.totalorder %s23, 1
      %p41 = por %p39, %p40
      %p42 = scmp.ne.s32.totalorder %s31, %s32
      %p43 = scmp.eq.s32.totalorder %s23, 0
      %p44 = por %p42, %p43
      %p45 = scmp.ne.s32.totalorder %s31, %s32
      %p46 = scmp.eq.s32.totalorder %s24, 1
      %p47 = por %p45, %p46
      %p49 = scmp.ne.s32.totalorder %s32, %s48
      %p50 = scmp.eq.s32.totalorder %s24, 0
      %p51 = por %p49, %p50
      %s52 = ssub.s32 %s18, %s25
      %p53 = scmp.eq.s32.totalorder %s52, 0
      %s55 = sadd.s32 %s54, 1
      %s56 = scalar_select %p53, %s54, %s55
      %p59 = pneg %p53
      %p60 = scmp.eq.s32.totalorder %s18, 1
      %p61 = por %p59, %p60
      %p62 = scmp.ne.s32.totalorder %s54, %s57
      %p63 = scmp.eq.s32.totalorder %s18, 0
      %p64 = por %p62, %p63
      %p65 = scmp.ne.s32.totalorder %s54, %s57
      %p66 = scmp.eq.s32.totalorder %s23, 1
      %p67 = por %p65, %p66
      %p68 = scmp.ne.s32.totalorder %s57, %s58
      %p69 = scmp.eq.s32.totalorder %s23, 0
      %p70 = por %p68, %p69
      %p71 = scmp.ne.s32.totalorder %s57, %s58
      %p72 = scmp.eq.s32.totalorder %s24, 1
      %p73 = por %p71, %p72
      %p75 = scmp.ne.s32.totalorder %s58, %s74
      %p76 = scmp.eq.s32.totalorder %s24, 0
      %p77 = por %p75, %p76
      %s78 = ssub.s32 %s18, %s25
      %p79 = scmp.eq.s32.totalorder %s78, 0
      %s81 = sadd.s32 %s80, 1
      %s82 = scalar_select %p79, %s80, %s81
      %p85 = pneg %p79
      %p86 = scmp.eq.s32.totalorder %s18, 1
      %p87 = por %p85, %p86
      %p88 = scmp.ne.s32.totalorder %s80, %s83
      %p89 = scmp.eq.s32.totalorder %s18, 0
      %p90 = por %p88, %p89
      %p91 = scmp.ne.s32.totalorder %s80, %s83
      %p92 = scmp.eq.s32.totalorder %s23, 1
      %p93 = por %p91, %p92
      %p94 = scmp.ne.s32.totalorder %s83, %s84
      %p95 = scmp.eq.s32.totalorder %s23, 0
      %p96 = por %p94, %p95
      %p97 = scmp.ne.s32.totalorder %s83, %s84
      %p98 = scmp.eq.s32.totalorder %s24, 1
      %p99 = por %p97, %p98
      %p101 = scmp.ne.s32.totalorder %s84, %s100
      %p102 = scmp.eq.s32.totalorder %s24, 0
      %p103 = por %p101, %p102
      %s105 = sadd.s32 %s104, 1
      %p108 = scmp.eq.s32.totalorder %s18, 1
      %p109 = scmp.ne.s32.totalorder %s104, %s106
      %p110 = scmp.eq.s32.totalorder %s18, 0
      %p111 = por %p109, %p110
      %p112 = scmp.ne.s32.totalorder %s104, %s106
      %p113 = scmp.eq.s32.totalorder %s23, 1
      %p114 = por %p112, %p113
      %p115 = scmp.ne.s32.totalorder %s106, %s107
      %p116 = scmp.eq.s32.totalorder %s23, 0
      %p117 = por %p115, %p116
      %p118 = scmp.ne.s32.totalorder %s106, %s107
      %p119 = scmp.eq.s32.totalorder %s24, 1
      %p120 = por %p118, %p119
      %p122 = scmp.ne.s32.totalorder %s107, %s121
      %p123 = scmp.eq.s32.totalorder %s24, 0
      %p124 = por %p122, %p123
      %s126 = sadd.s32 %s125, 1
      %p129 = scmp.eq.s32.totalorder %s18, 1
      %p130 = scmp.ne.s32.totalorder %s125, %s127
      %p131 = scmp.eq.s32.totalorder %s18, 0
      %p132 = por %p130, %p131
      %p133 = scmp.ne.s32.totalorder %s125, %s127
      %p134 = scmp.eq.s32.totalorder %s23, 1
      %p135 = por %p133, %p134
      %p136 = scmp.ne.s32.totalorder %s127, %s128
      %p137 = scmp.eq.s32.totalorder %s23, 0
      %p138 = por %p136, %p137
      %p139 = scmp.ne.s32.totalorder %s127, %s128
      %p140 = scmp.eq.s32.totalorder %s24, 1
      %p141 = por %p139, %p140
      %p143 = scmp.ne.s32.totalorder %s128, %s142
      %p144 = scmp.eq.s32.totalorder %s24, 0
      %p145 = por %p143, %p144
      %s147 = sadd.s32 %s146, 1
      %p150 = scmp.eq.s32.totalorder %s18, 1
      %p151 = scmp.ne.s32.totalorder %s146, %s148
      %p152 = scmp.eq.s32.totalorder %s18, 0
      %p153 = por %p151, %p152
      %p154 = scmp.ne.s32.totalorder %s146, %s148
      %p155 = scmp.eq.s32.totalorder %s23, 1
      %p156 = por %p154, %p155
      %p157 = scmp.ne.s32.totalorder %s148, %s149
      %p158 = scmp.eq.s32.totalorder %s23, 0
      %p159 = por %p157, %p158
      %p160 = scmp.ne.s32.totalorder %s148, %s149
      %p161 = scmp.eq.s32.totalorder %s24, 1
      %p162 = por %p160, %p161
      %p164 = scmp.ne.s32.totalorder %s149, %s163
      %p165 = scmp.eq.s32.totalorder %s24, 0
      %p166 = por %p164, %p165
      %s168 = sadd.s32 %s167, 1
      %p171 = scmp.eq.s32.totalorder %s18, 1
      %p172 = scmp.ne.s32.totalorder %s167, %s169
      %p173 = scmp.eq.s32.totalorder %s18, 0
      %p174 = por %p172, %p173
      %p175 = scmp.ne.s32.totalorder %s167, %s169
      %p176 = scmp.eq.s32.totalorder %s23, 1
      %p177 = por %p175, %p176
      %p178 = scmp.ne.s32.totalorder %s169, %s170
      %p179 = scmp.eq.s32.totalorder %s23, 0
      %p180 = por %p178, %p179
      %p181 = scmp.ne.s32.totalorder %s169, %s170
      %p182 = scmp.eq.s32.totalorder %s24, 1
      %p183 = por %p181, %p182
      %p185 = scmp.ne.s32.totalorder %s170, %s184
      %p186 = scmp.eq.s32.totalorder %s24, 0
      %p187 = por %p185, %p186
      %s189 = sadd.s32 %s188, 1
      %p192 = scmp.eq.s32.totalorder %s18, 1
      %p193 = scmp.ne.s32.totalorder %s188, %s190
      %p194 = scmp.eq.s32.totalorder %s18, 0
      %p195 = por %p193, %p194
      %p196 = scmp.ne.s32.totalorder %s188, %s190
      %p197 = scmp.eq.s32.totalorder %s23, 1
      %p198 = por %p196, %p197
      %p199 = scmp.ne.s32.totalorder %s190, %s191
      %p200 = scmp.eq.s32.totalorder %s23, 0
      %p201 = por %p199, %p200
      %p202 = scmp.ne.s32.totalorder %s190, %s191
      %p203 = scmp.eq.s32.totalorder %s24, 1
      %p204 = por %p202, %p203
      %p206 = scmp.ne.s32.totalorder %s191, %s205
      %p207 = scmp.eq.s32.totalorder %s24, 0
      %p208 = por %p206, %p207
      %s210 = sadd.s32 %s209, 1
      %p213 = scmp.eq.s32.totalorder %s18, 1
      %p214 = scmp.ne.s32.totalorder %s209, %s211
      %p215 = scmp.eq.s32.totalorder %s18, 0
      %p216 = por %p214, %p215
      %p217 = scmp.ne.s32.totalorder %s209, %s211
      %p218 = scmp.eq.s32.totalorder %s23, 1
      %p219 = por %p217, %p218
      %p220 = scmp.ne.s32.totalorder %s211, %s212
      %p221 = scmp.eq.s32.totalorder %s23, 0
      %p222 = por %p220, %p221
      %p223 = scmp.ne.s32.totalorder %s211, %s212
      %p224 = scmp.eq.s32.totalorder %s24, 1
      %p225 = por %p223, %p224
      %p227 = scmp.ne.s32.totalorder %s212, %s226
      %p228 = scmp.eq.s32.totalorder %s24, 0
      %p229 = por %p227, %p228
      %s231 = sadd.s32 %s230, 1
      %p234 = scmp.eq.s32.totalorder %s18, 1
      %p235 = scmp.ne.s32.totalorder %s230, %s232
      %p236 = scmp.eq.s32.totalorder %s18, 0
      %p237 = por %p235, %p236
      %p238 = scmp.ne.s32.totalorder %s230, %s232
      %p239 = scmp.eq.s32.totalorder %s23, 1
      %p240 = por %p238, %p239
      %p241 = scmp.ne.s32.totalorder %s232, %s233
      %p242 = scmp.eq.s32.totalorder %s23, 0
      %p243 = por %p241, %p242
      %p244 = scmp.ne.s32.totalorder %s232, %s233
      %p245 = scmp.eq.s32.totalorder %s24, 1
      %p246 = por %p244, %p245
      %p248 = scmp.ne.s32.totalorder %s233, %s247
      %p249 = scmp.eq.s32.totalorder %s24, 0
      %p250 = por %p248, %p249
      %s252 = sadd.s32 %s251, 1
      %p255 = scmp.eq.s32.totalorder %s18, 1
      %p256 = scmp.ne.s32.totalorder %s251, %s253
      %p257 = scmp.eq.s32.totalorder %s18, 0
      %p258 = por %p256, %p257
      %p259 = scmp.ne.s32.totalorder %s251, %s253
      %p260 = scmp.eq.s32.totalorder %s23, 1
      %p261 = por %p259, %p260
      %p262 = scmp.ne.s32.totalorder %s253, %s254
      %p263 = scmp.eq.s32.totalorder %s23, 0
      %p264 = por %p262, %p263
      %p265 = scmp.ne.s32.totalorder %s253, %s254
      %p266 = scmp.eq.s32.totalorder %s24, 1
      %p267 = por %p265, %p266
      %p269 = scmp.ne.s32.totalorder %s254, %s268
      %p270 = scmp.eq.s32.totalorder %s24, 0
      %p271 = por %p269, %p270
      %s272 = ssub.s32 %s18, %s25
      %p273 = scmp.eq.s32.totalorder %s272, 0
      %s275 = sadd.s32 %s274, 1
      %s276 = scalar_select %p273, %s274, %s275
      %p279 = pneg %p273
      %p280 = scmp.eq.s32.totalorder %s18, 1
      %p281 = por %p279, %p280
      %p282 = scmp.ne.s32.totalorder %s274, %s277
      %p283 = scmp.eq.s32.totalorder %s18, 0
      %p284 = por %p282, %p283
      %p285 = scmp.ne.s32.totalorder %s274, %s277
      %p286 = scmp.eq.s32.totalorder %s23, 1
      %p287 = por %p285, %p286
      %p288 = scmp.ne.s32.totalorder %s277, %s278
      %p289 = scmp.eq.s32.totalorder %s23, 0
      %p290 = por %p288, %p289
      %p291 = scmp.ne.s32.totalorder %s277, %s278
      %p292 = scmp.eq.s32.totalorder %s24, 1
      %p293 = por %p291, %p292
      %p295 = scmp.ne.s32.totalorder %s278, %s294
      %p296 = scmp.eq.s32.totalorder %s24, 0
      %p297 = por %p295, %p296
      %p298 = scmp.le.s32.totalorder 1, %s18
      %p299 = scmp.lt.s32.totalorder %s18, 3
      %p300 = pnand %p298, %p299
      %p301 = pneg %p300
      // Predicated region
      $region9: #{doft_forward.5} parent=5 // pred_check
        _
      $region10: #{doft_forward.5} parent=5 // pred_check_branch
        %303 = sbr.rel (%p300) target = $region12
      $region11: #{doft_forward.5} parent=5 // pred_region
        %s304 = ssub.s32 %s18, 1
        // Predicated region
        $region13: #{doft_forward.5} parent=11 // pred_check
          %p305 = pneg %p117
        $region14: #{doft_forward.5} parent=11 // pred_check_branch
          %307 = sbr.rel (%p305) target = $region16
        $region15: #{doft_forward.5} parent=11 // pred_region
          _
        $region16: #{doft_forward.5} parent=11 // pred_fallthru
          _
        // Predicated region
        $region17: #{doft_forward.5} parent=11 // pred_check
          %p308 = pneg %p138
        $region18: #{doft_forward.5} parent=11 // pred_check_branch
          %310 = sbr.rel (%p308) target = $region20
        $region19: #{doft_forward.5} parent=11 // pred_region
          _
        $region20: #{doft_forward.5} parent=11 // pred_fallthru
          _
        // Predicated region
        $region21: #{doft_forward.5} parent=11 // pred_check
          %p311 = pneg %p159
        $region22: #{doft_forward.5} parent=11 // pred_check_branch
          %313 = sbr.rel (%p311) target = $region24
        $region23: #{doft_forward.5} parent=11 // pred_region
          _
        $region24: #{doft_forward.5} parent=11 // pred_fallthru
          _
        // Predicated region
        $region25: #{doft_forward.5} parent=11 // pred_check
          %p314 = pneg %p180
        $region26: #{doft_forward.5} parent=11 // pred_check_branch
          %316 = sbr.rel (%p314) target = $region28
        $region27: #{doft_forward.5} parent=11 // pred_region
          _
        $region28: #{doft_forward.5} parent=11 // pred_fallthru
          _
        // Predicated region
        $region29: #{doft_forward.5} parent=11 // pred_check
          %p317 = pneg %p201
        $region30: #{doft_forward.5} parent=11 // pred_check_branch
          %319 = sbr.rel (%p317) target = $region32
        $region31: #{doft_forward.5} parent=11 // pred_region
          _
        $region32: #{doft_forward.5} parent=11 // pred_fallthru
          _
        // Predicated region
        $region33: #{doft_forward.5} parent=11 // pred_check
          %p320 = pneg %p222
        $region34: #{doft_forward.5} parent=11 // pred_check_branch
          %322 = sbr.rel (%p320) target = $region36
        $region35: #{doft_forward.5} parent=11 // pred_region
          _
        $region36: #{doft_forward.5} parent=11 // pred_fallthru
          _
        // Predicated region
        $region37: #{doft_forward.5} parent=11 // pred_check
          %p323 = pneg %p243
        $region38: #{doft_forward.5} parent=11 // pred_check_branch
          %325 = sbr.rel (%p323) target = $region40
        $region39: #{doft_forward.5} parent=11 // pred_region
          %327 = vsyncadd [#allocation5], 0
          %s328 = sshll.u32 %s9, 4
          %s329 = int_to_ptr.hbm [resolvable:$true] %s328
          %s330 = sshll.u32 [#allocation4], 4
          %s331 = int_to_ptr.vmem [resolvable:$true] %s330
          %336 = dma.hbm_to_vmem [thread:$0]  %s329, 24576, %s331, [#allocation5], 128, 128, 8
        $region40: #{doft_forward.5} parent=11 // pred_fallthru
          _
        // Predicated region
        $region41: #{doft_forward.5} parent=11 // pred_check
          %p337 = pneg %p264
        $region42: #{doft_forward.5} parent=11 // pred_check_branch
          %339 = sbr.rel (%p337) target = $region44
        $region43: #{doft_forward.5} parent=11 // pred_region
          _
        $region44: #{doft_forward.5} parent=11 // pred_fallthru
          _
      $region12: #{doft_forward.5} parent=5 // pred_fallthru
        _
      %p340 = scmp.lt.s32.totalorder %s18, 2
      // Predicated region
      $region45: #{doft_forward.5} parent=5 // pred_check
        %p341 = pneg %p340
      $region46: #{doft_forward.5} parent=5 // pred_check_branch
        %343 = sbr.rel (%p341) target = $region48
      $region47: #{doft_forward.5} parent=5 // pred_region
        // Predicated region
        $region49: #{doft_forward.5} parent=47 // pred_check
          %p344 = pneg %p38
        $region50: #{doft_forward.5} parent=47 // pred_check_branch
          %346 = sbr.rel (%p344) target = $region52
        $region51: #{doft_forward.5} parent=47 // pred_region
          %p347 = scmp.lt.s32.totalorder %s18, 1
          %s348 = scalar_select %p347, %s18, 1
          %s349 = smul.addr %s348, 4
          %s350 = smul.addr %s349, 8
          %s351 = scalar_lea.vmem %s0, %s350
        $region52: #{doft_forward.5} parent=47 // pred_fallthru
          _
        // Predicated region
        $region53: #{doft_forward.5} parent=47 // pred_check
          %p352 = pneg %p64
        $region54: #{doft_forward.5} parent=47 // pred_check_branch
          %354 = sbr.rel (%p352) target = $region56
        $region55: #{doft_forward.5} parent=47 // pred_region
          %p355 = scmp.lt.s32.totalorder %s18, 1
          %s356 = scalar_select %p355, %s18, 1
          %s357 = smul.addr %s356, 4
          %s358 = smul.addr %s357, 4
          %s359 = scalar_lea.vmem %s1, %s358
        $region56: #{doft_forward.5} parent=47 // pred_fallthru
          _
        // Predicated region
        $region57: #{doft_forward.5} parent=47 // pred_check
          %p360 = pneg %p90
        $region58: #{doft_forward.5} parent=47 // pred_check_branch
          %362 = sbr.rel (%p360) target = $region60
        $region59: #{doft_forward.5} parent=47 // pred_region
          %p363 = scmp.lt.s32.totalorder %s18, 1
          %s364 = scalar_select %p363, %s18, 1
          %s365 = smul.addr %s364, 4
          %s366 = smul.addr %s365, 8
          %s367 = scalar_lea.vmem %s2, %s366
        $region60: #{doft_forward.5} parent=47 // pred_fallthru
          _
      $region48: #{doft_forward.5} parent=5 // pred_fallthru
        _
      %p368 = scmp.le.s32.totalorder 1, %s18
      %p369 = scmp.lt.s32.totalorder %s18, 3
      %p370 = pnand %p368, %p369
      %p371 = pneg %p370
      // Predicated region
      $region61: #{doft_forward.5} parent=5 // pred_check
        _
      $region62: #{doft_forward.5} parent=5 // pred_check_branch
        %373 = sbr.rel (%p370) target = $region64
      $region63: #{doft_forward.5} parent=5 // pred_region
        %s374 = ssub.s32 %s18, 1
        // Predicated region
        $region65: #{doft_forward.5} parent=63 // pred_check
          %p375 = pneg %p243
        $region66: #{doft_forward.5} parent=63 // pred_check_branch
          %377 = sbr.rel (%p375) target = $region68
        $region67: #{doft_forward.5} parent=63 // pred_region
          %379 = dma.done [#allocation5], 24576
        $region68: #{doft_forward.5} parent=63 // pred_fallthru
          _
        %p380 = scmp.lt.s32.totalorder %s23, 1
        %s381 = scalar_select %p380, %s23, 1
        %s382 = smul.addr %s381, 4
        %s383 = smul.addr %s382, 8
        %s384 = scalar_lea.vmem %s0, %s383
        %p385 = pneg %p44
        %p386 = pneg %p41
        %p387 = scmp.lt.s32.totalorder %s23, 1
        %s388 = scalar_select %p387, %s23, 1
        %s389 = smul.addr %s388, 4
        %s390 = smul.addr %s389, 4
        %s391 = scalar_lea.vmem %s1, %s390
        %p392 = pneg %p70
        %p393 = pneg %p67
        %p394 = scmp.lt.s32.totalorder %s23, 1
        %s395 = scalar_select %p394, %s23, 1
        %s396 = smul.addr %s395, 4
        %s397 = smul.addr %s396, 8
        %s398 = scalar_lea.vmem %s2, %s397
        %p399 = pneg %p96
        %p400 = pneg %p93
        %p401 = pneg %p117
        %p402 = pneg %p114
        %p403 = pneg %p138
        %p404 = pneg %p135
        %p405 = pneg %p159
        %p406 = pneg %p156
        %p407 = pneg %p180
        %p408 = pneg %p177
        %p409 = pneg %p201
        %p410 = pneg %p198
        %p411 = pneg %p222
        %p412 = pneg %p219
        %p413 = pneg %p243
        %p414 = pneg %p240
        %p415 = pneg %p264
        %p416 = pneg %p261
        %p417 = pneg %p290
        %p418 = pneg %p287
        %p419 = scmp.lt.s32.totalorder %s23, 1
        %s420 = scalar_select %p419, %s23, 1
        %s421 = smul.addr %s420, 4
        %s422 = smul.addr %s421, 8
        %s423 = scalar_lea.vmem %s11, %s422
        %p424 = scmp.lt.s32.totalorder %s23, 1
        %s425 = scalar_select %p424, %s23, 1
        %s426 = smul.addr %s425, 4
        %s427 = smul.addr %s426, 8
        %s428 = scalar_lea.vmem %s0, %s427
        %p429 = scmp.lt.s32.totalorder %s23, 1
        %s430 = scalar_select %p429, %s23, 1
        %s431 = smul.addr %s430, 4
        %s432 = smul.addr %s431, 4
        %s433 = scalar_lea.vmem %s1, %s432
        %p434 = scmp.lt.s32.totalorder %s23, 1
        %s435 = scalar_select %p434, %s23, 1
        %s436 = smul.addr %s435, 4
        %s437 = smul.addr %s436, 8
        %s438 = scalar_lea.vmem %s2, %s437
        %p439 = scmp.lt.s32.totalorder %s23, 1
        %s440 = scalar_select %p439, %s23, 1
        %s441 = smul.addr %s440, 4
        %s442 = smul.addr %s441, 8
        %s443 = scalar_lea.vmem %s11, %s442
        %v445 = vlaneseq
        %vm446 = vcmp.ge.s32.totalorder %v445, 0
        %vm447 = vcmp.lt.s32.totalorder %v445, 256
        %vm448 = vmand %vm446, %vm447
        %s449 = scalar_lea.vmem [#allocation2], 7
        %450 = vst.msk [vmem:[%s449] ss:$8 sm:$0x3] %vm448, 0.0
        %451 = vst.msk [vmem:[%s449] ss:$8 sm:$0x0] %vm448, 0.0
        %s452 = scalar_lea.vmem [#allocation2], 48
        %453 = vst.msk [vmem:[%s452] ss:$8 sm:$0x3] %vm448, 0.0
        %454 = vst.msk [vmem:[%s452] ss:$8 sm:$0x0] %vm448, 0.0
        %s455 = scalar_lea.vmem [#allocation3], 7
        %456 = vst.msk [vmem:[%s455] ss:$8 sm:$0x3] %vm448, 0.0
        %457 = vst.msk [vmem:[%s455] ss:$8 sm:$0x0] %vm448, 0.0
        %s458 = scalar_lea.vmem [#allocation3], 48
        %459 = vst.msk [vmem:[%s458] ss:$8 sm:$0x3] %vm448, 0.0
        %460 = vst.msk [vmem:[%s458] ss:$8 sm:$0x0] %vm448, 0.0
        %v461 = vld [vmem:[%s428] sm:$0xff]
        %v462 = vld [vmem:[%s428 + $0x8] sm:$0xff]
        %v463 = vld [vmem:[%s428 + $0x10] sm:$0xff]
        %v464 = vld [vmem:[%s428 + $0x18] sm:$0xff]
        %v465 = vpack.c.bf16 %v463, %v461
        %v466 = vpack.c.bf16 %v464, %v462
        %v467 = vld [vmem:[%s433] sm:$0xff]
        %v468 = vld [vmem:[%s433 + $0x8] sm:$0xff]
        %v469 = vld [vmem:[%s438] sm:$0xff]
        %v470 = vld [vmem:[%s438 + $0x8] sm:$0xff]
        %v471 = vld [vmem:[%s438 + $0x10] sm:$0xff]
        %v472 = vld [vmem:[%s438 + $0x18] sm:$0xff]
        %v473 = vld [vmem:[%s3] sm:$0xf]
        %v474 = vld [vmem:[%s3 + $0x4] sm:$0xf]
        %v475 = vld [vmem:[%s3 + $0x8] sm:$0xf]
        %v476 = vld [vmem:[%s3 + $0xc] sm:$0xf]
        %v477 = vld [vmem:[%s3 + $0x10] sm:$0xf]
        %v478 = vld [vmem:[%s3 + $0x14] sm:$0xf]
        %v479 = vld [vmem:[%s3 + $0x18] sm:$0xf]
        %v480 = vld [vmem:[%s3 + $0x1c] sm:$0xf]
        %v481 = vld [vmem:[%s3 + $0x20] sm:$0xf]
        %v482 = vld [vmem:[%s3 + $0x24] sm:$0xf]
        %v483 = vld [vmem:[%s3 + $0x28] sm:$0xf]
        %v484 = vld [vmem:[%s3 + $0x2c] sm:$0xf]
        %v485 = vld [vmem:[%s3 + $0x30] sm:$0xf]
        %v486 = vld [vmem:[%s3 + $0x34] sm:$0xf]
        %v487 = vld [vmem:[%s3 + $0x38] sm:$0xf]
        %v488 = vld [vmem:[%s3 + $0x3c] sm:$0xf]
        %v489 = vld [vmem:[%s3 + $0x40] sm:$0xf]
        %v490 = vld [vmem:[%s3 + $0x44] sm:$0xf]
        %v491 = vld [vmem:[%s3 + $0x48] sm:$0xf]
        %v492 = vld [vmem:[%s3 + $0x4c] sm:$0xf]
        %v493 = vld [vmem:[%s3 + $0x50] sm:$0xf]
        %v494 = vld [vmem:[%s3 + $0x54] sm:$0xf]
        %v495 = vld [vmem:[%s3 + $0x58] sm:$0xf]
        %v496 = vld [vmem:[%s3 + $0x5c] sm:$0xf]
        %v497 = vld [vmem:[%s3 + $0x60] sm:$0xf]
        %v498 = vld [vmem:[%s3 + $0x64] sm:$0xf]
        %v499 = vld [vmem:[%s3 + $0x68] sm:$0xf]
        %v500 = vld [vmem:[%s3 + $0x6c] sm:$0xf]
        %v501 = vld [vmem:[%s3 + $0x70] sm:$0xf]
        %v502 = vld [vmem:[%s3 + $0x74] sm:$0xf]
        %v503 = vld [vmem:[%s3 + $0x78] sm:$0xf]
        %v504 = vld [vmem:[%s3 + $0x7c] sm:$0xf]
        %v505 = vld [vmem:[%s4] sm:$0x1]
        %v507 = vperm.slane %v505, 0
        %v541 = vunpack.c.l.b16 %v473
        %v542 = vunpack.c.l.b16 %v474
        %v543 = vunpack.c.l.b16 %v475
        %v544 = vunpack.c.l.b16 %v476
        %v545 = vunpack.c.l.b16 %v477
        %v546 = vunpack.c.l.b16 %v478
        %v547 = vunpack.c.l.b16 %v479
        %v548 = vunpack.c.l.b16 %v480
        %v549 = vunpack.c.l.b16 %v481
        %v550 = vunpack.c.l.b16 %v482
        %v551 = vunpack.c.l.b16 %v483
        %v552 = vunpack.c.l.b16 %v484
        %v553 = vunpack.c.l.b16 %v485
        %v554 = vunpack.c.l.b16 %v486
        %v555 = vunpack.c.l.b16 %v487
        %v556 = vunpack.c.l.b16 %v488
        %v557 = vunpack.c.l.b16 %v489
        %v558 = vunpack.c.l.b16 %v490
        %v559 = vunpack.c.l.b16 %v491
        %v560 = vunpack.c.l.b16 %v492
        %v561 = vunpack.c.l.b16 %v493
        %v562 = vunpack.c.l.b16 %v494
        %v563 = vunpack.c.l.b16 %v495
        %v564 = vunpack.c.l.b16 %v496
        %v565 = vunpack.c.l.b16 %v497
        %v566 = vunpack.c.l.b16 %v498
        %v567 = vunpack.c.l.b16 %v499
        %v568 = vunpack.c.l.b16 %v500
        %v569 = vunpack.c.l.b16 %v501
        %v570 = vunpack.c.l.b16 %v502
        %v571 = vunpack.c.l.b16 %v503
        %v572 = vunpack.c.l.b16 %v504
        %v573 = vpack.c.b16 %v542, %v541
        %v574 = vpack.c.b16 %v544, %v543
        %v575 = vpack.c.b16 %v546, %v545
        %v576 = vpack.c.b16 %v548, %v547
        %v577 = vpack.c.b16 %v550, %v549
        %v578 = vpack.c.b16 %v552, %v551
        %v579 = vpack.c.b16 %v554, %v553
        %v580 = vpack.c.b16 %v556, %v555
        %v581 = vpack.c.b16 %v558, %v557
        %v582 = vpack.c.b16 %v560, %v559
        %v583 = vpack.c.b16 %v562, %v561
        %v584 = vpack.c.b16 %v564, %v563
        %v585 = vpack.c.b16 %v566, %v565
        %v586 = vpack.c.b16 %v568, %v567
        %v587 = vpack.c.b16 %v570, %v569
        %v588 = vpack.c.b16 %v572, %v571
        %605 = vmatpush.bf16.msra.mxu0 %v580
        %606 = vmatpush.bf16.msra.mxu0 %v579
        %607 = vmatpush.bf16.msra.mxu0 %v578
        %608 = vmatpush.bf16.msra.mxu0 %v577
        %609 = vmatpush.bf16.msra.mxu0 %v576
        %610 = vmatpush.bf16.msra.mxu0 %v575
        %611 = vmatpush.bf16.msra.mxu0 %v574
        %612 = vmatpush.bf16.msra.mxu0 %v573
        %613 = vmatmul.bf16.gmra.mxu0 %v465
        %v614 = vpop.f32.mrf.mxu0
        %v615 = vadd.f32 %v507, %v614
        %v616 = vpop.f32.mrf.mxu0
        %v617 = vadd.f32 %v507, %v616
        %618 = vdwg.mxu0
        %619 = vmatpush.bf16.msra.mxu0 %v588
        %620 = vmatpush.bf16.msra.mxu0 %v587
        %621 = vmatpush.bf16.msra.mxu0 %v586
        %622 = vmatpush.bf16.msra.mxu0 %v585
        %623 = vmatpush.bf16.msra.mxu0 %v584
        %624 = vmatpush.bf16.msra.mxu0 %v583
        %625 = vmatpush.bf16.msra.mxu0 %v582
        %626 = vmatpush.bf16.msra.mxu0 %v581
        %627 = vmatmul.bf16.gmra.mxu0 %v466
        %v628 = vpop.f32.mrf.mxu0
        %v629 = vadd.f32 %v615, %v628
        %v630 = vpop.f32.mrf.mxu0
        %v631 = vadd.f32 %v617, %v630
        %632 = vdwg.mxu0
        %v633 = vxor.u32 %v629, 2147483648
        %v634 = vxor.u32 %v631, 2147483648
        %v635 = vmul.f32 %v633, 1.442695
        %v636 = vpow.pop %v635
        %v637 = vmul.f32 %v634, 1.442695
        %v638 = vpow.pop %v637
        %v639 = vadd.f32 %v636, 1.0
        %v640 = vadd.f32 %v638, 1.0
        %v641 = vrcp.pop %v639
        %v642 = vmul.f32 %v639, %v641
        %v643 = vsub.f32 1.0, %v642
        %v644 = vmul.f32 %v641, %v643
        %v645 = vadd.f32 %v641, %v644
        %vm646 = vweird.f32 %v639
        %vm647 = vweird.f32 %v641
        %vm648 = vmor %vm646, %vm647
        %v649 = vsel %vm648, %v641, %v645
        %v650 = vand.u32 2147483647, %v639
        %vm651 = vcmp.eq.f32.partialorder %v650, 8.507059e+37
        %v652 = vand.u32 %v639, 2147483648
        %v653 = vor.u32 1.1754944e-38, %v652
        %v654 = vsel %vm651, %v653, %v649
        %v655 = vmul.f32 1.0, %v654
        %v656 = vrcp.pop %v640
        %v657 = vmul.f32 %v640, %v656
        %v658 = vsub.f32 1.0, %v657
        %v659 = vmul.f32 %v656, %v658
        %v660 = vadd.f32 %v656, %v659
        %vm661 = vweird.f32 %v640
        %vm662 = vweird.f32 %v656
        %vm663 = vmor %vm661, %vm662
        %v664 = vsel %vm663, %v656, %v660
        %v665 = vand.u32 2147483647, %v640
        %vm666 = vcmp.eq.f32.partialorder %v665, 8.507059e+37
        %v667 = vand.u32 %v640, 2147483648
        %v668 = vor.u32 1.1754944e-38, %v667
        %v669 = vsel %vm666, %v668, %v664
        %v670 = vmul.f32 1.0, %v669
        %v671 = vld [vmem:[%s5] sm:$0xf]
        %v672 = vld [vmem:[%s5 + $0x4] sm:$0xf]
        %v673 = vld [vmem:[%s5 + $0x8] sm:$0xf]
        %v674 = vld [vmem:[%s5 + $0xc] sm:$0xf]
        %v675 = vld [vmem:[%s5 + $0x10] sm:$0xf]
        %v676 = vld [vmem:[%s5 + $0x14] sm:$0xf]
        %v677 = vld [vmem:[%s5 + $0x18] sm:$0xf]
        %v678 = vld [vmem:[%s5 + $0x1c] sm:$0xf]
        %v679 = vld [vmem:[%s5 + $0x20] sm:$0xf]
        %v680 = vld [vmem:[%s5 + $0x24] sm:$0xf]
        %v681 = vld [vmem:[%s5 + $0x28] sm:$0xf]
        %v682 = vld [vmem:[%s5 + $0x2c] sm:$0xf]
        %v683 = vld [vmem:[%s5 + $0x30] sm:$0xf]
        %v684 = vld [vmem:[%s5 + $0x34] sm:$0xf]
        %v685 = vld [vmem:[%s5 + $0x38] sm:$0xf]
        %v686 = vld [vmem:[%s5 + $0x3c] sm:$0xf]
        %v687 = vld [vmem:[%s5 + $0x40] sm:$0xf]
        %v688 = vld [vmem:[%s5 + $0x44] sm:$0xf]
        %v689 = vld [vmem:[%s5 + $0x48] sm:$0xf]
        %v690 = vld [vmem:[%s5 + $0x4c] sm:$0xf]
        %v691 = vld [vmem:[%s5 + $0x50] sm:$0xf]
        %v692 = vld [vmem:[%s5 + $0x54] sm:$0xf]
        %v693 = vld [vmem:[%s5 + $0x58] sm:$0xf]
        %v694 = vld [vmem:[%s5 + $0x5c] sm:$0xf]
        %v695 = vld [vmem:[%s5 + $0x60] sm:$0xf]
        %v696 = vld [vmem:[%s5 + $0x64] sm:$0xf]
        %v697 = vld [vmem:[%s5 + $0x68] sm:$0xf]
        %v698 = vld [vmem:[%s5 + $0x6c] sm:$0xf]
        %v699 = vld [vmem:[%s5 + $0x70] sm:$0xf]
        %v700 = vld [vmem:[%s5 + $0x74] sm:$0xf]
        %v701 = vld [vmem:[%s5 + $0x78] sm:$0xf]
        %v702 = vld [vmem:[%s5 + $0x7c] sm:$0xf]
        %v703 = vld [vmem:[%s6] sm:$0x1]
        %v705 = vperm.slane %v703, 0
        %v709 = vunpack.c.l.b16 %v467
        %v710 = vunpack.c.h.b16 %v467
        %v711 = vunpack.c.l.b16 %v468
        %v712 = vunpack.c.h.b16 %v468
        %v713 = vpack.c.b16 %v711, %v709
        %v714 = vpack.c.b16 %v712, %v710
        %v749 = vunpack.c.l.b16 %v671
        %v750 = vunpack.c.l.b16 %v672
        %v751 = vunpack.c.l.b16 %v673
        %v752 = vunpack.c.l.b16 %v674
        %v753 = vunpack.c.l.b16 %v675
        %v754 = vunpack.c.l.b16 %v676
        %v755 = vunpack.c.l.b16 %v677
        %v756 = vunpack.c.l.b16 %v678
        %v757 = vunpack.c.l.b16 %v679
        %v758 = vunpack.c.l.b16 %v680
        %v759 = vunpack.c.l.b16 %v681
        %v760 = vunpack.c.l.b16 %v682
        %v761 = vunpack.c.l.b16 %v683
        %v762 = vunpack.c.l.b16 %v684
        %v763 = vunpack.c.l.b16 %v685
        %v764 = vunpack.c.l.b16 %v686
        %v765 = vunpack.c.l.b16 %v687
        %v766 = vunpack.c.l.b16 %v688
        %v767 = vunpack.c.l.b16 %v689
        %v768 = vunpack.c.l.b16 %v690
        %v769 = vunpack.c.l.b16 %v691
        %v770 = vunpack.c.l.b16 %v692
        %v771 = vunpack.c.l.b16 %v693
        %v772 = vunpack.c.l.b16 %v694
        %v773 = vunpack.c.l.b16 %v695
        %v774 = vunpack.c.l.b16 %v696
        %v775 = vunpack.c.l.b16 %v697
        %v776 = vunpack.c.l.b16 %v698
        %v777 = vunpack.c.l.b16 %v699
        %v778 = vunpack.c.l.b16 %v700
        %v779 = vunpack.c.l.b16 %v701
        %v780 = vunpack.c.l.b16 %v702
        %v781 = vpack.c.b16 %v750, %v749
        %v782 = vpack.c.b16 %v752, %v751
        %v783 = vpack.c.b16 %v754, %v753
        %v784 = vpack.c.b16 %v756, %v755
        %v785 = vpack.c.b16 %v758, %v757
        %v786 = vpack.c.b16 %v760, %v759
        %v787 = vpack.c.b16 %v762, %v761
        %v788 = vpack.c.b16 %v764, %v763
        %v789 = vpack.c.b16 %v766, %v765
        %v790 = vpack.c.b16 %v768, %v767
        %v791 = vpack.c.b16 %v770, %v769
        %v792 = vpack.c.b16 %v772, %v771
        %v793 = vpack.c.b16 %v774, %v773
        %v794 = vpack.c.b16 %v776, %v775
        %v795 = vpack.c.b16 %v778, %v777
        %v796 = vpack.c.b16 %v780, %v779
        %813 = vmatpush.bf16.msra.mxu0 %v788
        %814 = vmatpush.bf16.msra.mxu0 %v787
        %815 = vmatpush.bf16.msra.mxu0 %v786
        %816 = vmatpush.bf16.msra.mxu0 %v785
        %817 = vmatpush.bf16.msra.mxu0 %v784
        %818 = vmatpush.bf16.msra.mxu0 %v783
        %819 = vmatpush.bf16.msra.mxu0 %v782
        %820 = vmatpush.bf16.msra.mxu0 %v781
        %821 = vmatmul.bf16.gmra.mxu0 %v713
        %v822 = vpop.f32.mrf.mxu0
        %v823 = vadd.f32 %v705, %v822
        %v824 = vpop.f32.mrf.mxu0
        %v825 = vadd.f32 %v705, %v824
        %826 = vdwg.mxu0
        %827 = vmatpush.bf16.msra.mxu0 %v796
        %828 = vmatpush.bf16.msra.mxu0 %v795
        %829 = vmatpush.bf16.msra.mxu0 %v794
        %830 = vmatpush.bf16.msra.mxu0 %v793
        %831 = vmatpush.bf16.msra.mxu0 %v792
        %832 = vmatpush.bf16.msra.mxu0 %v791
        %833 = vmatpush.bf16.msra.mxu0 %v790
        %834 = vmatpush.bf16.msra.mxu0 %v789
        %835 = vmatmul.bf16.gmra.mxu0 %v714
        %v836 = vpop.f32.mrf.mxu0
        %v837 = vadd.f32 %v823, %v836
        %v838 = vpop.f32.mrf.mxu0
        %v839 = vadd.f32 %v825, %v838
        %840 = vdwg.mxu0
        %v841 = vmul.f32 %v837, %v655
        %v842 = vmul.f32 %v839, %v670
        %v843 = vpack.c.bf16 %v842, %v841
        %v844 = vld [vmem:[%s7] sm:$0xff]
        %v845 = vld [vmem:[%s7 + $0x8] sm:$0xff]
        %v846 = vld [vmem:[%s7 + $0x10] sm:$0xff]
        %v847 = vld [vmem:[%s7 + $0x18] sm:$0xff]
        %v848 = vld [vmem:[%s7 + $0x20] sm:$0xff]
        %v849 = vld [vmem:[%s7 + $0x28] sm:$0xff]
        %v850 = vld [vmem:[%s7 + $0x30] sm:$0xff]
        %v851 = vld [vmem:[%s7 + $0x38] sm:$0xff]
        %v852 = vld [vmem:[%s8] sm:$0x3]
        %v854 = vperm.slane %v852, 0
        %v855 = vperm.slane %v852, 1
        %v866 = vunpack.c.l.b16 %v844
        %v867 = vunpack.c.h.b16 %v844
        %v868 = vunpack.c.l.b16 %v845
        %v869 = vunpack.c.h.b16 %v845
        %v870 = vunpack.c.l.b16 %v846
        %v871 = vunpack.c.h.b16 %v846
        %v872 = vunpack.c.l.b16 %v847
        %v873 = vunpack.c.h.b16 %v847
        %v874 = vunpack.c.l.b16 %v848
        %v875 = vunpack.c.h.b16 %v848
        %v876 = vunpack.c.l.b16 %v849
        %v877 = vunpack.c.h.b16 %v849
        %v878 = vunpack.c.l.b16 %v850
        %v879 = vunpack.c.h.b16 %v850
        %v880 = vunpack.c.l.b16 %v851
        %v881 = vunpack.c.h.b16 %v851
        %v882 = vpack.c.b16 %v868, %v866
        %v883 = vpack.c.b16 %v869, %v867
        %v884 = vpack.c.b16 %v872, %v870
        %v885 = vpack.c.b16 %v873, %v871
        %v886 = vpack.c.b16 %v876, %v874
        %v887 = vpack.c.b16 %v877, %v875
        %v888 = vpack.c.b16 %v880, %v878
        %v889 = vpack.c.b16 %v881, %v879
        %vm898 = vcmask 523264
        %v900 = vsel %vm898, %v843, 0
        %902 = vmatpush.bf16.msra.mxu0 0
        %903 = vmatpush.bf16.msra.mxu0 0
        %904 = vmatpush.bf16.msra.mxu0 0
        %905 = vmatpush.bf16.msra.mxu0 0
        %906 = vmatpush.bf16.msra.mxu0 %v888
        %907 = vmatpush.bf16.msra.mxu0 %v886
        %908 = vmatpush.bf16.msra.mxu0 %v884
        %909 = vmatpush.bf16.msra.mxu0 %v882
        %910 = vmatmul.bf16.gmra.mxu0 %v900
        %v911 = vpop.f32.mrf.mxu0
        %v912 = vadd.f32 %v854, %v911
        %v913 = vpop.f32.mrf.mxu0
        %v914 = vadd.f32 %v854, %v913
        %915 = vdwg.mxu0
        %916 = vmatpush.bf16.msra.mxu0 0
        %917 = vmatpush.bf16.msra.mxu0 0
        %918 = vmatpush.bf16.msra.mxu0 0
        %919 = vmatpush.bf16.msra.mxu0 0
        %920 = vmatpush.bf16.msra.mxu0 %v889
        %921 = vmatpush.bf16.msra.mxu0 %v887
        %922 = vmatpush.bf16.msra.mxu0 %v885
        %923 = vmatpush.bf16.msra.mxu0 %v883
        %924 = vmatmul.bf16.gmra.mxu0 %v900
        %v925 = vpop.f32.mrf.mxu0
        %v926 = vadd.f32 %v855, %v925
        %v927 = vpop.f32.mrf.mxu0
        %v928 = vadd.f32 %v855, %v927
        %929 = vdwg.mxu0
        %v930 = vunpack.c.l.bf16 %v467
        %v931 = vunpack.c.h.bf16 %v467
        %v932 = vunpack.c.l.bf16 %v468
        %v933 = vunpack.c.h.bf16 %v468
        %v934 = vadd.f32 %v912, %v930
        %v935 = vadd.f32 %v926, %v931
        %v936 = vadd.f32 %v914, %v932
        %v937 = vadd.f32 %v928, %v933
        %938 = vst [vmem:[#allocation2 + $0x10] sm:$0xff] %v934
        %939 = vst [vmem:[#allocation2 + $0x18] sm:$0xff] %v935
        %940 = vst [vmem:[#allocation2 + $0x20] sm:$0xff] %v936
        %941 = vst [vmem:[#allocation2 + $0x28] sm:$0xff] %v937
        %942 = vst [vmem:[#allocation3 + $0x10] sm:$0xff] %v469
        %943 = vst [vmem:[#allocation3 + $0x18] sm:$0xff] %v470
        %944 = vst [vmem:[#allocation3 + $0x20] sm:$0xff] %v471
        %945 = vst [vmem:[#allocation3 + $0x28] sm:$0xff] %v472
        %v946 = vld [vmem:[#allocation2] sm:$0x80]
        %v947 = vld [vmem:[#allocation2 + $0x8] sm:$0x80]
        %v948 = vld [vmem:[#allocation2 + $0x10] sm:$0xff]
        %v949 = vld [vmem:[#allocation2 + $0x18] sm:$0xff]
        %v950 = vld [vmem:[#allocation2 + $0x20] sm:$0x7f]
        %v951 = vld [vmem:[#allocation2 + $0x28] sm:$0x7f]
        %v952 = vpack.c.bf16 %v948, %v946
        %v953 = vpack.c.bf16 %v949, %v947
        %v954 = vpack.c.bf16 %v950, %v950
        %v955 = vpack.c.bf16 %v951, %v951
        %v956 = vld [vmem:[#allocation4] sm:$0xff]
        %v957 = vld [vmem:[#allocation4 + $0x8] sm:$0xff]
        %v958 = vld [vmem:[#allocation4 + $0x10] sm:$0xff]
        %v959 = vld [vmem:[#allocation4 + $0x18] sm:$0xff]
        %v960 = vld [vmem:[#allocation4 + $0x20] sm:$0xff]
        %v961 = vld [vmem:[#allocation4 + $0x28] sm:$0xff]
        %v962 = vld [vmem:[#allocation4 + $0x30] sm:$0xff]
        %v963 = vld [vmem:[#allocation4 + $0x38] sm:$0xff]
        %v964 = vld [vmem:[#allocation4 + $0x40] sm:$0xff]
        %v965 = vld [vmem:[#allocation4 + $0x48] sm:$0xff]
        %v966 = vld [vmem:[#allocation4 + $0x50] sm:$0xff]
        %v967 = vld [vmem:[#allocation4 + $0x58] sm:$0xff]
        %v968 = vld [vmem:[#allocation4 + $0x60] sm:$0xff]
        %v969 = vld [vmem:[#allocation4 + $0x68] sm:$0xff]
        %v970 = vld [vmem:[#allocation4 + $0x70] sm:$0xff]
        %v971 = vld [vmem:[#allocation4 + $0x78] sm:$0xff]
        %v972 = vld [vmem:[#allocation4 + $0x80] sm:$0xff]
        %v973 = vld [vmem:[#allocation4 + $0x88] sm:$0xff]
        %v974 = vld [vmem:[#allocation4 + $0x90] sm:$0xff]
        %v975 = vld [vmem:[#allocation4 + $0x98] sm:$0xff]
        %v976 = vld [vmem:[#allocation4 + $0xa0] sm:$0xff]
        %v977 = vld [vmem:[#allocation4 + $0xa8] sm:$0xff]
        %v978 = vld [vmem:[#allocation4 + $0xb0] sm:$0xff]
        %v979 = vld [vmem:[#allocation4 + $0xb8] sm:$0xff]
        %v980 = vld [vmem:[#allocation4 + $0xc0] sm:$0xff]
        %v981 = vld [vmem:[#allocation4 + $0xc8] sm:$0xff]
        %v982 = vld [vmem:[#allocation4 + $0xd0] sm:$0xff]
        %v983 = vld [vmem:[#allocation4 + $0xd8] sm:$0xff]
        %v984 = vld [vmem:[#allocation4 + $0xe0] sm:$0xff]
        %v985 = vld [vmem:[#allocation4 + $0xe8] sm:$0xff]
        %v986 = vld [vmem:[#allocation4 + $0xf0] sm:$0xff]
        %v987 = vld [vmem:[#allocation4 + $0xf8] sm:$0xff]
        %v988 = vld [vmem:[#allocation3] sm:$0x80]
        %v989 = vld [vmem:[#allocation3 + $0x8] sm:$0x80]
        %v990 = vld [vmem:[#allocation3 + $0x10] sm:$0xff]
        %v991 = vld [vmem:[#allocation3 + $0x18] sm:$0xff]
        %v992 = vld [vmem:[#allocation3 + $0x20] sm:$0x7f]
        %v993 = vld [vmem:[#allocation3 + $0x28] sm:$0x7f]
        %v994 = vpack.c.bf16 %v990, %v988
        %v995 = vpack.c.bf16 %v991, %v989
        %v996 = vpack.c.bf16 %v992, %v992
        %v997 = vpack.c.bf16 %v993, %v993
        %v998 = vld [vmem:[#allocation4 + $0x100] sm:$0xff]
        %v999 = vld [vmem:[#allocation4 + $0x108] sm:$0xff]
        %v1000 = vld [vmem:[#allocation4 + $0x110] sm:$0xff]
        %v1001 = vld [vmem:[#allocation4 + $0x118] sm:$0xff]
        %v1002 = vld [vmem:[#allocation4 + $0x120] sm:$0xff]
        %v1003 = vld [vmem:[#allocation4 + $0x128] sm:$0xff]
        %v1004 = vld [vmem:[#allocation4 + $0x130] sm:$0xff]
        %v1005 = vld [vmem:[#allocation4 + $0x138] sm:$0xff]
        %v1006 = vld [vmem:[#allocation4 + $0x140] sm:$0xff]
        %v1007 = vld [vmem:[#allocation4 + $0x148] sm:$0xff]
        %v1008 = vld [vmem:[#allocation4 + $0x150] sm:$0xff]
        %v1009 = vld [vmem:[#allocation4 + $0x158] sm:$0xff]
        %v1010 = vld [vmem:[#allocation4 + $0x160] sm:$0xff]
        %v1011 = vld [vmem:[#allocation4 + $0x168] sm:$0xff]
        %v1012 = vld [vmem:[#allocation4 + $0x170] sm:$0xff]
        %v1013 = vld [vmem:[#allocation4 + $0x178] sm:$0xff]
        %v1014 = vld [vmem:[#allocation4 + $0x180] sm:$0xff]
        %v1015 = vld [vmem:[#allocation4 + $0x188] sm:$0xff]
        %v1016 = vld [vmem:[#allocation4 + $0x190] sm:$0xff]
        %v1017 = vld [vmem:[#allocation4 + $0x198] sm:$0xff]
        %v1018 = vld [vmem:[#allocation4 + $0x1a0] sm:$0xff]
        %v1019 = vld [vmem:[#allocation4 + $0x1a8] sm:$0xff]
        %v1020 = vld [vmem:[#allocation4 + $0x1b0] sm:$0xff]
        %v1021 = vld [vmem:[#allocation4 + $0x1b8] sm:$0xff]
        %v1022 = vld [vmem:[#allocation4 + $0x1c0] sm:$0xff]
        %v1023 = vld [vmem:[#allocation4 + $0x1c8] sm:$0xff]
        %v1024 = vld [vmem:[#allocation4 + $0x1d0] sm:$0xff]
        %v1025 = vld [vmem:[#allocation4 + $0x1d8] sm:$0xff]
        %v1026 = vld [vmem:[#allocation4 + $0x1e0] sm:$0xff]
        %v1027 = vld [vmem:[#allocation4 + $0x1e8] sm:$0xff]
        %v1028 = vld [vmem:[#allocation4 + $0x1f0] sm:$0xff]
        %v1029 = vld [vmem:[#allocation4 + $0x1f8] sm:$0xff]
        %vm1030 = vsmask.f32 4352
        %v1032 = vshrl.u32 %v994, 16
        %v1034 = vrot.slane %v1032, 3
        %v1035 = vshll.u32 %v994, 16
        %v1037 = vrot.slane %v1035, 4
        %v1038 = vor.u32 %v1034, %v1037
        %v1040 = vshrl.u32 %v996, 16
        %v1042 = vrot.slane %v1040, 3
        %v1043 = vshll.u32 %v996, 16
        %v1045 = vrot.slane %v1043, 4
        %v1046 = vor.u32 %v1042, %v1045
        %v1047 = vsel %vm1030, %v1038, %v1046
        %v1049 = vshrl.u32 %v995, 16
        %v1051 = vrot.slane %v1049, 3
        %v1052 = vshll.u32 %v995, 16
        %v1054 = vrot.slane %v1052, 4
        %v1055 = vor.u32 %v1051, %v1054
        %v1057 = vshrl.u32 %v997, 16
        %v1059 = vrot.slane %v1057, 3
        %v1060 = vshll.u32 %v997, 16
        %v1062 = vrot.slane %v1060, 4
        %v1063 = vor.u32 %v1059, %v1062
        %v1064 = vsel %vm1030, %v1055, %v1063
        %v1099 = vunpack.c.l.b16 %v998
        %v1100 = vunpack.c.h.b16 %v998
        %v1101 = vunpack.c.l.b16 %v999
        %v1102 = vunpack.c.h.b16 %v999
        %v1103 = vunpack.c.l.b16 %v1000
        %v1104 = vunpack.c.h.b16 %v1000
        %v1105 = vunpack.c.l.b16 %v1001
        %v1106 = vunpack.c.h.b16 %v1001
        %v1107 = vunpack.c.l.b16 %v1002
        %v1108 = vunpack.c.h.b16 %v1002
        %v1109 = vunpack.c.l.b16 %v1003
        %v1110 = vunpack.c.h.b16 %v1003
        %v1111 = vunpack.c.l.b16 %v1004
        %v1112 = vunpack.c.h.b16 %v1004
        %v1113 = vunpack.c.l.b16 %v1005
        %v1114 = vunpack.c.h.b16 %v1005
        %v1115 = vunpack.c.l.b16 %v1006
        %v1116 = vunpack.c.h.b16 %v1006
        %v1117 = vunpack.c.l.b16 %v1007
        %v1118 = vunpack.c.h.b16 %v1007
        %v1119 = vunpack.c.l.b16 %v1008
        %v1120 = vunpack.c.h.b16 %v1008
        %v1121 = vunpack.c.l.b16 %v1009
        %v1122 = vunpack.c.h.b16 %v1009
        %v1123 = vunpack.c.l.b16 %v1010
        %v1124 = vunpack.c.h.b16 %v1010
        %v1125 = vunpack.c.l.b16 %v1011
        %v1126 = vunpack.c.h.b16 %v1011
        %v1127 = vunpack.c.l.b16 %v1012
        %v1128 = vunpack.c.h.b16 %v1012
        %v1129 = vunpack.c.l.b16 %v1013
        %v1130 = vunpack.c.h.b16 %v1013
        %v1131 = vunpack.c.l.b16 %v1014
        %v1132 = vunpack.c.h.b16 %v1014
        %v1133 = vunpack.c.l.b16 %v1015
        %v1134 = vunpack.c.h.b16 %v1015
        %v1135 = vunpack.c.l.b16 %v1016
        %v1136 = vunpack.c.h.b16 %v1016
        %v1137 = vunpack.c.l.b16 %v1017
        %v1138 = vunpack.c.h.b16 %v1017
        %v1139 = vunpack.c.l.b16 %v1018
        %v1140 = vunpack.c.h.b16 %v1018
        %v1141 = vunpack.c.l.b16 %v1019
        %v1142 = vunpack.c.h.b16 %v1019
        %v1143 = vunpack.c.l.b16 %v1020
        %v1144 = vunpack.c.h.b16 %v1020
        %v1145 = vunpack.c.l.b16 %v1021
        %v1146 = vunpack.c.h.b16 %v1021
        %v1147 = vunpack.c.l.b16 %v1022
        %v1148 = vunpack.c.h.b16 %v1022
        %v1149 = vunpack.c.l.b16 %v1023
        %v1150 = vunpack.c.h.b16 %v1023
        %v1151 = vunpack.c.l.b16 %v1024
        %v1152 = vunpack.c.h.b16 %v1024
        %v1153 = vunpack.c.l.b16 %v1025
        %v1154 = vunpack.c.h.b16 %v1025
        %v1155 = vunpack.c.l.b16 %v1026
        %v1156 = vunpack.c.h.b16 %v1026
        %v1157 = vunpack.c.l.b16 %v1027
        %v1158 = vunpack.c.h.b16 %v1027
        %v1159 = vunpack.c.l.b16 %v1028
        %v1160 = vunpack.c.h.b16 %v1028
        %v1161 = vunpack.c.l.b16 %v1029
        %v1162 = vunpack.c.h.b16 %v1029
        %v1163 = vpack.c.b16 %v1101, %v1099
        %v1164 = vpack.c.b16 %v1102, %v1100
        %v1165 = vpack.c.b16 %v1105, %v1103
        %v1166 = vpack.c.b16 %v1106, %v1104
        %v1167 = vpack.c.b16 %v1109, %v1107
        %v1168 = vpack.c.b16 %v1110, %v1108
        %v1169 = vpack.c.b16 %v1113, %v1111
        %v1170 = vpack.c.b16 %v1114, %v1112
        %v1171 = vpack.c.b16 %v1117, %v1115
        %v1172 = vpack.c.b16 %v1118, %v1116
        %v1173 = vpack.c.b16 %v1121, %v1119
        %v1174 = vpack.c.b16 %v1122, %v1120
        %v1175 = vpack.c.b16 %v1125, %v1123
        %v1176 = vpack.c.b16 %v1126, %v1124
        %v1177 = vpack.c.b16 %v1129, %v1127
        %v1178 = vpack.c.b16 %v1130, %v1128
        %v1179 = vpack.c.b16 %v1133, %v1131
        %v1180 = vpack.c.b16 %v1134, %v1132
        %v1181 = vpack.c.b16 %v1137, %v1135
        %v1182 = vpack.c.b16 %v1138, %v1136
        %v1183 = vpack.c.b16 %v1141, %v1139
        %v1184 = vpack.c.b16 %v1142, %v1140
        %v1185 = vpack.c.b16 %v1145, %v1143
        %v1186 = vpack.c.b16 %v1146, %v1144
        %v1187 = vpack.c.b16 %v1149, %v1147
        %v1188 = vpack.c.b16 %v1150, %v1148
        %v1189 = vpack.c.b16 %v1153, %v1151
        %v1190 = vpack.c.b16 %v1154, %v1152
        %v1191 = vpack.c.b16 %v1157, %v1155
        %v1192 = vpack.c.b16 %v1158, %v1156
        %v1193 = vpack.c.b16 %v1161, %v1159
        %v1194 = vpack.c.b16 %v1162, %v1160
        %1227 = vmatpush.bf16.msra.mxu0 %v1177
        %1228 = vmatpush.bf16.msra.mxu0 %v1175
        %1229 = vmatpush.bf16.msra.mxu0 %v1173
        %1230 = vmatpush.bf16.msra.mxu0 %v1171
        %1231 = vmatpush.bf16.msra.mxu0 %v1169
        %1232 = vmatpush.bf16.msra.mxu0 %v1167
        %1233 = vmatpush.bf16.msra.mxu0 %v1165
        %1234 = vmatpush.bf16.msra.mxu0 %v1163
        %1235 = vmatmul.bf16.gmra.mxu0 %v1047
        %v1236 = vpop.f32.mrf.mxu0
        %v1237 = vadd.f32 0.0, %v1236
        %v1238 = vpop.f32.mrf.mxu0
        %v1239 = vadd.f32 0.0, %v1238
        %1240 = vdwg.mxu0
        %1241 = vmatpush.bf16.msra.mxu0 %v1193
        %1242 = vmatpush.bf16.msra.mxu0 %v1191
        %1243 = vmatpush.bf16.msra.mxu0 %v1189
        %1244 = vmatpush.bf16.msra.mxu0 %v1187
        %1245 = vmatpush.bf16.msra.mxu0 %v1185
        %1246 = vmatpush.bf16.msra.mxu0 %v1183
        %1247 = vmatpush.bf16.msra.mxu0 %v1181
        %1248 = vmatpush.bf16.msra.mxu0 %v1179
        %1249 = vmatmul.bf16.gmra.mxu0 %v1064
        %v1250 = vpop.f32.mrf.mxu0
        %v1251 = vadd.f32 %v1237, %v1250
        %v1252 = vpop.f32.mrf.mxu0
        %v1253 = vadd.f32 %v1239, %v1252
        %1254 = vdwg.mxu0
        %1255 = vmatpush.bf16.msra.mxu0 %v1178
        %1256 = vmatpush.bf16.msra.mxu0 %v1176
        %1257 = vmatpush.bf16.msra.mxu0 %v1174
        %1258 = vmatpush.bf16.msra.mxu0 %v1172
        %1259 = vmatpush.bf16.msra.mxu0 %v1170
        %1260 = vmatpush.bf16.msra.mxu0 %v1168
        %1261 = vmatpush.bf16.msra.mxu0 %v1166
        %1262 = vmatpush.bf16.msra.mxu0 %v1164
        %1263 = vmatmul.bf16.gmra.mxu0 %v1047
        %v1264 = vpop.f32.mrf.mxu0
        %v1265 = vadd.f32 0.0, %v1264
        %v1266 = vpop.f32.mrf.mxu0
        %v1267 = vadd.f32 0.0, %v1266
        %1268 = vdwg.mxu0
        %1269 = vmatpush.bf16.msra.mxu0 %v1194
        %1270 = vmatpush.bf16.msra.mxu0 %v1192
        %1271 = vmatpush.bf16.msra.mxu0 %v1190
        %1272 = vmatpush.bf16.msra.mxu0 %v1188
        %1273 = vmatpush.bf16.msra.mxu0 %v1186
        %1274 = vmatpush.bf16.msra.mxu0 %v1184
        %1275 = vmatpush.bf16.msra.mxu0 %v1182
        %1276 = vmatpush.bf16.msra.mxu0 %v1180
        %1277 = vmatmul.bf16.gmra.mxu0 %v1064
        %v1278 = vpop.f32.mrf.mxu0
        %v1279 = vadd.f32 %v1265, %v1278
        %v1280 = vpop.f32.mrf.mxu0
        %v1281 = vadd.f32 %v1267, %v1280
        %1282 = vdwg.mxu0
        %v1284 = vshrl.u32 %v952, 16
        %v1286 = vrot.slane %v1284, 3
        %v1287 = vshll.u32 %v952, 16
        %v1289 = vrot.slane %v1287, 4
        %v1290 = vor.u32 %v1286, %v1289
        %v1292 = vshrl.u32 %v954, 16
        %v1294 = vrot.slane %v1292, 3
        %v1295 = vshll.u32 %v954, 16
        %v1297 = vrot.slane %v1295, 4
        %v1298 = vor.u32 %v1294, %v1297
        %v1299 = vsel %vm1030, %v1290, %v1298
        %v1301 = vshrl.u32 %v953, 16
        %v1303 = vrot.slane %v1301, 3
        %v1304 = vshll.u32 %v953, 16
        %v1306 = vrot.slane %v1304, 4
        %v1307 = vor.u32 %v1303, %v1306
        %v1309 = vshrl.u32 %v955, 16
        %v1311 = vrot.slane %v1309, 3
        %v1312 = vshll.u32 %v955, 16
        %v1314 = vrot.slane %v1312, 4
        %v1315 = vor.u32 %v1311, %v1314
        %v1316 = vsel %vm1030, %v1307, %v1315
        %v1351 = vunpack.c.l.b16 %v956
        %v1352 = vunpack.c.h.b16 %v956
        %v1353 = vunpack.c.l.b16 %v957
        %v1354 = vunpack.c.h.b16 %v957
        %v1355 = vunpack.c.l.b16 %v958
        %v1356 = vunpack.c.h.b16 %v958
        %v1357 = vunpack.c.l.b16 %v959
        %v1358 = vunpack.c.h.b16 %v959
        %v1359 = vunpack.c.l.b16 %v960
        %v1360 = vunpack.c.h.b16 %v960
        %v1361 = vunpack.c.l.b16 %v961
        %v1362 = vunpack.c.h.b16 %v961
        %v1363 = vunpack.c.l.b16 %v962
        %v1364 = vunpack.c.h.b16 %v962
        %v1365 = vunpack.c.l.b16 %v963
        %v1366 = vunpack.c.h.b16 %v963
        %v1367 = vunpack.c.l.b16 %v964
        %v1368 = vunpack.c.h.b16 %v964
        %v1369 = vunpack.c.l.b16 %v965
        %v1370 = vunpack.c.h.b16 %v965
        %v1371 = vunpack.c.l.b16 %v966
        %v1372 = vunpack.c.h.b16 %v966
        %v1373 = vunpack.c.l.b16 %v967
        %v1374 = vunpack.c.h.b16 %v967
        %v1375 = vunpack.c.l.b16 %v968
        %v1376 = vunpack.c.h.b16 %v968
        %v1377 = vunpack.c.l.b16 %v969
        %v1378 = vunpack.c.h.b16 %v969
        %v1379 = vunpack.c.l.b16 %v970
        %v1380 = vunpack.c.h.b16 %v970
        %v1381 = vunpack.c.l.b16 %v971
        %v1382 = vunpack.c.h.b16 %v971
        %v1383 = vunpack.c.l.b16 %v972
        %v1384 = vunpack.c.h.b16 %v972
        %v1385 = vunpack.c.l.b16 %v973
        %v1386 = vunpack.c.h.b16 %v973
        %v1387 = vunpack.c.l.b16 %v974
        %v1388 = vunpack.c.h.b16 %v974
        %v1389 = vunpack.c.l.b16 %v975
        %v1390 = vunpack.c.h.b16 %v975
        %v1391 = vunpack.c.l.b16 %v976
        %v1392 = vunpack.c.h.b16 %v976
        %v1393 = vunpack.c.l.b16 %v977
        %v1394 = vunpack.c.h.b16 %v977
        %v1395 = vunpack.c.l.b16 %v978
        %v1396 = vunpack.c.h.b16 %v978
        %v1397 = vunpack.c.l.b16 %v979
        %v1398 = vunpack.c.h.b16 %v979
        %v1399 = vunpack.c.l.b16 %v980
        %v1400 = vunpack.c.h.b16 %v980
        %v1401 = vunpack.c.l.b16 %v981
        %v1402 = vunpack.c.h.b16 %v981
        %v1403 = vunpack.c.l.b16 %v982
        %v1404 = vunpack.c.h.b16 %v982
        %v1405 = vunpack.c.l.b16 %v983
        %v1406 = vunpack.c.h.b16 %v983
        %v1407 = vunpack.c.l.b16 %v984
        %v1408 = vunpack.c.h.b16 %v984
        %v1409 = vunpack.c.l.b16 %v985
        %v1410 = vunpack.c.h.b16 %v985
        %v1411 = vunpack.c.l.b16 %v986
        %v1412 = vunpack.c.h.b16 %v986
        %v1413 = vunpack.c.l.b16 %v987
        %v1414 = vunpack.c.h.b16 %v987
        %v1415 = vpack.c.b16 %v1353, %v1351
        %v1416 = vpack.c.b16 %v1354, %v1352
        %v1417 = vpack.c.b16 %v1357, %v1355
        %v1418 = vpack.c.b16 %v1358, %v1356
        %v1419 = vpack.c.b16 %v1361, %v1359
        %v1420 = vpack.c.b16 %v1362, %v1360
        %v1421 = vpack.c.b16 %v1365, %v1363
        %v1422 = vpack.c.b16 %v1366, %v1364
        %v1423 = vpack.c.b16 %v1369, %v1367
        %v1424 = vpack.c.b16 %v1370, %v1368
        %v1425 = vpack.c.b16 %v1373, %v1371
        %v1426 = vpack.c.b16 %v1374, %v1372
        %v1427 = vpack.c.b16 %v1377, %v1375
        %v1428 = vpack.c.b16 %v1378, %v1376
        %v1429 = vpack.c.b16 %v1381, %v1379
        %v1430 = vpack.c.b16 %v1382, %v1380
        %v1431 = vpack.c.b16 %v1385, %v1383
        %v1432 = vpack.c.b16 %v1386, %v1384
        %v1433 = vpack.c.b16 %v1389, %v1387
        %v1434 = vpack.c.b16 %v1390, %v1388
        %v1435 = vpack.c.b16 %v1393, %v1391
        %v1436 = vpack.c.b16 %v1394, %v1392
        %v1437 = vpack.c.b16 %v1397, %v1395
        %v1438 = vpack.c.b16 %v1398, %v1396
        %v1439 = vpack.c.b16 %v1401, %v1399
        %v1440 = vpack.c.b16 %v1402, %v1400
        %v1441 = vpack.c.b16 %v1405, %v1403
        %v1442 = vpack.c.b16 %v1406, %v1404
        %v1443 = vpack.c.b16 %v1409, %v1407
        %v1444 = vpack.c.b16 %v1410, %v1408
        %v1445 = vpack.c.b16 %v1413, %v1411
        %v1446 = vpack.c.b16 %v1414, %v1412
        %1479 = vmatpush.bf16.msra.mxu0 %v1429
        %1480 = vmatpush.bf16.msra.mxu0 %v1427
        %1481 = vmatpush.bf16.msra.mxu0 %v1425
        %1482 = vmatpush.bf16.msra.mxu0 %v1423
        %1483 = vmatpush.bf16.msra.mxu0 %v1421
        %1484 = vmatpush.bf16.msra.mxu0 %v1419
        %1485 = vmatpush.bf16.msra.mxu0 %v1417
        %1486 = vmatpush.bf16.msra.mxu0 %v1415
        %1487 = vmatmul.bf16.gmra.mxu0 %v1299
        %v1488 = vpop.f32.mrf.mxu0
        %v1489 = vadd.f32 %v1251, %v1488
        %v1490 = vpop.f32.mrf.mxu0
        %v1491 = vadd.f32 %v1253, %v1490
        %1492 = vdwg.mxu0
        %1493 = vmatpush.bf16.msra.mxu0 %v1445
        %1494 = vmatpush.bf16.msra.mxu0 %v1443
        %1495 = vmatpush.bf16.msra.mxu0 %v1441
        %1496 = vmatpush.bf16.msra.mxu0 %v1439
        %1497 = vmatpush.bf16.msra.mxu0 %v1437
        %1498 = vmatpush.bf16.msra.mxu0 %v1435
        %1499 = vmatpush.bf16.msra.mxu0 %v1433
        %1500 = vmatpush.bf16.msra.mxu0 %v1431
        %1501 = vmatmul.bf16.gmra.mxu0 %v1316
        %v1502 = vpop.f32.mrf.mxu0
        %v1503 = vadd.f32 %v1489, %v1502
        %v1504 = vpop.f32.mrf.mxu0
        %v1505 = vadd.f32 %v1491, %v1504
        %1506 = vdwg.mxu0
        %1507 = vmatpush.bf16.msra.mxu0 %v1430
        %1508 = vmatpush.bf16.msra.mxu0 %v1428
        %1509 = vmatpush.bf16.msra.mxu0 %v1426
        %1510 = vmatpush.bf16.msra.mxu0 %v1424
        %1511 = vmatpush.bf16.msra.mxu0 %v1422
        %1512 = vmatpush.bf16.msra.mxu0 %v1420
        %1513 = vmatpush.bf16.msra.mxu0 %v1418
        %1514 = vmatpush.bf16.msra.mxu0 %v1416
        %1515 = vmatmul.bf16.gmra.mxu0 %v1299
        %v1516 = vpop.f32.mrf.mxu0
        %v1517 = vadd.f32 %v1279, %v1516
        %v1518 = vpop.f32.mrf.mxu0
        %v1519 = vadd.f32 %v1281, %v1518
        %1520 = vdwg.mxu0
        %1521 = vmatpush.bf16.msra.mxu0 %v1446
        %1522 = vmatpush.bf16.msra.mxu0 %v1444
        %1523 = vmatpush.bf16.msra.mxu0 %v1442
        %1524 = vmatpush.bf16.msra.mxu0 %v1440
        %1525 = vmatpush.bf16.msra.mxu0 %v1438
        %1526 = vmatpush.bf16.msra.mxu0 %v1436
        %1527 = vmatpush.bf16.msra.mxu0 %v1434
        %1528 = vmatpush.bf16.msra.mxu0 %v1432
        %1529 = vmatmul.bf16.gmra.mxu0 %v1316
        %v1530 = vpop.f32.mrf.mxu0
        %v1531 = vadd.f32 %v1517, %v1530
        %v1532 = vpop.f32.mrf.mxu0
        %v1533 = vadd.f32 %v1519, %v1532
        %1534 = vdwg.mxu0
        %v1535 = vld [vmem:[#allocation2 + $0x20] sm:$0xff]
        %v1536 = vld [vmem:[#allocation2 + $0x28] sm:$0xff]
        %v1537 = vpack.c.bf16 %v1535, %v948
        %v1538 = vpack.c.bf16 %v1536, %v949
        %v1539 = vld [vmem:[#allocation4 + $0x200] sm:$0xff]
        %v1540 = vld [vmem:[#allocation4 + $0x208] sm:$0xff]
        %v1541 = vld [vmem:[#allocation4 + $0x210] sm:$0xff]
        %v1542 = vld [vmem:[#allocation4 + $0x218] sm:$0xff]
        %v1543 = vld [vmem:[#allocation4 + $0x220] sm:$0xff]
        %v1544 = vld [vmem:[#allocation4 + $0x228] sm:$0xff]
        %v1545 = vld [vmem:[#allocation4 + $0x230] sm:$0xff]
        %v1546 = vld [vmem:[#allocation4 + $0x238] sm:$0xff]
        %v1547 = vld [vmem:[#allocation4 + $0x240] sm:$0xff]
        %v1548 = vld [vmem:[#allocation4 + $0x248] sm:$0xff]
        %v1549 = vld [vmem:[#allocation4 + $0x250] sm:$0xff]
        %v1550 = vld [vmem:[#allocation4 + $0x258] sm:$0xff]
        %v1551 = vld [vmem:[#allocation4 + $0x260] sm:$0xff]
        %v1552 = vld [vmem:[#allocation4 + $0x268] sm:$0xff]
        %v1553 = vld [vmem:[#allocation4 + $0x270] sm:$0xff]
        %v1554 = vld [vmem:[#allocation4 + $0x278] sm:$0xff]
        %v1555 = vld [vmem:[#allocation4 + $0x280] sm:$0xff]
        %v1556 = vld [vmem:[#allocation4 + $0x288] sm:$0xff]
        %v1557 = vld [vmem:[#allocation4 + $0x290] sm:$0xff]
        %v1558 = vld [vmem:[#allocation4 + $0x298] sm:$0xff]
        %v1559 = vld [vmem:[#allocation4 + $0x2a0] sm:$0xff]
        %v1560 = vld [vmem:[#allocation4 + $0x2a8] sm:$0xff]
        %v1561 = vld [vmem:[#allocation4 + $0x2b0] sm:$0xff]
        %v1562 = vld [vmem:[#allocation4 + $0x2b8] sm:$0xff]
        %v1563 = vld [vmem:[#allocation4 + $0x2c0] sm:$0xff]
        %v1564 = vld [vmem:[#allocation4 + $0x2c8] sm:$0xff]
        %v1565 = vld [vmem:[#allocation4 + $0x2d0] sm:$0xff]
        %v1566 = vld [vmem:[#allocation4 + $0x2d8] sm:$0xff]
        %v1567 = vld [vmem:[#allocation4 + $0x2e0] sm:$0xff]
        %v1568 = vld [vmem:[#allocation4 + $0x2e8] sm:$0xff]
        %v1569 = vld [vmem:[#allocation4 + $0x2f0] sm:$0xff]
        %v1570 = vld [vmem:[#allocation4 + $0x2f8] sm:$0xff]
        %v1603 = vunpack.c.l.b16 %v1539
        %v1604 = vunpack.c.h.b16 %v1539
        %v1605 = vunpack.c.l.b16 %v1540
        %v1606 = vunpack.c.h.b16 %v1540
        %v1607 = vunpack.c.l.b16 %v1541
        %v1608 = vunpack.c.h.b16 %v1541
        %v1609 = vunpack.c.l.b16 %v1542
        %v1610 = vunpack.c.h.b16 %v1542
        %v1611 = vunpack.c.l.b16 %v1543
        %v1612 = vunpack.c.h.b16 %v1543
        %v1613 = vunpack.c.l.b16 %v1544
        %v1614 = vunpack.c.h.b16 %v1544
        %v1615 = vunpack.c.l.b16 %v1545
        %v1616 = vunpack.c.h.b16 %v1545
        %v1617 = vunpack.c.l.b16 %v1546
        %v1618 = vunpack.c.h.b16 %v1546
        %v1619 = vunpack.c.l.b16 %v1547
        %v1620 = vunpack.c.h.b16 %v1547
        %v1621 = vunpack.c.l.b16 %v1548
        %v1622 = vunpack.c.h.b16 %v1548
        %v1623 = vunpack.c.l.b16 %v1549
        %v1624 = vunpack.c.h.b16 %v1549
        %v1625 = vunpack.c.l.b16 %v1550
        %v1626 = vunpack.c.h.b16 %v1550
        %v1627 = vunpack.c.l.b16 %v1551
        %v1628 = vunpack.c.h.b16 %v1551
        %v1629 = vunpack.c.l.b16 %v1552
        %v1630 = vunpack.c.h.b16 %v1552
        %v1631 = vunpack.c.l.b16 %v1553
        %v1632 = vunpack.c.h.b16 %v1553
        %v1633 = vunpack.c.l.b16 %v1554
        %v1634 = vunpack.c.h.b16 %v1554
        %v1635 = vunpack.c.l.b16 %v1555
        %v1636 = vunpack.c.h.b16 %v1555
        %v1637 = vunpack.c.l.b16 %v1556
        %v1638 = vunpack.c.h.b16 %v1556
        %v1639 = vunpack.c.l.b16 %v1557
        %v1640 = vunpack.c.h.b16 %v1557
        %v1641 = vunpack.c.l.b16 %v1558
        %v1642 = vunpack.c.h.b16 %v1558
        %v1643 = vunpack.c.l.b16 %v1559
        %v1644 = vunpack.c.h.b16 %v1559
        %v1645 = vunpack.c.l.b16 %v1560
        %v1646 = vunpack.c.h.b16 %v1560
        %v1647 = vunpack.c.l.b16 %v1561
        %v1648 = vunpack.c.h.b16 %v1561
        %v1649 = vunpack.c.l.b16 %v1562
        %v1650 = vunpack.c.h.b16 %v1562
        %v1651 = vunpack.c.l.b16 %v1563
        %v1652 = vunpack.c.h.b16 %v1563
        %v1653 = vunpack.c.l.b16 %v1564
        %v1654 = vunpack.c.h.b16 %v1564
        %v1655 = vunpack.c.l.b16 %v1565
        %v1656 = vunpack.c.h.b16 %v1565
        %v1657 = vunpack.c.l.b16 %v1566
        %v1658 = vunpack.c.h.b16 %v1566
        %v1659 = vunpack.c.l.b16 %v1567
        %v1660 = vunpack.c.h.b16 %v1567
        %v1661 = vunpack.c.l.b16 %v1568
        %v1662 = vunpack.c.h.b16 %v1568
        %v1663 = vunpack.c.l.b16 %v1569
        %v1664 = vunpack.c.h.b16 %v1569
        %v1665 = vunpack.c.l.b16 %v1570
        %v1666 = vunpack.c.h.b16 %v1570
        %v1667 = vpack.c.b16 %v1605, %v1603
        %v1668 = vpack.c.b16 %v1606, %v1604
        %v1669 = vpack.c.b16 %v1609, %v1607
        %v1670 = vpack.c.b16 %v1610, %v1608
        %v1671 = vpack.c.b16 %v1613, %v1611
        %v1672 = vpack.c.b16 %v1614, %v1612
        %v1673 = vpack.c.b16 %v1617, %v1615
        %v1674 = vpack.c.b16 %v1618, %v1616
        %v1675 = vpack.c.b16 %v1621, %v1619
        %v1676 = vpack.c.b16 %v1622, %v1620
        %v1677 = vpack.c.b16 %v1625, %v1623
        %v1678 = vpack.c.b16 %v1626, %v1624
        %v1679 = vpack.c.b16 %v1629, %v1627
        %v1680 = vpack.c.b16 %v1630, %v1628
        %v1681 = vpack.c.b16 %v1633, %v1631
        %v1682 = vpack.c.b16 %v1634, %v1632
        %v1683 = vpack.c.b16 %v1637, %v1635
        %v1684 = vpack.c.b16 %v1638, %v1636
        %v1685 = vpack.c.b16 %v1641, %v1639
        %v1686 = vpack.c.b16 %v1642, %v1640
        %v1687 = vpack.c.b16 %v1645, %v1643
        %v1688 = vpack.c.b16 %v1646, %v1644
        %v1689 = vpack.c.b16 %v1649, %v1647
        %v1690 = vpack.c.b16 %v1650, %v1648
        %v1691 = vpack.c.b16 %v1653, %v1651
        %v1692 = vpack.c.b16 %v1654, %v1652
        %v1693 = vpack.c.b16 %v1657, %v1655
        %v1694 = vpack.c.b16 %v1658, %v1656
        %v1695 = vpack.c.b16 %v1661, %v1659
        %v1696 = vpack.c.b16 %v1662, %v1660
        %v1697 = vpack.c.b16 %v1665, %v1663
        %v1698 = vpack.c.b16 %v1666, %v1664
        %1731 = vmatpush.bf16.msra.mxu0 %v1681
        %1732 = vmatpush.bf16.msra.mxu0 %v1679
        %1733 = vmatpush.bf16.msra.mxu0 %v1677
        %1734 = vmatpush.bf16.msra.mxu0 %v1675
        %1735 = vmatpush.bf16.msra.mxu0 %v1673
        %1736 = vmatpush.bf16.msra.mxu0 %v1671
        %1737 = vmatpush.bf16.msra.mxu0 %v1669
        %1738 = vmatpush.bf16.msra.mxu0 %v1667
        %1739 = vmatmul.bf16.gmra.mxu0 %v1537
        %v1740 = vpop.f32.mrf.mxu0
        %v1741 = vadd.f32 0.0, %v1740
        %v1742 = vpop.f32.mrf.mxu0
        %v1743 = vadd.f32 0.0, %v1742
        %1744 = vdwg.mxu0
        %1745 = vmatpush.bf16.msra.mxu0 %v1697
        %1746 = vmatpush.bf16.msra.mxu0 %v1695
        %1747 = vmatpush.bf16.msra.mxu0 %v1693
        %1748 = vmatpush.bf16.msra.mxu0 %v1691
        %1749 = vmatpush.bf16.msra.mxu0 %v1689
        %1750 = vmatpush.bf16.msra.mxu0 %v1687
        %1751 = vmatpush.bf16.msra.mxu0 %v1685
        %1752 = vmatpush.bf16.msra.mxu0 %v1683
        %1753 = vmatmul.bf16.gmra.mxu0 %v1538
        %v1754 = vpop.f32.mrf.mxu0
        %v1755 = vadd.f32 %v1741, %v1754
        %v1756 = vpop.f32.mrf.mxu0
        %v1757 = vadd.f32 %v1743, %v1756
        %1758 = vdwg.mxu0
        %1759 = vmatpush.bf16.msra.mxu0 %v1682
        %1760 = vmatpush.bf16.msra.mxu0 %v1680
        %1761 = vmatpush.bf16.msra.mxu0 %v1678
        %1762 = vmatpush.bf16.msra.mxu0 %v1676
        %1763 = vmatpush.bf16.msra.mxu0 %v1674
        %1764 = vmatpush.bf16.msra.mxu0 %v1672
        %1765 = vmatpush.bf16.msra.mxu0 %v1670
        %1766 = vmatpush.bf16.msra.mxu0 %v1668
        %1767 = vmatmul.bf16.gmra.mxu0 %v1537
        %v1768 = vpop.f32.mrf.mxu0
        %v1769 = vadd.f32 0.0, %v1768
        %v1770 = vpop.f32.mrf.mxu0
        %v1771 = vadd.f32 0.0, %v1770
        %1772 = vdwg.mxu0
        %1773 = vmatpush.bf16.msra.mxu0 %v1698
        %1774 = vmatpush.bf16.msra.mxu0 %v1696
        %1775 = vmatpush.bf16.msra.mxu0 %v1694
        %1776 = vmatpush.bf16.msra.mxu0 %v1692
        %1777 = vmatpush.bf16.msra.mxu0 %v1690
        %1778 = vmatpush.bf16.msra.mxu0 %v1688
        %1779 = vmatpush.bf16.msra.mxu0 %v1686
        %1780 = vmatpush.bf16.msra.mxu0 %v1684
        %1781 = vmatmul.bf16.gmra.mxu0 %v1538
        %v1782 = vpop.f32.mrf.mxu0
        %v1783 = vadd.f32 %v1769, %v1782
        %v1784 = vpop.f32.mrf.mxu0
        %v1785 = vadd.f32 %v1771, %v1784
        %1786 = vdwg.mxu0
        %v1787 = vadd.f32 %v1503, %v1755
        %v1788 = vadd.f32 %v1531, %v1783
        %v1789 = vadd.f32 %v1505, %v1757
        %v1790 = vadd.f32 %v1533, %v1785
        %v1791 = vld [vmem:[#allocation3 + $0x20] sm:$0xff]
        %v1792 = vld [vmem:[#allocation3 + $0x28] sm:$0xff]
        %v1793 = vpack.c.bf16 %v1791, %v990
        %v1794 = vpack.c.bf16 %v1792, %v991
        %v1795 = vld [vmem:[#allocation4 + $0x300] sm:$0xff]
        %v1796 = vld [vmem:[#allocation4 + $0x308] sm:$0xff]
        %v1797 = vld [vmem:[#allocation4 + $0x310] sm:$0xff]
        %v1798 = vld [vmem:[#allocation4 + $0x318] sm:$0xff]
        %v1799 = vld [vmem:[#allocation4 + $0x320] sm:$0xff]
        %v1800 = vld [vmem:[#allocation4 + $0x328] sm:$0xff]
        %v1801 = vld [vmem:[#allocation4 + $0x330] sm:$0xff]
        %v1802 = vld [vmem:[#allocation4 + $0x338] sm:$0xff]
        %v1803 = vld [vmem:[#allocation4 + $0x340] sm:$0xff]
        %v1804 = vld [vmem:[#allocation4 + $0x348] sm:$0xff]
        %v1805 = vld [vmem:[#allocation4 + $0x350] sm:$0xff]
        %v1806 = vld [vmem:[#allocation4 + $0x358] sm:$0xff]
        %v1807 = vld [vmem:[#allocation4 + $0x360] sm:$0xff]
        %v1808 = vld [vmem:[#allocation4 + $0x368] sm:$0xff]
        %v1809 = vld [vmem:[#allocation4 + $0x370] sm:$0xff]
        %v1810 = vld [vmem:[#allocation4 + $0x378] sm:$0xff]
        %v1811 = vld [vmem:[#allocation4 + $0x380] sm:$0xff]
        %v1812 = vld [vmem:[#allocation4 + $0x388] sm:$0xff]
        %v1813 = vld [vmem:[#allocation4 + $0x390] sm:$0xff]
        %v1814 = vld [vmem:[#allocation4 + $0x398] sm:$0xff]
        %v1815 = vld [vmem:[#allocation4 + $0x3a0] sm:$0xff]
        %v1816 = vld [vmem:[#allocation4 + $0x3a8] sm:$0xff]
        %v1817 = vld [vmem:[#allocation4 + $0x3b0] sm:$0xff]
        %v1818 = vld [vmem:[#allocation4 + $0x3b8] sm:$0xff]
        %v1819 = vld [vmem:[#allocation4 + $0x3c0] sm:$0xff]
        %v1820 = vld [vmem:[#allocation4 + $0x3c8] sm:$0xff]
        %v1821 = vld [vmem:[#allocation4 + $0x3d0] sm:$0xff]
        %v1822 = vld [vmem:[#allocation4 + $0x3d8] sm:$0xff]
        %v1823 = vld [vmem:[#allocation4 + $0x3e0] sm:$0xff]
        %v1824 = vld [vmem:[#allocation4 + $0x3e8] sm:$0xff]
        %v1825 = vld [vmem:[#allocation4 + $0x3f0] sm:$0xff]
        %v1826 = vld [vmem:[#allocation4 + $0x3f8] sm:$0xff]
        %v1859 = vunpack.c.l.b16 %v1795
        %v1860 = vunpack.c.h.b16 %v1795
        %v1861 = vunpack.c.l.b16 %v1796
        %v1862 = vunpack.c.h.b16 %v1796
        %v1863 = vunpack.c.l.b16 %v1797
        %v1864 = vunpack.c.h.b16 %v1797
        %v1865 = vunpack.c.l.b16 %v1798
        %v1866 = vunpack.c.h.b16 %v1798
        %v1867 = vunpack.c.l.b16 %v1799
        %v1868 = vunpack.c.h.b16 %v1799
        %v1869 = vunpack.c.l.b16 %v1800
        %v1870 = vunpack.c.h.b16 %v1800
        %v1871 = vunpack.c.l.b16 %v1801
        %v1872 = vunpack.c.h.b16 %v1801
        %v1873 = vunpack.c.l.b16 %v1802
        %v1874 = vunpack.c.h.b16 %v1802
        %v1875 = vunpack.c.l.b16 %v1803
        %v1876 = vunpack.c.h.b16 %v1803
        %v1877 = vunpack.c.l.b16 %v1804
        %v1878 = vunpack.c.h.b16 %v1804
        %v1879 = vunpack.c.l.b16 %v1805
        %v1880 = vunpack.c.h.b16 %v1805
        %v1881 = vunpack.c.l.b16 %v1806
        %v1882 = vunpack.c.h.b16 %v1806
        %v1883 = vunpack.c.l.b16 %v1807
        %v1884 = vunpack.c.h.b16 %v1807
        %v1885 = vunpack.c.l.b16 %v1808
        %v1886 = vunpack.c.h.b16 %v1808
        %v1887 = vunpack.c.l.b16 %v1809
        %v1888 = vunpack.c.h.b16 %v1809
        %v1889 = vunpack.c.l.b16 %v1810
        %v1890 = vunpack.c.h.b16 %v1810
        %v1891 = vunpack.c.l.b16 %v1811
        %v1892 = vunpack.c.h.b16 %v1811
        %v1893 = vunpack.c.l.b16 %v1812
        %v1894 = vunpack.c.h.b16 %v1812
        %v1895 = vunpack.c.l.b16 %v1813
        %v1896 = vunpack.c.h.b16 %v1813
        %v1897 = vunpack.c.l.b16 %v1814
        %v1898 = vunpack.c.h.b16 %v1814
        %v1899 = vunpack.c.l.b16 %v1815
        %v1900 = vunpack.c.h.b16 %v1815
        %v1901 = vunpack.c.l.b16 %v1816
        %v1902 = vunpack.c.h.b16 %v1816
        %v1903 = vunpack.c.l.b16 %v1817
        %v1904 = vunpack.c.h.b16 %v1817
        %v1905 = vunpack.c.l.b16 %v1818
        %v1906 = vunpack.c.h.b16 %v1818
        %v1907 = vunpack.c.l.b16 %v1819
        %v1908 = vunpack.c.h.b16 %v1819
        %v1909 = vunpack.c.l.b16 %v1820
        %v1910 = vunpack.c.h.b16 %v1820
        %v1911 = vunpack.c.l.b16 %v1821
        %v1912 = vunpack.c.h.b16 %v1821
        %v1913 = vunpack.c.l.b16 %v1822
        %v1914 = vunpack.c.h.b16 %v1822
        %v1915 = vunpack.c.l.b16 %v1823
        %v1916 = vunpack.c.h.b16 %v1823
        %v1917 = vunpack.c.l.b16 %v1824
        %v1918 = vunpack.c.h.b16 %v1824
        %v1919 = vunpack.c.l.b16 %v1825
        %v1920 = vunpack.c.h.b16 %v1825
        %v1921 = vunpack.c.l.b16 %v1826
        %v1922 = vunpack.c.h.b16 %v1826
        %v1923 = vpack.c.b16 %v1861, %v1859
        %v1924 = vpack.c.b16 %v1862, %v1860
        %v1925 = vpack.c.b16 %v1865, %v1863
        %v1926 = vpack.c.b16 %v1866, %v1864
        %v1927 = vpack.c.b16 %v1869, %v1867
        %v1928 = vpack.c.b16 %v1870, %v1868
        %v1929 = vpack.c.b16 %v1873, %v1871
        %v1930 = vpack.c.b16 %v1874, %v1872
        %v1931 = vpack.c.b16 %v1877, %v1875
        %v1932 = vpack.c.b16 %v1878, %v1876
        %v1933 = vpack.c.b16 %v1881, %v1879
        %v1934 = vpack.c.b16 %v1882, %v1880
        %v1935 = vpack.c.b16 %v1885, %v1883
        %v1936 = vpack.c.b16 %v1886, %v1884
        %v1937 = vpack.c.b16 %v1889, %v1887
        %v1938 = vpack.c.b16 %v1890, %v1888
        %v1939 = vpack.c.b16 %v1893, %v1891
        %v1940 = vpack.c.b16 %v1894, %v1892
        %v1941 = vpack.c.b16 %v1897, %v1895
        %v1942 = vpack.c.b16 %v1898, %v1896
        %v1943 = vpack.c.b16 %v1901, %v1899
        %v1944 = vpack.c.b16 %v1902, %v1900
        %v1945 = vpack.c.b16 %v1905, %v1903
        %v1946 = vpack.c.b16 %v1906, %v1904
        %v1947 = vpack.c.b16 %v1909, %v1907
        %v1948 = vpack.c.b16 %v1910, %v1908
        %v1949 = vpack.c.b16 %v1913, %v1911
        %v1950 = vpack.c.b16 %v1914, %v1912
        %v1951 = vpack.c.b16 %v1917, %v1915
        %v1952 = vpack.c.b16 %v1918, %v1916
        %v1953 = vpack.c.b16 %v1921, %v1919
        %v1954 = vpack.c.b16 %v1922, %v1920
        %1987 = vmatpush.bf16.msra.mxu0 %v1937
        %1988 = vmatpush.bf16.msra.mxu0 %v1935
        %1989 = vmatpush.bf16.msra.mxu0 %v1933
        %1990 = vmatpush.bf16.msra.mxu0 %v1931
        %1991 = vmatpush.bf16.msra.mxu0 %v1929
        %1992 = vmatpush.bf16.msra.mxu0 %v1927
        %1993 = vmatpush.bf16.msra.mxu0 %v1925
        %1994 = vmatpush.bf16.msra.mxu0 %v1923
        %1995 = vmatmul.bf16.gmra.mxu0 %v1793
        %v1996 = vpop.f32.mrf.mxu0
        %v1997 = vadd.f32 0.0, %v1996
        %v1998 = vpop.f32.mrf.mxu0
        %v1999 = vadd.f32 0.0, %v1998
        %2000 = vdwg.mxu0
        %2001 = vmatpush.bf16.msra.mxu0 %v1953
        %2002 = vmatpush.bf16.msra.mxu0 %v1951
        %2003 = vmatpush.bf16.msra.mxu0 %v1949
        %2004 = vmatpush.bf16.msra.mxu0 %v1947
        %2005 = vmatpush.bf16.msra.mxu0 %v1945
        %2006 = vmatpush.bf16.msra.mxu0 %v1943
        %2007 = vmatpush.bf16.msra.mxu0 %v1941
        %2008 = vmatpush.bf16.msra.mxu0 %v1939
        %2009 = vmatmul.bf16.gmra.mxu0 %v1794
        %v2010 = vpop.f32.mrf.mxu0
        %v2011 = vadd.f32 %v1997, %v2010
        %v2012 = vpop.f32.mrf.mxu0
        %v2013 = vadd.f32 %v1999, %v2012
        %2014 = vdwg.mxu0
        %2015 = vmatpush.bf16.msra.mxu0 %v1938
        %2016 = vmatpush.bf16.msra.mxu0 %v1936
        %2017 = vmatpush.bf16.msra.mxu0 %v1934
        %2018 = vmatpush.bf16.msra.mxu0 %v1932
        %2019 = vmatpush.bf16.msra.mxu0 %v1930
        %2020 = vmatpush.bf16.msra.mxu0 %v1928
        %2021 = vmatpush.bf16.msra.mxu0 %v1926
        %2022 = vmatpush.bf16.msra.mxu0 %v1924
        %2023 = vmatmul.bf16.gmra.mxu0 %v1793
        %v2024 = vpop.f32.mrf.mxu0
        %v2025 = vadd.f32 0.0, %v2024
        %v2026 = vpop.f32.mrf.mxu0
        %v2027 = vadd.f32 0.0, %v2026
        %2028 = vdwg.mxu0
        %2029 = vmatpush.bf16.msra.mxu0 %v1954
        %2030 = vmatpush.bf16.msra.mxu0 %v1952
        %2031 = vmatpush.bf16.msra.mxu0 %v1950
        %2032 = vmatpush.bf16.msra.mxu0 %v1948
        %2033 = vmatpush.bf16.msra.mxu0 %v1946
        %2034 = vmatpush.bf16.msra.mxu0 %v1944
        %2035 = vmatpush.bf16.msra.mxu0 %v1942
        %2036 = vmatpush.bf16.msra.mxu0 %v1940
        %2037 = vmatmul.bf16.gmra.mxu0 %v1794
        %v2038 = vpop.f32.mrf.mxu0
        %v2039 = vadd.f32 %v2025, %v2038
        %v2040 = vpop.f32.mrf.mxu0
        %v2041 = vadd.f32 %v2027, %v2040
        %2042 = vdwg.mxu0
        %v2043 = vadd.f32 %v1787, %v2011
        %v2044 = vadd.f32 %v1788, %v2039
        %v2045 = vadd.f32 %v1789, %v2013
        %v2046 = vadd.f32 %v1790, %v2041
        %v2047 = vld [vmem:[#allocation2 + $0x10] sm:$0xfe]
        %v2048 = vld [vmem:[#allocation2 + $0x18] sm:$0xfe]
        %v2049 = vld [vmem:[#allocation2 + $0x20] sm:$0xff]
        %v2050 = vld [vmem:[#allocation2 + $0x28] sm:$0xff]
        %v2051 = vld [vmem:[#allocation2 + $0x30] sm:$0x1]
        %v2052 = vld [vmem:[#allocation2 + $0x38] sm:$0x1]
        %v2053 = vpack.c.bf16 %v2049, %v2047
        %v2054 = vpack.c.bf16 %v2050, %v2048
        %v2055 = vpack.c.bf16 %v2051, %v2051
        %v2056 = vpack.c.bf16 %v2052, %v2052
        %v2057 = vld [vmem:[#allocation4 + $0x400] sm:$0xff]
        %v2058 = vld [vmem:[#allocation4 + $0x408] sm:$0xff]
        %v2059 = vld [vmem:[#allocation4 + $0x410] sm:$0xff]
        %v2060 = vld [vmem:[#allocation4 + $0x418] sm:$0xff]
        %v2061 = vld [vmem:[#allocation4 + $0x420] sm:$0xff]
        %v2062 = vld [vmem:[#allocation4 + $0x428] sm:$0xff]
        %v2063 = vld [vmem:[#allocation4 + $0x430] sm:$0xff]
        %v2064 = vld [vmem:[#allocation4 + $0x438] sm:$0xff]
        %v2065 = vld [vmem:[#allocation4 + $0x440] sm:$0xff]
        %v2066 = vld [vmem:[#allocation4 + $0x448] sm:$0xff]
        %v2067 = vld [vmem:[#allocation4 + $0x450] sm:$0xff]
        %v2068 = vld [vmem:[#allocation4 + $0x458] sm:$0xff]
        %v2069 = vld [vmem:[#allocation4 + $0x460] sm:$0xff]
        %v2070 = vld [vmem:[#allocation4 + $0x468] sm:$0xff]
        %v2071 = vld [vmem:[#allocation4 + $0x470] sm:$0xff]
        %v2072 = vld [vmem:[#allocation4 + $0x478] sm:$0xff]
        %v2073 = vld [vmem:[#allocation4 + $0x480] sm:$0xff]
        %v2074 = vld [vmem:[#allocation4 + $0x488] sm:$0xff]
        %v2075 = vld [vmem:[#allocation4 + $0x490] sm:$0xff]
        %v2076 = vld [vmem:[#allocation4 + $0x498] sm:$0xff]
        %v2077 = vld [vmem:[#allocation4 + $0x4a0] sm:$0xff]
        %v2078 = vld [vmem:[#allocation4 + $0x4a8] sm:$0xff]
        %v2079 = vld [vmem:[#allocation4 + $0x4b0] sm:$0xff]
        %v2080 = vld [vmem:[#allocation4 + $0x4b8] sm:$0xff]
        %v2081 = vld [vmem:[#allocation4 + $0x4c0] sm:$0xff]
        %v2082 = vld [vmem:[#allocation4 + $0x4c8] sm:$0xff]
        %v2083 = vld [vmem:[#allocation4 + $0x4d0] sm:$0xff]
        %v2084 = vld [vmem:[#allocation4 + $0x4d8] sm:$0xff]
        %v2085 = vld [vmem:[#allocation4 + $0x4e0] sm:$0xff]
        %v2086 = vld [vmem:[#allocation4 + $0x4e8] sm:$0xff]
        %v2087 = vld [vmem:[#allocation4 + $0x4f0] sm:$0xff]
        %v2088 = vld [vmem:[#allocation4 + $0x4f8] sm:$0xff]
        %vm2089 = vsmask.f32 7424
        %v2091 = vshrl.u32 %v2053, 16
        %v2093 = vshll.u32 %v2053, 16
        %v2095 = vrot.slane %v2093, 1
        %v2096 = vor.u32 %v2091, %v2095
        %v2098 = vshll.u32 %v2055, 16
        %v2100 = vrot.slane %v2098, 1
        %v2101 = vsel %vm2089, %v2096, %v2100
        %v2103 = vshrl.u32 %v2054, 16
        %v2105 = vshll.u32 %v2054, 16
        %v2107 = vrot.slane %v2105, 1
        %v2108 = vor.u32 %v2103, %v2107
        %v2110 = vshll.u32 %v2056, 16
        %v2112 = vrot.slane %v2110, 1
        %v2113 = vsel %vm2089, %v2108, %v2112
        %v2148 = vunpack.c.l.b16 %v2057
        %v2149 = vunpack.c.h.b16 %v2057
        %v2150 = vunpack.c.l.b16 %v2058
        %v2151 = vunpack.c.h.b16 %v2058
        %v2152 = vunpack.c.l.b16 %v2059
        %v2153 = vunpack.c.h.b16 %v2059
        %v2154 = vunpack.c.l.b16 %v2060
        %v2155 = vunpack.c.h.b16 %v2060
        %v2156 = vunpack.c.l.b16 %v2061
        %v2157 = vunpack.c.h.b16 %v2061
        %v2158 = vunpack.c.l.b16 %v2062
        %v2159 = vunpack.c.h.b16 %v2062
        %v2160 = vunpack.c.l.b16 %v2063
        %v2161 = vunpack.c.h.b16 %v2063
        %v2162 = vunpack.c.l.b16 %v2064
        %v2163 = vunpack.c.h.b16 %v2064
        %v2164 = vunpack.c.l.b16 %v2065
        %v2165 = vunpack.c.h.b16 %v2065
        %v2166 = vunpack.c.l.b16 %v2066
        %v2167 = vunpack.c.h.b16 %v2066
        %v2168 = vunpack.c.l.b16 %v2067
        %v2169 = vunpack.c.h.b16 %v2067
        %v2170 = vunpack.c.l.b16 %v2068
        %v2171 = vunpack.c.h.b16 %v2068
        %v2172 = vunpack.c.l.b16 %v2069
        %v2173 = vunpack.c.h.b16 %v2069
        %v2174 = vunpack.c.l.b16 %v2070
        %v2175 = vunpack.c.h.b16 %v2070
        %v2176 = vunpack.c.l.b16 %v2071
        %v2177 = vunpack.c.h.b16 %v2071
        %v2178 = vunpack.c.l.b16 %v2072
        %v2179 = vunpack.c.h.b16 %v2072
        %v2180 = vunpack.c.l.b16 %v2073
        %v2181 = vunpack.c.h.b16 %v2073
        %v2182 = vunpack.c.l.b16 %v2074
        %v2183 = vunpack.c.h.b16 %v2074
        %v2184 = vunpack.c.l.b16 %v2075
        %v2185 = vunpack.c.h.b16 %v2075
        %v2186 = vunpack.c.l.b16 %v2076
        %v2187 = vunpack.c.h.b16 %v2076
        %v2188 = vunpack.c.l.b16 %v2077
        %v2189 = vunpack.c.h.b16 %v2077
        %v2190 = vunpack.c.l.b16 %v2078
        %v2191 = vunpack.c.h.b16 %v2078
        %v2192 = vunpack.c.l.b16 %v2079
        %v2193 = vunpack.c.h.b16 %v2079
        %v2194 = vunpack.c.l.b16 %v2080
        %v2195 = vunpack.c.h.b16 %v2080
        %v2196 = vunpack.c.l.b16 %v2081
        %v2197 = vunpack.c.h.b16 %v2081
        %v2198 = vunpack.c.l.b16 %v2082
        %v2199 = vunpack.c.h.b16 %v2082
        %v2200 = vunpack.c.l.b16 %v2083
        %v2201 = vunpack.c.h.b16 %v2083
        %v2202 = vunpack.c.l.b16 %v2084
        %v2203 = vunpack.c.h.b16 %v2084
        %v2204 = vunpack.c.l.b16 %v2085
        %v2205 = vunpack.c.h.b16 %v2085
        %v2206 = vunpack.c.l.b16 %v2086
        %v2207 = vunpack.c.h.b16 %v2086
        %v2208 = vunpack.c.l.b16 %v2087
        %v2209 = vunpack.c.h.b16 %v2087
        %v2210 = vunpack.c.l.b16 %v2088
        %v2211 = vunpack.c.h.b16 %v2088
        %v2212 = vpack.c.b16 %v2150, %v2148
        %v2213 = vpack.c.b16 %v2151, %v2149
        %v2214 = vpack.c.b16 %v2154, %v2152
        %v2215 = vpack.c.b16 %v2155, %v2153
        %v2216 = vpack.c.b16 %v2158, %v2156
        %v2217 = vpack.c.b16 %v2159, %v2157
        %v2218 = vpack.c.b16 %v2162, %v2160
        %v2219 = vpack.c.b16 %v2163, %v2161
        %v2220 = vpack.c.b16 %v2166, %v2164
        %v2221 = vpack.c.b16 %v2167, %v2165
        %v2222 = vpack.c.b16 %v2170, %v2168
        %v2223 = vpack.c.b16 %v2171, %v2169
        %v2224 = vpack.c.b16 %v2174, %v2172
        %v2225 = vpack.c.b16 %v2175, %v2173
        %v2226 = vpack.c.b16 %v2178, %v2176
        %v2227 = vpack.c.b16 %v2179, %v2177
        %v2228 = vpack.c.b16 %v2182, %v2180
        %v2229 = vpack.c.b16 %v2183, %v2181
        %v2230 = vpack.c.b16 %v2186, %v2184
        %v2231 = vpack.c.b16 %v2187, %v2185
        %v2232 = vpack.c.b16 %v2190, %v2188
        %v2233 = vpack.c.b16 %v2191, %v2189
        %v2234 = vpack.c.b16 %v2194, %v2192
        %v2235 = vpack.c.b16 %v2195, %v2193
        %v2236 = vpack.c.b16 %v2198, %v2196
        %v2237 = vpack.c.b16 %v2199, %v2197
        %v2238 = vpack.c.b16 %v2202, %v2200
        %v2239 = vpack.c.b16 %v2203, %v2201
        %v2240 = vpack.c.b16 %v2206, %v2204
        %v2241 = vpack.c.b16 %v2207, %v2205
        %v2242 = vpack.c.b16 %v2210, %v2208
        %v2243 = vpack.c.b16 %v2211, %v2209
        %2276 = vmatpush.bf16.msra.mxu0 %v2226
        %2277 = vmatpush.bf16.msra.mxu0 %v2224
        %2278 = vmatpush.bf16.msra.mxu0 %v2222
        %2279 = vmatpush.bf16.msra.mxu0 %v2220
        %2280 = vmatpush.bf16.msra.mxu0 %v2218
        %2281 = vmatpush.bf16.msra.mxu0 %v2216
        %2282 = vmatpush.bf16.msra.mxu0 %v2214
        %2283 = vmatpush.bf16.msra.mxu0 %v2212
        %2284 = vmatmul.bf16.gmra.mxu0 %v2101
        %v2285 = vpop.f32.mrf.mxu0
        %v2286 = vadd.f32 0.0, %v2285
        %v2287 = vpop.f32.mrf.mxu0
        %v2288 = vadd.f32 0.0, %v2287
        %2289 = vdwg.mxu0
        %2290 = vmatpush.bf16.msra.mxu0 %v2242
        %2291 = vmatpush.bf16.msra.mxu0 %v2240
        %2292 = vmatpush.bf16.msra.mxu0 %v2238
        %2293 = vmatpush.bf16.msra.mxu0 %v2236
        %2294 = vmatpush.bf16.msra.mxu0 %v2234
        %2295 = vmatpush.bf16.msra.mxu0 %v2232
        %2296 = vmatpush.bf16.msra.mxu0 %v2230
        %2297 = vmatpush.bf16.msra.mxu0 %v2228
        %2298 = vmatmul.bf16.gmra.mxu0 %v2113
        %v2299 = vpop.f32.mrf.mxu0
        %v2300 = vadd.f32 %v2286, %v2299
        %v2301 = vpop.f32.mrf.mxu0
        %v2302 = vadd.f32 %v2288, %v2301
        %2303 = vdwg.mxu0
        %2304 = vmatpush.bf16.msra.mxu0 %v2227
        %2305 = vmatpush.bf16.msra.mxu0 %v2225
        %2306 = vmatpush.bf16.msra.mxu0 %v2223
        %2307 = vmatpush.bf16.msra.mxu0 %v2221
        %2308 = vmatpush.bf16.msra.mxu0 %v2219
        %2309 = vmatpush.bf16.msra.mxu0 %v2217
        %2310 = vmatpush.bf16.msra.mxu0 %v2215
        %2311 = vmatpush.bf16.msra.mxu0 %v2213
        %2312 = vmatmul.bf16.gmra.mxu0 %v2101
        %v2313 = vpop.f32.mrf.mxu0
        %v2314 = vadd.f32 0.0, %v2313
        %v2315 = vpop.f32.mrf.mxu0
        %v2316 = vadd.f32 0.0, %v2315
        %2317 = vdwg.mxu0
        %2318 = vmatpush.bf16.msra.mxu0 %v2243
        %2319 = vmatpush.bf16.msra.mxu0 %v2241
        %2320 = vmatpush.bf16.msra.mxu0 %v2239
        %2321 = vmatpush.bf16.msra.mxu0 %v2237
        %2322 = vmatpush.bf16.msra.mxu0 %v2235
        %2323 = vmatpush.bf16.msra.mxu0 %v2233
        %2324 = vmatpush.bf16.msra.mxu0 %v2231
        %2325 = vmatpush.bf16.msra.mxu0 %v2229
        %2326 = vmatmul.bf16.gmra.mxu0 %v2113
        %v2327 = vpop.f32.mrf.mxu0
        %v2328 = vadd.f32 %v2314, %v2327
        %v2329 = vpop.f32.mrf.mxu0
        %v2330 = vadd.f32 %v2316, %v2329
        %2331 = vdwg.mxu0
        %v2332 = vadd.f32 %v2043, %v2300
        %v2333 = vadd.f32 %v2044, %v2328
        %v2334 = vadd.f32 %v2045, %v2302
        %v2335 = vadd.f32 %v2046, %v2330
        %v2336 = vld [vmem:[#allocation3 + $0x10] sm:$0xfe]
        %v2337 = vld [vmem:[#allocation3 + $0x18] sm:$0xfe]
        %v2338 = vld [vmem:[#allocation3 + $0x20] sm:$0xff]
        %v2339 = vld [vmem:[#allocation3 + $0x28] sm:$0xff]
        %v2340 = vld [vmem:[#allocation3 + $0x30] sm:$0x1]
        %v2341 = vld [vmem:[#allocation3 + $0x38] sm:$0x1]
        %v2342 = vpack.c.bf16 %v2338, %v2336
        %v2343 = vpack.c.bf16 %v2339, %v2337
        %v2344 = vpack.c.bf16 %v2340, %v2340
        %v2345 = vpack.c.bf16 %v2341, %v2341
        %v2346 = vld [vmem:[#allocation4 + $0x500] sm:$0xff]
        %v2347 = vld [vmem:[#allocation4 + $0x508] sm:$0xff]
        %v2348 = vld [vmem:[#allocation4 + $0x510] sm:$0xff]
        %v2349 = vld [vmem:[#allocation4 + $0x518] sm:$0xff]
        %v2350 = vld [vmem:[#allocation4 + $0x520] sm:$0xff]
        %v2351 = vld [vmem:[#allocation4 + $0x528] sm:$0xff]
        %v2352 = vld [vmem:[#allocation4 + $0x530] sm:$0xff]
        %v2353 = vld [vmem:[#allocation4 + $0x538] sm:$0xff]
        %v2354 = vld [vmem:[#allocation4 + $0x540] sm:$0xff]
        %v2355 = vld [vmem:[#allocation4 + $0x548] sm:$0xff]
        %v2356 = vld [vmem:[#allocation4 + $0x550] sm:$0xff]
        %v2357 = vld [vmem:[#allocation4 + $0x558] sm:$0xff]
        %v2358 = vld [vmem:[#allocation4 + $0x560] sm:$0xff]
        %v2359 = vld [vmem:[#allocation4 + $0x568] sm:$0xff]
        %v2360 = vld [vmem:[#allocation4 + $0x570] sm:$0xff]
        %v2361 = vld [vmem:[#allocation4 + $0x578] sm:$0xff]
        %v2362 = vld [vmem:[#allocation4 + $0x580] sm:$0xff]
        %v2363 = vld [vmem:[#allocation4 + $0x588] sm:$0xff]
        %v2364 = vld [vmem:[#allocation4 + $0x590] sm:$0xff]
        %v2365 = vld [vmem:[#allocation4 + $0x598] sm:$0xff]
        %v2366 = vld [vmem:[#allocation4 + $0x5a0] sm:$0xff]
        %v2367 = vld [vmem:[#allocation4 + $0x5a8] sm:$0xff]
        %v2368 = vld [vmem:[#allocation4 + $0x5b0] sm:$0xff]
        %v2369 = vld [vmem:[#allocation4 + $0x5b8] sm:$0xff]
        %v2370 = vld [vmem:[#allocation4 + $0x5c0] sm:$0xff]
        %v2371 = vld [vmem:[#allocation4 + $0x5c8] sm:$0xff]
        %v2372 = vld [vmem:[#allocation4 + $0x5d0] sm:$0xff]
        %v2373 = vld [vmem:[#allocation4 + $0x5d8] sm:$0xff]
        %v2374 = vld [vmem:[#allocation4 + $0x5e0] sm:$0xff]
        %v2375 = vld [vmem:[#allocation4 + $0x5e8] sm:$0xff]
        %v2376 = vld [vmem:[#allocation4 + $0x5f0] sm:$0xff]
        %v2377 = vld [vmem:[#allocation4 + $0x5f8] sm:$0xff]
        %v2379 = vshrl.u32 %v2342, 16
        %v2381 = vshll.u32 %v2342, 16
        %v2383 = vrot.slane %v2381, 1
        %v2384 = vor.u32 %v2379, %v2383
        %v2386 = vshll.u32 %v2344, 16
        %v2388 = vrot.slane %v2386, 1
        %v2389 = vsel %vm2089, %v2384, %v2388
        %v2391 = vshrl.u32 %v2343, 16
        %v2393 = vshll.u32 %v2343, 16
        %v2395 = vrot.slane %v2393, 1
        %v2396 = vor.u32 %v2391, %v2395
        %v2398 = vshll.u32 %v2345, 16
        %v2400 = vrot.slane %v2398, 1
        %v2401 = vsel %vm2089, %v2396, %v2400
        %v2436 = vunpack.c.l.b16 %v2346
        %v2437 = vunpack.c.h.b16 %v2346
        %v2438 = vunpack.c.l.b16 %v2347
        %v2439 = vunpack.c.h.b16 %v2347
        %v2440 = vunpack.c.l.b16 %v2348
        %v2441 = vunpack.c.h.b16 %v2348
        %v2442 = vunpack.c.l.b16 %v2349
        %v2443 = vunpack.c.h.b16 %v2349
        %v2444 = vunpack.c.l.b16 %v2350
        %v2445 = vunpack.c.h.b16 %v2350
        %v2446 = vunpack.c.l.b16 %v2351
        %v2447 = vunpack.c.h.b16 %v2351
        %v2448 = vunpack.c.l.b16 %v2352
        %v2449 = vunpack.c.h.b16 %v2352
        %v2450 = vunpack.c.l.b16 %v2353
        %v2451 = vunpack.c.h.b16 %v2353
        %v2452 = vunpack.c.l.b16 %v2354
        %v2453 = vunpack.c.h.b16 %v2354
        %v2454 = vunpack.c.l.b16 %v2355
        %v2455 = vunpack.c.h.b16 %v2355
        %v2456 = vunpack.c.l.b16 %v2356
        %v2457 = vunpack.c.h.b16 %v2356
        %v2458 = vunpack.c.l.b16 %v2357
        %v2459 = vunpack.c.h.b16 %v2357
        %v2460 = vunpack.c.l.b16 %v2358
        %v2461 = vunpack.c.h.b16 %v2358
        %v2462 = vunpack.c.l.b16 %v2359
        %v2463 = vunpack.c.h.b16 %v2359
        %v2464 = vunpack.c.l.b16 %v2360
        %v2465 = vunpack.c.h.b16 %v2360
        %v2466 = vunpack.c.l.b16 %v2361
        %v2467 = vunpack.c.h.b16 %v2361
        %v2468 = vunpack.c.l.b16 %v2362
        %v2469 = vunpack.c.h.b16 %v2362
        %v2470 = vunpack.c.l.b16 %v2363
        %v2471 = vunpack.c.h.b16 %v2363
        %v2472 = vunpack.c.l.b16 %v2364
        %v2473 = vunpack.c.h.b16 %v2364
        %v2474 = vunpack.c.l.b16 %v2365
        %v2475 = vunpack.c.h.b16 %v2365
        %v2476 = vunpack.c.l.b16 %v2366
        %v2477 = vunpack.c.h.b16 %v2366
        %v2478 = vunpack.c.l.b16 %v2367
        %v2479 = vunpack.c.h.b16 %v2367
        %v2480 = vunpack.c.l.b16 %v2368
        %v2481 = vunpack.c.h.b16 %v2368
        %v2482 = vunpack.c.l.b16 %v2369
        %v2483 = vunpack.c.h.b16 %v2369
        %v2484 = vunpack.c.l.b16 %v2370
        %v2485 = vunpack.c.h.b16 %v2370
        %v2486 = vunpack.c.l.b16 %v2371
        %v2487 = vunpack.c.h.b16 %v2371
        %v2488 = vunpack.c.l.b16 %v2372
        %v2489 = vunpack.c.h.b16 %v2372
        %v2490 = vunpack.c.l.b16 %v2373
        %v2491 = vunpack.c.h.b16 %v2373
        %v2492 = vunpack.c.l.b16 %v2374
        %v2493 = vunpack.c.h.b16 %v2374
        %v2494 = vunpack.c.l.b16 %v2375
        %v2495 = vunpack.c.h.b16 %v2375
        %v2496 = vunpack.c.l.b16 %v2376
        %v2497 = vunpack.c.h.b16 %v2376
        %v2498 = vunpack.c.l.b16 %v2377
        %v2499 = vunpack.c.h.b16 %v2377
        %v2500 = vpack.c.b16 %v2438, %v2436
        %v2501 = vpack.c.b16 %v2439, %v2437
        %v2502 = vpack.c.b16 %v2442, %v2440
        %v2503 = vpack.c.b16 %v2443, %v2441
        %v2504 = vpack.c.b16 %v2446, %v2444
        %v2505 = vpack.c.b16 %v2447, %v2445
        %v2506 = vpack.c.b16 %v2450, %v2448
        %v2507 = vpack.c.b16 %v2451, %v2449
        %v2508 = vpack.c.b16 %v2454, %v2452
        %v2509 = vpack.c.b16 %v2455, %v2453
        %v2510 = vpack.c.b16 %v2458, %v2456
        %v2511 = vpack.c.b16 %v2459, %v2457
        %v2512 = vpack.c.b16 %v2462, %v2460
        %v2513 = vpack.c.b16 %v2463, %v2461
        %v2514 = vpack.c.b16 %v2466, %v2464
        %v2515 = vpack.c.b16 %v2467, %v2465
        %v2516 = vpack.c.b16 %v2470, %v2468
        %v2517 = vpack.c.b16 %v2471, %v2469
        %v2518 = vpack.c.b16 %v2474, %v2472
        %v2519 = vpack.c.b16 %v2475, %v2473
        %v2520 = vpack.c.b16 %v2478, %v2476
        %v2521 = vpack.c.b16 %v2479, %v2477
        %v2522 = vpack.c.b16 %v2482, %v2480
        %v2523 = vpack.c.b16 %v2483, %v2481
        %v2524 = vpack.c.b16 %v2486, %v2484
        %v2525 = vpack.c.b16 %v2487, %v2485
        %v2526 = vpack.c.b16 %v2490, %v2488
        %v2527 = vpack.c.b16 %v2491, %v2489
        %v2528 = vpack.c.b16 %v2494, %v2492
        %v2529 = vpack.c.b16 %v2495, %v2493
        %v2530 = vpack.c.b16 %v2498, %v2496
        %v2531 = vpack.c.b16 %v2499, %v2497
        %2564 = vmatpush.bf16.msra.mxu0 %v2514
        %2565 = vmatpush.bf16.msra.mxu0 %v2512
        %2566 = vmatpush.bf16.msra.mxu0 %v2510
        %2567 = vmatpush.bf16.msra.mxu0 %v2508
        %2568 = vmatpush.bf16.msra.mxu0 %v2506
        %2569 = vmatpush.bf16.msra.mxu0 %v2504
        %2570 = vmatpush.bf16.msra.mxu0 %v2502
        %2571 = vmatpush.bf16.msra.mxu0 %v2500
        %2572 = vmatmul.bf16.gmra.mxu0 %v2389
        %v2573 = vpop.f32.mrf.mxu0
        %v2574 = vadd.f32 0.0, %v2573
        %v2575 = vpop.f32.mrf.mxu0
        %v2576 = vadd.f32 0.0, %v2575
        %2577 = vdwg.mxu0
        %2578 = vmatpush.bf16.msra.mxu0 %v2530
        %2579 = vmatpush.bf16.msra.mxu0 %v2528
        %2580 = vmatpush.bf16.msra.mxu0 %v2526
        %2581 = vmatpush.bf16.msra.mxu0 %v2524
        %2582 = vmatpush.bf16.msra.mxu0 %v2522
        %2583 = vmatpush.bf16.msra.mxu0 %v2520
        %2584 = vmatpush.bf16.msra.mxu0 %v2518
        %2585 = vmatpush.bf16.msra.mxu0 %v2516
        %2586 = vmatmul.bf16.gmra.mxu0 %v2401
        %v2587 = vpop.f32.mrf.mxu0
        %v2588 = vadd.f32 %v2574, %v2587
        %v2589 = vpop.f32.mrf.mxu0
        %v2590 = vadd.f32 %v2576, %v2589
        %2591 = vdwg.mxu0
        %2592 = vmatpush.bf16.msra.mxu0 %v2515
        %2593 = vmatpush.bf16.msra.mxu0 %v2513
        %2594 = vmatpush.bf16.msra.mxu0 %v2511
        %2595 = vmatpush.bf16.msra.mxu0 %v2509
        %2596 = vmatpush.bf16.msra.mxu0 %v2507
        %2597 = vmatpush.bf16.msra.mxu0 %v2505
        %2598 = vmatpush.bf16.msra.mxu0 %v2503
        %2599 = vmatpush.bf16.msra.mxu0 %v2501
        %2600 = vmatmul.bf16.gmra.mxu0 %v2389
        %v2601 = vpop.f32.mrf.mxu0
        %v2602 = vadd.f32 0.0, %v2601
        %v2603 = vpop.f32.mrf.mxu0
        %v2604 = vadd.f32 0.0, %v2603
        %2605 = vdwg.mxu0
        %2606 = vmatpush.bf16.msra.mxu0 %v2531
        %2607 = vmatpush.bf16.msra.mxu0 %v2529
        %2608 = vmatpush.bf16.msra.mxu0 %v2527
        %2609 = vmatpush.bf16.msra.mxu0 %v2525
        %2610 = vmatpush.bf16.msra.mxu0 %v2523
        %2611 = vmatpush.bf16.msra.mxu0 %v2521
        %2612 = vmatpush.bf16.msra.mxu0 %v2519
        %2613 = vmatpush.bf16.msra.mxu0 %v2517
        %2614 = vmatmul.bf16.gmra.mxu0 %v2401
        %v2615 = vpop.f32.mrf.mxu0
        %v2616 = vadd.f32 %v2602, %v2615
        %v2617 = vpop.f32.mrf.mxu0
        %v2618 = vadd.f32 %v2604, %v2617
        %2619 = vdwg.mxu0
        %v2620 = vadd.f32 %v2332, %v2588
        %v2621 = vadd.f32 %v2333, %v2616
        %v2622 = vadd.f32 %v2334, %v2590
        %v2623 = vadd.f32 %v2335, %v2618
        %v2624 = vld [vmem:[%s10] sm:$0x3]
        %v2626 = vperm.slane %v2624, 0
        %v2627 = vperm.slane %v2624, 1
        %v2630 = vadd.f32 %v2620, %v2626
        %v2631 = vadd.f32 %v2621, %v2627
        %v2632 = vadd.f32 %v2622, %v2626
        %v2633 = vadd.f32 %v2623, %v2627
        %v2634 = vadd.f32 %v2630, %v469
        %v2635 = vadd.f32 %v2631, %v470
        %v2636 = vadd.f32 %v2632, %v471
        %v2637 = vadd.f32 %v2633, %v472
        %2638 = vst [vmem:[%s443] sm:$0xff] %v2634
        %2639 = vst [vmem:[%s443 + $0x8] sm:$0xff] %v2635
        %2640 = vst [vmem:[%s443 + $0x10] sm:$0xff] %v2636
        %2641 = vst [vmem:[%s443 + $0x18] sm:$0xff] %v2637
        %p2642 = scmp.lt.s32.totalorder %s23, 1
        %s2643 = scalar_select %p2642, %s23, 1
        %s2644 = smul.addr %s2643, 4
        %s2645 = smul.addr %s2644, 8
        %s2646 = scalar_lea.vmem %s11, %s2645
        // Predicated region
        $region69: #{doft_forward.5} parent=63 // pred_check
          %p2647 = pneg %p287
        $region70: #{doft_forward.5} parent=63 // pred_check_branch
          %2649 = sbr.rel (%p2647) target = $region72
        $region71: #{doft_forward.5} parent=63 // pred_region
          _
        $region72: #{doft_forward.5} parent=63 // pred_fallthru
          _
      $region64: #{doft_forward.5} parent=5 // pred_fallthru
        _
      %p2650 = scmp.le.s32.totalorder 2, %s18
      // Predicated region
      $region73: #{doft_forward.5} parent=5 // pred_check
        %p2651 = pneg %p2650
      $region74: #{doft_forward.5} parent=5 // pred_check_branch
        %2653 = sbr.rel (%p2651) target = $region76
      $region75: #{doft_forward.5} parent=5 // pred_region
        %s2654 = ssub.s32 %s18, 2
        // Predicated region
        $region77: #{doft_forward.5} parent=75 // pred_check
          %p2655 = pneg %p293
        $region78: #{doft_forward.5} parent=75 // pred_check_branch
          %2657 = sbr.rel (%p2655) target = $region80
        $region79: #{doft_forward.5} parent=75 // pred_region
          %p2658 = scmp.lt.s32.totalorder %s24, 1
          %s2659 = scalar_select %p2658, %s24, 1
          %s2660 = smul.addr %s2659, 4
          %s2661 = smul.addr %s2660, 8
          %s2662 = scalar_lea.vmem %s11, %s2661
        $region80: #{doft_forward.5} parent=75 // pred_fallthru
          _
      $region76: #{doft_forward.5} parent=5 // pred_fallthru
        _
    $region6: #{doft_forward.5} parent=1 // loop_footer
      %s22 = sadd.s32 1, %s18
    $region7: #{doft_forward.5} parent=1 // loop_footer_branch
      %17 = sbr.rel target = $region3
    $region8: #{doft_forward.5} parent=1 // loop_exit
      _
    %2663 = vsyncpa [#allocation5], 1
    %s2664 = scalar_lea.sflag [#allocation5], 1
    %2665 = vsyncpa %s2664, 1

</llo_original>
